<compile_context>
chip_gen: v5e
topology: v5e:2x2
jax: 0.10.0
libtpu: 0.0.40
codegen_flags: <defaults>
</compile_context>

<pallas_src>
import functools

import jax
import jax.numpy as jnp
from jax import lax
from jax.experimental import pallas as pl
from jax.experimental.pallas import tpu as pltpu

_LANE = 128      # lane width (last dim tile)
_SUBLANE = 8     # sublane width (second-to-last dim tile)


def _round_up(x, m):
    return (x + m - 1) // m * m


def _pick_time_chunk(T, target=32):
    """Largest divisor of T that is <= target (bounds per-chunk scratch)."""
    for tc in range(min(T, target), 0, -1):
        if T % tc == 0:
            return tc
    return T


# ----------------------------------------------------------------------------
# Fused, time-chunked kernel
# ----------------------------------------------------------------------------
def _make_kernel(num_layers, Tc, Bp, hp):
    """hp: list of lane-padded hidden sizes (multiples of 128).

    Kernel ref order:
      x_chunk, (w_ih_t, w_hh_t, bias) * L, fc_w_t, fc_b,      # inputs
      probs, logits,                                          # outputs
      gx_scr, seq_scr, (h_scr, c_scr) * L                     # scratch
    """

    def kernel(*refs):
        x_ref = refs[0]
        idx = 1
        layers = []
        for _ in range(num_layers):
            layers.append(refs[idx:idx + 3])
            idx += 3
        w_fc_ref, b_fc_ref = refs[idx], refs[idx + 1]
        idx += 2
        probs_ref, logits_ref = refs[idx], refs[idx + 1]
        idx += 2
        gx_scr, seq_scr = refs[idx], refs[idx + 1]
        idx += 2
        state_refs = refs[idx:]                  # h0, c0, h1, c1, ...

        chunk = pl.program_id(0)
        n_chunks = pl.num_programs(0)

        # First chunk: zero the carried h/c state.  Together with the zero
        # padding of gate biases / W_hh rows this keeps padded hidden lanes
        # identically zero for the whole recurrence.
        @pl.when(chunk == 0)
        def _():
            for st in state_refs:
                st[...] = jnp.zeros_like(st)

        def run_layer(l, in_vals_bf16):
            """in_vals_bf16: (Tc*Bp, K) bf16 chunk input for layer l.
            Returns h_last (Bp, hp[l]) f32; writes this chunk's hidden
            sequence into seq_scr (f32) unless this is the last layer."""
            w_ih_ref, w_hh_ref, b_ref = layers[l]
            Hp = hp[l]
            G = 4 * Hp
            h_scr, c_scr = state_refs[2 * l], state_refs[2 * l + 1]
            is_last = (l == num_layers - 1)

            # Whole-chunk input projection in one MXU matmul
            # (bf16 operands, f32 accumulation), off the recurrent path.
            gx_scr[:, :G] = (
                jnp.dot(in_vals_bf16, w_ih_ref[...],
                        preferred_element_type=jnp.float32)
                + b_ref[...]
            )

            def step(t, carry):
                h, c = carry
                row = pl.multiple_of(t * Bp, _SUBLANE)   # aligned sublane window
                gates = gx_scr[pl.ds(row, Bp), :G] + jnp.dot(
                    h.astype(jnp.bfloat16), w_hh_ref[...],
                    preferred_element_type=jnp.float32)
                # PyTorch gate order i, f, g, o; lane-aligned slices (Hp % 128 == 0).
                i_g = jax.nn.sigmoid(gates[:, 0 * Hp:1 * Hp])
                f_g = jax.nn.sigmoid(gates[:, 1 * Hp:2 * Hp])
                g_g = jnp.tanh(gates[:, 2 * Hp:3 * Hp])
                o_g = jax.nn.sigmoid(gates[:, 3 * Hp:4 * Hp])
                c_new = f_g * c + i_g * g_g
                h_new = o_g * jnp.tanh(c_new)
                if not is_last:                          # feed the next layer
                    seq_scr[pl.ds(row, Bp), :Hp] = h_new
                return h_new, c_new

            h0 = h_scr[...]
            c0 = c_scr[...]
            # Bounded unroll: full unroll only for small chunks.
            h_last, c_last = lax.fori_loop(0, Tc, step, (h0, c0),
                                           unroll=min(Tc, 8))
            h_scr[...] = h_last
            c_scr[...] = c_last
            return h_last

        # Layer 0 reads the x chunk; layers >= 1 read the single, reused
        # inter-layer sequence buffer.  Reuse is safe: the gx matmul above
        # fully consumes the previous layer's sequence before the step loop
        # starts overwriting the same buffer.
        h_last = run_layer(0, x_ref[...].astype(jnp.bfloat16))
        for l in range(1, num_layers):
            prev_hp = hp[l - 1]
            h_last = run_layer(l, seq_scr[:, :prev_hp].astype(jnp.bfloat16))

        # Final time step of the last layer -> FC + sigmoid (f32, lane-dense
        # 128-wide output slab; padded columns are sliced off in the wrapper).
        @pl.when(chunk == n_chunks - 1)
        def _():
            logits = (
                jnp.dot(h_last, w_fc_ref[...],
                        preferred_element_type=jnp.float32)
                + b_fc_ref[...]
            )
            logits_ref[...] = logits
            probs_ref[...] = jax.nn.sigmoid(logits)

    return kernel


# ----------------------------------------------------------------------------
# Public forward (matches LSTM_RNN.forward)
# ----------------------------------------------------------------------------
@functools.partial(jax.jit, static_argnames=("output_dim", "sampling"))
def lstm_rnn_forward(x_btd, params, output_dim, sampling=False):
    """x_btd: (B, T, input_dim) float32, batch-first (PyTorch convention)."""
    B, T, D = x_btd.shape
    Bp = _round_up(B, _SUBLANE)
    lstm = params["lstm"]
    num_layers = len(lstm)
    hp = [int(layer["w_hh_t"].shape[0]) for layer in lstm]   # padded hidden sizes
    Op = int(params["fc_w_t"].shape[1])                      # lane-padded output

    Tc = _pick_time_chunk(T)
    n_chunks = T // Tc

    # time-major, batch padded to a sublane multiple, flattened to 2D so each
    # time chunk is a contiguous, tile-aligned (Tc*Bp, D) window.
    x = jnp.transpose(x_btd, (1, 0, 2))                      # (T, B, D)
    x = jnp.pad(x, ((0, 0), (0, Bp - B), (0, 0)))
    x2d = x.reshape(T * Bp, D)

    flat_args = [x2d]
    in_specs = [pl.BlockSpec((Tc * Bp, D), lambda c: (c, 0))]
    for layer in lstm:
        for name in ("w_ih_t", "w_hh_t", "bias"):
            arr = layer[name]
            flat_args.append(arr)
            in_specs.append(pl.BlockSpec(arr.shape, lambda c: (0, 0)))
    for name in ("fc_w_t", "fc_b"):
        arr = params[name]
        flat_args.append(arr)
        in_specs.append(pl.BlockSpec(arr.shape, lambda c: (0, 0)))

    max_hp = max(hp)
    seq_w = max(hp[:-1]) if num_layers > 1 else _LANE
    scratch_shapes = [
        pltpu.VMEM((Tc * Bp, 4 * max_hp), jnp.float32),  # per-chunk gate preacts
        pltpu.VMEM((Tc * Bp, seq_w), jnp.float32),       # shared inter-layer seq
    ]
    for h in hp:                                         # carried h/c per layer
        scratch_shapes += [pltpu.VMEM((Bp, h), jnp.float32),
                           pltpu.VMEM((Bp, h), jnp.float32)]

    # Explicit VMEM budget from the actual footprint (+ headroom), capped at
    # v7x's 64 MiB physical per-core VMEM.
    def _nbytes(a):
        return int(a.size) * a.dtype.itemsize
    scratch_bytes = 4 * (Tc * Bp * 4 * max_hp + Tc * Bp * seq_w
                         + 2 * Bp * sum(hp))
    io_bytes = 2 * (_nbytes(x2d) // n_chunks
                    + sum(_nbytes(a) for a in flat_args[1:])
                    + 2 * Bp * Op * 4)
    vmem_limit = min(max(2 * (scratch_bytes + io_bytes) + (4 << 20), 32 << 20),
                     64 << 20)

    out_block = pl.BlockSpec((Bp, Op), lambda c: (0, 0))
    probs, logits = pl.pallas_call(
        _make_kernel(num_layers, Tc, Bp, hp),
        grid=(n_chunks,),
        in_specs=in_specs,
        out_specs=(out_block, out_block),
        out_shape=(jax.ShapeDtypeStruct((Bp, Op), jnp.float32),
                   jax.ShapeDtypeStruct((Bp, Op), jnp.float32)),
        scratch_shapes=scratch_shapes,
        compiler_params=pltpu.CompilerParams(
            dimension_semantics=("arbitrary",),      # time chunks are sequential
            vmem_limit_bytes=vmem_limit),
    )(*flat_args)

    out = logits if sampling else probs
    return out[:B, :output_dim]


# ----------------------------------------------------------------------------
# Parameter init (mirrors nn.LSTM / nn.Linear: U(-k, k)) + kernel layout prep
# ----------------------------------------------------------------------------
def _pack_gate_weight(w, H, Hp, Din, Din_p):
    """(4H, Din) torch layout -> (Din_p, 4*Hp) bf16, per-gate zero-padded."""
    w4 = w.reshape(4, H, Din)
    w4 = jnp.pad(w4, ((0, 0), (0, Hp - H), (0, Din_p - Din)))
    return jnp.transpose(w4.reshape(4 * Hp, Din_p)).astype(jnp.bfloat16)


def _pack_gate_bias(b, H, Hp):
    # NOTE: the padded gate-bias columns MUST stay zero.  With zero-padded
    # W_hh rows this is what keeps padded hidden lanes exactly 0 forever.
    b4 = jnp.pad(b.reshape(4, H), ((0, 0), (0, Hp - H)))
    return b4.reshape(1, 4 * Hp).astype(jnp.float32)


def init_params(key, input_dim, output_dim, hidden_sizes):
    kernel_params = {"lstm": []}
    raw_params = {"lstm": []}
    prev, prev_p = input_dim, input_dim
    for h in hidden_sizes:
        hp = _round_up(h, _LANE)
        k = 1.0 / float(h) ** 0.5
        key, k1, k2, k3, k4 = jax.random.split(key, 5)
        w_ih = jax.random.uniform(k1, (4 * h, prev), jnp.float32, -k, k)
        w_hh = jax.random.uniform(k2, (4 * h, h), jnp.float32, -k, k)
        b_ih = jax.random.uniform(k3, (4 * h,), jnp.float32, -k, k)
        b_hh = jax.random.uniform(k4, (4 * h,), jnp.float32, -k, k)
        kernel_params["lstm"].append({
            "w_ih_t": _pack_gate_weight(w_ih, h, hp, prev, prev_p),
            "w_hh_t": _pack_gate_weight(w_hh, h, hp, h, hp),
            "bias": _pack_gate_bias(b_ih + b_hh, h, hp),
        })
        raw_params["lstm"].append(
            {"w_ih": w_ih, "w_hh": w_hh, "b_ih": b_ih, "b_hh": b_hh})
        prev, prev_p = h, hp

    k = 1.0 / float(prev) ** 0.5
    key, k1, k2 = jax.random.split(key, 3)
    w_fc = jax.random.uniform(k1, (output_dim, prev), jnp.float32, -k, k)
    b_fc = jax.random.uniform(k2, (output_dim,), jnp.float32, -k, k)
    Op = _round_up(output_dim, _LANE)                 # lane-dense FC output
    w_fc_p = jnp.pad(w_fc, ((0, Op - output_dim), (0, prev_p - prev)))
    kernel_params["fc_w_t"] = jnp.transpose(w_fc_p).astype(jnp.float32)  # (prev_p, Op)
    kernel_params["fc_b"] = jnp.pad(b_fc, (0, Op - output_dim))[None, :]  # (1, Op)
    raw_params["fc_w"] = w_fc
    raw_params["fc_b"] = b_fc
    return kernel_params, raw_params


# ----------------------------------------------------------------------------
# Pure-JAX references for the correctness checks
# ----------------------------------------------------------------------------
def _ref_forward_f32(x_btd, raw):
    """Faithful f32 reference of the PyTorch module."""
    x = x_btd
    for layer in raw["lstm"]:
        w_ih, w_hh = layer["w_ih"], layer["w_hh"]
        b = layer["b_ih"] + layer["b_hh"]
        H = w_hh.shape[1]
        B = x.shape[0]

        def step(carry, x_t, w_ih=w_ih, w_hh=w_hh, b=b, H=H):
            h, c = carry
            gates = x_t @ w_ih.T + h @ w_hh.T + b
            i = jax.nn.sigmoid(gates[:, 0 * H:1 * H])
            f = jax.nn.sigmoid(gates[:, 1 * H:2 * H])
            g = jnp.tanh(gates[:, 2 * H:3 * H])
            o = jax.nn.sigmoid(gates[:, 3 * H:4 * H])
            c = f * c + i * g
            h = o * jnp.tanh(c)
            return (h, c), h

        init = (jnp.zeros((B, H), jnp.float32), jnp.zeros((B, H), jnp.float32))
        _, ys = lax.scan(step, init, jnp.transpose(x, (1, 0, 2)))
        x = jnp.transpose(ys, (1, 0, 2))
    logits = x[:, -1, :] @ raw["fc_w"].T + raw["fc_b"]
    return logits, jax.nn.sigmoid(logits)


def _ref_forward_bf16(x_btd, raw):
    """Mirrors the kernel's numerics (bf16 matmul operands, f32 accumulation)."""
    bf = jnp.bfloat16
    x = x_btd
    for layer in raw["lstm"]:
        w_ih_bt = layer["w_ih"].T.astype(bf)
        w_hh_bt = layer["w_hh"].T.astype(bf)
        b = (layer["b_ih"] + layer["b_hh"]).astype(jnp.float32)
        H = layer["w_hh"].shape[1]
        B = x.shape[0]

        def step(carry, x_t, w_ih_bt=w_ih_bt, w_hh_bt=w_hh_bt, b=b, H=H):
            h, c = carry
            gx = jnp.dot(x_t.astype(bf), w_ih_bt,
                         preferred_element_type=jnp.float32) + b
            gates = gx + jnp.dot(h.astype(bf), w_hh_bt,
                                 preferred_element_type=jnp.float32)
            i = jax.nn.sigmoid(gates[:, 0 * H:1 * H])
            f = jax.nn.sigmoid(gates[:, 1 * H:2 * H])
            g = jnp.tanh(gates[:, 2 * H:3 * H])
            o = jax.nn.sigmoid(gates[:, 3 * H:4 * H])
            c = f * c + i * g
            h = o * jnp.tanh(c)
            return (h, c), h

        init = (jnp.zeros((B, H), jnp.float32), jnp.zeros((B, H), jnp.float32))
        _, ys = lax.scan(step, init, jnp.transpose(x, (1, 0, 2)))
        x = jnp.transpose(ys, (1, 0, 2))
    logits = x[:, -1, :] @ raw["fc_w"].T + raw["fc_b"]
    return logits, jax.nn.sigmoid(logits)


# ----------------------------------------------------------------------------
if __name__ == "__main__":
    B, T = 2, 8
    input_dim, output_dim = 16, 4
    hidden_sizes = [128, 32, 8]

    key = jax.random.PRNGKey(0)
    key, pkey, xkey = jax.random.split(key, 3)
    params, raw = init_params(pkey, input_dim, output_dim, hidden_sizes)
    x = jax.random.normal(xkey, (B, T, input_dim), jnp.float32)

    probs = jax.block_until_ready(
        lstm_rnn_forward(x, params, output_dim=output_dim, sampling=False))
    logits = jax.block_until_ready(
        lstm_rnn_forward(x, params, output_dim=output_dim, sampling=True))

    assert probs.shape == (B, output_dim)
    assert logits.shape == (B, output_dim)

    # Tight check against a reference mirroring the kernel's bf16/f32 numerics.
    mir_logits, mir_probs = _ref_forward_bf16(x, raw)
    assert jnp.allclose(logits, mir_logits, atol=2e-3, rtol=2e-3), (logits, mir_logits)
    assert jnp.allclose(probs, mir_probs, atol=2e-3, rtol=2e-3), (probs, mir_probs)

    # Looser check against the faithful f32 PyTorch-equivalent reference
    # (bounds the bf16-operand rounding error).
    f32_logits, f32_probs = _ref_forward_f32(x, raw)
    assert jnp.allclose(logits, f32_logits, atol=3e-2, rtol=3e-2), (logits, f32_logits)
    assert jnp.allclose(probs, f32_probs, atol=3e-2, rtol=3e-2), (probs, f32_probs)

    print("KERNEL_OK")
</pallas_src>

<mosaic_0001>
module attributes {stable_mosaic.version = 11 : i64} {
  func.func @kernel(%arg0: i32, %arg1: memref<64x16xf32, #tpu.memory_space<vmem>>, %arg2: memref<16x512xbf16, #tpu.memory_space<vmem>>, %arg3: memref<128x512xbf16, #tpu.memory_space<vmem>>, %arg4: memref<1x512xf32, #tpu.memory_space<vmem>>, %arg5: memref<128x512xbf16, #tpu.memory_space<vmem>>, %arg6: memref<128x512xbf16, #tpu.memory_space<vmem>>, %arg7: memref<1x512xf32, #tpu.memory_space<vmem>>, %arg8: memref<128x512xbf16, #tpu.memory_space<vmem>>, %arg9: memref<128x512xbf16, #tpu.memory_space<vmem>>, %arg10: memref<1x512xf32, #tpu.memory_space<vmem>>, %arg11: memref<128x128xf32, #tpu.memory_space<vmem>>, %arg12: memref<1x128xf32, #tpu.memory_space<vmem>>, %arg13: memref<8x128xf32, #tpu.memory_space<vmem>>, %arg14: memref<8x128xf32, #tpu.memory_space<vmem>>, %arg15: memref<64x512xf32, #tpu.memory_space<vmem>>, %arg16: memref<64x128xf32, #tpu.memory_space<vmem>>, %arg17: memref<8x128xf32, #tpu.memory_space<vmem>>, %arg18: memref<8x128xf32, #tpu.memory_space<vmem>>, %arg19: memref<8x128xf32, #tpu.memory_space<vmem>>, %arg20: memref<8x128xf32, #tpu.memory_space<vmem>>, %arg21: memref<8x128xf32, #tpu.memory_space<vmem>>, %arg22: memref<8x128xf32, #tpu.memory_space<vmem>>) attributes {dimension_semantics = [#tpu.dimension_semantics<arbitrary>], iteration_bounds = array<i64: 1>, scalar_prefetch = 0 : i64, scratch_operands = 8 : i64, tpu.core_type = #tpu.core_type<tc>, window_params = [{transform_indices = @transform_0, window_bounds = array<i64: 64, 16>}, {pipeline_mode = #tpu.pipeline_mode<synchronous>, transform_indices = @transform_1, window_bounds = array<i64: 16, 512>}, {pipeline_mode = #tpu.pipeline_mode<synchronous>, transform_indices = @transform_2, window_bounds = array<i64: 128, 512>}, {pipeline_mode = #tpu.pipeline_mode<synchronous>, transform_indices = @transform_3, window_bounds = array<i64: 1, 512>}, {pipeline_mode = #tpu.pipeline_mode<synchronous>, transform_indices = @transform_4, window_bounds = array<i64: 128, 512>}, {pipeline_mode = #tpu.pipeline_mode<synchronous>, transform_indices = @transform_5, window_bounds = array<i64: 128, 512>}, {pipeline_mode = #tpu.pipeline_mode<synchronous>, transform_indices = @transform_6, window_bounds = array<i64: 1, 512>}, {pipeline_mode = #tpu.pipeline_mode<synchronous>, transform_indices = @transform_7, window_bounds = array<i64: 128, 512>}, {pipeline_mode = #tpu.pipeline_mode<synchronous>, transform_indices = @transform_8, window_bounds = array<i64: 128, 512>}, {pipeline_mode = #tpu.pipeline_mode<synchronous>, transform_indices = @transform_9, window_bounds = array<i64: 1, 512>}, {pipeline_mode = #tpu.pipeline_mode<synchronous>, transform_indices = @transform_10, window_bounds = array<i64: 128, 128>}, {pipeline_mode = #tpu.pipeline_mode<synchronous>, transform_indices = @transform_11, window_bounds = array<i64: 1, 128>}, {pipeline_mode = #tpu.pipeline_mode<synchronous>, transform_indices = @transform_12, window_bounds = array<i64: 8, 128>}, {pipeline_mode = #tpu.pipeline_mode<synchronous>, transform_indices = @transform_13, window_bounds = array<i64: 8, 128>}]} {
    %c0_i32 = arith.constant 0 : i32
    %0 = arith.cmpi eq, %arg0, %c0_i32 : i32
    %1 = arith.extui %0 : i1 to i32
    %c0_i32_0 = arith.constant 0 : i32
    %2 = arith.cmpi ne, %1, %c0_i32_0 : i32
    scf.if %2 {
      %cst_279 = arith.constant 0.000000e+00 : f32
      %866 = vector.broadcast %cst_279 : f32 to vector<8x128xf32>
      %c0_280 = arith.constant 0 : index
      %c0_281 = arith.constant 0 : index
      %867 = vector.load %arg17[%c0_280, %c0_281] : memref<8x128xf32, #tpu.memory_space<vmem>>, vector<8x128xf32>
      tpu.vector_store %arg17[%c0_280, %c0_281], %866 {strides = array<i32>} : memref<8x128xf32, #tpu.memory_space<vmem>>, vector<8x128xf32>,
      %cst_282 = arith.constant 0.000000e+00 : f32
      %868 = vector.broadcast %cst_282 : f32 to vector<8x128xf32>
      %c0_283 = arith.constant 0 : index
      %c0_284 = arith.constant 0 : index
      %869 = vector.load %arg18[%c0_283, %c0_284] : memref<8x128xf32, #tpu.memory_space<vmem>>, vector<8x128xf32>
      tpu.vector_store %arg18[%c0_283, %c0_284], %868 {strides = array<i32>} : memref<8x128xf32, #tpu.memory_space<vmem>>, vector<8x128xf32>,
      %cst_285 = arith.constant 0.000000e+00 : f32
      %870 = vector.broadcast %cst_285 : f32 to vector<8x128xf32>
      %c0_286 = arith.constant 0 : index
      %c0_287 = arith.constant 0 : index
      %871 = vector.load %arg19[%c0_286, %c0_287] : memref<8x128xf32, #tpu.memory_space<vmem>>, vector<8x128xf32>
      tpu.vector_store %arg19[%c0_286, %c0_287], %870 {strides = array<i32>} : memref<8x128xf32, #tpu.memory_space<vmem>>, vector<8x128xf32>,
      %cst_288 = arith.constant 0.000000e+00 : f32
      %872 = vector.broadcast %cst_288 : f32 to vector<8x128xf32>
      %c0_289 = arith.constant 0 : index
      %c0_290 = arith.constant 0 : index
      %873 = vector.load %arg20[%c0_289, %c0_290] : memref<8x128xf32, #tpu.memory_space<vmem>>, vector<8x128xf32>
      tpu.vector_store %arg20[%c0_289, %c0_290], %872 {strides = array<i32>} : memref<8x128xf32, #tpu.memory_space<vmem>>, vector<8x128xf32>,
      %cst_291 = arith.constant 0.000000e+00 : f32
      %874 = vector.broadcast %cst_291 : f32 to vector<8x128xf32>
      %c0_292 = arith.constant 0 : index
      %c0_293 = arith.constant 0 : index
      %875 = vector.load %arg21[%c0_292, %c0_293] : memref<8x128xf32, #tpu.memory_space<vmem>>, vector<8x128xf32>
      tpu.vector_store %arg21[%c0_292, %c0_293], %874 {strides = array<i32>} : memref<8x128xf32, #tpu.memory_space<vmem>>, vector<8x128xf32>,
      %cst_294 = arith.constant 0.000000e+00 : f32
      %876 = vector.broadcast %cst_294 : f32 to vector<8x128xf32>
      %c0_295 = arith.constant 0 : index
      %c0_296 = arith.constant 0 : index
      %877 = vector.load %arg22[%c0_295, %c0_296] : memref<8x128xf32, #tpu.memory_space<vmem>>, vector<8x128xf32>
      tpu.vector_store %arg22[%c0_295, %c0_296], %876 {strides = array<i32>} : memref<8x128xf32, #tpu.memory_space<vmem>>, vector<8x128xf32>,
    } else {
    }
    %c0 = arith.constant 0 : index
    %c0_1 = arith.constant 0 : index
    %3 = vector.load %arg1[%c0, %c0_1] : memref<64x16xf32, #tpu.memory_space<vmem>>, vector<64x16xf32>
    %4 = arith.truncf %3 : vector<64x16xf32> to vector<64x16xbf16>
    %c0_2 = arith.constant 0 : index
    %c0_3 = arith.constant 0 : index
    %5 = vector.load %arg2[%c0_2, %c0_3] : memref<16x512xbf16, #tpu.memory_space<vmem>>, vector<16x512xbf16>
    %cst = arith.constant dense<0.000000e+00> : vector<64x512xf32>
    %6 = tpu.matmul %4, %5, %cst {dimension_numbers = #tpu.dot_dimension_numbers<[1], [0], [0], [1], [0, 0, 1, 1], [], []>} : vector<64x16xbf16>, vector<16x512xbf16>, vector<64x512xf32> -> vector<64x512xf32>
    %c0_4 = arith.constant 0 : index
    %c0_5 = arith.constant 0 : index
    %7 = vector.load %arg4[%c0_4, %c0_5] : memref<1x512xf32, #tpu.memory_space<vmem>>, vector<1x512xf32>
    %8 = vector.broadcast %7 : vector<1x512xf32> to vector<64x512xf32>
    %9 = arith.addf %6, %8 : vector<64x512xf32>
    %c0_6 = arith.constant 0 : index
    %c0_7 = arith.constant 0 : index
    %10 = vector.load %arg15[%c0_6, %c0_7] : memref<64x512xf32, #tpu.memory_space<vmem>>, vector<64x512xf32>
    tpu.vector_store %arg15[%c0_6, %c0_7], %9 {strides = array<i32>} : memref<64x512xf32, #tpu.memory_space<vmem>>, vector<64x512xf32>,
    %c0_8 = arith.constant 0 : index
    %c0_9 = arith.constant 0 : index
    %11 = vector.load %arg17[%c0_8, %c0_9] : memref<8x128xf32, #tpu.memory_space<vmem>>, vector<8x128xf32>
    %c0_10 = arith.constant 0 : index
    %c0_11 = arith.constant 0 : index
    %12 = vector.load %arg18[%c0_10, %c0_11] : memref<8x128xf32, #tpu.memory_space<vmem>>, vector<8x128xf32>
    %c0_i32_12 = arith.constant 0 : i32
    %c8_i32 = arith.constant 8 : i32
    %13 = arith.muli %c0_i32_12, %c8_i32 : i32
    %14 = tpu.assume_multiple %13, 8 : i32
    %15 = arith.index_cast %14 : i32 to index
    %c0_13 = arith.constant 0 : index
    %16 = vector.load %arg15[%15, %c0_13] : memref<64x512xf32, #tpu.memory_space<vmem>>, vector<8x512xf32>
    %17 = arith.truncf %11 : vector<8x128xf32> to vector<8x128xbf16>
    %c0_14 = arith.constant 0 : index
    %c0_15 = arith.constant 0 : index
    %18 = vector.load %arg3[%c0_14, %c0_15] : memref<128x512xbf16, #tpu.memory_space<vmem>>, vector<128x512xbf16>
    %cst_16 = arith.constant dense<0.000000e+00> : vector<8x512xf32>
    %19 = tpu.matmul %17, %18, %cst_16 {dimension_numbers = #tpu.dot_dimension_numbers<[1], [0], [0], [1], [0, 0, 1, 1], [], []>} : vector<8x128xbf16>, vector<128x512xbf16>, vector<8x512xf32> -> vector<8x512xf32>
    %20 = arith.addf %16, %19 : vector<8x512xf32>
    %21 = vector.extract_strided_slice %20 {offsets = [0, 0], sizes = [8, 128], strides = [1, 1]} : vector<8x512xf32> to vector<8x128xf32>
    %22 = arith.negf %21 : vector<8x128xf32>
    %23 = math.exp %22 : vector<8x128xf32>
    %cst_17 = arith.constant 1.000000e+00 : f32
    %24 = vector.broadcast %cst_17 : f32 to vector<8x128xf32>
    %25 = arith.addf %24, %23 : vector<8x128xf32>
    %26 = arith.divf %24, %25 : vector<8x128xf32>
    %27 = vector.extract_strided_slice %20 {offsets = [0, 128], sizes = [8, 128], strides = [1, 1]} : vector<8x512xf32> to vector<8x128xf32>
    %28 = arith.negf %27 : vector<8x128xf32>
    %29 = math.exp %28 : vector<8x128xf32>
    %cst_18 = arith.constant 1.000000e+00 : f32
    %30 = vector.broadcast %cst_18 : f32 to vector<8x128xf32>
    %31 = arith.addf %30, %29 : vector<8x128xf32>
    %32 = arith.divf %30, %31 : vector<8x128xf32>
    %33 = vector.extract_strided_slice %20 {offsets = [0, 256], sizes = [8, 128], strides = [1, 1]} : vector<8x512xf32> to vector<8x128xf32>
    %34 = math.tanh %33 : vector<8x128xf32>
    %35 = vector.extract_strided_slice %20 {offsets = [0, 384], sizes = [8, 128], strides = [1, 1]} : vector<8x512xf32> to vector<8x128xf32>
    %36 = arith.negf %35 : vector<8x128xf32>
    %37 = math.exp %36 : vector<8x128xf32>
    %cst_19 = arith.constant 1.000000e+00 : f32
    %38 = vector.broadcast %cst_19 : f32 to vector<8x128xf32>
    %39 = arith.addf %38, %37 : vector<8x128xf32>
    %40 = arith.divf %38, %39 : vector<8x128xf32>
    %41 = arith.mulf %32, %12 : vector<8x128xf32>
    %42 = arith.mulf %26, %34 : vector<8x128xf32>
    %43 = arith.addf %41, %42 : vector<8x128xf32>
    %44 = math.tanh %43 : vector<8x128xf32>
    %45 = arith.mulf %40, %44 : vector<8x128xf32>
    %46 = arith.index_cast %14 : i32 to index
    %c0_20 = arith.constant 0 : index
    %47 = vector.load %arg16[%46, %c0_20] : memref<64x128xf32, #tpu.memory_space<vmem>>, vector<8x128xf32>
    tpu.vector_store %arg16[%46, %c0_20], %45 {strides = array<i32>} : memref<64x128xf32, #tpu.memory_space<vmem>>, vector<8x128xf32>,
    %c1_i32 = arith.constant 1 : i32
    %c8_i32_21 = arith.constant 8 : i32
    %48 = arith.muli %c1_i32, %c8_i32_21 : i32
    %49 = tpu.assume_multiple %48, 8 : i32
    %50 = arith.index_cast %49 : i32 to index
    %c0_22 = arith.constant 0 : index
    %51 = vector.load %arg15[%50, %c0_22] : memref<64x512xf32, #tpu.memory_space<vmem>>, vector<8x512xf32>
    %52 = arith.truncf %45 : vector<8x128xf32> to vector<8x128xbf16>
    %c0_23 = arith.constant 0 : index
    %c0_24 = arith.constant 0 : index
    %53 = vector.load %arg3[%c0_23, %c0_24] : memref<128x512xbf16, #tpu.memory_space<vmem>>, vector<128x512xbf16>
    %cst_25 = arith.constant dense<0.000000e+00> : vector<8x512xf32>
    %54 = tpu.matmul %52, %53, %cst_25 {dimension_numbers = #tpu.dot_dimension_numbers<[1], [0], [0], [1], [0, 0, 1, 1], [], []>} : vector<8x128xbf16>, vector<128x512xbf16>, vector<8x512xf32> -> vector<8x512xf32>
    %55 = arith.addf %51, %54 : vector<8x512xf32>
    %56 = vector.extract_strided_slice %55 {offsets = [0, 0], sizes = [8, 128], strides = [1, 1]} : vector<8x512xf32> to vector<8x128xf32>
    %57 = arith.negf %56 : vector<8x128xf32>
    %58 = math.exp %57 : vector<8x128xf32>
    %cst_26 = arith.constant 1.000000e+00 : f32
    %59 = vector.broadcast %cst_26 : f32 to vector<8x128xf32>
    %60 = arith.addf %59, %58 : vector<8x128xf32>
    %61 = arith.divf %59, %60 : vector<8x128xf32>
    %62 = vector.extract_strided_slice %55 {offsets = [0, 128], sizes = [8, 128], strides = [1, 1]} : vector<8x512xf32> to vector<8x128xf32>
    %63 = arith.negf %62 : vector<8x128xf32>
    %64 = math.exp %63 : vector<8x128xf32>
    %cst_27 = arith.constant 1.000000e+00 : f32
    %65 = vector.broadcast %cst_27 : f32 to vector<8x128xf32>
    %66 = arith.addf %65, %64 : vector<8x128xf32>
    %67 = arith.divf %65, %66 : vector<8x128xf32>
    %68 = vector.extract_strided_slice %55 {offsets = [0, 256], sizes = [8, 128], strides = [1, 1]} : vector<8x512xf32> to vector<8x128xf32>
    %69 = math.tanh %68 : vector<8x128xf32>
    %70 = vector.extract_strided_slice %55 {offsets = [0, 384], sizes = [8, 128], strides = [1, 1]} : vector<8x512xf32> to vector<8x128xf32>
    %71 = arith.negf %70 : vector<8x128xf32>
    %72 = math.exp %71 : vector<8x128xf32>
    %cst_28 = arith.constant 1.000000e+00 : f32
    %73 = vector.broadcast %cst_28 : f32 to vector<8x128xf32>
    %74 = arith.addf %73, %72 : vector<8x128xf32>
    %75 = arith.divf %73, %74 : vector<8x128xf32>
    %76 = arith.mulf %67, %43 : vector<8x128xf32>
    %77 = arith.mulf %61, %69 : vector<8x128xf32>
    %78 = arith.addf %76, %77 : vector<8x128xf32>
    %79 = math.tanh %78 : vector<8x128xf32>
    %80 = arith.mulf %75, %79 : vector<8x128xf32>
    %81 = arith.index_cast %49 : i32 to index
    %c0_29 = arith.constant 0 : index
    %82 = vector.load %arg16[%81, %c0_29] : memref<64x128xf32, #tpu.memory_space<vmem>>, vector<8x128xf32>
    tpu.vector_store %arg16[%81, %c0_29], %80 {strides = array<i32>} : memref<64x128xf32, #tpu.memory_space<vmem>>, vector<8x128xf32>,
    %c2_i32 = arith.constant 2 : i32
    %c8_i32_30 = arith.constant 8 : i32
    %83 = arith.muli %c2_i32, %c8_i32_30 : i32
    %84 = tpu.assume_multiple %83, 8 : i32
    %85 = arith.index_cast %84 : i32 to index
    %c0_31 = arith.constant 0 : index
    %86 = vector.load %arg15[%85, %c0_31] : memref<64x512xf32, #tpu.memory_space<vmem>>, vector<8x512xf32>
    %87 = arith.truncf %80 : vector<8x128xf32> to vector<8x128xbf16>
    %c0_32 = arith.constant 0 : index
    %c0_33 = arith.constant 0 : index
    %88 = vector.load %arg3[%c0_32, %c0_33] : memref<128x512xbf16, #tpu.memory_space<vmem>>, vector<128x512xbf16>
    %cst_34 = arith.constant dense<0.000000e+00> : vector<8x512xf32>
    %89 = tpu.matmul %87, %88, %cst_34 {dimension_numbers = #tpu.dot_dimension_numbers<[1], [0], [0], [1], [0, 0, 1, 1], [], []>} : vector<8x128xbf16>, vector<128x512xbf16>, vector<8x512xf32> -> vector<8x512xf32>
    %90 = arith.addf %86, %89 : vector<8x512xf32>
    %91 = vector.extract_strided_slice %90 {offsets = [0, 0], sizes = [8, 128], strides = [1, 1]} : vector<8x512xf32> to vector<8x128xf32>
    %92 = arith.negf %91 : vector<8x128xf32>
    %93 = math.exp %92 : vector<8x128xf32>
    %cst_35 = arith.constant 1.000000e+00 : f32
    %94 = vector.broadcast %cst_35 : f32 to vector<8x128xf32>
    %95 = arith.addf %94, %93 : vector<8x128xf32>
    %96 = arith.divf %94, %95 : vector<8x128xf32>
    %97 = vector.extract_strided_slice %90 {offsets = [0, 128], sizes = [8, 128], strides = [1, 1]} : vector<8x512xf32> to vector<8x128xf32>
    %98 = arith.negf %97 : vector<8x128xf32>
    %99 = math.exp %98 : vector<8x128xf32>
    %cst_36 = arith.constant 1.000000e+00 : f32
    %100 = vector.broadcast %cst_36 : f32 to vector<8x128xf32>
    %101 = arith.addf %100, %99 : vector<8x128xf32>
    %102 = arith.divf %100, %101 : vector<8x128xf32>
    %103 = vector.extract_strided_slice %90 {offsets = [0, 256], sizes = [8, 128], strides = [1, 1]} : vector<8x512xf32> to vector<8x128xf32>
    %104 = math.tanh %103 : vector<8x128xf32>
    %105 = vector.extract_strided_slice %90 {offsets = [0, 384], sizes = [8, 128], strides = [1, 1]} : vector<8x512xf32> to vector<8x128xf32>
    %106 = arith.negf %105 : vector<8x128xf32>
    %107 = math.exp %106 : vector<8x128xf32>
    %cst_37 = arith.constant 1.000000e+00 : f32
    %108 = vector.broadcast %cst_37 : f32 to vector<8x128xf32>
    %109 = arith.addf %108, %107 : vector<8x128xf32>
    %110 = arith.divf %108, %109 : vector<8x128xf32>
    %111 = arith.mulf %102, %78 : vector<8x128xf32>
    %112 = arith.mulf %96, %104 : vector<8x128xf32>
    %113 = arith.addf %111, %112 : vector<8x128xf32>
    %114 = math.tanh %113 : vector<8x128xf32>
    %115 = arith.mulf %110, %114 : vector<8x128xf32>
    %116 = arith.index_cast %84 : i32 to index
    %c0_38 = arith.constant 0 : index
    %117 = vector.load %arg16[%116, %c0_38] : memref<64x128xf32, #tpu.memory_space<vmem>>, vector<8x128xf32>
    tpu.vector_store %arg16[%116, %c0_38], %115 {strides = array<i32>} : memref<64x128xf32, #tpu.memory_space<vmem>>, vector<8x128xf32>,
    %c3_i32 = arith.constant 3 : i32
    %c8_i32_39 = arith.constant 8 : i32
    %118 = arith.muli %c3_i32, %c8_i32_39 : i32
    %119 = tpu.assume_multiple %118, 8 : i32
    %120 = arith.index_cast %119 : i32 to index
    %c0_40 = arith.constant 0 : index
    %121 = vector.load %arg15[%120, %c0_40] : memref<64x512xf32, #tpu.memory_space<vmem>>, vector<8x512xf32>
    %122 = arith.truncf %115 : vector<8x128xf32> to vector<8x128xbf16>
    %c0_41 = arith.constant 0 : index
    %c0_42 = arith.constant 0 : index
    %123 = vector.load %arg3[%c0_41, %c0_42] : memref<128x512xbf16, #tpu.memory_space<vmem>>, vector<128x512xbf16>
    %cst_43 = arith.constant dense<0.000000e+00> : vector<8x512xf32>
    %124 = tpu.matmul %122, %123, %cst_43 {dimension_numbers = #tpu.dot_dimension_numbers<[1], [0], [0], [1], [0, 0, 1, 1], [], []>} : vector<8x128xbf16>, vector<128x512xbf16>, vector<8x512xf32> -> vector<8x512xf32>
    %125 = arith.addf %121, %124 : vector<8x512xf32>
    %126 = vector.extract_strided_slice %125 {offsets = [0, 0], sizes = [8, 128], strides = [1, 1]} : vector<8x512xf32> to vector<8x128xf32>
    %127 = arith.negf %126 : vector<8x128xf32>
    %128 = math.exp %127 : vector<8x128xf32>
    %cst_44 = arith.constant 1.000000e+00 : f32
    %129 = vector.broadcast %cst_44 : f32 to vector<8x128xf32>
    %130 = arith.addf %129, %128 : vector<8x128xf32>
    %131 = arith.divf %129, %130 : vector<8x128xf32>
    %132 = vector.extract_strided_slice %125 {offsets = [0, 128], sizes = [8, 128], strides = [1, 1]} : vector<8x512xf32> to vector<8x128xf32>
    %133 = arith.negf %132 : vector<8x128xf32>
    %134 = math.exp %133 : vector<8x128xf32>
    %cst_45 = arith.constant 1.000000e+00 : f32
    %135 = vector.broadcast %cst_45 : f32 to vector<8x128xf32>
    %136 = arith.addf %135, %134 : vector<8x128xf32>
    %137 = arith.divf %135, %136 : vector<8x128xf32>
    %138 = vector.extract_strided_slice %125 {offsets = [0, 256], sizes = [8, 128], strides = [1, 1]} : vector<8x512xf32> to vector<8x128xf32>
    %139 = math.tanh %138 : vector<8x128xf32>
    %140 = vector.extract_strided_slice %125 {offsets = [0, 384], sizes = [8, 128], strides = [1, 1]} : vector<8x512xf32> to vector<8x128xf32>
    %141 = arith.negf %140 : vector<8x128xf32>
    %142 = math.exp %141 : vector<8x128xf32>
    %cst_46 = arith.constant 1.000000e+00 : f32
    %143 = vector.broadcast %cst_46 : f32 to vector<8x128xf32>
    %144 = arith.addf %143, %142 : vector<8x128xf32>
    %145 = arith.divf %143, %144 : vector<8x128xf32>
    %146 = arith.mulf %137, %113 : vector<8x128xf32>
    %147 = arith.mulf %131, %139 : vector<8x128xf32>
    %148 = arith.addf %146, %147 : vector<8x128xf32>
    %149 = math.tanh %148 : vector<8x128xf32>
    %150 = arith.mulf %145, %149 : vector<8x128xf32>
    %151 = arith.index_cast %119 : i32 to index
    %c0_47 = arith.constant 0 : index
    %152 = vector.load %arg16[%151, %c0_47] : memref<64x128xf32, #tpu.memory_space<vmem>>, vector<8x128xf32>
    tpu.vector_store %arg16[%151, %c0_47], %150 {strides = array<i32>} : memref<64x128xf32, #tpu.memory_space<vmem>>, vector<8x128xf32>,
    %c4_i32 = arith.constant 4 : i32
    %c8_i32_48 = arith.constant 8 : i32
    %153 = arith.muli %c4_i32, %c8_i32_48 : i32
    %154 = tpu.assume_multiple %153, 8 : i32
    %155 = arith.index_cast %154 : i32 to index
    %c0_49 = arith.constant 0 : index
    %156 = vector.load %arg15[%155, %c0_49] : memref<64x512xf32, #tpu.memory_space<vmem>>, vector<8x512xf32>
    %157 = arith.truncf %150 : vector<8x128xf32> to vector<8x128xbf16>
    %c0_50 = arith.constant 0 : index
    %c0_51 = arith.constant 0 : index
    %158 = vector.load %arg3[%c0_50, %c0_51] : memref<128x512xbf16, #tpu.memory_space<vmem>>, vector<128x512xbf16>
    %cst_52 = arith.constant dense<0.000000e+00> : vector<8x512xf32>
    %159 = tpu.matmul %157, %158, %cst_52 {dimension_numbers = #tpu.dot_dimension_numbers<[1], [0], [0], [1], [0, 0, 1, 1], [], []>} : vector<8x128xbf16>, vector<128x512xbf16>, vector<8x512xf32> -> vector<8x512xf32>
    %160 = arith.addf %156, %159 : vector<8x512xf32>
    %161 = vector.extract_strided_slice %160 {offsets = [0, 0], sizes = [8, 128], strides = [1, 1]} : vector<8x512xf32> to vector<8x128xf32>
    %162 = arith.negf %161 : vector<8x128xf32>
    %163 = math.exp %162 : vector<8x128xf32>
    %cst_53 = arith.constant 1.000000e+00 : f32
    %164 = vector.broadcast %cst_53 : f32 to vector<8x128xf32>
    %165 = arith.addf %164, %163 : vector<8x128xf32>
    %166 = arith.divf %164, %165 : vector<8x128xf32>
    %167 = vector.extract_strided_slice %160 {offsets = [0, 128], sizes = [8, 128], strides = [1, 1]} : vector<8x512xf32> to vector<8x128xf32>
    %168 = arith.negf %167 : vector<8x128xf32>
    %169 = math.exp %168 : vector<8x128xf32>
    %cst_54 = arith.constant 1.000000e+00 : f32
    %170 = vector.broadcast %cst_54 : f32 to vector<8x128xf32>
    %171 = arith.addf %170, %169 : vector<8x128xf32>
    %172 = arith.divf %170, %171 : vector<8x128xf32>
    %173 = vector.extract_strided_slice %160 {offsets = [0, 256], sizes = [8, 128], strides = [1, 1]} : vector<8x512xf32> to vector<8x128xf32>
    %174 = math.tanh %173 : vector<8x128xf32>
    %175 = vector.extract_strided_slice %160 {offsets = [0, 384], sizes = [8, 128], strides = [1, 1]} : vector<8x512xf32> to vector<8x128xf32>
    %176 = arith.negf %175 : vector<8x128xf32>
    %177 = math.exp %176 : vector<8x128xf32>
    %cst_55 = arith.constant 1.000000e+00 : f32
    %178 = vector.broadcast %cst_55 : f32 to vector<8x128xf32>
    %179 = arith.addf %178, %177 : vector<8x128xf32>
    %180 = arith.divf %178, %179 : vector<8x128xf32>
    %181 = arith.mulf %172, %148 : vector<8x128xf32>
    %182 = arith.mulf %166, %174 : vector<8x128xf32>
    %183 = arith.addf %181, %182 : vector<8x128xf32>
    %184 = math.tanh %183 : vector<8x128xf32>
    %185 = arith.mulf %180, %184 : vector<8x128xf32>
    %186 = arith.index_cast %154 : i32 to index
    %c0_56 = arith.constant 0 : index
    %187 = vector.load %arg16[%186, %c0_56] : memref<64x128xf32, #tpu.memory_space<vmem>>, vector<8x128xf32>
    tpu.vector_store %arg16[%186, %c0_56], %185 {strides = array<i32>} : memref<64x128xf32, #tpu.memory_space<vmem>>, vector<8x128xf32>,
    %c5_i32 = arith.constant 5 : i32
    %c8_i32_57 = arith.constant 8 : i32
    %188 = arith.muli %c5_i32, %c8_i32_57 : i32
    %189 = tpu.assume_multiple %188, 8 : i32
    %190 = arith.index_cast %189 : i32 to index
    %c0_58 = arith.constant 0 : index
    %191 = vector.load %arg15[%190, %c0_58] : memref<64x512xf32, #tpu.memory_space<vmem>>, vector<8x512xf32>
    %192 = arith.truncf %185 : vector<8x128xf32> to vector<8x128xbf16>
    %c0_59 = arith.constant 0 : index
    %c0_60 = arith.constant 0 : index
    %193 = vector.load %arg3[%c0_59, %c0_60] : memref<128x512xbf16, #tpu.memory_space<vmem>>, vector<128x512xbf16>
    %cst_61 = arith.constant dense<0.000000e+00> : vector<8x512xf32>
    %194 = tpu.matmul %192, %193, %cst_61 {dimension_numbers = #tpu.dot_dimension_numbers<[1], [0], [0], [1], [0, 0, 1, 1], [], []>} : vector<8x128xbf16>, vector<128x512xbf16>, vector<8x512xf32> -> vector<8x512xf32>
    %195 = arith.addf %191, %194 : vector<8x512xf32>
    %196 = vector.extract_strided_slice %195 {offsets = [0, 0], sizes = [8, 128], strides = [1, 1]} : vector<8x512xf32> to vector<8x128xf32>
    %197 = arith.negf %196 : vector<8x128xf32>
    %198 = math.exp %197 : vector<8x128xf32>
    %cst_62 = arith.constant 1.000000e+00 : f32
    %199 = vector.broadcast %cst_62 : f32 to vector<8x128xf32>
    %200 = arith.addf %199, %198 : vector<8x128xf32>
    %201 = arith.divf %199, %200 : vector<8x128xf32>
    %202 = vector.extract_strided_slice %195 {offsets = [0, 128], sizes = [8, 128], strides = [1, 1]} : vector<8x512xf32> to vector<8x128xf32>
    %203 = arith.negf %202 : vector<8x128xf32>
    %204 = math.exp %203 : vector<8x128xf32>
    %cst_63 = arith.constant 1.000000e+00 : f32
    %205 = vector.broadcast %cst_63 : f32 to vector<8x128xf32>
    %206 = arith.addf %205, %204 : vector<8x128xf32>
    %207 = arith.divf %205, %206 : vector<8x128xf32>
    %208 = vector.extract_strided_slice %195 {offsets = [0, 256], sizes = [8, 128], strides = [1, 1]} : vector<8x512xf32> to vector<8x128xf32>
    %209 = math.tanh %208 : vector<8x128xf32>
    %210 = vector.extract_strided_slice %195 {offsets = [0, 384], sizes = [8, 128], strides = [1, 1]} : vector<8x512xf32> to vector<8x128xf32>
    %211 = arith.negf %210 : vector<8x128xf32>
    %212 = math.exp %211 : vector<8x128xf32>
    %cst_64 = arith.constant 1.000000e+00 : f32
    %213 = vector.broadcast %cst_64 : f32 to vector<8x128xf32>
    %214 = arith.addf %213, %212 : vector<8x128xf32>
    %215 = arith.divf %213, %214 : vector<8x128xf32>
    %216 = arith.mulf %207, %183 : vector<8x128xf32>
    %217 = arith.mulf %201, %209 : vector<8x128xf32>
    %218 = arith.addf %216, %217 : vector<8x128xf32>
    %219 = math.tanh %218 : vector<8x128xf32>
    %220 = arith.mulf %215, %219 : vector<8x128xf32>
    %221 = arith.index_cast %189 : i32 to index
    %c0_65 = arith.constant 0 : index
    %222 = vector.load %arg16[%221, %c0_65] : memref<64x128xf32, #tpu.memory_space<vmem>>, vector<8x128xf32>
    tpu.vector_store %arg16[%221, %c0_65], %220 {strides = array<i32>} : memref<64x128xf32, #tpu.memory_space<vmem>>, vector<8x128xf32>,
    %c6_i32 = arith.constant 6 : i32
    %c8_i32_66 = arith.constant 8 : i32
    %223 = arith.muli %c6_i32, %c8_i32_66 : i32
    %224 = tpu.assume_multiple %223, 8 : i32
    %225 = arith.index_cast %224 : i32 to index
    %c0_67 = arith.constant 0 : index
    %226 = vector.load %arg15[%225, %c0_67] : memref<64x512xf32, #tpu.memory_space<vmem>>, vector<8x512xf32>
    %227 = arith.truncf %220 : vector<8x128xf32> to vector<8x128xbf16>
    %c0_68 = arith.constant 0 : index
    %c0_69 = arith.constant 0 : index
    %228 = vector.load %arg3[%c0_68, %c0_69] : memref<128x512xbf16, #tpu.memory_space<vmem>>, vector<128x512xbf16>
    %cst_70 = arith.constant dense<0.000000e+00> : vector<8x512xf32>
    %229 = tpu.matmul %227, %228, %cst_70 {dimension_numbers = #tpu.dot_dimension_numbers<[1], [0], [0], [1], [0, 0, 1, 1], [], []>} : vector<8x128xbf16>, vector<128x512xbf16>, vector<8x512xf32> -> vector<8x512xf32>
    %230 = arith.addf %226, %229 : vector<8x512xf32>
    %231 = vector.extract_strided_slice %230 {offsets = [0, 0], sizes = [8, 128], strides = [1, 1]} : vector<8x512xf32> to vector<8x128xf32>
    %232 = arith.negf %231 : vector<8x128xf32>
    %233 = math.exp %232 : vector<8x128xf32>
    %cst_71 = arith.constant 1.000000e+00 : f32
    %234 = vector.broadcast %cst_71 : f32 to vector<8x128xf32>
    %235 = arith.addf %234, %233 : vector<8x128xf32>
    %236 = arith.divf %234, %235 : vector<8x128xf32>
    %237 = vector.extract_strided_slice %230 {offsets = [0, 128], sizes = [8, 128], strides = [1, 1]} : vector<8x512xf32> to vector<8x128xf32>
    %238 = arith.negf %237 : vector<8x128xf32>
    %239 = math.exp %238 : vector<8x128xf32>
    %cst_72 = arith.constant 1.000000e+00 : f32
    %240 = vector.broadcast %cst_72 : f32 to vector<8x128xf32>
    %241 = arith.addf %240, %239 : vector<8x128xf32>
    %242 = arith.divf %240, %241 : vector<8x128xf32>
    %243 = vector.extract_strided_slice %230 {offsets = [0, 256], sizes = [8, 128], strides = [1, 1]} : vector<8x512xf32> to vector<8x128xf32>
    %244 = math.tanh %243 : vector<8x128xf32>
    %245 = vector.extract_strided_slice %230 {offsets = [0, 384], sizes = [8, 128], strides = [1, 1]} : vector<8x512xf32> to vector<8x128xf32>
    %246 = arith.negf %245 : vector<8x128xf32>
    %247 = math.exp %246 : vector<8x128xf32>
    %cst_73 = arith.constant 1.000000e+00 : f32
    %248 = vector.broadcast %cst_73 : f32 to vector<8x128xf32>
    %249 = arith.addf %248, %247 : vector<8x128xf32>
    %250 = arith.divf %248, %249 : vector<8x128xf32>
    %251 = arith.mulf %242, %218 : vector<8x128xf32>
    %252 = arith.mulf %236, %244 : vector<8x128xf32>
    %253 = arith.addf %251, %252 : vector<8x128xf32>
    %254 = math.tanh %253 : vector<8x128xf32>
    %255 = arith.mulf %250, %254 : vector<8x128xf32>
    %256 = arith.index_cast %224 : i32 to index
    %c0_74 = arith.constant 0 : index
    %257 = vector.load %arg16[%256, %c0_74] : memref<64x128xf32, #tpu.memory_space<vmem>>, vector<8x128xf32>
    tpu.vector_store %arg16[%256, %c0_74], %255 {strides = array<i32>} : memref<64x128xf32, #tpu.memory_space<vmem>>, vector<8x128xf32>,
    %c7_i32 = arith.constant 7 : i32
    %c8_i32_75 = arith.constant 8 : i32
    %258 = arith.muli %c7_i32, %c8_i32_75 : i32
    %259 = tpu.assume_multiple %258, 8 : i32
    %260 = arith.index_cast %259 : i32 to index
    %c0_76 = arith.constant 0 : index
    %261 = vector.load %arg15[%260, %c0_76] : memref<64x512xf32, #tpu.memory_space<vmem>>, vector<8x512xf32>
    %262 = arith.truncf %255 : vector<8x128xf32> to vector<8x128xbf16>
    %c0_77 = arith.constant 0 : index
    %c0_78 = arith.constant 0 : index
    %263 = vector.load %arg3[%c0_77, %c0_78] : memref<128x512xbf16, #tpu.memory_space<vmem>>, vector<128x512xbf16>
    %cst_79 = arith.constant dense<0.000000e+00> : vector<8x512xf32>
    %264 = tpu.matmul %262, %263, %cst_79 {dimension_numbers = #tpu.dot_dimension_numbers<[1], [0], [0], [1], [0, 0, 1, 1], [], []>} : vector<8x128xbf16>, vector<128x512xbf16>, vector<8x512xf32> -> vector<8x512xf32>
    %265 = arith.addf %261, %264 : vector<8x512xf32>
    %266 = vector.extract_strided_slice %265 {offsets = [0, 0], sizes = [8, 128], strides = [1, 1]} : vector<8x512xf32> to vector<8x128xf32>
    %267 = arith.negf %266 : vector<8x128xf32>
    %268 = math.exp %267 : vector<8x128xf32>
    %cst_80 = arith.constant 1.000000e+00 : f32
    %269 = vector.broadcast %cst_80 : f32 to vector<8x128xf32>
    %270 = arith.addf %269, %268 : vector<8x128xf32>
    %271 = arith.divf %269, %270 : vector<8x128xf32>
    %272 = vector.extract_strided_slice %265 {offsets = [0, 128], sizes = [8, 128], strides = [1, 1]} : vector<8x512xf32> to vector<8x128xf32>
    %273 = arith.negf %272 : vector<8x128xf32>
    %274 = math.exp %273 : vector<8x128xf32>
    %cst_81 = arith.constant 1.000000e+00 : f32
    %275 = vector.broadcast %cst_81 : f32 to vector<8x128xf32>
    %276 = arith.addf %275, %274 : vector<8x128xf32>
    %277 = arith.divf %275, %276 : vector<8x128xf32>
    %278 = vector.extract_strided_slice %265 {offsets = [0, 256], sizes = [8, 128], strides = [1, 1]} : vector<8x512xf32> to vector<8x128xf32>
    %279 = math.tanh %278 : vector<8x128xf32>
    %280 = vector.extract_strided_slice %265 {offsets = [0, 384], sizes = [8, 128], strides = [1, 1]} : vector<8x512xf32> to vector<8x128xf32>
    %281 = arith.negf %280 : vector<8x128xf32>
    %282 = math.exp %281 : vector<8x128xf32>
    %cst_82 = arith.constant 1.000000e+00 : f32
    %283 = vector.broadcast %cst_82 : f32 to vector<8x128xf32>
    %284 = arith.addf %283, %282 : vector<8x128xf32>
    %285 = arith.divf %283, %284 : vector<8x128xf32>
    %286 = arith.mulf %277, %253 : vector<8x128xf32>
    %287 = arith.mulf %271, %279 : vector<8x128xf32>
    %288 = arith.addf %286, %287 : vector<8x128xf32>
    %289 = math.tanh %288 : vector<8x128xf32>
    %290 = arith.mulf %285, %289 : vector<8x128xf32>
    %291 = arith.index_cast %259 : i32 to index
    %c0_83 = arith.constant 0 : index
    %292 = vector.load %arg16[%291, %c0_83] : memref<64x128xf32, #tpu.memory_space<vmem>>, vector<8x128xf32>
    tpu.vector_store %arg16[%291, %c0_83], %290 {strides = array<i32>} : memref<64x128xf32, #tpu.memory_space<vmem>>, vector<8x128xf32>,
    %c8_i32_84 = arith.constant 8 : i32
    %c0_85 = arith.constant 0 : index
    %c0_86 = arith.constant 0 : index
    %293 = vector.load %arg17[%c0_85, %c0_86] : memref<8x128xf32, #tpu.memory_space<vmem>>, vector<8x128xf32>
    tpu.vector_store %arg17[%c0_85, %c0_86], %290 {strides = array<i32>} : memref<8x128xf32, #tpu.memory_space<vmem>>, vector<8x128xf32>,
    %c0_87 = arith.constant 0 : index
    %c0_88 = arith.constant 0 : index
    %294 = vector.load %arg18[%c0_87, %c0_88] : memref<8x128xf32, #tpu.memory_space<vmem>>, vector<8x128xf32>
    tpu.vector_store %arg18[%c0_87, %c0_88], %288 {strides = array<i32>} : memref<8x128xf32, #tpu.memory_space<vmem>>, vector<8x128xf32>,
    %c0_89 = arith.constant 0 : index
    %c0_90 = arith.constant 0 : index
    %295 = vector.load %arg16[%c0_89, %c0_90] : memref<64x128xf32, #tpu.memory_space<vmem>>, vector<64x128xf32>
    %296 = arith.truncf %295 : vector<64x128xf32> to vector<64x128xbf16>
    %c0_91 = arith.constant 0 : index
    %c0_92 = arith.constant 0 : index
    %297 = vector.load %arg5[%c0_91, %c0_92] : memref<128x512xbf16, #tpu.memory_space<vmem>>, vector<128x512xbf16>
    %cst_93 = arith.constant dense<0.000000e+00> : vector<64x512xf32>
    %298 = tpu.matmul %296, %297, %cst_93 {dimension_numbers = #tpu.dot_dimension_numbers<[1], [0], [0], [1], [0, 0, 1, 1], [], []>} : vector<64x128xbf16>, vector<128x512xbf16>, vector<64x512xf32> -> vector<64x512xf32>
    %c0_94 = arith.constant 0 : index
    %c0_95 = arith.constant 0 : index
    %299 = vector.load %arg7[%c0_94, %c0_95] : memref<1x512xf32, #tpu.memory_space<vmem>>, vector<1x512xf32>
    %300 = vector.broadcast %299 : vector<1x512xf32> to vector<64x512xf32>
    %301 = arith.addf %298, %300 : vector<64x512xf32>
    %c0_96 = arith.constant 0 : index
    %c0_97 = arith.constant 0 : index
    %302 = vector.load %arg15[%c0_96, %c0_97] : memref<64x512xf32, #tpu.memory_space<vmem>>, vector<64x512xf32>
    tpu.vector_store %arg15[%c0_96, %c0_97], %301 {strides = array<i32>} : memref<64x512xf32, #tpu.memory_space<vmem>>, vector<64x512xf32>,
    %c0_98 = arith.constant 0 : index
    %c0_99 = arith.constant 0 : index
    %303 = vector.load %arg19[%c0_98, %c0_99] : memref<8x128xf32, #tpu.memory_space<vmem>>, vector<8x128xf32>
    %c0_100 = arith.constant 0 : index
    %c0_101 = arith.constant 0 : index
    %304 = vector.load %arg20[%c0_100, %c0_101] : memref<8x128xf32, #tpu.memory_space<vmem>>, vector<8x128xf32>
    %c0_i32_102 = arith.constant 0 : i32
    %c8_i32_103 = arith.constant 8 : i32
    %305 = arith.muli %c0_i32_102, %c8_i32_103 : i32
    %306 = tpu.assume_multiple %305, 8 : i32
    %307 = arith.index_cast %306 : i32 to index
    %c0_104 = arith.constant 0 : index
    %308 = vector.load %arg15[%307, %c0_104] : memref<64x512xf32, #tpu.memory_space<vmem>>, vector<8x512xf32>
    %309 = arith.truncf %303 : vector<8x128xf32> to vector<8x128xbf16>
    %c0_105 = arith.constant 0 : index
    %c0_106 = arith.constant 0 : index
    %310 = vector.load %arg6[%c0_105, %c0_106] : memref<128x512xbf16, #tpu.memory_space<vmem>>, vector<128x512xbf16>
    %cst_107 = arith.constant dense<0.000000e+00> : vector<8x512xf32>
    %311 = tpu.matmul %309, %310, %cst_107 {dimension_numbers = #tpu.dot_dimension_numbers<[1], [0], [0], [1], [0, 0, 1, 1], [], []>} : vector<8x128xbf16>, vector<128x512xbf16>, vector<8x512xf32> -> vector<8x512xf32>
    %312 = arith.addf %308, %311 : vector<8x512xf32>
    %313 = vector.extract_strided_slice %312 {offsets = [0, 0], sizes = [8, 128], strides = [1, 1]} : vector<8x512xf32> to vector<8x128xf32>
    %314 = arith.negf %313 : vector<8x128xf32>
    %315 = math.exp %314 : vector<8x128xf32>
    %cst_108 = arith.constant 1.000000e+00 : f32
    %316 = vector.broadcast %cst_108 : f32 to vector<8x128xf32>
    %317 = arith.addf %316, %315 : vector<8x128xf32>
    %318 = arith.divf %316, %317 : vector<8x128xf32>
    %319 = vector.extract_strided_slice %312 {offsets = [0, 128], sizes = [8, 128], strides = [1, 1]} : vector<8x512xf32> to vector<8x128xf32>
    %320 = arith.negf %319 : vector<8x128xf32>
    %321 = math.exp %320 : vector<8x128xf32>
    %cst_109 = arith.constant 1.000000e+00 : f32
    %322 = vector.broadcast %cst_109 : f32 to vector<8x128xf32>
    %323 = arith.addf %322, %321 : vector<8x128xf32>
    %324 = arith.divf %322, %323 : vector<8x128xf32>
    %325 = vector.extract_strided_slice %312 {offsets = [0, 256], sizes = [8, 128], strides = [1, 1]} : vector<8x512xf32> to vector<8x128xf32>
    %326 = math.tanh %325 : vector<8x128xf32>
    %327 = vector.extract_strided_slice %312 {offsets = [0, 384], sizes = [8, 128], strides = [1, 1]} : vector<8x512xf32> to vector<8x128xf32>
    %328 = arith.negf %327 : vector<8x128xf32>
    %329 = math.exp %328 : vector<8x128xf32>
    %cst_110 = arith.constant 1.000000e+00 : f32
    %330 = vector.broadcast %cst_110 : f32 to vector<8x128xf32>
    %331 = arith.addf %330, %329 : vector<8x128xf32>
    %332 = arith.divf %330, %331 : vector<8x128xf32>
    %333 = arith.mulf %324, %304 : vector<8x128xf32>
    %334 = arith.mulf %318, %326 : vector<8x128xf32>
    %335 = arith.addf %333, %334 : vector<8x128xf32>
    %336 = math.tanh %335 : vector<8x128xf32>
    %337 = arith.mulf %332, %336 : vector<8x128xf32>
    %338 = arith.index_cast %306 : i32 to index
    %c0_111 = arith.constant 0 : index
    %339 = vector.load %arg16[%338, %c0_111] : memref<64x128xf32, #tpu.memory_space<vmem>>, vector<8x128xf32>
    tpu.vector_store %arg16[%338, %c0_111], %337 {strides = array<i32>} : memref<64x128xf32, #tpu.memory_space<vmem>>, vector<8x128xf32>,
    %c1_i32_112 = arith.constant 1 : i32
    %c8_i32_113 = arith.constant 8 : i32
    %340 = arith.muli %c1_i32_112, %c8_i32_113 : i32
    %341 = tpu.assume_multiple %340, 8 : i32
    %342 = arith.index_cast %341 : i32 to index
    %c0_114 = arith.constant 0 : index
    %343 = vector.load %arg15[%342, %c0_114] : memref<64x512xf32, #tpu.memory_space<vmem>>, vector<8x512xf32>
    %344 = arith.truncf %337 : vector<8x128xf32> to vector<8x128xbf16>
    %c0_115 = arith.constant 0 : index
    %c0_116 = arith.constant 0 : index
    %345 = vector.load %arg6[%c0_115, %c0_116] : memref<128x512xbf16, #tpu.memory_space<vmem>>, vector<128x512xbf16>
    %cst_117 = arith.constant dense<0.000000e+00> : vector<8x512xf32>
    %346 = tpu.matmul %344, %345, %cst_117 {dimension_numbers = #tpu.dot_dimension_numbers<[1], [0], [0], [1], [0, 0, 1, 1], [], []>} : vector<8x128xbf16>, vector<128x512xbf16>, vector<8x512xf32> -> vector<8x512xf32>
    %347 = arith.addf %343, %346 : vector<8x512xf32>
    %348 = vector.extract_strided_slice %347 {offsets = [0, 0], sizes = [8, 128], strides = [1, 1]} : vector<8x512xf32> to vector<8x128xf32>
    %349 = arith.negf %348 : vector<8x128xf32>
    %350 = math.exp %349 : vector<8x128xf32>
    %cst_118 = arith.constant 1.000000e+00 : f32
    %351 = vector.broadcast %cst_118 : f32 to vector<8x128xf32>
    %352 = arith.addf %351, %350 : vector<8x128xf32>
    %353 = arith.divf %351, %352 : vector<8x128xf32>
    %354 = vector.extract_strided_slice %347 {offsets = [0, 128], sizes = [8, 128], strides = [1, 1]} : vector<8x512xf32> to vector<8x128xf32>
    %355 = arith.negf %354 : vector<8x128xf32>
    %356 = math.exp %355 : vector<8x128xf32>
    %cst_119 = arith.constant 1.000000e+00 : f32
    %357 = vector.broadcast %cst_119 : f32 to vector<8x128xf32>
    %358 = arith.addf %357, %356 : vector<8x128xf32>
    %359 = arith.divf %357, %358 : vector<8x128xf32>
    %360 = vector.extract_strided_slice %347 {offsets = [0, 256], sizes = [8, 128], strides = [1, 1]} : vector<8x512xf32> to vector<8x128xf32>
    %361 = math.tanh %360 : vector<8x128xf32>
    %362 = vector.extract_strided_slice %347 {offsets = [0, 384], sizes = [8, 128], strides = [1, 1]} : vector<8x512xf32> to vector<8x128xf32>
    %363 = arith.negf %362 : vector<8x128xf32>
    %364 = math.exp %363 : vector<8x128xf32>
    %cst_120 = arith.constant 1.000000e+00 : f32
    %365 = vector.broadcast %cst_120 : f32 to vector<8x128xf32>
    %366 = arith.addf %365, %364 : vector<8x128xf32>
    %367 = arith.divf %365, %366 : vector<8x128xf32>
    %368 = arith.mulf %359, %335 : vector<8x128xf32>
    %369 = arith.mulf %353, %361 : vector<8x128xf32>
    %370 = arith.addf %368, %369 : vector<8x128xf32>
    %371 = math.tanh %370 : vector<8x128xf32>
    %372 = arith.mulf %367, %371 : vector<8x128xf32>
    %373 = arith.index_cast %341 : i32 to index
    %c0_121 = arith.constant 0 : index
    %374 = vector.load %arg16[%373, %c0_121] : memref<64x128xf32, #tpu.memory_space<vmem>>, vector<8x128xf32>
    tpu.vector_store %arg16[%373, %c0_121], %372 {strides = array<i32>} : memref<64x128xf32, #tpu.memory_space<vmem>>, vector<8x128xf32>,
    %c2_i32_122 = arith.constant 2 : i32
    %c8_i32_123 = arith.constant 8 : i32
    %375 = arith.muli %c2_i32_122, %c8_i32_123 : i32
    %376 = tpu.assume_multiple %375, 8 : i32
    %377 = arith.index_cast %376 : i32 to index
    %c0_124 = arith.constant 0 : index
    %378 = vector.load %arg15[%377, %c0_124] : memref<64x512xf32, #tpu.memory_space<vmem>>, vector<8x512xf32>
    %379 = arith.truncf %372 : vector<8x128xf32> to vector<8x128xbf16>
    %c0_125 = arith.constant 0 : index
    %c0_126 = arith.constant 0 : index
    %380 = vector.load %arg6[%c0_125, %c0_126] : memref<128x512xbf16, #tpu.memory_space<vmem>>, vector<128x512xbf16>
    %cst_127 = arith.constant dense<0.000000e+00> : vector<8x512xf32>
    %381 = tpu.matmul %379, %380, %cst_127 {dimension_numbers = #tpu.dot_dimension_numbers<[1], [0], [0], [1], [0, 0, 1, 1], [], []>} : vector<8x128xbf16>, vector<128x512xbf16>, vector<8x512xf32> -> vector<8x512xf32>
    %382 = arith.addf %378, %381 : vector<8x512xf32>
    %383 = vector.extract_strided_slice %382 {offsets = [0, 0], sizes = [8, 128], strides = [1, 1]} : vector<8x512xf32> to vector<8x128xf32>
    %384 = arith.negf %383 : vector<8x128xf32>
    %385 = math.exp %384 : vector<8x128xf32>
    %cst_128 = arith.constant 1.000000e+00 : f32
    %386 = vector.broadcast %cst_128 : f32 to vector<8x128xf32>
    %387 = arith.addf %386, %385 : vector<8x128xf32>
    %388 = arith.divf %386, %387 : vector<8x128xf32>
    %389 = vector.extract_strided_slice %382 {offsets = [0, 128], sizes = [8, 128], strides = [1, 1]} : vector<8x512xf32> to vector<8x128xf32>
    %390 = arith.negf %389 : vector<8x128xf32>
    %391 = math.exp %390 : vector<8x128xf32>
    %cst_129 = arith.constant 1.000000e+00 : f32
    %392 = vector.broadcast %cst_129 : f32 to vector<8x128xf32>
    %393 = arith.addf %392, %391 : vector<8x128xf32>
    %394 = arith.divf %392, %393 : vector<8x128xf32>
    %395 = vector.extract_strided_slice %382 {offsets = [0, 256], sizes = [8, 128], strides = [1, 1]} : vector<8x512xf32> to vector<8x128xf32>
    %396 = math.tanh %395 : vector<8x128xf32>
    %397 = vector.extract_strided_slice %382 {offsets = [0, 384], sizes = [8, 128], strides = [1, 1]} : vector<8x512xf32> to vector<8x128xf32>
    %398 = arith.negf %397 : vector<8x128xf32>
    %399 = math.exp %398 : vector<8x128xf32>
    %cst_130 = arith.constant 1.000000e+00 : f32
    %400 = vector.broadcast %cst_130 : f32 to vector<8x128xf32>
    %401 = arith.addf %400, %399 : vector<8x128xf32>
    %402 = arith.divf %400, %401 : vector<8x128xf32>
    %403 = arith.mulf %394, %370 : vector<8x128xf32>
    %404 = arith.mulf %388, %396 : vector<8x128xf32>
    %405 = arith.addf %403, %404 : vector<8x128xf32>
    %406 = math.tanh %405 : vector<8x128xf32>
    %407 = arith.mulf %402, %406 : vector<8x128xf32>
    %408 = arith.index_cast %376 : i32 to index
    %c0_131 = arith.constant 0 : index
    %409 = vector.load %arg16[%408, %c0_131] : memref<64x128xf32, #tpu.memory_space<vmem>>, vector<8x128xf32>
    tpu.vector_store %arg16[%408, %c0_131], %407 {strides = array<i32>} : memref<64x128xf32, #tpu.memory_space<vmem>>, vector<8x128xf32>,
    %c3_i32_132 = arith.constant 3 : i32
    %c8_i32_133 = arith.constant 8 : i32
    %410 = arith.muli %c3_i32_132, %c8_i32_133 : i32
    %411 = tpu.assume_multiple %410, 8 : i32
    %412 = arith.index_cast %411 : i32 to index
    %c0_134 = arith.constant 0 : index
    %413 = vector.load %arg15[%412, %c0_134] : memref<64x512xf32, #tpu.memory_space<vmem>>, vector<8x512xf32>
    %414 = arith.truncf %407 : vector<8x128xf32> to vector<8x128xbf16>
    %c0_135 = arith.constant 0 : index
    %c0_136 = arith.constant 0 : index
    %415 = vector.load %arg6[%c0_135, %c0_136] : memref<128x512xbf16, #tpu.memory_space<vmem>>, vector<128x512xbf16>
    %cst_137 = arith.constant dense<0.000000e+00> : vector<8x512xf32>
    %416 = tpu.matmul %414, %415, %cst_137 {dimension_numbers = #tpu.dot_dimension_numbers<[1], [0], [0], [1], [0, 0, 1, 1], [], []>} : vector<8x128xbf16>, vector<128x512xbf16>, vector<8x512xf32> -> vector<8x512xf32>
    %417 = arith.addf %413, %416 : vector<8x512xf32>
    %418 = vector.extract_strided_slice %417 {offsets = [0, 0], sizes = [8, 128], strides = [1, 1]} : vector<8x512xf32> to vector<8x128xf32>
    %419 = arith.negf %418 : vector<8x128xf32>
    %420 = math.exp %419 : vector<8x128xf32>
    %cst_138 = arith.constant 1.000000e+00 : f32
    %421 = vector.broadcast %cst_138 : f32 to vector<8x128xf32>
    %422 = arith.addf %421, %420 : vector<8x128xf32>
    %423 = arith.divf %421, %422 : vector<8x128xf32>
    %424 = vector.extract_strided_slice %417 {offsets = [0, 128], sizes = [8, 128], strides = [1, 1]} : vector<8x512xf32> to vector<8x128xf32>
    %425 = arith.negf %424 : vector<8x128xf32>
    %426 = math.exp %425 : vector<8x128xf32>
    %cst_139 = arith.constant 1.000000e+00 : f32
    %427 = vector.broadcast %cst_139 : f32 to vector<8x128xf32>
    %428 = arith.addf %427, %426 : vector<8x128xf32>
    %429 = arith.divf %427, %428 : vector<8x128xf32>
    %430 = vector.extract_strided_slice %417 {offsets = [0, 256], sizes = [8, 128], strides = [1, 1]} : vector<8x512xf32> to vector<8x128xf32>
    %431 = math.tanh %430 : vector<8x128xf32>
    %432 = vector.extract_strided_slice %417 {offsets = [0, 384], sizes = [8, 128], strides = [1, 1]} : vector<8x512xf32> to vector<8x128xf32>
    %433 = arith.negf %432 : vector<8x128xf32>
    %434 = math.exp %433 : vector<8x128xf32>
    %cst_140 = arith.constant 1.000000e+00 : f32
    %435 = vector.broadcast %cst_140 : f32 to vector<8x128xf32>
    %436 = arith.addf %435, %434 : vector<8x128xf32>
    %437 = arith.divf %435, %436 : vector<8x128xf32>
    %438 = arith.mulf %429, %405 : vector<8x128xf32>
    %439 = arith.mulf %423, %431 : vector<8x128xf32>
    %440 = arith.addf %438, %439 : vector<8x128xf32>
    %441 = math.tanh %440 : vector<8x128xf32>
    %442 = arith.mulf %437, %441 : vector<8x128xf32>
    %443 = arith.index_cast %411 : i32 to index
    %c0_141 = arith.constant 0 : index
    %444 = vector.load %arg16[%443, %c0_141] : memref<64x128xf32, #tpu.memory_space<vmem>>, vector<8x128xf32>
    tpu.vector_store %arg16[%443, %c0_141], %442 {strides = array<i32>} : memref<64x128xf32, #tpu.memory_space<vmem>>, vector<8x128xf32>,
    %c4_i32_142 = arith.constant 4 : i32
    %c8_i32_143 = arith.constant 8 : i32
    %445 = arith.muli %c4_i32_142, %c8_i32_143 : i32
    %446 = tpu.assume_multiple %445, 8 : i32
    %447 = arith.index_cast %446 : i32 to index
    %c0_144 = arith.constant 0 : index
    %448 = vector.load %arg15[%447, %c0_144] : memref<64x512xf32, #tpu.memory_space<vmem>>, vector<8x512xf32>
    %449 = arith.truncf %442 : vector<8x128xf32> to vector<8x128xbf16>
    %c0_145 = arith.constant 0 : index
    %c0_146 = arith.constant 0 : index
    %450 = vector.load %arg6[%c0_145, %c0_146] : memref<128x512xbf16, #tpu.memory_space<vmem>>, vector<128x512xbf16>
    %cst_147 = arith.constant dense<0.000000e+00> : vector<8x512xf32>
    %451 = tpu.matmul %449, %450, %cst_147 {dimension_numbers = #tpu.dot_dimension_numbers<[1], [0], [0], [1], [0, 0, 1, 1], [], []>} : vector<8x128xbf16>, vector<128x512xbf16>, vector<8x512xf32> -> vector<8x512xf32>
    %452 = arith.addf %448, %451 : vector<8x512xf32>
    %453 = vector.extract_strided_slice %452 {offsets = [0, 0], sizes = [8, 128], strides = [1, 1]} : vector<8x512xf32> to vector<8x128xf32>
    %454 = arith.negf %453 : vector<8x128xf32>
    %455 = math.exp %454 : vector<8x128xf32>
    %cst_148 = arith.constant 1.000000e+00 : f32
    %456 = vector.broadcast %cst_148 : f32 to vector<8x128xf32>
    %457 = arith.addf %456, %455 : vector<8x128xf32>
    %458 = arith.divf %456, %457 : vector<8x128xf32>
    %459 = vector.extract_strided_slice %452 {offsets = [0, 128], sizes = [8, 128], strides = [1, 1]} : vector<8x512xf32> to vector<8x128xf32>
    %460 = arith.negf %459 : vector<8x128xf32>
    %461 = math.exp %460 : vector<8x128xf32>
    %cst_149 = arith.constant 1.000000e+00 : f32
    %462 = vector.broadcast %cst_149 : f32 to vector<8x128xf32>
    %463 = arith.addf %462, %461 : vector<8x128xf32>
    %464 = arith.divf %462, %463 : vector<8x128xf32>
    %465 = vector.extract_strided_slice %452 {offsets = [0, 256], sizes = [8, 128], strides = [1, 1]} : vector<8x512xf32> to vector<8x128xf32>
    %466 = math.tanh %465 : vector<8x128xf32>
    %467 = vector.extract_strided_slice %452 {offsets = [0, 384], sizes = [8, 128], strides = [1, 1]} : vector<8x512xf32> to vector<8x128xf32>
    %468 = arith.negf %467 : vector<8x128xf32>
    %469 = math.exp %468 : vector<8x128xf32>
    %cst_150 = arith.constant 1.000000e+00 : f32
    %470 = vector.broadcast %cst_150 : f32 to vector<8x128xf32>
    %471 = arith.addf %470, %469 : vector<8x128xf32>
    %472 = arith.divf %470, %471 : vector<8x128xf32>
    %473 = arith.mulf %464, %440 : vector<8x128xf32>
    %474 = arith.mulf %458, %466 : vector<8x128xf32>
    %475 = arith.addf %473, %474 : vector<8x128xf32>
    %476 = math.tanh %475 : vector<8x128xf32>
    %477 = arith.mulf %472, %476 : vector<8x128xf32>
    %478 = arith.index_cast %446 : i32 to index
    %c0_151 = arith.constant 0 : index
    %479 = vector.load %arg16[%478, %c0_151] : memref<64x128xf32, #tpu.memory_space<vmem>>, vector<8x128xf32>
    tpu.vector_store %arg16[%478, %c0_151], %477 {strides = array<i32>} : memref<64x128xf32, #tpu.memory_space<vmem>>, vector<8x128xf32>,
    %c5_i32_152 = arith.constant 5 : i32
    %c8_i32_153 = arith.constant 8 : i32
    %480 = arith.muli %c5_i32_152, %c8_i32_153 : i32
    %481 = tpu.assume_multiple %480, 8 : i32
    %482 = arith.index_cast %481 : i32 to index
    %c0_154 = arith.constant 0 : index
    %483 = vector.load %arg15[%482, %c0_154] : memref<64x512xf32, #tpu.memory_space<vmem>>, vector<8x512xf32>
    %484 = arith.truncf %477 : vector<8x128xf32> to vector<8x128xbf16>
    %c0_155 = arith.constant 0 : index
    %c0_156 = arith.constant 0 : index
    %485 = vector.load %arg6[%c0_155, %c0_156] : memref<128x512xbf16, #tpu.memory_space<vmem>>, vector<128x512xbf16>
    %cst_157 = arith.constant dense<0.000000e+00> : vector<8x512xf32>
    %486 = tpu.matmul %484, %485, %cst_157 {dimension_numbers = #tpu.dot_dimension_numbers<[1], [0], [0], [1], [0, 0, 1, 1], [], []>} : vector<8x128xbf16>, vector<128x512xbf16>, vector<8x512xf32> -> vector<8x512xf32>
    %487 = arith.addf %483, %486 : vector<8x512xf32>
    %488 = vector.extract_strided_slice %487 {offsets = [0, 0], sizes = [8, 128], strides = [1, 1]} : vector<8x512xf32> to vector<8x128xf32>
    %489 = arith.negf %488 : vector<8x128xf32>
    %490 = math.exp %489 : vector<8x128xf32>
    %cst_158 = arith.constant 1.000000e+00 : f32
    %491 = vector.broadcast %cst_158 : f32 to vector<8x128xf32>
    %492 = arith.addf %491, %490 : vector<8x128xf32>
    %493 = arith.divf %491, %492 : vector<8x128xf32>
    %494 = vector.extract_strided_slice %487 {offsets = [0, 128], sizes = [8, 128], strides = [1, 1]} : vector<8x512xf32> to vector<8x128xf32>
    %495 = arith.negf %494 : vector<8x128xf32>
    %496 = math.exp %495 : vector<8x128xf32>
    %cst_159 = arith.constant 1.000000e+00 : f32
    %497 = vector.broadcast %cst_159 : f32 to vector<8x128xf32>
    %498 = arith.addf %497, %496 : vector<8x128xf32>
    %499 = arith.divf %497, %498 : vector<8x128xf32>
    %500 = vector.extract_strided_slice %487 {offsets = [0, 256], sizes = [8, 128], strides = [1, 1]} : vector<8x512xf32> to vector<8x128xf32>
    %501 = math.tanh %500 : vector<8x128xf32>
    %502 = vector.extract_strided_slice %487 {offsets = [0, 384], sizes = [8, 128], strides = [1, 1]} : vector<8x512xf32> to vector<8x128xf32>
    %503 = arith.negf %502 : vector<8x128xf32>
    %504 = math.exp %503 : vector<8x128xf32>
    %cst_160 = arith.constant 1.000000e+00 : f32
    %505 = vector.broadcast %cst_160 : f32 to vector<8x128xf32>
    %506 = arith.addf %505, %504 : vector<8x128xf32>
    %507 = arith.divf %505, %506 : vector<8x128xf32>
    %508 = arith.mulf %499, %475 : vector<8x128xf32>
    %509 = arith.mulf %493, %501 : vector<8x128xf32>
    %510 = arith.addf %508, %509 : vector<8x128xf32>
    %511 = math.tanh %510 : vector<8x128xf32>
    %512 = arith.mulf %507, %511 : vector<8x128xf32>
    %513 = arith.index_cast %481 : i32 to index
    %c0_161 = arith.constant 0 : index
    %514 = vector.load %arg16[%513, %c0_161] : memref<64x128xf32, #tpu.memory_space<vmem>>, vector<8x128xf32>
    tpu.vector_store %arg16[%513, %c0_161], %512 {strides = array<i32>} : memref<64x128xf32, #tpu.memory_space<vmem>>, vector<8x128xf32>,
    %c6_i32_162 = arith.constant 6 : i32
    %c8_i32_163 = arith.constant 8 : i32
    %515 = arith.muli %c6_i32_162, %c8_i32_163 : i32
    %516 = tpu.assume_multiple %515, 8 : i32
    %517 = arith.index_cast %516 : i32 to index
    %c0_164 = arith.constant 0 : index
    %518 = vector.load %arg15[%517, %c0_164] : memref<64x512xf32, #tpu.memory_space<vmem>>, vector<8x512xf32>
    %519 = arith.truncf %512 : vector<8x128xf32> to vector<8x128xbf16>
    %c0_165 = arith.constant 0 : index
    %c0_166 = arith.constant 0 : index
    %520 = vector.load %arg6[%c0_165, %c0_166] : memref<128x512xbf16, #tpu.memory_space<vmem>>, vector<128x512xbf16>
    %cst_167 = arith.constant dense<0.000000e+00> : vector<8x512xf32>
    %521 = tpu.matmul %519, %520, %cst_167 {dimension_numbers = #tpu.dot_dimension_numbers<[1], [0], [0], [1], [0, 0, 1, 1], [], []>} : vector<8x128xbf16>, vector<128x512xbf16>, vector<8x512xf32> -> vector<8x512xf32>
    %522 = arith.addf %518, %521 : vector<8x512xf32>
    %523 = vector.extract_strided_slice %522 {offsets = [0, 0], sizes = [8, 128], strides = [1, 1]} : vector<8x512xf32> to vector<8x128xf32>
    %524 = arith.negf %523 : vector<8x128xf32>
    %525 = math.exp %524 : vector<8x128xf32>
    %cst_168 = arith.constant 1.000000e+00 : f32
    %526 = vector.broadcast %cst_168 : f32 to vector<8x128xf32>
    %527 = arith.addf %526, %525 : vector<8x128xf32>
    %528 = arith.divf %526, %527 : vector<8x128xf32>
    %529 = vector.extract_strided_slice %522 {offsets = [0, 128], sizes = [8, 128], strides = [1, 1]} : vector<8x512xf32> to vector<8x128xf32>
    %530 = arith.negf %529 : vector<8x128xf32>
    %531 = math.exp %530 : vector<8x128xf32>
    %cst_169 = arith.constant 1.000000e+00 : f32
    %532 = vector.broadcast %cst_169 : f32 to vector<8x128xf32>
    %533 = arith.addf %532, %531 : vector<8x128xf32>
    %534 = arith.divf %532, %533 : vector<8x128xf32>
    %535 = vector.extract_strided_slice %522 {offsets = [0, 256], sizes = [8, 128], strides = [1, 1]} : vector<8x512xf32> to vector<8x128xf32>
    %536 = math.tanh %535 : vector<8x128xf32>
    %537 = vector.extract_strided_slice %522 {offsets = [0, 384], sizes = [8, 128], strides = [1, 1]} : vector<8x512xf32> to vector<8x128xf32>
    %538 = arith.negf %537 : vector<8x128xf32>
    %539 = math.exp %538 : vector<8x128xf32>
    %cst_170 = arith.constant 1.000000e+00 : f32
    %540 = vector.broadcast %cst_170 : f32 to vector<8x128xf32>
    %541 = arith.addf %540, %539 : vector<8x128xf32>
    %542 = arith.divf %540, %541 : vector<8x128xf32>
    %543 = arith.mulf %534, %510 : vector<8x128xf32>
    %544 = arith.mulf %528, %536 : vector<8x128xf32>
    %545 = arith.addf %543, %544 : vector<8x128xf32>
    %546 = math.tanh %545 : vector<8x128xf32>
    %547 = arith.mulf %542, %546 : vector<8x128xf32>
    %548 = arith.index_cast %516 : i32 to index
    %c0_171 = arith.constant 0 : index
    %549 = vector.load %arg16[%548, %c0_171] : memref<64x128xf32, #tpu.memory_space<vmem>>, vector<8x128xf32>
    tpu.vector_store %arg16[%548, %c0_171], %547 {strides = array<i32>} : memref<64x128xf32, #tpu.memory_space<vmem>>, vector<8x128xf32>,
    %c7_i32_172 = arith.constant 7 : i32
    %c8_i32_173 = arith.constant 8 : i32
    %550 = arith.muli %c7_i32_172, %c8_i32_173 : i32
    %551 = tpu.assume_multiple %550, 8 : i32
    %552 = arith.index_cast %551 : i32 to index
    %c0_174 = arith.constant 0 : index
    %553 = vector.load %arg15[%552, %c0_174] : memref<64x512xf32, #tpu.memory_space<vmem>>, vector<8x512xf32>
    %554 = arith.truncf %547 : vector<8x128xf32> to vector<8x128xbf16>
    %c0_175 = arith.constant 0 : index
    %c0_176 = arith.constant 0 : index
    %555 = vector.load %arg6[%c0_175, %c0_176] : memref<128x512xbf16, #tpu.memory_space<vmem>>, vector<128x512xbf16>
    %cst_177 = arith.constant dense<0.000000e+00> : vector<8x512xf32>
    %556 = tpu.matmul %554, %555, %cst_177 {dimension_numbers = #tpu.dot_dimension_numbers<[1], [0], [0], [1], [0, 0, 1, 1], [], []>} : vector<8x128xbf16>, vector<128x512xbf16>, vector<8x512xf32> -> vector<8x512xf32>
    %557 = arith.addf %553, %556 : vector<8x512xf32>
    %558 = vector.extract_strided_slice %557 {offsets = [0, 0], sizes = [8, 128], strides = [1, 1]} : vector<8x512xf32> to vector<8x128xf32>
    %559 = arith.negf %558 : vector<8x128xf32>
    %560 = math.exp %559 : vector<8x128xf32>
    %cst_178 = arith.constant 1.000000e+00 : f32
    %561 = vector.broadcast %cst_178 : f32 to vector<8x128xf32>
    %562 = arith.addf %561, %560 : vector<8x128xf32>
    %563 = arith.divf %561, %562 : vector<8x128xf32>
    %564 = vector.extract_strided_slice %557 {offsets = [0, 128], sizes = [8, 128], strides = [1, 1]} : vector<8x512xf32> to vector<8x128xf32>
    %565 = arith.negf %564 : vector<8x128xf32>
    %566 = math.exp %565 : vector<8x128xf32>
    %cst_179 = arith.constant 1.000000e+00 : f32
    %567 = vector.broadcast %cst_179 : f32 to vector<8x128xf32>
    %568 = arith.addf %567, %566 : vector<8x128xf32>
    %569 = arith.divf %567, %568 : vector<8x128xf32>
    %570 = vector.extract_strided_slice %557 {offsets = [0, 256], sizes = [8, 128], strides = [1, 1]} : vector<8x512xf32> to vector<8x128xf32>
    %571 = math.tanh %570 : vector<8x128xf32>
    %572 = vector.extract_strided_slice %557 {offsets = [0, 384], sizes = [8, 128], strides = [1, 1]} : vector<8x512xf32> to vector<8x128xf32>
    %573 = arith.negf %572 : vector<8x128xf32>
    %574 = math.exp %573 : vector<8x128xf32>
    %cst_180 = arith.constant 1.000000e+00 : f32
    %575 = vector.broadcast %cst_180 : f32 to vector<8x128xf32>
    %576 = arith.addf %575, %574 : vector<8x128xf32>
    %577 = arith.divf %575, %576 : vector<8x128xf32>
    %578 = arith.mulf %569, %545 : vector<8x128xf32>
    %579 = arith.mulf %563, %571 : vector<8x128xf32>
    %580 = arith.addf %578, %579 : vector<8x128xf32>
    %581 = math.tanh %580 : vector<8x128xf32>
    %582 = arith.mulf %577, %581 : vector<8x128xf32>
    %583 = arith.index_cast %551 : i32 to index
    %c0_181 = arith.constant 0 : index
    %584 = vector.load %arg16[%583, %c0_181] : memref<64x128xf32, #tpu.memory_space<vmem>>, vector<8x128xf32>
    tpu.vector_store %arg16[%583, %c0_181], %582 {strides = array<i32>} : memref<64x128xf32, #tpu.memory_space<vmem>>, vector<8x128xf32>,
    %c8_i32_182 = arith.constant 8 : i32
    %c0_183 = arith.constant 0 : index
    %c0_184 = arith.constant 0 : index
    %585 = vector.load %arg19[%c0_183, %c0_184] : memref<8x128xf32, #tpu.memory_space<vmem>>, vector<8x128xf32>
    tpu.vector_store %arg19[%c0_183, %c0_184], %582 {strides = array<i32>} : memref<8x128xf32, #tpu.memory_space<vmem>>, vector<8x128xf32>,
    %c0_185 = arith.constant 0 : index
    %c0_186 = arith.constant 0 : index
    %586 = vector.load %arg20[%c0_185, %c0_186] : memref<8x128xf32, #tpu.memory_space<vmem>>, vector<8x128xf32>
    tpu.vector_store %arg20[%c0_185, %c0_186], %580 {strides = array<i32>} : memref<8x128xf32, #tpu.memory_space<vmem>>, vector<8x128xf32>,
    %c0_187 = arith.constant 0 : index
    %c0_188 = arith.constant 0 : index
    %587 = vector.load %arg16[%c0_187, %c0_188] : memref<64x128xf32, #tpu.memory_space<vmem>>, vector<64x128xf32>
    %588 = arith.truncf %587 : vector<64x128xf32> to vector<64x128xbf16>
    %c0_189 = arith.constant 0 : index
    %c0_190 = arith.constant 0 : index
    %589 = vector.load %arg8[%c0_189, %c0_190] : memref<128x512xbf16, #tpu.memory_space<vmem>>, vector<128x512xbf16>
    %cst_191 = arith.constant dense<0.000000e+00> : vector<64x512xf32>
    %590 = tpu.matmul %588, %589, %cst_191 {dimension_numbers = #tpu.dot_dimension_numbers<[1], [0], [0], [1], [0, 0, 1, 1], [], []>} : vector<64x128xbf16>, vector<128x512xbf16>, vector<64x512xf32> -> vector<64x512xf32>
    %c0_192 = arith.constant 0 : index
    %c0_193 = arith.constant 0 : index
    %591 = vector.load %arg10[%c0_192, %c0_193] : memref<1x512xf32, #tpu.memory_space<vmem>>, vector<1x512xf32>
    %592 = vector.broadcast %591 : vector<1x512xf32> to vector<64x512xf32>
    %593 = arith.addf %590, %592 : vector<64x512xf32>
    %c0_194 = arith.constant 0 : index
    %c0_195 = arith.constant 0 : index
    %594 = vector.load %arg15[%c0_194, %c0_195] : memref<64x512xf32, #tpu.memory_space<vmem>>, vector<64x512xf32>
    tpu.vector_store %arg15[%c0_194, %c0_195], %593 {strides = array<i32>} : memref<64x512xf32, #tpu.memory_space<vmem>>, vector<64x512xf32>,
    %c0_196 = arith.constant 0 : index
    %c0_197 = arith.constant 0 : index
    %595 = vector.load %arg21[%c0_196, %c0_197] : memref<8x128xf32, #tpu.memory_space<vmem>>, vector<8x128xf32>
    %c0_198 = arith.constant 0 : index
    %c0_199 = arith.constant 0 : index
    %596 = vector.load %arg22[%c0_198, %c0_199] : memref<8x128xf32, #tpu.memory_space<vmem>>, vector<8x128xf32>
    %c0_i32_200 = arith.constant 0 : i32
    %c8_i32_201 = arith.constant 8 : i32
    %597 = arith.muli %c0_i32_200, %c8_i32_201 : i32
    %598 = tpu.assume_multiple %597, 8 : i32
    %599 = arith.index_cast %598 : i32 to index
    %c0_202 = arith.constant 0 : index
    %600 = vector.load %arg15[%599, %c0_202] : memref<64x512xf32, #tpu.memory_space<vmem>>, vector<8x512xf32>
    %601 = arith.truncf %595 : vector<8x128xf32> to vector<8x128xbf16>
    %c0_203 = arith.constant 0 : index
    %c0_204 = arith.constant 0 : index
    %602 = vector.load %arg9[%c0_203, %c0_204] : memref<128x512xbf16, #tpu.memory_space<vmem>>, vector<128x512xbf16>
    %cst_205 = arith.constant dense<0.000000e+00> : vector<8x512xf32>
    %603 = tpu.matmul %601, %602, %cst_205 {dimension_numbers = #tpu.dot_dimension_numbers<[1], [0], [0], [1], [0, 0, 1, 1], [], []>} : vector<8x128xbf16>, vector<128x512xbf16>, vector<8x512xf32> -> vector<8x512xf32>
    %604 = arith.addf %600, %603 : vector<8x512xf32>
    %605 = vector.extract_strided_slice %604 {offsets = [0, 0], sizes = [8, 128], strides = [1, 1]} : vector<8x512xf32> to vector<8x128xf32>
    %606 = arith.negf %605 : vector<8x128xf32>
    %607 = math.exp %606 : vector<8x128xf32>
    %cst_206 = arith.constant 1.000000e+00 : f32
    %608 = vector.broadcast %cst_206 : f32 to vector<8x128xf32>
    %609 = arith.addf %608, %607 : vector<8x128xf32>
    %610 = arith.divf %608, %609 : vector<8x128xf32>
    %611 = vector.extract_strided_slice %604 {offsets = [0, 128], sizes = [8, 128], strides = [1, 1]} : vector<8x512xf32> to vector<8x128xf32>
    %612 = arith.negf %611 : vector<8x128xf32>
    %613 = math.exp %612 : vector<8x128xf32>
    %cst_207 = arith.constant 1.000000e+00 : f32
    %614 = vector.broadcast %cst_207 : f32 to vector<8x128xf32>
    %615 = arith.addf %614, %613 : vector<8x128xf32>
    %616 = arith.divf %614, %615 : vector<8x128xf32>
    %617 = vector.extract_strided_slice %604 {offsets = [0, 256], sizes = [8, 128], strides = [1, 1]} : vector<8x512xf32> to vector<8x128xf32>
    %618 = math.tanh %617 : vector<8x128xf32>
    %619 = vector.extract_strided_slice %604 {offsets = [0, 384], sizes = [8, 128], strides = [1, 1]} : vector<8x512xf32> to vector<8x128xf32>
    %620 = arith.negf %619 : vector<8x128xf32>
    %621 = math.exp %620 : vector<8x128xf32>
    %cst_208 = arith.constant 1.000000e+00 : f32
    %622 = vector.broadcast %cst_208 : f32 to vector<8x128xf32>
    %623 = arith.addf %622, %621 : vector<8x128xf32>
    %624 = arith.divf %622, %623 : vector<8x128xf32>
    %625 = arith.mulf %616, %596 : vector<8x128xf32>
    %626 = arith.mulf %610, %618 : vector<8x128xf32>
    %627 = arith.addf %625, %626 : vector<8x128xf32>
    %628 = math.tanh %627 : vector<8x128xf32>
    %629 = arith.mulf %624, %628 : vector<8x128xf32>
    %c1_i32_209 = arith.constant 1 : i32
    %c8_i32_210 = arith.constant 8 : i32
    %630 = arith.muli %c1_i32_209, %c8_i32_210 : i32
    %631 = tpu.assume_multiple %630, 8 : i32
    %632 = arith.index_cast %631 : i32 to index
    %c0_211 = arith.constant 0 : index
    %633 = vector.load %arg15[%632, %c0_211] : memref<64x512xf32, #tpu.memory_space<vmem>>, vector<8x512xf32>
    %634 = arith.truncf %629 : vector<8x128xf32> to vector<8x128xbf16>
    %c0_212 = arith.constant 0 : index
    %c0_213 = arith.constant 0 : index
    %635 = vector.load %arg9[%c0_212, %c0_213] : memref<128x512xbf16, #tpu.memory_space<vmem>>, vector<128x512xbf16>
    %cst_214 = arith.constant dense<0.000000e+00> : vector<8x512xf32>
    %636 = tpu.matmul %634, %635, %cst_214 {dimension_numbers = #tpu.dot_dimension_numbers<[1], [0], [0], [1], [0, 0, 1, 1], [], []>} : vector<8x128xbf16>, vector<128x512xbf16>, vector<8x512xf32> -> vector<8x512xf32>
    %637 = arith.addf %633, %636 : vector<8x512xf32>
    %638 = vector.extract_strided_slice %637 {offsets = [0, 0], sizes = [8, 128], strides = [1, 1]} : vector<8x512xf32> to vector<8x128xf32>
    %639 = arith.negf %638 : vector<8x128xf32>
    %640 = math.exp %639 : vector<8x128xf32>
    %cst_215 = arith.constant 1.000000e+00 : f32
    %641 = vector.broadcast %cst_215 : f32 to vector<8x128xf32>
    %642 = arith.addf %641, %640 : vector<8x128xf32>
    %643 = arith.divf %641, %642 : vector<8x128xf32>
    %644 = vector.extract_strided_slice %637 {offsets = [0, 128], sizes = [8, 128], strides = [1, 1]} : vector<8x512xf32> to vector<8x128xf32>
    %645 = arith.negf %644 : vector<8x128xf32>
    %646 = math.exp %645 : vector<8x128xf32>
    %cst_216 = arith.constant 1.000000e+00 : f32
    %647 = vector.broadcast %cst_216 : f32 to vector<8x128xf32>
    %648 = arith.addf %647, %646 : vector<8x128xf32>
    %649 = arith.divf %647, %648 : vector<8x128xf32>
    %650 = vector.extract_strided_slice %637 {offsets = [0, 256], sizes = [8, 128], strides = [1, 1]} : vector<8x512xf32> to vector<8x128xf32>
    %651 = math.tanh %650 : vector<8x128xf32>
    %652 = vector.extract_strided_slice %637 {offsets = [0, 384], sizes = [8, 128], strides = [1, 1]} : vector<8x512xf32> to vector<8x128xf32>
    %653 = arith.negf %652 : vector<8x128xf32>
    %654 = math.exp %653 : vector<8x128xf32>
    %cst_217 = arith.constant 1.000000e+00 : f32
    %655 = vector.broadcast %cst_217 : f32 to vector<8x128xf32>
    %656 = arith.addf %655, %654 : vector<8x128xf32>
    %657 = arith.divf %655, %656 : vector<8x128xf32>
    %658 = arith.mulf %649, %627 : vector<8x128xf32>
    %659 = arith.mulf %643, %651 : vector<8x128xf32>
    %660 = arith.addf %658, %659 : vector<8x128xf32>
    %661 = math.tanh %660 : vector<8x128xf32>
    %662 = arith.mulf %657, %661 : vector<8x128xf32>
    %c2_i32_218 = arith.constant 2 : i32
    %c8_i32_219 = arith.constant 8 : i32
    %663 = arith.muli %c2_i32_218, %c8_i32_219 : i32
    %664 = tpu.assume_multiple %663, 8 : i32
    %665 = arith.index_cast %664 : i32 to index
    %c0_220 = arith.constant 0 : index
    %666 = vector.load %arg15[%665, %c0_220] : memref<64x512xf32, #tpu.memory_space<vmem>>, vector<8x512xf32>
    %667 = arith.truncf %662 : vector<8x128xf32> to vector<8x128xbf16>
    %c0_221 = arith.constant 0 : index
    %c0_222 = arith.constant 0 : index
    %668 = vector.load %arg9[%c0_221, %c0_222] : memref<128x512xbf16, #tpu.memory_space<vmem>>, vector<128x512xbf16>
    %cst_223 = arith.constant dense<0.000000e+00> : vector<8x512xf32>
    %669 = tpu.matmul %667, %668, %cst_223 {dimension_numbers = #tpu.dot_dimension_numbers<[1], [0], [0], [1], [0, 0, 1, 1], [], []>} : vector<8x128xbf16>, vector<128x512xbf16>, vector<8x512xf32> -> vector<8x512xf32>
    %670 = arith.addf %666, %669 : vector<8x512xf32>
    %671 = vector.extract_strided_slice %670 {offsets = [0, 0], sizes = [8, 128], strides = [1, 1]} : vector<8x512xf32> to vector<8x128xf32>
    %672 = arith.negf %671 : vector<8x128xf32>
    %673 = math.exp %672 : vector<8x128xf32>
    %cst_224 = arith.constant 1.000000e+00 : f32
    %674 = vector.broadcast %cst_224 : f32 to vector<8x128xf32>
    %675 = arith.addf %674, %673 : vector<8x128xf32>
    %676 = arith.divf %674, %675 : vector<8x128xf32>
    %677 = vector.extract_strided_slice %670 {offsets = [0, 128], sizes = [8, 128], strides = [1, 1]} : vector<8x512xf32> to vector<8x128xf32>
    %678 = arith.negf %677 : vector<8x128xf32>
    %679 = math.exp %678 : vector<8x128xf32>
    %cst_225 = arith.constant 1.000000e+00 : f32
    %680 = vector.broadcast %cst_225 : f32 to vector<8x128xf32>
    %681 = arith.addf %680, %679 : vector<8x128xf32>
    %682 = arith.divf %680, %681 : vector<8x128xf32>
    %683 = vector.extract_strided_slice %670 {offsets = [0, 256], sizes = [8, 128], strides = [1, 1]} : vector<8x512xf32> to vector<8x128xf32>
    %684 = math.tanh %683 : vector<8x128xf32>
    %685 = vector.extract_strided_slice %670 {offsets = [0, 384], sizes = [8, 128], strides = [1, 1]} : vector<8x512xf32> to vector<8x128xf32>
    %686 = arith.negf %685 : vector<8x128xf32>
    %687 = math.exp %686 : vector<8x128xf32>
    %cst_226 = arith.constant 1.000000e+00 : f32
    %688 = vector.broadcast %cst_226 : f32 to vector<8x128xf32>
    %689 = arith.addf %688, %687 : vector<8x128xf32>
    %690 = arith.divf %688, %689 : vector<8x128xf32>
    %691 = arith.mulf %682, %660 : vector<8x128xf32>
    %692 = arith.mulf %676, %684 : vector<8x128xf32>
    %693 = arith.addf %691, %692 : vector<8x128xf32>
    %694 = math.tanh %693 : vector<8x128xf32>
    %695 = arith.mulf %690, %694 : vector<8x128xf32>
    %c3_i32_227 = arith.constant 3 : i32
    %c8_i32_228 = arith.constant 8 : i32
    %696 = arith.muli %c3_i32_227, %c8_i32_228 : i32
    %697 = tpu.assume_multiple %696, 8 : i32
    %698 = arith.index_cast %697 : i32 to index
    %c0_229 = arith.constant 0 : index
    %699 = vector.load %arg15[%698, %c0_229] : memref<64x512xf32, #tpu.memory_space<vmem>>, vector<8x512xf32>
    %700 = arith.truncf %695 : vector<8x128xf32> to vector<8x128xbf16>
    %c0_230 = arith.constant 0 : index
    %c0_231 = arith.constant 0 : index
    %701 = vector.load %arg9[%c0_230, %c0_231] : memref<128x512xbf16, #tpu.memory_space<vmem>>, vector<128x512xbf16>
    %cst_232 = arith.constant dense<0.000000e+00> : vector<8x512xf32>
    %702 = tpu.matmul %700, %701, %cst_232 {dimension_numbers = #tpu.dot_dimension_numbers<[1], [0], [0], [1], [0, 0, 1, 1], [], []>} : vector<8x128xbf16>, vector<128x512xbf16>, vector<8x512xf32> -> vector<8x512xf32>
    %703 = arith.addf %699, %702 : vector<8x512xf32>
    %704 = vector.extract_strided_slice %703 {offsets = [0, 0], sizes = [8, 128], strides = [1, 1]} : vector<8x512xf32> to vector<8x128xf32>
    %705 = arith.negf %704 : vector<8x128xf32>
    %706 = math.exp %705 : vector<8x128xf32>
    %cst_233 = arith.constant 1.000000e+00 : f32
    %707 = vector.broadcast %cst_233 : f32 to vector<8x128xf32>
    %708 = arith.addf %707, %706 : vector<8x128xf32>
    %709 = arith.divf %707, %708 : vector<8x128xf32>
    %710 = vector.extract_strided_slice %703 {offsets = [0, 128], sizes = [8, 128], strides = [1, 1]} : vector<8x512xf32> to vector<8x128xf32>
    %711 = arith.negf %710 : vector<8x128xf32>
    %712 = math.exp %711 : vector<8x128xf32>
    %cst_234 = arith.constant 1.000000e+00 : f32
    %713 = vector.broadcast %cst_234 : f32 to vector<8x128xf32>
    %714 = arith.addf %713, %712 : vector<8x128xf32>
    %715 = arith.divf %713, %714 : vector<8x128xf32>
    %716 = vector.extract_strided_slice %703 {offsets = [0, 256], sizes = [8, 128], strides = [1, 1]} : vector<8x512xf32> to vector<8x128xf32>
    %717 = math.tanh %716 : vector<8x128xf32>
    %718 = vector.extract_strided_slice %703 {offsets = [0, 384], sizes = [8, 128], strides = [1, 1]} : vector<8x512xf32> to vector<8x128xf32>
    %719 = arith.negf %718 : vector<8x128xf32>
    %720 = math.exp %719 : vector<8x128xf32>
    %cst_235 = arith.constant 1.000000e+00 : f32
    %721 = vector.broadcast %cst_235 : f32 to vector<8x128xf32>
    %722 = arith.addf %721, %720 : vector<8x128xf32>
    %723 = arith.divf %721, %722 : vector<8x128xf32>
    %724 = arith.mulf %715, %693 : vector<8x128xf32>
    %725 = arith.mulf %709, %717 : vector<8x128xf32>
    %726 = arith.addf %724, %725 : vector<8x128xf32>
    %727 = math.tanh %726 : vector<8x128xf32>
    %728 = arith.mulf %723, %727 : vector<8x128xf32>
    %c4_i32_236 = arith.constant 4 : i32
    %c8_i32_237 = arith.constant 8 : i32
    %729 = arith.muli %c4_i32_236, %c8_i32_237 : i32
    %730 = tpu.assume_multiple %729, 8 : i32
    %731 = arith.index_cast %730 : i32 to index
    %c0_238 = arith.constant 0 : index
    %732 = vector.load %arg15[%731, %c0_238] : memref<64x512xf32, #tpu.memory_space<vmem>>, vector<8x512xf32>
    %733 = arith.truncf %728 : vector<8x128xf32> to vector<8x128xbf16>
    %c0_239 = arith.constant 0 : index
    %c0_240 = arith.constant 0 : index
    %734 = vector.load %arg9[%c0_239, %c0_240] : memref<128x512xbf16, #tpu.memory_space<vmem>>, vector<128x512xbf16>
    %cst_241 = arith.constant dense<0.000000e+00> : vector<8x512xf32>
    %735 = tpu.matmul %733, %734, %cst_241 {dimension_numbers = #tpu.dot_dimension_numbers<[1], [0], [0], [1], [0, 0, 1, 1], [], []>} : vector<8x128xbf16>, vector<128x512xbf16>, vector<8x512xf32> -> vector<8x512xf32>
    %736 = arith.addf %732, %735 : vector<8x512xf32>
    %737 = vector.extract_strided_slice %736 {offsets = [0, 0], sizes = [8, 128], strides = [1, 1]} : vector<8x512xf32> to vector<8x128xf32>
    %738 = arith.negf %737 : vector<8x128xf32>
    %739 = math.exp %738 : vector<8x128xf32>
    %cst_242 = arith.constant 1.000000e+00 : f32
    %740 = vector.broadcast %cst_242 : f32 to vector<8x128xf32>
    %741 = arith.addf %740, %739 : vector<8x128xf32>
    %742 = arith.divf %740, %741 : vector<8x128xf32>
    %743 = vector.extract_strided_slice %736 {offsets = [0, 128], sizes = [8, 128], strides = [1, 1]} : vector<8x512xf32> to vector<8x128xf32>
    %744 = arith.negf %743 : vector<8x128xf32>
    %745 = math.exp %744 : vector<8x128xf32>
    %cst_243 = arith.constant 1.000000e+00 : f32
    %746 = vector.broadcast %cst_243 : f32 to vector<8x128xf32>
    %747 = arith.addf %746, %745 : vector<8x128xf32>
    %748 = arith.divf %746, %747 : vector<8x128xf32>
    %749 = vector.extract_strided_slice %736 {offsets = [0, 256], sizes = [8, 128], strides = [1, 1]} : vector<8x512xf32> to vector<8x128xf32>
    %750 = math.tanh %749 : vector<8x128xf32>
    %751 = vector.extract_strided_slice %736 {offsets = [0, 384], sizes = [8, 128], strides = [1, 1]} : vector<8x512xf32> to vector<8x128xf32>
    %752 = arith.negf %751 : vector<8x128xf32>
    %753 = math.exp %752 : vector<8x128xf32>
    %cst_244 = arith.constant 1.000000e+00 : f32
    %754 = vector.broadcast %cst_244 : f32 to vector<8x128xf32>
    %755 = arith.addf %754, %753 : vector<8x128xf32>
    %756 = arith.divf %754, %755 : vector<8x128xf32>
    %757 = arith.mulf %748, %726 : vector<8x128xf32>
    %758 = arith.mulf %742, %750 : vector<8x128xf32>
    %759 = arith.addf %757, %758 : vector<8x128xf32>
    %760 = math.tanh %759 : vector<8x128xf32>
    %761 = arith.mulf %756, %760 : vector<8x128xf32>
    %c5_i32_245 = arith.constant 5 : i32
    %c8_i32_246 = arith.constant 8 : i32
    %762 = arith.muli %c5_i32_245, %c8_i32_246 : i32
    %763 = tpu.assume_multiple %762, 8 : i32
    %764 = arith.index_cast %763 : i32 to index
    %c0_247 = arith.constant 0 : index
    %765 = vector.load %arg15[%764, %c0_247] : memref<64x512xf32, #tpu.memory_space<vmem>>, vector<8x512xf32>
    %766 = arith.truncf %761 : vector<8x128xf32> to vector<8x128xbf16>
    %c0_248 = arith.constant 0 : index
    %c0_249 = arith.constant 0 : index
    %767 = vector.load %arg9[%c0_248, %c0_249] : memref<128x512xbf16, #tpu.memory_space<vmem>>, vector<128x512xbf16>
    %cst_250 = arith.constant dense<0.000000e+00> : vector<8x512xf32>
    %768 = tpu.matmul %766, %767, %cst_250 {dimension_numbers = #tpu.dot_dimension_numbers<[1], [0], [0], [1], [0, 0, 1, 1], [], []>} : vector<8x128xbf16>, vector<128x512xbf16>, vector<8x512xf32> -> vector<8x512xf32>
    %769 = arith.addf %765, %768 : vector<8x512xf32>
    %770 = vector.extract_strided_slice %769 {offsets = [0, 0], sizes = [8, 128], strides = [1, 1]} : vector<8x512xf32> to vector<8x128xf32>
    %771 = arith.negf %770 : vector<8x128xf32>
    %772 = math.exp %771 : vector<8x128xf32>
    %cst_251 = arith.constant 1.000000e+00 : f32
    %773 = vector.broadcast %cst_251 : f32 to vector<8x128xf32>
    %774 = arith.addf %773, %772 : vector<8x128xf32>
    %775 = arith.divf %773, %774 : vector<8x128xf32>
    %776 = vector.extract_strided_slice %769 {offsets = [0, 128], sizes = [8, 128], strides = [1, 1]} : vector<8x512xf32> to vector<8x128xf32>
    %777 = arith.negf %776 : vector<8x128xf32>
    %778 = math.exp %777 : vector<8x128xf32>
    %cst_252 = arith.constant 1.000000e+00 : f32
    %779 = vector.broadcast %cst_252 : f32 to vector<8x128xf32>
    %780 = arith.addf %779, %778 : vector<8x128xf32>
    %781 = arith.divf %779, %780 : vector<8x128xf32>
    %782 = vector.extract_strided_slice %769 {offsets = [0, 256], sizes = [8, 128], strides = [1, 1]} : vector<8x512xf32> to vector<8x128xf32>
    %783 = math.tanh %782 : vector<8x128xf32>
    %784 = vector.extract_strided_slice %769 {offsets = [0, 384], sizes = [8, 128], strides = [1, 1]} : vector<8x512xf32> to vector<8x128xf32>
    %785 = arith.negf %784 : vector<8x128xf32>
    %786 = math.exp %785 : vector<8x128xf32>
    %cst_253 = arith.constant 1.000000e+00 : f32
    %787 = vector.broadcast %cst_253 : f32 to vector<8x128xf32>
    %788 = arith.addf %787, %786 : vector<8x128xf32>
    %789 = arith.divf %787, %788 : vector<8x128xf32>
    %790 = arith.mulf %781, %759 : vector<8x128xf32>
    %791 = arith.mulf %775, %783 : vector<8x128xf32>
    %792 = arith.addf %790, %791 : vector<8x128xf32>
    %793 = math.tanh %792 : vector<8x128xf32>
    %794 = arith.mulf %789, %793 : vector<8x128xf32>
    %c6_i32_254 = arith.constant 6 : i32
    %c8_i32_255 = arith.constant 8 : i32
    %795 = arith.muli %c6_i32_254, %c8_i32_255 : i32
    %796 = tpu.assume_multiple %795, 8 : i32
    %797 = arith.index_cast %796 : i32 to index
    %c0_256 = arith.constant 0 : index
    %798 = vector.load %arg15[%797, %c0_256] : memref<64x512xf32, #tpu.memory_space<vmem>>, vector<8x512xf32>
    %799 = arith.truncf %794 : vector<8x128xf32> to vector<8x128xbf16>
    %c0_257 = arith.constant 0 : index
    %c0_258 = arith.constant 0 : index
    %800 = vector.load %arg9[%c0_257, %c0_258] : memref<128x512xbf16, #tpu.memory_space<vmem>>, vector<128x512xbf16>
    %cst_259 = arith.constant dense<0.000000e+00> : vector<8x512xf32>
    %801 = tpu.matmul %799, %800, %cst_259 {dimension_numbers = #tpu.dot_dimension_numbers<[1], [0], [0], [1], [0, 0, 1, 1], [], []>} : vector<8x128xbf16>, vector<128x512xbf16>, vector<8x512xf32> -> vector<8x512xf32>
    %802 = arith.addf %798, %801 : vector<8x512xf32>
    %803 = vector.extract_strided_slice %802 {offsets = [0, 0], sizes = [8, 128], strides = [1, 1]} : vector<8x512xf32> to vector<8x128xf32>
    %804 = arith.negf %803 : vector<8x128xf32>
    %805 = math.exp %804 : vector<8x128xf32>
    %cst_260 = arith.constant 1.000000e+00 : f32
    %806 = vector.broadcast %cst_260 : f32 to vector<8x128xf32>
    %807 = arith.addf %806, %805 : vector<8x128xf32>
    %808 = arith.divf %806, %807 : vector<8x128xf32>
    %809 = vector.extract_strided_slice %802 {offsets = [0, 128], sizes = [8, 128], strides = [1, 1]} : vector<8x512xf32> to vector<8x128xf32>
    %810 = arith.negf %809 : vector<8x128xf32>
    %811 = math.exp %810 : vector<8x128xf32>
    %cst_261 = arith.constant 1.000000e+00 : f32
    %812 = vector.broadcast %cst_261 : f32 to vector<8x128xf32>
    %813 = arith.addf %812, %811 : vector<8x128xf32>
    %814 = arith.divf %812, %813 : vector<8x128xf32>
    %815 = vector.extract_strided_slice %802 {offsets = [0, 256], sizes = [8, 128], strides = [1, 1]} : vector<8x512xf32> to vector<8x128xf32>
    %816 = math.tanh %815 : vector<8x128xf32>
    %817 = vector.extract_strided_slice %802 {offsets = [0, 384], sizes = [8, 128], strides = [1, 1]} : vector<8x512xf32> to vector<8x128xf32>
    %818 = arith.negf %817 : vector<8x128xf32>
    %819 = math.exp %818 : vector<8x128xf32>
    %cst_262 = arith.constant 1.000000e+00 : f32
    %820 = vector.broadcast %cst_262 : f32 to vector<8x128xf32>
    %821 = arith.addf %820, %819 : vector<8x128xf32>
    %822 = arith.divf %820, %821 : vector<8x128xf32>
    %823 = arith.mulf %814, %792 : vector<8x128xf32>
    %824 = arith.mulf %808, %816 : vector<8x128xf32>
    %825 = arith.addf %823, %824 : vector<8x128xf32>
    %826 = math.tanh %825 : vector<8x128xf32>
    %827 = arith.mulf %822, %826 : vector<8x128xf32>
    %c7_i32_263 = arith.constant 7 : i32
    %c8_i32_264 = arith.constant 8 : i32
    %828 = arith.muli %c7_i32_263, %c8_i32_264 : i32
    %829 = tpu.assume_multiple %828, 8 : i32
    %830 = arith.index_cast %829 : i32 to index
    %c0_265 = arith.constant 0 : index
    %831 = vector.load %arg15[%830, %c0_265] : memref<64x512xf32, #tpu.memory_space<vmem>>, vector<8x512xf32>
    %832 = arith.truncf %827 : vector<8x128xf32> to vector<8x128xbf16>
    %c0_266 = arith.constant 0 : index
    %c0_267 = arith.constant 0 : index
    %833 = vector.load %arg9[%c0_266, %c0_267] : memref<128x512xbf16, #tpu.memory_space<vmem>>, vector<128x512xbf16>
    %cst_268 = arith.constant dense<0.000000e+00> : vector<8x512xf32>
    %834 = tpu.matmul %832, %833, %cst_268 {dimension_numbers = #tpu.dot_dimension_numbers<[1], [0], [0], [1], [0, 0, 1, 1], [], []>} : vector<8x128xbf16>, vector<128x512xbf16>, vector<8x512xf32> -> vector<8x512xf32>
    %835 = arith.addf %831, %834 : vector<8x512xf32>
    %836 = vector.extract_strided_slice %835 {offsets = [0, 0], sizes = [8, 128], strides = [1, 1]} : vector<8x512xf32> to vector<8x128xf32>
    %837 = arith.negf %836 : vector<8x128xf32>
    %838 = math.exp %837 : vector<8x128xf32>
    %cst_269 = arith.constant 1.000000e+00 : f32
    %839 = vector.broadcast %cst_269 : f32 to vector<8x128xf32>
    %840 = arith.addf %839, %838 : vector<8x128xf32>
    %841 = arith.divf %839, %840 : vector<8x128xf32>
    %842 = vector.extract_strided_slice %835 {offsets = [0, 128], sizes = [8, 128], strides = [1, 1]} : vector<8x512xf32> to vector<8x128xf32>
    %843 = arith.negf %842 : vector<8x128xf32>
    %844 = math.exp %843 : vector<8x128xf32>
    %cst_270 = arith.constant 1.000000e+00 : f32
    %845 = vector.broadcast %cst_270 : f32 to vector<8x128xf32>
    %846 = arith.addf %845, %844 : vector<8x128xf32>
    %847 = arith.divf %845, %846 : vector<8x128xf32>
    %848 = vector.extract_strided_slice %835 {offsets = [0, 256], sizes = [8, 128], strides = [1, 1]} : vector<8x512xf32> to vector<8x128xf32>
    %849 = math.tanh %848 : vector<8x128xf32>
    %850 = vector.extract_strided_slice %835 {offsets = [0, 384], sizes = [8, 128], strides = [1, 1]} : vector<8x512xf32> to vector<8x128xf32>
    %851 = arith.negf %850 : vector<8x128xf32>
    %852 = math.exp %851 : vector<8x128xf32>
    %cst_271 = arith.constant 1.000000e+00 : f32
    %853 = vector.broadcast %cst_271 : f32 to vector<8x128xf32>
    %854 = arith.addf %853, %852 : vector<8x128xf32>
    %855 = arith.divf %853, %854 : vector<8x128xf32>
    %856 = arith.mulf %847, %825 : vector<8x128xf32>
    %857 = arith.mulf %841, %849 : vector<8x128xf32>
    %858 = arith.addf %856, %857 : vector<8x128xf32>
    %859 = math.tanh %858 : vector<8x128xf32>
    %860 = arith.mulf %855, %859 : vector<8x128xf32>
    %c8_i32_272 = arith.constant 8 : i32
    %c0_273 = arith.constant 0 : index
    %c0_274 = arith.constant 0 : index
    %861 = vector.load %arg21[%c0_273, %c0_274] : memref<8x128xf32, #tpu.memory_space<vmem>>, vector<8x128xf32>
    tpu.vector_store %arg21[%c0_273, %c0_274], %860 {strides = array<i32>} : memref<8x128xf32, #tpu.memory_space<vmem>>, vector<8x128xf32>,
    %c0_275 = arith.constant 0 : index
    %c0_276 = arith.constant 0 : index
    %862 = vector.load %arg22[%c0_275, %c0_276] : memref<8x128xf32, #tpu.memory_space<vmem>>, vector<8x128xf32>
    tpu.vector_store %arg22[%c0_275, %c0_276], %858 {strides = array<i32>} : memref<8x128xf32, #tpu.memory_space<vmem>>, vector<8x128xf32>,
    %c0_i32_277 = arith.constant 0 : i32
    %863 = arith.cmpi eq, %arg0, %c0_i32_277 : i32
    %864 = arith.extui %863 : i1 to i32
    %c0_i32_278 = arith.constant 0 : i32
    %865 = arith.cmpi ne, %864, %c0_i32_278 : i32
    scf.if %865 {
      %c0_279 = arith.constant 0 : index
      %c0_280 = arith.constant 0 : index
      %866 = vector.load %arg11[%c0_279, %c0_280] : memref<128x128xf32, #tpu.memory_space<vmem>>, vector<128x128xf32>
      %cst_281 = arith.constant dense<0.000000e+00> : vector<8x128xf32>
      %867 = tpu.matmul %860, %866, %cst_281 {dimension_numbers = #tpu.dot_dimension_numbers<[1], [0], [0], [1], [0, 0, 1, 1], [], []>} : vector<8x128xf32>, vector<128x128xf32>, vector<8x128xf32> -> vector<8x128xf32>
      %c0_282 = arith.constant 0 : index
      %c0_283 = arith.constant 0 : index
      %868 = vector.load %arg12[%c0_282, %c0_283] : memref<1x128xf32, #tpu.memory_space<vmem>>, vector<1x128xf32>
      %869 = vector.broadcast %868 : vector<1x128xf32> to vector<8x128xf32>
      %870 = arith.addf %867, %869 : vector<8x128xf32>
      %c0_284 = arith.constant 0 : index
      %c0_285 = arith.constant 0 : index
      %871 = vector.load %arg14[%c0_284, %c0_285] : memref<8x128xf32, #tpu.memory_space<vmem>>, vector<8x128xf32>
      tpu.vector_store %arg14[%c0_284, %c0_285], %870 {strides = array<i32>} : memref<8x128xf32, #tpu.memory_space<vmem>>, vector<8x128xf32>,
      %872 = arith.negf %870 : vector<8x128xf32>
      %873 = math.exp %872 : vector<8x128xf32>
      %cst_286 = arith.constant 1.000000e+00 : f32
      %874 = vector.broadcast %cst_286 : f32 to vector<8x128xf32>
      %875 = arith.addf %874, %873 : vector<8x128xf32>
      %876 = arith.divf %874, %875 : vector<8x128xf32>
      %c0_287 = arith.constant 0 : index
      %c0_288 = arith.constant 0 : index
      %877 = vector.load %arg13[%c0_287, %c0_288] : memref<8x128xf32, #tpu.memory_space<vmem>>, vector<8x128xf32>
      tpu.vector_store %arg13[%c0_287, %c0_288], %876 {strides = array<i32>} : memref<8x128xf32, #tpu.memory_space<vmem>>, vector<8x128xf32>,
    } else {
    }
    return
  }
  func.func @transform_0(%arg0: i32) -> (i32, i32) {
    %c0_i32 = arith.constant 0 : i32
    %c0_i32_0 = arith.constant 0 : i32
    return %arg0, %c0_i32 : i32, i32
  }
  func.func @transform_1(%arg0: i32) -> (i32, i32) {
    %c0_i32 = arith.constant 0 : i32
    %c0_i32_0 = arith.constant 0 : i32
    %c0_i32_1 = arith.constant 0 : i32
    return %c0_i32, %c0_i32_0 : i32, i32
  }
  func.func @transform_2(%arg0: i32) -> (i32, i32) {
    %c0_i32 = arith.constant 0 : i32
    %c0_i32_0 = arith.constant 0 : i32
    %c0_i32_1 = arith.constant 0 : i32
    return %c0_i32, %c0_i32_0 : i32, i32
  }
  func.func @transform_3(%arg0: i32) -> (i32, i32) {
    %c0_i32 = arith.constant 0 : i32
    %c0_i32_0 = arith.constant 0 : i32
    %c0_i32_1 = arith.constant 0 : i32
    return %c0_i32, %c0_i32_0 : i32, i32
  }
  func.func @transform_4(%arg0: i32) -> (i32, i32) {
    %c0_i32 = arith.constant 0 : i32
    %c0_i32_0 = arith.constant 0 : i32
    %c0_i32_1 = arith.constant 0 : i32
    return %c0_i32, %c0_i32_0 : i32, i32
  }
  func.func @transform_5(%arg0: i32) -> (i32, i32) {
    %c0_i32 = arith.constant 0 : i32
    %c0_i32_0 = arith.constant 0 : i32
    %c0_i32_1 = arith.constant 0 : i32
    return %c0_i32, %c0_i32_0 : i32, i32
  }
  func.func @transform_6(%arg0: i32) -> (i32, i32) {
    %c0_i32 = arith.constant 0 : i32
    %c0_i32_0 = arith.constant 0 : i32
    %c0_i32_1 = arith.constant 0 : i32
    return %c0_i32, %c0_i32_0 : i32, i32
  }
  func.func @transform_7(%arg0: i32) -> (i32, i32) {
    %c0_i32 = arith.constant 0 : i32
    %c0_i32_0 = arith.constant 0 : i32
    %c0_i32_1 = arith.constant 0 : i32
    return %c0_i32, %c0_i32_0 : i32, i32
  }
  func.func @transform_8(%arg0: i32) -> (i32, i32) {
    %c0_i32 = arith.constant 0 : i32
    %c0_i32_0 = arith.constant 0 : i32
    %c0_i32_1 = arith.constant 0 : i32
    return %c0_i32, %c0_i32_0 : i32, i32
  }
  func.func @transform_9(%arg0: i32) -> (i32, i32) {
    %c0_i32 = arith.constant 0 : i32
    %c0_i32_0 = arith.constant 0 : i32
    %c0_i32_1 = arith.constant 0 : i32
    return %c0_i32, %c0_i32_0 : i32, i32
  }
  func.func @transform_10(%arg0: i32) -> (i32, i32) {
    %c0_i32 = arith.constant 0 : i32
    %c0_i32_0 = arith.constant 0 : i32
    %c0_i32_1 = arith.constant 0 : i32
    return %c0_i32, %c0_i32_0 : i32, i32
  }
  func.func @transform_11(%arg0: i32) -> (i32, i32) {
    %c0_i32 = arith.constant 0 : i32
    %c0_i32_0 = arith.constant 0 : i32
    %c0_i32_1 = arith.constant 0 : i32
    return %c0_i32, %c0_i32_0 : i32, i32
  }
  func.func @transform_12(%arg0: i32) -> (i32, i32) {
    %c0_i32 = arith.constant 0 : i32
    %c0_i32_0 = arith.constant 0 : i32
    %c0_i32_1 = arith.constant 0 : i32
    return %c0_i32, %c0_i32_0 : i32, i32
  }
  func.func @transform_13(%arg0: i32) -> (i32, i32) {
    %c0_i32 = arith.constant 0 : i32
    %c0_i32_0 = arith.constant 0 : i32
    %c0_i32_1 = arith.constant 0 : i32
    return %c0_i32, %c0_i32_0 : i32, i32
  }
}

</mosaic_0001>

<llo_original>
// kernel: lstm_rnn_forward.1
$region0: #{lstm_rnn_forward.1}
  #allocation0 [shape = 'u32[]', space=smem, size = 0x4, offset = 0x4, fixed_abs, tag = 'smem constant byte address 0x4 - core index']
  #allocation1 [shape = 'u32[72,128]{1,0:T(1,128)}', space=vmem, size = 0x9000, scoped, tag = 'internal scratch']
  #allocation2 [shape = 'f32[64,512]{1,0:T(8,128)}', space=vmem, size = 0x20000, scoped, tag = 'scratch operand']
  #allocation3 [shape = 'f32[64,128]{1,0:T(8,128)}', space=vmem, size = 0x8000, scoped, tag = 'scratch operand']
  #allocation4 [shape = 'f32[8,128]{1,0:T(8,128)}', space=vmem, size = 0x1000, scoped, tag = 'scratch operand']
  #allocation5 [shape = 'f32[8,128]{1,0:T(8,128)}', space=vmem, size = 0x1000, scoped, tag = 'scratch operand']
  #allocation6 [shape = 'f32[8,128]{1,0:T(8,128)}', space=vmem, size = 0x1000, scoped, tag = 'scratch operand']
  #allocation7 [shape = 'f32[8,128]{1,0:T(8,128)}', space=vmem, size = 0x1000, scoped, tag = 'scratch operand']
  #allocation8 [shape = 'f32[8,128]{1,0:T(8,128)}', space=vmem, size = 0x1000, scoped, tag = 'scratch operand']
  #allocation9 [shape = 'f32[8,128]{1,0:T(8,128)}', space=vmem, size = 0x1000, scoped, tag = 'scratch operand']
  %s0 = inlined_call_operand.vmem [shape: f32[64,16], index: 0, kind: input, shape index: {}]
  %s1 = inlined_call_operand.vmem [shape: bf16[16,512], index: 1, kind: input, shape index: {}]
  %s2 = inlined_call_operand.hbm [shape: bf16[128,512], index: 2, kind: input, shape index: {}]
  %s3 = inlined_call_operand.vmem [shape: f32[1,512], index: 3, kind: input, shape index: {}]
  %s4 = inlined_call_operand.hbm [shape: bf16[128,512], index: 4, kind: input, shape index: {}]
  %s5 = inlined_call_operand.hbm [shape: bf16[128,512], index: 5, kind: input, shape index: {}]
  %s6 = inlined_call_operand.vmem [shape: f32[1,512], index: 6, kind: input, shape index: {}]
  %s7 = inlined_call_operand.hbm [shape: bf16[128,512], index: 7, kind: input, shape index: {}]
  %s8 = inlined_call_operand.hbm [shape: bf16[128,512], index: 8, kind: input, shape index: {}]
  %s9 = inlined_call_operand.vmem [shape: f32[1,512], index: 9, kind: input, shape index: {}]
  %s10 = inlined_call_operand.hbm [shape: f32[128,128], index: 10, kind: input, shape index: {}]
  %s11 = inlined_call_operand.vmem [shape: f32[1,128], index: 11, kind: input, shape index: {}]
  %s12 = inlined_call_operand.vmem [shape: f32[8,128], index: 12, kind: output, shape index: {0}]
  %s13 = inlined_call_operand.hbm [shape: f32[8,128], index: 13, kind: output, shape index: {1}]
  %14 = xla_tuple %s12, %s13
  %s15 = sld [smem:[#allocation0]]
  $region98: #{lstm_rnn_forward.1} parent=0
    _
  %s17 = ssub.s32 1, %s15
  %s18 = scalar_select 0, %s17, %s15
  $region1: #{lstm_rnn_forward.1} parent=0
    #allocation10 [shape = 'u8[131072]{0}', space=vmem, size = 0x20000, scoped, tag = 'input window, operand 2, single buffered']
    #allocation11 [shape = 's32[1]{0}', space=sflag, size = 0x4, scoped, tag = 'scoped memory for lstm_rnn_forward.1']
    #allocation12 [shape = 's32[1]{0}', space=sflag, size = 0x4, scoped, tag = 'scoped memory for lstm_rnn_forward.1']
    #allocation13 [shape = 'u8[131072]{0}', space=vmem, size = 0x20000, scoped, tag = 'input window, operand 4, single buffered']
    #allocation14 [shape = 's32[1]{0}', space=sflag, size = 0x4, scoped, tag = 'scoped memory for lstm_rnn_forward.1']
    #allocation15 [shape = 'u8[131072]{0}', space=vmem, size = 0x20000, scoped, tag = 'input window, operand 5, single buffered']
    #allocation16 [shape = 'u8[131072]{0}', space=vmem, size = 0x20000, scoped, tag = 'input window, operand 7, single buffered']
    #allocation17 [shape = 's32[1]{0}', space=sflag, size = 0x4, scoped, tag = 'scoped memory for lstm_rnn_forward.1']
    #allocation18 [shape = 'u8[131072]{0}', space=vmem, size = 0x20000, scoped, tag = 'input window, operand 8, single buffered']
    #allocation19 [shape = 'u8[65536]{0}', space=vmem, size = 0x10000, scoped, tag = 'input window, operand 10, single buffered']
    #allocation20 [shape = 's32[1]{0}', space=sflag, size = 0x4, scoped, tag = 'scoped memory for lstm_rnn_forward.1']
    #allocation21 [shape = 'u8[4096]{0}', space=vmem, size = 0x1000, scoped, tag = 'output window, operand 1, single buffered']
    %19 = vsyncpa [#allocation11], 0
    %20 = vsyncpa [#allocation14], 0
    %21 = vsyncpa [#allocation17], 0
    %22 = vsyncpa [#allocation20], 0
    %23 = vsyncpa [#allocation12], 0
    // Predicated region
    $region2: #{lstm_rnn_forward.1} parent=1 // pred_check
      _
    $region3: #{lstm_rnn_forward.1} parent=1 // pred_check_branch
      %25 = sbr.rel (0) target = $region5
    $region4: #{lstm_rnn_forward.1} parent=1 // pred_region
      _
    $region5: #{lstm_rnn_forward.1} parent=1 // pred_fallthru
      _
    // Predicated region
    $region6: #{lstm_rnn_forward.1} parent=1 // pred_check
      _
    $region7: #{lstm_rnn_forward.1} parent=1 // pred_check_branch
      %27 = sbr.rel (0) target = $region9
    $region8: #{lstm_rnn_forward.1} parent=1 // pred_region
      _
    $region9: #{lstm_rnn_forward.1} parent=1 // pred_fallthru
      _
    // Predicated region
    $region10: #{lstm_rnn_forward.1} parent=1 // pred_check
      _
    $region11: #{lstm_rnn_forward.1} parent=1 // pred_check_branch
      %29 = sbr.rel (0) target = $region13
    $region12: #{lstm_rnn_forward.1} parent=1 // pred_region
      %31 = vsyncadd [#allocation11], 0
      %s32 = sshll.u32 %s2, 4
      %s33 = int_to_ptr.hbm [resolvable:$true] %s32
      %s34 = sshll.u32 [#allocation10], 4
      %s35 = int_to_ptr.vmem [resolvable:$true] %s34
      %40 = dma.hbm_to_vmem [thread:$0]  %s33, 4096, %s35, [#allocation11], 256, 256, 16
    $region13: #{lstm_rnn_forward.1} parent=1 // pred_fallthru
      _
    // Predicated region
    $region14: #{lstm_rnn_forward.1} parent=1 // pred_check
      _
    $region15: #{lstm_rnn_forward.1} parent=1 // pred_check_branch
      %42 = sbr.rel (0) target = $region17
    $region16: #{lstm_rnn_forward.1} parent=1 // pred_region
      _
    $region17: #{lstm_rnn_forward.1} parent=1 // pred_fallthru
      _
    // Predicated region
    $region18: #{lstm_rnn_forward.1} parent=1 // pred_check
      _
    $region19: #{lstm_rnn_forward.1} parent=1 // pred_check_branch
      %44 = sbr.rel (0) target = $region21
    $region20: #{lstm_rnn_forward.1} parent=1 // pred_region
      %46 = vsyncadd [#allocation14], 0
      %s47 = sshll.u32 %s4, 4
      %s48 = int_to_ptr.hbm [resolvable:$true] %s47
      %s49 = sshll.u32 [#allocation13], 4
      %s50 = int_to_ptr.vmem [resolvable:$true] %s49
      %55 = dma.hbm_to_vmem [thread:$0]  %s48, 4096, %s50, [#allocation14], 256, 256, 16
    $region21: #{lstm_rnn_forward.1} parent=1 // pred_fallthru
      _
    // Predicated region
    $region22: #{lstm_rnn_forward.1} parent=1 // pred_check
      _
    $region23: #{lstm_rnn_forward.1} parent=1 // pred_check_branch
      %57 = sbr.rel (0) target = $region25
    $region24: #{lstm_rnn_forward.1} parent=1 // pred_region
      %59 = vsyncadd [#allocation14], 0
      %s60 = sshll.u32 %s5, 4
      %s61 = int_to_ptr.hbm [resolvable:$true] %s60
      %s62 = sshll.u32 [#allocation15], 4
      %s63 = int_to_ptr.vmem [resolvable:$true] %s62
      %68 = dma.hbm_to_vmem [thread:$0]  %s61, 4096, %s63, [#allocation14], 256, 256, 16
    $region25: #{lstm_rnn_forward.1} parent=1 // pred_fallthru
      _
    // Predicated region
    $region26: #{lstm_rnn_forward.1} parent=1 // pred_check
      _
    $region27: #{lstm_rnn_forward.1} parent=1 // pred_check_branch
      %70 = sbr.rel (0) target = $region29
    $region28: #{lstm_rnn_forward.1} parent=1 // pred_region
      _
    $region29: #{lstm_rnn_forward.1} parent=1 // pred_fallthru
      _
    // Predicated region
    $region30: #{lstm_rnn_forward.1} parent=1 // pred_check
      _
    $region31: #{lstm_rnn_forward.1} parent=1 // pred_check_branch
      %72 = sbr.rel (0) target = $region33
    $region32: #{lstm_rnn_forward.1} parent=1 // pred_region
      %74 = vsyncadd [#allocation17], 0
      %s75 = sshll.u32 %s7, 4
      %s76 = int_to_ptr.hbm [resolvable:$true] %s75
      %s77 = sshll.u32 [#allocation16], 4
      %s78 = int_to_ptr.vmem [resolvable:$true] %s77
      %83 = dma.hbm_to_vmem [thread:$0]  %s76, 4096, %s78, [#allocation17], 256, 256, 16
    $region33: #{lstm_rnn_forward.1} parent=1 // pred_fallthru
      _
    // Predicated region
    $region34: #{lstm_rnn_forward.1} parent=1 // pred_check
      _
    $region35: #{lstm_rnn_forward.1} parent=1 // pred_check_branch
      %85 = sbr.rel (0) target = $region37
    $region36: #{lstm_rnn_forward.1} parent=1 // pred_region
      %87 = vsyncadd [#allocation17], 0
      %s88 = sshll.u32 %s8, 4
      %s89 = int_to_ptr.hbm [resolvable:$true] %s88
      %s90 = sshll.u32 [#allocation18], 4
      %s91 = int_to_ptr.vmem [resolvable:$true] %s90
      %96 = dma.hbm_to_vmem [thread:$0]  %s89, 4096, %s91, [#allocation17], 256, 256, 16
    $region37: #{lstm_rnn_forward.1} parent=1 // pred_fallthru
      _
    // Predicated region
    $region38: #{lstm_rnn_forward.1} parent=1 // pred_check
      _
    $region39: #{lstm_rnn_forward.1} parent=1 // pred_check_branch
      %98 = sbr.rel (0) target = $region41
    $region40: #{lstm_rnn_forward.1} parent=1 // pred_region
      _
    $region41: #{lstm_rnn_forward.1} parent=1 // pred_fallthru
      _
    // Predicated region
    $region42: #{lstm_rnn_forward.1} parent=1 // pred_check
      _
    $region43: #{lstm_rnn_forward.1} parent=1 // pred_check_branch
      %100 = sbr.rel (0) target = $region45
    $region44: #{lstm_rnn_forward.1} parent=1 // pred_region
      %102 = vsyncadd [#allocation20], 0
      %s103 = sshll.u32 %s10, 4
      %s104 = int_to_ptr.hbm [resolvable:$true] %s103
      %s105 = sshll.u32 [#allocation19], 4
      %s106 = int_to_ptr.vmem [resolvable:$true] %s105
      %111 = dma.hbm_to_vmem [thread:$0]  %s104, 2048, %s106, [#allocation20], 128, 128, 8
    $region45: #{lstm_rnn_forward.1} parent=1 // pred_fallthru
      _
    // Predicated region
    $region46: #{lstm_rnn_forward.1} parent=1 // pred_check
      _
    $region47: #{lstm_rnn_forward.1} parent=1 // pred_check_branch
      %113 = sbr.rel (0) target = $region49
    $region48: #{lstm_rnn_forward.1} parent=1 // pred_region
      _
    $region49: #{lstm_rnn_forward.1} parent=1 // pred_fallthru
      _
    // Predicated region
    $region50: #{lstm_rnn_forward.1} parent=1 // pred_check
      _
    $region51: #{lstm_rnn_forward.1} parent=1 // pred_check_branch
      %115 = sbr.rel (0) target = $region53
    $region52: #{lstm_rnn_forward.1} parent=1 // pred_region
      %117 = dma.done [#allocation11], 4096
    $region53: #{lstm_rnn_forward.1} parent=1 // pred_fallthru
      _
    // Predicated region
    $region54: #{lstm_rnn_forward.1} parent=1 // pred_check
      _
    $region55: #{lstm_rnn_forward.1} parent=1 // pred_check_branch
      %119 = sbr.rel (0) target = $region57
    $region56: #{lstm_rnn_forward.1} parent=1 // pred_region
      %121 = dma.done [#allocation14], 4096
    $region57: #{lstm_rnn_forward.1} parent=1 // pred_fallthru
      _
    // Predicated region
    $region58: #{lstm_rnn_forward.1} parent=1 // pred_check
      _
    $region59: #{lstm_rnn_forward.1} parent=1 // pred_check_branch
      %123 = sbr.rel (0) target = $region61
    $region60: #{lstm_rnn_forward.1} parent=1 // pred_region
      %125 = dma.done [#allocation14], 4096
    $region61: #{lstm_rnn_forward.1} parent=1 // pred_fallthru
      _
    // Predicated region
    $region62: #{lstm_rnn_forward.1} parent=1 // pred_check
      _
    $region63: #{lstm_rnn_forward.1} parent=1 // pred_check_branch
      %127 = sbr.rel (0) target = $region65
    $region64: #{lstm_rnn_forward.1} parent=1 // pred_region
      %129 = dma.done [#allocation17], 4096
    $region65: #{lstm_rnn_forward.1} parent=1 // pred_fallthru
      _
    // Predicated region
    $region66: #{lstm_rnn_forward.1} parent=1 // pred_check
      _
    $region67: #{lstm_rnn_forward.1} parent=1 // pred_check_branch
      %131 = sbr.rel (0) target = $region69
    $region68: #{lstm_rnn_forward.1} parent=1 // pred_region
      %133 = dma.done [#allocation17], 4096
    $region69: #{lstm_rnn_forward.1} parent=1 // pred_fallthru
      _
    // Predicated region
    $region70: #{lstm_rnn_forward.1} parent=1 // pred_check
      _
    $region71: #{lstm_rnn_forward.1} parent=1 // pred_check_branch
      %135 = sbr.rel (0) target = $region73
    $region72: #{lstm_rnn_forward.1} parent=1 // pred_region
      %137 = dma.done [#allocation20], 2048
    $region73: #{lstm_rnn_forward.1} parent=1 // pred_fallthru
      _
    %p139 = scmp.eq.s32.totalorder 0, 0
    // Predicated region
    $region74: #{lstm_rnn_forward.1} parent=1 // pred_check
      %p140 = pneg %p139
    $region75: #{lstm_rnn_forward.1} parent=1 // pred_check_branch
      %142 = sbr.rel (%p140) target = $region77
    $region76: #{lstm_rnn_forward.1} parent=1 // pred_region
      %143 = vst [vmem:[#allocation4] sm:$0xff] 0.0
      %144 = vst [vmem:[#allocation5] sm:$0xff] 0.0
      %145 = vst [vmem:[#allocation6] sm:$0xff] 0.0
      %146 = vst [vmem:[#allocation7] sm:$0xff] 0.0
      %147 = vst [vmem:[#allocation8] sm:$0xff] 0.0
      %148 = vst [vmem:[#allocation9] sm:$0xff] 0.0
    $region77: #{lstm_rnn_forward.1} parent=1 // pred_fallthru
      _
    %v149 = vld [vmem:[%s0] sm:$0xff]
    %v150 = vld [vmem:[%s0 + $0x8] sm:$0xff]
    %v151 = vld [vmem:[%s0 + $0x10] sm:$0xff]
    %v152 = vld [vmem:[%s0 + $0x18] sm:$0xff]
    %v153 = vld [vmem:[%s0 + $0x20] sm:$0xff]
    %v154 = vld [vmem:[%s0 + $0x28] sm:$0xff]
    %v155 = vld [vmem:[%s0 + $0x30] sm:$0xff]
    %v156 = vld [vmem:[%s0 + $0x38] sm:$0xff]
    %v157 = vpack.c.bf16 %v150, %v149
    %v158 = vpack.c.bf16 %v152, %v151
    %v159 = vpack.c.bf16 %v154, %v153
    %v160 = vpack.c.bf16 %v156, %v155
    %v161 = vld [vmem:[%s1] sm:$0xff]
    %v162 = vld [vmem:[%s1 + $0x8] sm:$0xff]
    %v163 = vld [vmem:[%s1 + $0x10] sm:$0xff]
    %v164 = vld [vmem:[%s1 + $0x18] sm:$0xff]
    %v165 = vld [vmem:[%s3] sm:$0xf]
    %v167 = vperm.slane %v165, 0
    %v168 = vperm.slane %v165, 1
    %v169 = vperm.slane %v165, 2
    %v170 = vperm.slane %v165, 3
    %v179 = vunpack.c.l.b16 %v161
    %v180 = vunpack.c.h.b16 %v161
    %v181 = vunpack.c.l.b16 %v162
    %v182 = vunpack.c.h.b16 %v162
    %v183 = vunpack.c.l.b16 %v163
    %v184 = vunpack.c.h.b16 %v163
    %v185 = vunpack.c.l.b16 %v164
    %v186 = vunpack.c.h.b16 %v164
    %v187 = vpack.c.b16 %v183, %v179
    %v188 = vpack.c.b16 %v184, %v180
    %v189 = vpack.c.b16 %v185, %v181
    %v190 = vpack.c.b16 %v186, %v182
    %vm195 = vcmask 130048
    %v197 = vsel %vm195, %v157, 0
    %v200 = vsel %vm195, %v158, 0
    %v203 = vsel %vm195, %v159, 0
    %v206 = vsel %vm195, %v160, 0
    %208 = vmatpush.bf16.msra.mxu0 0
    %209 = vmatpush.bf16.msra.mxu0 0
    %210 = vmatpush.bf16.msra.mxu0 0
    %211 = vmatpush.bf16.msra.mxu0 0
    %212 = vmatpush.bf16.msra.mxu0 0
    %213 = vmatpush.bf16.msra.mxu0 0
    %214 = vmatpush.bf16.msra.mxu0 0
    %215 = vmatpush.bf16.msra.mxu0 %v187
    %216 = vmatmul.bf16.gmra.mxu0 %v197
    %v217 = vpop.f32.mrf.mxu0
    %v218 = vadd.f32 %v167, %v217
    %v219 = vpop.f32.mrf.mxu0
    %v220 = vadd.f32 %v167, %v219
    %221 = vmatmul.bf16.gmra.mxu0 %v200
    %v222 = vpop.f32.mrf.mxu0
    %v223 = vadd.f32 %v167, %v222
    %v224 = vpop.f32.mrf.mxu0
    %v225 = vadd.f32 %v167, %v224
    %226 = vmatmul.bf16.gmra.mxu0 %v203
    %v227 = vpop.f32.mrf.mxu0
    %v228 = vadd.f32 %v167, %v227
    %v229 = vpop.f32.mrf.mxu0
    %v230 = vadd.f32 %v167, %v229
    %231 = vmatmul.bf16.gmra.mxu0 %v206
    %v232 = vpop.f32.mrf.mxu0
    %v233 = vadd.f32 %v167, %v232
    %v234 = vpop.f32.mrf.mxu0
    %v235 = vadd.f32 %v167, %v234
    %236 = vdwg.mxu0
    %237 = vmatpush.bf16.msra.mxu0 0
    %238 = vmatpush.bf16.msra.mxu0 0
    %239 = vmatpush.bf16.msra.mxu0 0
    %240 = vmatpush.bf16.msra.mxu0 0
    %241 = vmatpush.bf16.msra.mxu0 0
    %242 = vmatpush.bf16.msra.mxu0 0
    %243 = vmatpush.bf16.msra.mxu0 0
    %244 = vmatpush.bf16.msra.mxu0 %v188
    %245 = vmatmul.bf16.gmra.mxu0 %v197
    %v246 = vpop.f32.mrf.mxu0
    %v247 = vadd.f32 %v168, %v246
    %v248 = vpop.f32.mrf.mxu0
    %v249 = vadd.f32 %v168, %v248
    %250 = vmatmul.bf16.gmra.mxu0 %v200
    %v251 = vpop.f32.mrf.mxu0
    %v252 = vadd.f32 %v168, %v251
    %v253 = vpop.f32.mrf.mxu0
    %v254 = vadd.f32 %v168, %v253
    %255 = vmatmul.bf16.gmra.mxu0 %v203
    %v256 = vpop.f32.mrf.mxu0
    %v257 = vadd.f32 %v168, %v256
    %v258 = vpop.f32.mrf.mxu0
    %v259 = vadd.f32 %v168, %v258
    %260 = vmatmul.bf16.gmra.mxu0 %v206
    %v261 = vpop.f32.mrf.mxu0
    %v262 = vadd.f32 %v168, %v261
    %v263 = vpop.f32.mrf.mxu0
    %v264 = vadd.f32 %v168, %v263
    %265 = vdwg.mxu0
    %266 = vmatpush.bf16.msra.mxu0 0
    %267 = vmatpush.bf16.msra.mxu0 0
    %268 = vmatpush.bf16.msra.mxu0 0
    %269 = vmatpush.bf16.msra.mxu0 0
    %270 = vmatpush.bf16.msra.mxu0 0
    %271 = vmatpush.bf16.msra.mxu0 0
    %272 = vmatpush.bf16.msra.mxu0 0
    %273 = vmatpush.bf16.msra.mxu0 %v189
    %274 = vmatmul.bf16.gmra.mxu0 %v197
    %v275 = vpop.f32.mrf.mxu0
    %v276 = vadd.f32 %v169, %v275
    %v277 = vpop.f32.mrf.mxu0
    %v278 = vadd.f32 %v169, %v277
    %279 = vmatmul.bf16.gmra.mxu0 %v200
    %v280 = vpop.f32.mrf.mxu0
    %v281 = vadd.f32 %v169, %v280
    %v282 = vpop.f32.mrf.mxu0
    %v283 = vadd.f32 %v169, %v282
    %284 = vmatmul.bf16.gmra.mxu0 %v203
    %v285 = vpop.f32.mrf.mxu0
    %v286 = vadd.f32 %v169, %v285
    %v287 = vpop.f32.mrf.mxu0
    %v288 = vadd.f32 %v169, %v287
    %289 = vmatmul.bf16.gmra.mxu0 %v206
    %v290 = vpop.f32.mrf.mxu0
    %v291 = vadd.f32 %v169, %v290
    %v292 = vpop.f32.mrf.mxu0
    %v293 = vadd.f32 %v169, %v292
    %294 = vdwg.mxu0
    %295 = vmatpush.bf16.msra.mxu0 0
    %296 = vmatpush.bf16.msra.mxu0 0
    %297 = vmatpush.bf16.msra.mxu0 0
    %298 = vmatpush.bf16.msra.mxu0 0
    %299 = vmatpush.bf16.msra.mxu0 0
    %300 = vmatpush.bf16.msra.mxu0 0
    %301 = vmatpush.bf16.msra.mxu0 0
    %302 = vmatpush.bf16.msra.mxu0 %v190
    %303 = vmatmul.bf16.gmra.mxu0 %v197
    %v304 = vpop.f32.mrf.mxu0
    %v305 = vadd.f32 %v170, %v304
    %v306 = vpop.f32.mrf.mxu0
    %v307 = vadd.f32 %v170, %v306
    %308 = vmatmul.bf16.gmra.mxu0 %v200
    %v309 = vpop.f32.mrf.mxu0
    %v310 = vadd.f32 %v170, %v309
    %v311 = vpop.f32.mrf.mxu0
    %v312 = vadd.f32 %v170, %v311
    %313 = vmatmul.bf16.gmra.mxu0 %v203
    %v314 = vpop.f32.mrf.mxu0
    %v315 = vadd.f32 %v170, %v314
    %v316 = vpop.f32.mrf.mxu0
    %v317 = vadd.f32 %v170, %v316
    %318 = vmatmul.bf16.gmra.mxu0 %v206
    %v319 = vpop.f32.mrf.mxu0
    %v320 = vadd.f32 %v170, %v319
    %v321 = vpop.f32.mrf.mxu0
    %v322 = vadd.f32 %v170, %v321
    %323 = vdwg.mxu0
    %324 = vst [vmem:[#allocation2] sm:$0xff] %v218
    %325 = vst [vmem:[#allocation2 + $0x8] sm:$0xff] %v247
    %326 = vst [vmem:[#allocation2 + $0x10] sm:$0xff] %v276
    %327 = vst [vmem:[#allocation2 + $0x18] sm:$0xff] %v305
    %328 = vst [vmem:[#allocation2 + $0x20] sm:$0xff] %v220
    %329 = vst [vmem:[#allocation2 + $0x28] sm:$0xff] %v249
    %330 = vst [vmem:[#allocation2 + $0x30] sm:$0xff] %v278
    %331 = vst [vmem:[#allocation2 + $0x38] sm:$0xff] %v307
    %332 = vst [vmem:[#allocation2 + $0x40] sm:$0xff] %v223
    %333 = vst [vmem:[#allocation2 + $0x48] sm:$0xff] %v252
    %334 = vst [vmem:[#allocation2 + $0x50] sm:$0xff] %v281
    %335 = vst [vmem:[#allocation2 + $0x58] sm:$0xff] %v310
    %336 = vst [vmem:[#allocation2 + $0x60] sm:$0xff] %v225
    %337 = vst [vmem:[#allocation2 + $0x68] sm:$0xff] %v254
    %338 = vst [vmem:[#allocation2 + $0x70] sm:$0xff] %v283
    %339 = vst [vmem:[#allocation2 + $0x78] sm:$0xff] %v312
    %340 = vst [vmem:[#allocation2 + $0x80] sm:$0xff] %v228
    %341 = vst [vmem:[#allocation2 + $0x88] sm:$0xff] %v257
    %342 = vst [vmem:[#allocation2 + $0x90] sm:$0xff] %v286
    %343 = vst [vmem:[#allocation2 + $0x98] sm:$0xff] %v315
    %344 = vst [vmem:[#allocation2 + $0xa0] sm:$0xff] %v230
    %345 = vst [vmem:[#allocation2 + $0xa8] sm:$0xff] %v259
    %346 = vst [vmem:[#allocation2 + $0xb0] sm:$0xff] %v288
    %347 = vst [vmem:[#allocation2 + $0xb8] sm:$0xff] %v317
    %348 = vst [vmem:[#allocation2 + $0xc0] sm:$0xff] %v233
    %349 = vst [vmem:[#allocation2 + $0xc8] sm:$0xff] %v262
    %350 = vst [vmem:[#allocation2 + $0xd0] sm:$0xff] %v291
    %351 = vst [vmem:[#allocation2 + $0xd8] sm:$0xff] %v320
    %352 = vst [vmem:[#allocation2 + $0xe0] sm:$0xff] %v235
    %353 = vst [vmem:[#allocation2 + $0xe8] sm:$0xff] %v264
    %354 = vst [vmem:[#allocation2 + $0xf0] sm:$0xff] %v293
    %355 = vst [vmem:[#allocation2 + $0xf8] sm:$0xff] %v322
    %v356 = vld [vmem:[#allocation4] sm:$0xff]
    %v357 = vld [vmem:[#allocation5] sm:$0xff]
    %s358 = smul.u32 0, 4
    %s359 = smul.addr %s358, 8
    %s360 = scalar_lea.vmem [#allocation2], %s359
    %v361 = vld [vmem:[%s360] sm:$0xff]
    %v362 = vld [vmem:[%s360 + $0x8] sm:$0xff]
    %v363 = vld [vmem:[%s360 + $0x10] sm:$0xff]
    %v364 = vld [vmem:[%s360 + $0x18] sm:$0xff]
    %v365 = vpack.c.bf16 %v356, %v356
    %v366 = vld [vmem:[#allocation10] sm:$0xff]
    %v367 = vld [vmem:[#allocation10 + $0x8] sm:$0xff]
    %v368 = vld [vmem:[#allocation10 + $0x10] sm:$0xff]
    %v369 = vld [vmem:[#allocation10 + $0x18] sm:$0xff]
    %v370 = vld [vmem:[#allocation10 + $0x20] sm:$0xff]
    %v371 = vld [vmem:[#allocation10 + $0x28] sm:$0xff]
    %v372 = vld [vmem:[#allocation10 + $0x30] sm:$0xff]
    %v373 = vld [vmem:[#allocation10 + $0x38] sm:$0xff]
    %v374 = vld [vmem:[#allocation10 + $0x40] sm:$0xff]
    %v375 = vld [vmem:[#allocation10 + $0x48] sm:$0xff]
    %v376 = vld [vmem:[#allocation10 + $0x50] sm:$0xff]
    %v377 = vld [vmem:[#allocation10 + $0x58] sm:$0xff]
    %v378 = vld [vmem:[#allocation10 + $0x60] sm:$0xff]
    %v379 = vld [vmem:[#allocation10 + $0x68] sm:$0xff]
    %v380 = vld [vmem:[#allocation10 + $0x70] sm:$0xff]
    %v381 = vld [vmem:[#allocation10 + $0x78] sm:$0xff]
    %v382 = vld [vmem:[#allocation10 + $0x80] sm:$0xff]
    %v383 = vld [vmem:[#allocation10 + $0x88] sm:$0xff]
    %v384 = vld [vmem:[#allocation10 + $0x90] sm:$0xff]
    %v385 = vld [vmem:[#allocation10 + $0x98] sm:$0xff]
    %v386 = vld [vmem:[#allocation10 + $0xa0] sm:$0xff]
    %v387 = vld [vmem:[#allocation10 + $0xa8] sm:$0xff]
    %v388 = vld [vmem:[#allocation10 + $0xb0] sm:$0xff]
    %v389 = vld [vmem:[#allocation10 + $0xb8] sm:$0xff]
    %v390 = vld [vmem:[#allocation10 + $0xc0] sm:$0xff]
    %v391 = vld [vmem:[#allocation10 + $0xc8] sm:$0xff]
    %v392 = vld [vmem:[#allocation10 + $0xd0] sm:$0xff]
    %v393 = vld [vmem:[#allocation10 + $0xd8] sm:$0xff]
    %v394 = vld [vmem:[#allocation10 + $0xe0] sm:$0xff]
    %v395 = vld [vmem:[#allocation10 + $0xe8] sm:$0xff]
    %v396 = vld [vmem:[#allocation10 + $0xf0] sm:$0xff]
    %v397 = vld [vmem:[#allocation10 + $0xf8] sm:$0xff]
    %v430 = vunpack.c.l.b16 %v366
    %v431 = vunpack.c.h.b16 %v366
    %v432 = vunpack.c.l.b16 %v367
    %v433 = vunpack.c.h.b16 %v367
    %v434 = vunpack.c.l.b16 %v368
    %v435 = vunpack.c.h.b16 %v368
    %v436 = vunpack.c.l.b16 %v369
    %v437 = vunpack.c.h.b16 %v369
    %v438 = vunpack.c.l.b16 %v370
    %v439 = vunpack.c.h.b16 %v370
    %v440 = vunpack.c.l.b16 %v371
    %v441 = vunpack.c.h.b16 %v371
    %v442 = vunpack.c.l.b16 %v372
    %v443 = vunpack.c.h.b16 %v372
    %v444 = vunpack.c.l.b16 %v373
    %v445 = vunpack.c.h.b16 %v373
    %v446 = vunpack.c.l.b16 %v374
    %v447 = vunpack.c.h.b16 %v374
    %v448 = vunpack.c.l.b16 %v375
    %v449 = vunpack.c.h.b16 %v375
    %v450 = vunpack.c.l.b16 %v376
    %v451 = vunpack.c.h.b16 %v376
    %v452 = vunpack.c.l.b16 %v377
    %v453 = vunpack.c.h.b16 %v377
    %v454 = vunpack.c.l.b16 %v378
    %v455 = vunpack.c.h.b16 %v378
    %v456 = vunpack.c.l.b16 %v379
    %v457 = vunpack.c.h.b16 %v379
    %v458 = vunpack.c.l.b16 %v380
    %v459 = vunpack.c.h.b16 %v380
    %v460 = vunpack.c.l.b16 %v381
    %v461 = vunpack.c.h.b16 %v381
    %v462 = vunpack.c.l.b16 %v382
    %v463 = vunpack.c.h.b16 %v382
    %v464 = vunpack.c.l.b16 %v383
    %v465 = vunpack.c.h.b16 %v383
    %v466 = vunpack.c.l.b16 %v384
    %v467 = vunpack.c.h.b16 %v384
    %v468 = vunpack.c.l.b16 %v385
    %v469 = vunpack.c.h.b16 %v385
    %v470 = vunpack.c.l.b16 %v386
    %v471 = vunpack.c.h.b16 %v386
    %v472 = vunpack.c.l.b16 %v387
    %v473 = vunpack.c.h.b16 %v387
    %v474 = vunpack.c.l.b16 %v388
    %v475 = vunpack.c.h.b16 %v388
    %v476 = vunpack.c.l.b16 %v389
    %v477 = vunpack.c.h.b16 %v389
    %v478 = vunpack.c.l.b16 %v390
    %v479 = vunpack.c.h.b16 %v390
    %v480 = vunpack.c.l.b16 %v391
    %v481 = vunpack.c.h.b16 %v391
    %v482 = vunpack.c.l.b16 %v392
    %v483 = vunpack.c.h.b16 %v392
    %v484 = vunpack.c.l.b16 %v393
    %v485 = vunpack.c.h.b16 %v393
    %v486 = vunpack.c.l.b16 %v394
    %v487 = vunpack.c.h.b16 %v394
    %v488 = vunpack.c.l.b16 %v395
    %v489 = vunpack.c.h.b16 %v395
    %v490 = vunpack.c.l.b16 %v396
    %v491 = vunpack.c.h.b16 %v396
    %v492 = vunpack.c.l.b16 %v397
    %v493 = vunpack.c.h.b16 %v397
    %v494 = vpack.c.b16 %v434, %v430
    %v495 = vpack.c.b16 %v435, %v431
    %v496 = vpack.c.b16 %v436, %v432
    %v497 = vpack.c.b16 %v437, %v433
    %v498 = vpack.c.b16 %v442, %v438
    %v499 = vpack.c.b16 %v443, %v439
    %v500 = vpack.c.b16 %v444, %v440
    %v501 = vpack.c.b16 %v445, %v441
    %v502 = vpack.c.b16 %v450, %v446
    %v503 = vpack.c.b16 %v451, %v447
    %v504 = vpack.c.b16 %v452, %v448
    %v505 = vpack.c.b16 %v453, %v449
    %v506 = vpack.c.b16 %v458, %v454
    %v507 = vpack.c.b16 %v459, %v455
    %v508 = vpack.c.b16 %v460, %v456
    %v509 = vpack.c.b16 %v461, %v457
    %v510 = vpack.c.b16 %v466, %v462
    %v511 = vpack.c.b16 %v467, %v463
    %v512 = vpack.c.b16 %v468, %v464
    %v513 = vpack.c.b16 %v469, %v465
    %v514 = vpack.c.b16 %v474, %v470
    %v515 = vpack.c.b16 %v475, %v471
    %v516 = vpack.c.b16 %v476, %v472
    %v517 = vpack.c.b16 %v477, %v473
    %v518 = vpack.c.b16 %v482, %v478
    %v519 = vpack.c.b16 %v483, %v479
    %v520 = vpack.c.b16 %v484, %v480
    %v521 = vpack.c.b16 %v485, %v481
    %v522 = vpack.c.b16 %v490, %v486
    %v523 = vpack.c.b16 %v491, %v487
    %v524 = vpack.c.b16 %v492, %v488
    %v525 = vpack.c.b16 %v493, %v489
    %558 = vmatpush.bf16.msra.mxu0 %v522
    %559 = vmatpush.bf16.msra.mxu0 %v518
    %560 = vmatpush.bf16.msra.mxu0 %v514
    %561 = vmatpush.bf16.msra.mxu0 %v510
    %562 = vmatpush.bf16.msra.mxu0 %v506
    %563 = vmatpush.bf16.msra.mxu0 %v502
    %564 = vmatpush.bf16.msra.mxu0 %v498
    %565 = vmatpush.bf16.msra.mxu0 %v494
    %566 = vmatmul.bf16.gmra.mxu0 %v365
    %v567 = vpop.f32.mrf.mxu0
    %v568 = vadd.f32 0.0, %v567
    %v569 = vpop.f32.mrf.mxu0
    %570 = vdwg.mxu0
    %571 = vmatpush.bf16.msra.mxu0 %v523
    %572 = vmatpush.bf16.msra.mxu0 %v519
    %573 = vmatpush.bf16.msra.mxu0 %v515
    %574 = vmatpush.bf16.msra.mxu0 %v511
    %575 = vmatpush.bf16.msra.mxu0 %v507
    %576 = vmatpush.bf16.msra.mxu0 %v503
    %577 = vmatpush.bf16.msra.mxu0 %v499
    %578 = vmatpush.bf16.msra.mxu0 %v495
    %579 = vmatmul.bf16.gmra.mxu0 %v365
    %v580 = vpop.f32.mrf.mxu0
    %v581 = vadd.f32 0.0, %v580
    %v582 = vpop.f32.mrf.mxu0
    %583 = vdwg.mxu0
    %584 = vmatpush.bf16.msra.mxu0 %v524
    %585 = vmatpush.bf16.msra.mxu0 %v520
    %586 = vmatpush.bf16.msra.mxu0 %v516
    %587 = vmatpush.bf16.msra.mxu0 %v512
    %588 = vmatpush.bf16.msra.mxu0 %v508
    %589 = vmatpush.bf16.msra.mxu0 %v504
    %590 = vmatpush.bf16.msra.mxu0 %v500
    %591 = vmatpush.bf16.msra.mxu0 %v496
    %592 = vmatmul.bf16.gmra.mxu0 %v365
    %v593 = vpop.f32.mrf.mxu0
    %v594 = vadd.f32 0.0, %v593
    %v595 = vpop.f32.mrf.mxu0
    %596 = vdwg.mxu0
    %597 = vmatpush.bf16.msra.mxu0 %v525
    %598 = vmatpush.bf16.msra.mxu0 %v521
    %599 = vmatpush.bf16.msra.mxu0 %v517
    %600 = vmatpush.bf16.msra.mxu0 %v513
    %601 = vmatpush.bf16.msra.mxu0 %v509
    %602 = vmatpush.bf16.msra.mxu0 %v505
    %603 = vmatpush.bf16.msra.mxu0 %v501
    %604 = vmatpush.bf16.msra.mxu0 %v497
    %605 = vmatmul.bf16.gmra.mxu0 %v365
    %v606 = vpop.f32.mrf.mxu0
    %v607 = vadd.f32 0.0, %v606
    %v608 = vpop.f32.mrf.mxu0
    %609 = vdwg.mxu0
    %v610 = vadd.f32 %v361, %v568
    %v611 = vadd.f32 %v362, %v581
    %v612 = vadd.f32 %v363, %v594
    %v613 = vadd.f32 %v364, %v607
    %v614 = vxor.u32 %v610, 2147483648
    %v615 = vmul.f32 %v614, 1.442695
    %v616 = vpow.pop %v615
    %v617 = vadd.f32 %v616, 1.0
    %v618 = vrcp.pop %v617
    %v619 = vmul.f32 %v617, %v618
    %v620 = vsub.f32 1.0, %v619
    %v621 = vmul.f32 %v618, %v620
    %v622 = vadd.f32 %v618, %v621
    %vm623 = vweird.f32 %v617
    %vm624 = vweird.f32 %v618
    %vm625 = vmor %vm623, %vm624
    %v626 = vsel %vm625, %v618, %v622
    %v627 = vand.u32 2147483647, %v617
    %vm628 = vcmp.eq.f32.partialorder %v627, 8.507059e+37
    %v629 = vand.u32 %v617, 2147483648
    %v630 = vor.u32 1.1754944e-38, %v629
    %v631 = vsel %vm628, %v630, %v626
    %v632 = vmul.f32 1.0, %v631
    %v633 = vxor.u32 %v611, 2147483648
    %v634 = vmul.f32 %v633, 1.442695
    %v635 = vpow.pop %v634
    %v636 = vadd.f32 %v635, 1.0
    %v637 = vrcp.pop %v636
    %v638 = vmul.f32 %v636, %v637
    %v639 = vsub.f32 1.0, %v638
    %v640 = vmul.f32 %v637, %v639
    %v641 = vadd.f32 %v637, %v640
    %vm642 = vweird.f32 %v636
    %vm643 = vweird.f32 %v637
    %vm644 = vmor %vm642, %vm643
    %v645 = vsel %vm644, %v637, %v641
    %v646 = vand.u32 2147483647, %v636
    %vm647 = vcmp.eq.f32.partialorder %v646, 8.507059e+37
    %v648 = vand.u32 %v636, 2147483648
    %v649 = vor.u32 1.1754944e-38, %v648
    %v650 = vsel %vm647, %v649, %v645
    %v651 = vmul.f32 1.0, %v650
    %v652 = vtanh.pop %v612
    %v653 = vxor.u32 %v613, 2147483648
    %v654 = vmul.f32 %v653, 1.442695
    %v655 = vpow.pop %v654
    %v656 = vadd.f32 %v655, 1.0
    %v657 = vrcp.pop %v656
    %v658 = vmul.f32 %v656, %v657
    %v659 = vsub.f32 1.0, %v658
    %v660 = vmul.f32 %v657, %v659
    %v661 = vadd.f32 %v657, %v660
    %vm662 = vweird.f32 %v656
    %vm663 = vweird.f32 %v657
    %vm664 = vmor %vm662, %vm663
    %v665 = vsel %vm664, %v657, %v661
    %v666 = vand.u32 2147483647, %v656
    %vm667 = vcmp.eq.f32.partialorder %v666, 8.507059e+37
    %v668 = vand.u32 %v656, 2147483648
    %v669 = vor.u32 1.1754944e-38, %v668
    %v670 = vsel %vm667, %v669, %v665
    %v671 = vmul.f32 1.0, %v670
    %v672 = vmul.f32 %v651, %v357
    %v673 = vmul.f32 %v632, %v652
    %v674 = vadd.f32 %v672, %v673
    %v675 = vtanh.pop %v674
    %v676 = vmul.f32 %v671, %v675
    %677 = vst [vmem:[#allocation3] sm:$0xff] %v676
    %s678 = smul.u32 1, 4
    %s679 = smul.addr %s678, 8
    %s680 = scalar_lea.vmem [#allocation2], %s679
    %v681 = vld [vmem:[%s680] sm:$0xff]
    %v682 = vld [vmem:[%s680 + $0x8] sm:$0xff]
    %v683 = vld [vmem:[%s680 + $0x10] sm:$0xff]
    %v684 = vld [vmem:[%s680 + $0x18] sm:$0xff]
    %v685 = vpack.c.bf16 %v676, %v676
    %v686 = vld [vmem:[#allocation10] sm:$0xff]
    %v687 = vld [vmem:[#allocation10 + $0x8] sm:$0xff]
    %v688 = vld [vmem:[#allocation10 + $0x10] sm:$0xff]
    %v689 = vld [vmem:[#allocation10 + $0x18] sm:$0xff]
    %v690 = vld [vmem:[#allocation10 + $0x20] sm:$0xff]
    %v691 = vld [vmem:[#allocation10 + $0x28] sm:$0xff]
    %v692 = vld [vmem:[#allocation10 + $0x30] sm:$0xff]
    %v693 = vld [vmem:[#allocation10 + $0x38] sm:$0xff]
    %v694 = vld [vmem:[#allocation10 + $0x40] sm:$0xff]
    %v695 = vld [vmem:[#allocation10 + $0x48] sm:$0xff]
    %v696 = vld [vmem:[#allocation10 + $0x50] sm:$0xff]
    %v697 = vld [vmem:[#allocation10 + $0x58] sm:$0xff]
    %v698 = vld [vmem:[#allocation10 + $0x60] sm:$0xff]
    %v699 = vld [vmem:[#allocation10 + $0x68] sm:$0xff]
    %v700 = vld [vmem:[#allocation10 + $0x70] sm:$0xff]
    %v701 = vld [vmem:[#allocation10 + $0x78] sm:$0xff]
    %v702 = vld [vmem:[#allocation10 + $0x80] sm:$0xff]
    %v703 = vld [vmem:[#allocation10 + $0x88] sm:$0xff]
    %v704 = vld [vmem:[#allocation10 + $0x90] sm:$0xff]
    %v705 = vld [vmem:[#allocation10 + $0x98] sm:$0xff]
    %v706 = vld [vmem:[#allocation10 + $0xa0] sm:$0xff]
    %v707 = vld [vmem:[#allocation10 + $0xa8] sm:$0xff]
    %v708 = vld [vmem:[#allocation10 + $0xb0] sm:$0xff]
    %v709 = vld [vmem:[#allocation10 + $0xb8] sm:$0xff]
    %v710 = vld [vmem:[#allocation10 + $0xc0] sm:$0xff]
    %v711 = vld [vmem:[#allocation10 + $0xc8] sm:$0xff]
    %v712 = vld [vmem:[#allocation10 + $0xd0] sm:$0xff]
    %v713 = vld [vmem:[#allocation10 + $0xd8] sm:$0xff]
    %v714 = vld [vmem:[#allocation10 + $0xe0] sm:$0xff]
    %v715 = vld [vmem:[#allocation10 + $0xe8] sm:$0xff]
    %v716 = vld [vmem:[#allocation10 + $0xf0] sm:$0xff]
    %v717 = vld [vmem:[#allocation10 + $0xf8] sm:$0xff]
    %v750 = vunpack.c.l.b16 %v686
    %v751 = vunpack.c.h.b16 %v686
    %v752 = vunpack.c.l.b16 %v687
    %v753 = vunpack.c.h.b16 %v687
    %v754 = vunpack.c.l.b16 %v688
    %v755 = vunpack.c.h.b16 %v688
    %v756 = vunpack.c.l.b16 %v689
    %v757 = vunpack.c.h.b16 %v689
    %v758 = vunpack.c.l.b16 %v690
    %v759 = vunpack.c.h.b16 %v690
    %v760 = vunpack.c.l.b16 %v691
    %v761 = vunpack.c.h.b16 %v691
    %v762 = vunpack.c.l.b16 %v692
    %v763 = vunpack.c.h.b16 %v692
    %v764 = vunpack.c.l.b16 %v693
    %v765 = vunpack.c.h.b16 %v693
    %v766 = vunpack.c.l.b16 %v694
    %v767 = vunpack.c.h.b16 %v694
    %v768 = vunpack.c.l.b16 %v695
    %v769 = vunpack.c.h.b16 %v695
    %v770 = vunpack.c.l.b16 %v696
    %v771 = vunpack.c.h.b16 %v696
    %v772 = vunpack.c.l.b16 %v697
    %v773 = vunpack.c.h.b16 %v697
    %v774 = vunpack.c.l.b16 %v698
    %v775 = vunpack.c.h.b16 %v698
    %v776 = vunpack.c.l.b16 %v699
    %v777 = vunpack.c.h.b16 %v699
    %v778 = vunpack.c.l.b16 %v700
    %v779 = vunpack.c.h.b16 %v700
    %v780 = vunpack.c.l.b16 %v701
    %v781 = vunpack.c.h.b16 %v701
    %v782 = vunpack.c.l.b16 %v702
    %v783 = vunpack.c.h.b16 %v702
    %v784 = vunpack.c.l.b16 %v703
    %v785 = vunpack.c.h.b16 %v703
    %v786 = vunpack.c.l.b16 %v704
    %v787 = vunpack.c.h.b16 %v704
    %v788 = vunpack.c.l.b16 %v705
    %v789 = vunpack.c.h.b16 %v705
    %v790 = vunpack.c.l.b16 %v706
    %v791 = vunpack.c.h.b16 %v706
    %v792 = vunpack.c.l.b16 %v707
    %v793 = vunpack.c.h.b16 %v707
    %v794 = vunpack.c.l.b16 %v708
    %v795 = vunpack.c.h.b16 %v708
    %v796 = vunpack.c.l.b16 %v709
    %v797 = vunpack.c.h.b16 %v709
    %v798 = vunpack.c.l.b16 %v710
    %v799 = vunpack.c.h.b16 %v710
    %v800 = vunpack.c.l.b16 %v711
    %v801 = vunpack.c.h.b16 %v711
    %v802 = vunpack.c.l.b16 %v712
    %v803 = vunpack.c.h.b16 %v712
    %v804 = vunpack.c.l.b16 %v713
    %v805 = vunpack.c.h.b16 %v713
    %v806 = vunpack.c.l.b16 %v714
    %v807 = vunpack.c.h.b16 %v714
    %v808 = vunpack.c.l.b16 %v715
    %v809 = vunpack.c.h.b16 %v715
    %v810 = vunpack.c.l.b16 %v716
    %v811 = vunpack.c.h.b16 %v716
    %v812 = vunpack.c.l.b16 %v717
    %v813 = vunpack.c.h.b16 %v717
    %v814 = vpack.c.b16 %v754, %v750
    %v815 = vpack.c.b16 %v755, %v751
    %v816 = vpack.c.b16 %v756, %v752
    %v817 = vpack.c.b16 %v757, %v753
    %v818 = vpack.c.b16 %v762, %v758
    %v819 = vpack.c.b16 %v763, %v759
    %v820 = vpack.c.b16 %v764, %v760
    %v821 = vpack.c.b16 %v765, %v761
    %v822 = vpack.c.b16 %v770, %v766
    %v823 = vpack.c.b16 %v771, %v767
    %v824 = vpack.c.b16 %v772, %v768
    %v825 = vpack.c.b16 %v773, %v769
    %v826 = vpack.c.b16 %v778, %v774
    %v827 = vpack.c.b16 %v779, %v775
    %v828 = vpack.c.b16 %v780, %v776
    %v829 = vpack.c.b16 %v781, %v777
    %v830 = vpack.c.b16 %v786, %v782
    %v831 = vpack.c.b16 %v787, %v783
    %v832 = vpack.c.b16 %v788, %v784
    %v833 = vpack.c.b16 %v789, %v785
    %v834 = vpack.c.b16 %v794, %v790
    %v835 = vpack.c.b16 %v795, %v791
    %v836 = vpack.c.b16 %v796, %v792
    %v837 = vpack.c.b16 %v797, %v793
    %v838 = vpack.c.b16 %v802, %v798
    %v839 = vpack.c.b16 %v803, %v799
    %v840 = vpack.c.b16 %v804, %v800
    %v841 = vpack.c.b16 %v805, %v801
    %v842 = vpack.c.b16 %v810, %v806
    %v843 = vpack.c.b16 %v811, %v807
    %v844 = vpack.c.b16 %v812, %v808
    %v845 = vpack.c.b16 %v813, %v809
    %878 = vmatpush.bf16.msra.mxu0 %v842
    %879 = vmatpush.bf16.msra.mxu0 %v838
    %880 = vmatpush.bf16.msra.mxu0 %v834
    %881 = vmatpush.bf16.msra.mxu0 %v830
    %882 = vmatpush.bf16.msra.mxu0 %v826
    %883 = vmatpush.bf16.msra.mxu0 %v822
    %884 = vmatpush.bf16.msra.mxu0 %v818
    %885 = vmatpush.bf16.msra.mxu0 %v814
    %886 = vmatmul.bf16.gmra.mxu0 %v685
    %v887 = vpop.f32.mrf.mxu0
    %v888 = vadd.f32 0.0, %v887
    %v889 = vpop.f32.mrf.mxu0
    %890 = vdwg.mxu0
    %891 = vmatpush.bf16.msra.mxu0 %v843
    %892 = vmatpush.bf16.msra.mxu0 %v839
    %893 = vmatpush.bf16.msra.mxu0 %v835
    %894 = vmatpush.bf16.msra.mxu0 %v831
    %895 = vmatpush.bf16.msra.mxu0 %v827
    %896 = vmatpush.bf16.msra.mxu0 %v823
    %897 = vmatpush.bf16.msra.mxu0 %v819
    %898 = vmatpush.bf16.msra.mxu0 %v815
    %899 = vmatmul.bf16.gmra.mxu0 %v685
    %v900 = vpop.f32.mrf.mxu0
    %v901 = vadd.f32 0.0, %v900
    %v902 = vpop.f32.mrf.mxu0
    %903 = vdwg.mxu0
    %904 = vmatpush.bf16.msra.mxu0 %v844
    %905 = vmatpush.bf16.msra.mxu0 %v840
    %906 = vmatpush.bf16.msra.mxu0 %v836
    %907 = vmatpush.bf16.msra.mxu0 %v832
    %908 = vmatpush.bf16.msra.mxu0 %v828
    %909 = vmatpush.bf16.msra.mxu0 %v824
    %910 = vmatpush.bf16.msra.mxu0 %v820
    %911 = vmatpush.bf16.msra.mxu0 %v816
    %912 = vmatmul.bf16.gmra.mxu0 %v685
    %v913 = vpop.f32.mrf.mxu0
    %v914 = vadd.f32 0.0, %v913
    %v915 = vpop.f32.mrf.mxu0
    %916 = vdwg.mxu0
    %917 = vmatpush.bf16.msra.mxu0 %v845
    %918 = vmatpush.bf16.msra.mxu0 %v841
    %919 = vmatpush.bf16.msra.mxu0 %v837
    %920 = vmatpush.bf16.msra.mxu0 %v833
    %921 = vmatpush.bf16.msra.mxu0 %v829
    %922 = vmatpush.bf16.msra.mxu0 %v825
    %923 = vmatpush.bf16.msra.mxu0 %v821
    %924 = vmatpush.bf16.msra.mxu0 %v817
    %925 = vmatmul.bf16.gmra.mxu0 %v685
    %v926 = vpop.f32.mrf.mxu0
    %v927 = vadd.f32 0.0, %v926
    %v928 = vpop.f32.mrf.mxu0
    %929 = vdwg.mxu0
    %v930 = vadd.f32 %v681, %v888
    %v931 = vadd.f32 %v682, %v901
    %v932 = vadd.f32 %v683, %v914
    %v933 = vadd.f32 %v684, %v927
    %v934 = vxor.u32 %v930, 2147483648
    %v935 = vmul.f32 %v934, 1.442695
    %v936 = vpow.pop %v935
    %v937 = vadd.f32 %v936, 1.0
    %v938 = vrcp.pop %v937
    %v939 = vmul.f32 %v937, %v938
    %v940 = vsub.f32 1.0, %v939
    %v941 = vmul.f32 %v938, %v940
    %v942 = vadd.f32 %v938, %v941
    %vm943 = vweird.f32 %v937
    %vm944 = vweird.f32 %v938
    %vm945 = vmor %vm943, %vm944
    %v946 = vsel %vm945, %v938, %v942
    %v947 = vand.u32 2147483647, %v937
    %vm948 = vcmp.eq.f32.partialorder %v947, 8.507059e+37
    %v949 = vand.u32 %v937, 2147483648
    %v950 = vor.u32 1.1754944e-38, %v949
    %v951 = vsel %vm948, %v950, %v946
    %v952 = vmul.f32 1.0, %v951
    %v953 = vxor.u32 %v931, 2147483648
    %v954 = vmul.f32 %v953, 1.442695
    %v955 = vpow.pop %v954
    %v956 = vadd.f32 %v955, 1.0
    %v957 = vrcp.pop %v956
    %v958 = vmul.f32 %v956, %v957
    %v959 = vsub.f32 1.0, %v958
    %v960 = vmul.f32 %v957, %v959
    %v961 = vadd.f32 %v957, %v960
    %vm962 = vweird.f32 %v956
    %vm963 = vweird.f32 %v957
    %vm964 = vmor %vm962, %vm963
    %v965 = vsel %vm964, %v957, %v961
    %v966 = vand.u32 2147483647, %v956
    %vm967 = vcmp.eq.f32.partialorder %v966, 8.507059e+37
    %v968 = vand.u32 %v956, 2147483648
    %v969 = vor.u32 1.1754944e-38, %v968
    %v970 = vsel %vm967, %v969, %v965
    %v971 = vmul.f32 1.0, %v970
    %v972 = vtanh.pop %v932
    %v973 = vxor.u32 %v933, 2147483648
    %v974 = vmul.f32 %v973, 1.442695
    %v975 = vpow.pop %v974
    %v976 = vadd.f32 %v975, 1.0
    %v977 = vrcp.pop %v976
    %v978 = vmul.f32 %v976, %v977
    %v979 = vsub.f32 1.0, %v978
    %v980 = vmul.f32 %v977, %v979
    %v981 = vadd.f32 %v977, %v980
    %vm982 = vweird.f32 %v976
    %vm983 = vweird.f32 %v977
    %vm984 = vmor %vm982, %vm983
    %v985 = vsel %vm984, %v977, %v981
    %v986 = vand.u32 2147483647, %v976
    %vm987 = vcmp.eq.f32.partialorder %v986, 8.507059e+37
    %v988 = vand.u32 %v976, 2147483648
    %v989 = vor.u32 1.1754944e-38, %v988
    %v990 = vsel %vm987, %v989, %v985
    %v991 = vmul.f32 1.0, %v990
    %v992 = vmul.f32 %v971, %v674
    %v993 = vmul.f32 %v952, %v972
    %v994 = vadd.f32 %v992, %v993
    %v995 = vtanh.pop %v994
    %v996 = vmul.f32 %v991, %v995
    %s997 = scalar_lea.vmem [#allocation3], 8
    %998 = vst [vmem:[%s997] sm:$0xff] %v996
    %s999 = smul.u32 2, 4
    %s1000 = smul.addr %s999, 8
    %s1001 = scalar_lea.vmem [#allocation2], %s1000
    %v1002 = vld [vmem:[%s1001] sm:$0xff]
    %v1003 = vld [vmem:[%s1001 + $0x8] sm:$0xff]
    %v1004 = vld [vmem:[%s1001 + $0x10] sm:$0xff]
    %v1005 = vld [vmem:[%s1001 + $0x18] sm:$0xff]
    %v1006 = vpack.c.bf16 %v996, %v996
    %v1007 = vld [vmem:[#allocation10] sm:$0xff]
    %v1008 = vld [vmem:[#allocation10 + $0x8] sm:$0xff]
    %v1009 = vld [vmem:[#allocation10 + $0x10] sm:$0xff]
    %v1010 = vld [vmem:[#allocation10 + $0x18] sm:$0xff]
    %v1011 = vld [vmem:[#allocation10 + $0x20] sm:$0xff]
    %v1012 = vld [vmem:[#allocation10 + $0x28] sm:$0xff]
    %v1013 = vld [vmem:[#allocation10 + $0x30] sm:$0xff]
    %v1014 = vld [vmem:[#allocation10 + $0x38] sm:$0xff]
    %v1015 = vld [vmem:[#allocation10 + $0x40] sm:$0xff]
    %v1016 = vld [vmem:[#allocation10 + $0x48] sm:$0xff]
    %v1017 = vld [vmem:[#allocation10 + $0x50] sm:$0xff]
    %v1018 = vld [vmem:[#allocation10 + $0x58] sm:$0xff]
    %v1019 = vld [vmem:[#allocation10 + $0x60] sm:$0xff]
    %v1020 = vld [vmem:[#allocation10 + $0x68] sm:$0xff]
    %v1021 = vld [vmem:[#allocation10 + $0x70] sm:$0xff]
    %v1022 = vld [vmem:[#allocation10 + $0x78] sm:$0xff]
    %v1023 = vld [vmem:[#allocation10 + $0x80] sm:$0xff]
    %v1024 = vld [vmem:[#allocation10 + $0x88] sm:$0xff]
    %v1025 = vld [vmem:[#allocation10 + $0x90] sm:$0xff]
    %v1026 = vld [vmem:[#allocation10 + $0x98] sm:$0xff]
    %v1027 = vld [vmem:[#allocation10 + $0xa0] sm:$0xff]
    %v1028 = vld [vmem:[#allocation10 + $0xa8] sm:$0xff]
    %v1029 = vld [vmem:[#allocation10 + $0xb0] sm:$0xff]
    %v1030 = vld [vmem:[#allocation10 + $0xb8] sm:$0xff]
    %v1031 = vld [vmem:[#allocation10 + $0xc0] sm:$0xff]
    %v1032 = vld [vmem:[#allocation10 + $0xc8] sm:$0xff]
    %v1033 = vld [vmem:[#allocation10 + $0xd0] sm:$0xff]
    %v1034 = vld [vmem:[#allocation10 + $0xd8] sm:$0xff]
    %v1035 = vld [vmem:[#allocation10 + $0xe0] sm:$0xff]
    %v1036 = vld [vmem:[#allocation10 + $0xe8] sm:$0xff]
    %v1037 = vld [vmem:[#allocation10 + $0xf0] sm:$0xff]
    %v1038 = vld [vmem:[#allocation10 + $0xf8] sm:$0xff]
    %v1071 = vunpack.c.l.b16 %v1007
    %v1072 = vunpack.c.h.b16 %v1007
    %v1073 = vunpack.c.l.b16 %v1008
    %v1074 = vunpack.c.h.b16 %v1008
    %v1075 = vunpack.c.l.b16 %v1009
    %v1076 = vunpack.c.h.b16 %v1009
    %v1077 = vunpack.c.l.b16 %v1010
    %v1078 = vunpack.c.h.b16 %v1010
    %v1079 = vunpack.c.l.b16 %v1011
    %v1080 = vunpack.c.h.b16 %v1011
    %v1081 = vunpack.c.l.b16 %v1012
    %v1082 = vunpack.c.h.b16 %v1012
    %v1083 = vunpack.c.l.b16 %v1013
    %v1084 = vunpack.c.h.b16 %v1013
    %v1085 = vunpack.c.l.b16 %v1014
    %v1086 = vunpack.c.h.b16 %v1014
    %v1087 = vunpack.c.l.b16 %v1015
    %v1088 = vunpack.c.h.b16 %v1015
    %v1089 = vunpack.c.l.b16 %v1016
    %v1090 = vunpack.c.h.b16 %v1016
    %v1091 = vunpack.c.l.b16 %v1017
    %v1092 = vunpack.c.h.b16 %v1017
    %v1093 = vunpack.c.l.b16 %v1018
    %v1094 = vunpack.c.h.b16 %v1018
    %v1095 = vunpack.c.l.b16 %v1019
    %v1096 = vunpack.c.h.b16 %v1019
    %v1097 = vunpack.c.l.b16 %v1020
    %v1098 = vunpack.c.h.b16 %v1020
    %v1099 = vunpack.c.l.b16 %v1021
    %v1100 = vunpack.c.h.b16 %v1021
    %v1101 = vunpack.c.l.b16 %v1022
    %v1102 = vunpack.c.h.b16 %v1022
    %v1103 = vunpack.c.l.b16 %v1023
    %v1104 = vunpack.c.h.b16 %v1023
    %v1105 = vunpack.c.l.b16 %v1024
    %v1106 = vunpack.c.h.b16 %v1024
    %v1107 = vunpack.c.l.b16 %v1025
    %v1108 = vunpack.c.h.b16 %v1025
    %v1109 = vunpack.c.l.b16 %v1026
    %v1110 = vunpack.c.h.b16 %v1026
    %v1111 = vunpack.c.l.b16 %v1027
    %v1112 = vunpack.c.h.b16 %v1027
    %v1113 = vunpack.c.l.b16 %v1028
    %v1114 = vunpack.c.h.b16 %v1028
    %v1115 = vunpack.c.l.b16 %v1029
    %v1116 = vunpack.c.h.b16 %v1029
    %v1117 = vunpack.c.l.b16 %v1030
    %v1118 = vunpack.c.h.b16 %v1030
    %v1119 = vunpack.c.l.b16 %v1031
    %v1120 = vunpack.c.h.b16 %v1031
    %v1121 = vunpack.c.l.b16 %v1032
    %v1122 = vunpack.c.h.b16 %v1032
    %v1123 = vunpack.c.l.b16 %v1033
    %v1124 = vunpack.c.h.b16 %v1033
    %v1125 = vunpack.c.l.b16 %v1034
    %v1126 = vunpack.c.h.b16 %v1034
    %v1127 = vunpack.c.l.b16 %v1035
    %v1128 = vunpack.c.h.b16 %v1035
    %v1129 = vunpack.c.l.b16 %v1036
    %v1130 = vunpack.c.h.b16 %v1036
    %v1131 = vunpack.c.l.b16 %v1037
    %v1132 = vunpack.c.h.b16 %v1037
    %v1133 = vunpack.c.l.b16 %v1038
    %v1134 = vunpack.c.h.b16 %v1038
    %v1135 = vpack.c.b16 %v1075, %v1071
    %v1136 = vpack.c.b16 %v1076, %v1072
    %v1137 = vpack.c.b16 %v1077, %v1073
    %v1138 = vpack.c.b16 %v1078, %v1074
    %v1139 = vpack.c.b16 %v1083, %v1079
    %v1140 = vpack.c.b16 %v1084, %v1080
    %v1141 = vpack.c.b16 %v1085, %v1081
    %v1142 = vpack.c.b16 %v1086, %v1082
    %v1143 = vpack.c.b16 %v1091, %v1087
    %v1144 = vpack.c.b16 %v1092, %v1088
    %v1145 = vpack.c.b16 %v1093, %v1089
    %v1146 = vpack.c.b16 %v1094, %v1090
    %v1147 = vpack.c.b16 %v1099, %v1095
    %v1148 = vpack.c.b16 %v1100, %v1096
    %v1149 = vpack.c.b16 %v1101, %v1097
    %v1150 = vpack.c.b16 %v1102, %v1098
    %v1151 = vpack.c.b16 %v1107, %v1103
    %v1152 = vpack.c.b16 %v1108, %v1104
    %v1153 = vpack.c.b16 %v1109, %v1105
    %v1154 = vpack.c.b16 %v1110, %v1106
    %v1155 = vpack.c.b16 %v1115, %v1111
    %v1156 = vpack.c.b16 %v1116, %v1112
    %v1157 = vpack.c.b16 %v1117, %v1113
    %v1158 = vpack.c.b16 %v1118, %v1114
    %v1159 = vpack.c.b16 %v1123, %v1119
    %v1160 = vpack.c.b16 %v1124, %v1120
    %v1161 = vpack.c.b16 %v1125, %v1121
    %v1162 = vpack.c.b16 %v1126, %v1122
    %v1163 = vpack.c.b16 %v1131, %v1127
    %v1164 = vpack.c.b16 %v1132, %v1128
    %v1165 = vpack.c.b16 %v1133, %v1129
    %v1166 = vpack.c.b16 %v1134, %v1130
    %1199 = vmatpush.bf16.msra.mxu0 %v1163
    %1200 = vmatpush.bf16.msra.mxu0 %v1159
    %1201 = vmatpush.bf16.msra.mxu0 %v1155
    %1202 = vmatpush.bf16.msra.mxu0 %v1151
    %1203 = vmatpush.bf16.msra.mxu0 %v1147
    %1204 = vmatpush.bf16.msra.mxu0 %v1143
    %1205 = vmatpush.bf16.msra.mxu0 %v1139
    %1206 = vmatpush.bf16.msra.mxu0 %v1135
    %1207 = vmatmul.bf16.gmra.mxu0 %v1006
    %v1208 = vpop.f32.mrf.mxu0
    %v1209 = vadd.f32 0.0, %v1208
    %v1210 = vpop.f32.mrf.mxu0
    %1211 = vdwg.mxu0
    %1212 = vmatpush.bf16.msra.mxu0 %v1164
    %1213 = vmatpush.bf16.msra.mxu0 %v1160
    %1214 = vmatpush.bf16.msra.mxu0 %v1156
    %1215 = vmatpush.bf16.msra.mxu0 %v1152
    %1216 = vmatpush.bf16.msra.mxu0 %v1148
    %1217 = vmatpush.bf16.msra.mxu0 %v1144
    %1218 = vmatpush.bf16.msra.mxu0 %v1140
    %1219 = vmatpush.bf16.msra.mxu0 %v1136
    %1220 = vmatmul.bf16.gmra.mxu0 %v1006
    %v1221 = vpop.f32.mrf.mxu0
    %v1222 = vadd.f32 0.0, %v1221
    %v1223 = vpop.f32.mrf.mxu0
    %1224 = vdwg.mxu0
    %1225 = vmatpush.bf16.msra.mxu0 %v1165
    %1226 = vmatpush.bf16.msra.mxu0 %v1161
    %1227 = vmatpush.bf16.msra.mxu0 %v1157
    %1228 = vmatpush.bf16.msra.mxu0 %v1153
    %1229 = vmatpush.bf16.msra.mxu0 %v1149
    %1230 = vmatpush.bf16.msra.mxu0 %v1145
    %1231 = vmatpush.bf16.msra.mxu0 %v1141
    %1232 = vmatpush.bf16.msra.mxu0 %v1137
    %1233 = vmatmul.bf16.gmra.mxu0 %v1006
    %v1234 = vpop.f32.mrf.mxu0
    %v1235 = vadd.f32 0.0, %v1234
    %v1236 = vpop.f32.mrf.mxu0
    %1237 = vdwg.mxu0
    %1238 = vmatpush.bf16.msra.mxu0 %v1166
    %1239 = vmatpush.bf16.msra.mxu0 %v1162
    %1240 = vmatpush.bf16.msra.mxu0 %v1158
    %1241 = vmatpush.bf16.msra.mxu0 %v1154
    %1242 = vmatpush.bf16.msra.mxu0 %v1150
    %1243 = vmatpush.bf16.msra.mxu0 %v1146
    %1244 = vmatpush.bf16.msra.mxu0 %v1142
    %1245 = vmatpush.bf16.msra.mxu0 %v1138
    %1246 = vmatmul.bf16.gmra.mxu0 %v1006
    %v1247 = vpop.f32.mrf.mxu0
    %v1248 = vadd.f32 0.0, %v1247
    %v1249 = vpop.f32.mrf.mxu0
    %1250 = vdwg.mxu0
    %v1251 = vadd.f32 %v1002, %v1209
    %v1252 = vadd.f32 %v1003, %v1222
    %v1253 = vadd.f32 %v1004, %v1235
    %v1254 = vadd.f32 %v1005, %v1248
    %v1255 = vxor.u32 %v1251, 2147483648
    %v1256 = vmul.f32 %v1255, 1.442695
    %v1257 = vpow.pop %v1256
    %v1258 = vadd.f32 %v1257, 1.0
    %v1259 = vrcp.pop %v1258
    %v1260 = vmul.f32 %v1258, %v1259
    %v1261 = vsub.f32 1.0, %v1260
    %v1262 = vmul.f32 %v1259, %v1261
    %v1263 = vadd.f32 %v1259, %v1262
    %vm1264 = vweird.f32 %v1258
    %vm1265 = vweird.f32 %v1259
    %vm1266 = vmor %vm1264, %vm1265
    %v1267 = vsel %vm1266, %v1259, %v1263
    %v1268 = vand.u32 2147483647, %v1258
    %vm1269 = vcmp.eq.f32.partialorder %v1268, 8.507059e+37
    %v1270 = vand.u32 %v1258, 2147483648
    %v1271 = vor.u32 1.1754944e-38, %v1270
    %v1272 = vsel %vm1269, %v1271, %v1267
    %v1273 = vmul.f32 1.0, %v1272
    %v1274 = vxor.u32 %v1252, 2147483648
    %v1275 = vmul.f32 %v1274, 1.442695
    %v1276 = vpow.pop %v1275
    %v1277 = vadd.f32 %v1276, 1.0
    %v1278 = vrcp.pop %v1277
    %v1279 = vmul.f32 %v1277, %v1278
    %v1280 = vsub.f32 1.0, %v1279
    %v1281 = vmul.f32 %v1278, %v1280
    %v1282 = vadd.f32 %v1278, %v1281
    %vm1283 = vweird.f32 %v1277
    %vm1284 = vweird.f32 %v1278
    %vm1285 = vmor %vm1283, %vm1284
    %v1286 = vsel %vm1285, %v1278, %v1282
    %v1287 = vand.u32 2147483647, %v1277
    %vm1288 = vcmp.eq.f32.partialorder %v1287, 8.507059e+37
    %v1289 = vand.u32 %v1277, 2147483648
    %v1290 = vor.u32 1.1754944e-38, %v1289
    %v1291 = vsel %vm1288, %v1290, %v1286
    %v1292 = vmul.f32 1.0, %v1291
    %v1293 = vtanh.pop %v1253
    %v1294 = vxor.u32 %v1254, 2147483648
    %v1295 = vmul.f32 %v1294, 1.442695
    %v1296 = vpow.pop %v1295
    %v1297 = vadd.f32 %v1296, 1.0
    %v1298 = vrcp.pop %v1297
    %v1299 = vmul.f32 %v1297, %v1298
    %v1300 = vsub.f32 1.0, %v1299
    %v1301 = vmul.f32 %v1298, %v1300
    %v1302 = vadd.f32 %v1298, %v1301
    %vm1303 = vweird.f32 %v1297
    %vm1304 = vweird.f32 %v1298
    %vm1305 = vmor %vm1303, %vm1304
    %v1306 = vsel %vm1305, %v1298, %v1302
    %v1307 = vand.u32 2147483647, %v1297
    %vm1308 = vcmp.eq.f32.partialorder %v1307, 8.507059e+37
    %v1309 = vand.u32 %v1297, 2147483648
    %v1310 = vor.u32 1.1754944e-38, %v1309
    %v1311 = vsel %vm1308, %v1310, %v1306
    %v1312 = vmul.f32 1.0, %v1311
    %v1313 = vmul.f32 %v1292, %v994
    %v1314 = vmul.f32 %v1273, %v1293
    %v1315 = vadd.f32 %v1313, %v1314
    %v1316 = vtanh.pop %v1315
    %v1317 = vmul.f32 %v1312, %v1316
    %s1318 = scalar_lea.vmem [#allocation3], 16
    %1319 = vst [vmem:[%s1318] sm:$0xff] %v1317
    %s1320 = smul.u32 3, 4
    %s1321 = smul.addr %s1320, 8
    %s1322 = scalar_lea.vmem [#allocation2], %s1321
    %v1323 = vld [vmem:[%s1322] sm:$0xff]
    %v1324 = vld [vmem:[%s1322 + $0x8] sm:$0xff]
    %v1325 = vld [vmem:[%s1322 + $0x10] sm:$0xff]
    %v1326 = vld [vmem:[%s1322 + $0x18] sm:$0xff]
    %v1327 = vpack.c.bf16 %v1317, %v1317
    %v1328 = vld [vmem:[#allocation10] sm:$0xff]
    %v1329 = vld [vmem:[#allocation10 + $0x8] sm:$0xff]
    %v1330 = vld [vmem:[#allocation10 + $0x10] sm:$0xff]
    %v1331 = vld [vmem:[#allocation10 + $0x18] sm:$0xff]
    %v1332 = vld [vmem:[#allocation10 + $0x20] sm:$0xff]
    %v1333 = vld [vmem:[#allocation10 + $0x28] sm:$0xff]
    %v1334 = vld [vmem:[#allocation10 + $0x30] sm:$0xff]
    %v1335 = vld [vmem:[#allocation10 + $0x38] sm:$0xff]
    %v1336 = vld [vmem:[#allocation10 + $0x40] sm:$0xff]
    %v1337 = vld [vmem:[#allocation10 + $0x48] sm:$0xff]
    %v1338 = vld [vmem:[#allocation10 + $0x50] sm:$0xff]
    %v1339 = vld [vmem:[#allocation10 + $0x58] sm:$0xff]
    %v1340 = vld [vmem:[#allocation10 + $0x60] sm:$0xff]
    %v1341 = vld [vmem:[#allocation10 + $0x68] sm:$0xff]
    %v1342 = vld [vmem:[#allocation10 + $0x70] sm:$0xff]
    %v1343 = vld [vmem:[#allocation10 + $0x78] sm:$0xff]
    %v1344 = vld [vmem:[#allocation10 + $0x80] sm:$0xff]
    %v1345 = vld [vmem:[#allocation10 + $0x88] sm:$0xff]
    %v1346 = vld [vmem:[#allocation10 + $0x90] sm:$0xff]
    %v1347 = vld [vmem:[#allocation10 + $0x98] sm:$0xff]
    %v1348 = vld [vmem:[#allocation10 + $0xa0] sm:$0xff]
    %v1349 = vld [vmem:[#allocation10 + $0xa8] sm:$0xff]
    %v1350 = vld [vmem:[#allocation10 + $0xb0] sm:$0xff]
    %v1351 = vld [vmem:[#allocation10 + $0xb8] sm:$0xff]
    %v1352 = vld [vmem:[#allocation10 + $0xc0] sm:$0xff]
    %v1353 = vld [vmem:[#allocation10 + $0xc8] sm:$0xff]
    %v1354 = vld [vmem:[#allocation10 + $0xd0] sm:$0xff]
    %v1355 = vld [vmem:[#allocation10 + $0xd8] sm:$0xff]
    %v1356 = vld [vmem:[#allocation10 + $0xe0] sm:$0xff]
    %v1357 = vld [vmem:[#allocation10 + $0xe8] sm:$0xff]
    %v1358 = vld [vmem:[#allocation10 + $0xf0] sm:$0xff]
    %v1359 = vld [vmem:[#allocation10 + $0xf8] sm:$0xff]
    %v1392 = vunpack.c.l.b16 %v1328
    %v1393 = vunpack.c.h.b16 %v1328
    %v1394 = vunpack.c.l.b16 %v1329
    %v1395 = vunpack.c.h.b16 %v1329
    %v1396 = vunpack.c.l.b16 %v1330
    %v1397 = vunpack.c.h.b16 %v1330
    %v1398 = vunpack.c.l.b16 %v1331
    %v1399 = vunpack.c.h.b16 %v1331
    %v1400 = vunpack.c.l.b16 %v1332
    %v1401 = vunpack.c.h.b16 %v1332
    %v1402 = vunpack.c.l.b16 %v1333
    %v1403 = vunpack.c.h.b16 %v1333
    %v1404 = vunpack.c.l.b16 %v1334
    %v1405 = vunpack.c.h.b16 %v1334
    %v1406 = vunpack.c.l.b16 %v1335
    %v1407 = vunpack.c.h.b16 %v1335
    %v1408 = vunpack.c.l.b16 %v1336
    %v1409 = vunpack.c.h.b16 %v1336
    %v1410 = vunpack.c.l.b16 %v1337
    %v1411 = vunpack.c.h.b16 %v1337
    %v1412 = vunpack.c.l.b16 %v1338
    %v1413 = vunpack.c.h.b16 %v1338
    %v1414 = vunpack.c.l.b16 %v1339
    %v1415 = vunpack.c.h.b16 %v1339
    %v1416 = vunpack.c.l.b16 %v1340
    %v1417 = vunpack.c.h.b16 %v1340
    %v1418 = vunpack.c.l.b16 %v1341
    %v1419 = vunpack.c.h.b16 %v1341
    %v1420 = vunpack.c.l.b16 %v1342
    %v1421 = vunpack.c.h.b16 %v1342
    %v1422 = vunpack.c.l.b16 %v1343
    %v1423 = vunpack.c.h.b16 %v1343
    %v1424 = vunpack.c.l.b16 %v1344
    %v1425 = vunpack.c.h.b16 %v1344
    %v1426 = vunpack.c.l.b16 %v1345
    %v1427 = vunpack.c.h.b16 %v1345
    %v1428 = vunpack.c.l.b16 %v1346
    %v1429 = vunpack.c.h.b16 %v1346
    %v1430 = vunpack.c.l.b16 %v1347
    %v1431 = vunpack.c.h.b16 %v1347
    %v1432 = vunpack.c.l.b16 %v1348
    %v1433 = vunpack.c.h.b16 %v1348
    %v1434 = vunpack.c.l.b16 %v1349
    %v1435 = vunpack.c.h.b16 %v1349
    %v1436 = vunpack.c.l.b16 %v1350
    %v1437 = vunpack.c.h.b16 %v1350
    %v1438 = vunpack.c.l.b16 %v1351
    %v1439 = vunpack.c.h.b16 %v1351
    %v1440 = vunpack.c.l.b16 %v1352
    %v1441 = vunpack.c.h.b16 %v1352
    %v1442 = vunpack.c.l.b16 %v1353
    %v1443 = vunpack.c.h.b16 %v1353
    %v1444 = vunpack.c.l.b16 %v1354
    %v1445 = vunpack.c.h.b16 %v1354
    %v1446 = vunpack.c.l.b16 %v1355
    %v1447 = vunpack.c.h.b16 %v1355
    %v1448 = vunpack.c.l.b16 %v1356
    %v1449 = vunpack.c.h.b16 %v1356
    %v1450 = vunpack.c.l.b16 %v1357
    %v1451 = vunpack.c.h.b16 %v1357
    %v1452 = vunpack.c.l.b16 %v1358
    %v1453 = vunpack.c.h.b16 %v1358
    %v1454 = vunpack.c.l.b16 %v1359
    %v1455 = vunpack.c.h.b16 %v1359
    %v1456 = vpack.c.b16 %v1396, %v1392
    %v1457 = vpack.c.b16 %v1397, %v1393
    %v1458 = vpack.c.b16 %v1398, %v1394
    %v1459 = vpack.c.b16 %v1399, %v1395
    %v1460 = vpack.c.b16 %v1404, %v1400
    %v1461 = vpack.c.b16 %v1405, %v1401
    %v1462 = vpack.c.b16 %v1406, %v1402
    %v1463 = vpack.c.b16 %v1407, %v1403
    %v1464 = vpack.c.b16 %v1412, %v1408
    %v1465 = vpack.c.b16 %v1413, %v1409
    %v1466 = vpack.c.b16 %v1414, %v1410
    %v1467 = vpack.c.b16 %v1415, %v1411
    %v1468 = vpack.c.b16 %v1420, %v1416
    %v1469 = vpack.c.b16 %v1421, %v1417
    %v1470 = vpack.c.b16 %v1422, %v1418
    %v1471 = vpack.c.b16 %v1423, %v1419
    %v1472 = vpack.c.b16 %v1428, %v1424
    %v1473 = vpack.c.b16 %v1429, %v1425
    %v1474 = vpack.c.b16 %v1430, %v1426
    %v1475 = vpack.c.b16 %v1431, %v1427
    %v1476 = vpack.c.b16 %v1436, %v1432
    %v1477 = vpack.c.b16 %v1437, %v1433
    %v1478 = vpack.c.b16 %v1438, %v1434
    %v1479 = vpack.c.b16 %v1439, %v1435
    %v1480 = vpack.c.b16 %v1444, %v1440
    %v1481 = vpack.c.b16 %v1445, %v1441
    %v1482 = vpack.c.b16 %v1446, %v1442
    %v1483 = vpack.c.b16 %v1447, %v1443
    %v1484 = vpack.c.b16 %v1452, %v1448
    %v1485 = vpack.c.b16 %v1453, %v1449
    %v1486 = vpack.c.b16 %v1454, %v1450
    %v1487 = vpack.c.b16 %v1455, %v1451
    %1520 = vmatpush.bf16.msra.mxu0 %v1484
    %1521 = vmatpush.bf16.msra.mxu0 %v1480
    %1522 = vmatpush.bf16.msra.mxu0 %v1476
    %1523 = vmatpush.bf16.msra.mxu0 %v1472
    %1524 = vmatpush.bf16.msra.mxu0 %v1468
    %1525 = vmatpush.bf16.msra.mxu0 %v1464
    %1526 = vmatpush.bf16.msra.mxu0 %v1460
    %1527 = vmatpush.bf16.msra.mxu0 %v1456
    %1528 = vmatmul.bf16.gmra.mxu0 %v1327
    %v1529 = vpop.f32.mrf.mxu0
    %v1530 = vadd.f32 0.0, %v1529
    %v1531 = vpop.f32.mrf.mxu0
    %1532 = vdwg.mxu0
    %1533 = vmatpush.bf16.msra.mxu0 %v1485
    %1534 = vmatpush.bf16.msra.mxu0 %v1481
    %1535 = vmatpush.bf16.msra.mxu0 %v1477
    %1536 = vmatpush.bf16.msra.mxu0 %v1473
    %1537 = vmatpush.bf16.msra.mxu0 %v1469
    %1538 = vmatpush.bf16.msra.mxu0 %v1465
    %1539 = vmatpush.bf16.msra.mxu0 %v1461
    %1540 = vmatpush.bf16.msra.mxu0 %v1457
    %1541 = vmatmul.bf16.gmra.mxu0 %v1327
    %v1542 = vpop.f32.mrf.mxu0
    %v1543 = vadd.f32 0.0, %v1542
    %v1544 = vpop.f32.mrf.mxu0
    %1545 = vdwg.mxu0
    %1546 = vmatpush.bf16.msra.mxu0 %v1486
    %1547 = vmatpush.bf16.msra.mxu0 %v1482
    %1548 = vmatpush.bf16.msra.mxu0 %v1478
    %1549 = vmatpush.bf16.msra.mxu0 %v1474
    %1550 = vmatpush.bf16.msra.mxu0 %v1470
    %1551 = vmatpush.bf16.msra.mxu0 %v1466
    %1552 = vmatpush.bf16.msra.mxu0 %v1462
    %1553 = vmatpush.bf16.msra.mxu0 %v1458
    %1554 = vmatmul.bf16.gmra.mxu0 %v1327
    %v1555 = vpop.f32.mrf.mxu0
    %v1556 = vadd.f32 0.0, %v1555
    %v1557 = vpop.f32.mrf.mxu0
    %1558 = vdwg.mxu0
    %1559 = vmatpush.bf16.msra.mxu0 %v1487
    %1560 = vmatpush.bf16.msra.mxu0 %v1483
    %1561 = vmatpush.bf16.msra.mxu0 %v1479
    %1562 = vmatpush.bf16.msra.mxu0 %v1475
    %1563 = vmatpush.bf16.msra.mxu0 %v1471
    %1564 = vmatpush.bf16.msra.mxu0 %v1467
    %1565 = vmatpush.bf16.msra.mxu0 %v1463
    %1566 = vmatpush.bf16.msra.mxu0 %v1459
    %1567 = vmatmul.bf16.gmra.mxu0 %v1327
    %v1568 = vpop.f32.mrf.mxu0
    %v1569 = vadd.f32 0.0, %v1568
    %v1570 = vpop.f32.mrf.mxu0
    %1571 = vdwg.mxu0
    %v1572 = vadd.f32 %v1323, %v1530
    %v1573 = vadd.f32 %v1324, %v1543
    %v1574 = vadd.f32 %v1325, %v1556
    %v1575 = vadd.f32 %v1326, %v1569
    %v1576 = vxor.u32 %v1572, 2147483648
    %v1577 = vmul.f32 %v1576, 1.442695
    %v1578 = vpow.pop %v1577
    %v1579 = vadd.f32 %v1578, 1.0
    %v1580 = vrcp.pop %v1579
    %v1581 = vmul.f32 %v1579, %v1580
    %v1582 = vsub.f32 1.0, %v1581
    %v1583 = vmul.f32 %v1580, %v1582
    %v1584 = vadd.f32 %v1580, %v1583
    %vm1585 = vweird.f32 %v1579
    %vm1586 = vweird.f32 %v1580
    %vm1587 = vmor %vm1585, %vm1586
    %v1588 = vsel %vm1587, %v1580, %v1584
    %v1589 = vand.u32 2147483647, %v1579
    %vm1590 = vcmp.eq.f32.partialorder %v1589, 8.507059e+37
    %v1591 = vand.u32 %v1579, 2147483648
    %v1592 = vor.u32 1.1754944e-38, %v1591
    %v1593 = vsel %vm1590, %v1592, %v1588
    %v1594 = vmul.f32 1.0, %v1593
    %v1595 = vxor.u32 %v1573, 2147483648
    %v1596 = vmul.f32 %v1595, 1.442695
    %v1597 = vpow.pop %v1596
    %v1598 = vadd.f32 %v1597, 1.0
    %v1599 = vrcp.pop %v1598
    %v1600 = vmul.f32 %v1598, %v1599
    %v1601 = vsub.f32 1.0, %v1600
    %v1602 = vmul.f32 %v1599, %v1601
    %v1603 = vadd.f32 %v1599, %v1602
    %vm1604 = vweird.f32 %v1598
    %vm1605 = vweird.f32 %v1599
    %vm1606 = vmor %vm1604, %vm1605
    %v1607 = vsel %vm1606, %v1599, %v1603
    %v1608 = vand.u32 2147483647, %v1598
    %vm1609 = vcmp.eq.f32.partialorder %v1608, 8.507059e+37
    %v1610 = vand.u32 %v1598, 2147483648
    %v1611 = vor.u32 1.1754944e-38, %v1610
    %v1612 = vsel %vm1609, %v1611, %v1607
    %v1613 = vmul.f32 1.0, %v1612
    %v1614 = vtanh.pop %v1574
    %v1615 = vxor.u32 %v1575, 2147483648
    %v1616 = vmul.f32 %v1615, 1.442695
    %v1617 = vpow.pop %v1616
    %v1618 = vadd.f32 %v1617, 1.0
    %v1619 = vrcp.pop %v1618
    %v1620 = vmul.f32 %v1618, %v1619
    %v1621 = vsub.f32 1.0, %v1620
    %v1622 = vmul.f32 %v1619, %v1621
    %v1623 = vadd.f32 %v1619, %v1622
    %vm1624 = vweird.f32 %v1618
    %vm1625 = vweird.f32 %v1619
    %vm1626 = vmor %vm1624, %vm1625
    %v1627 = vsel %vm1626, %v1619, %v1623
    %v1628 = vand.u32 2147483647, %v1618
    %vm1629 = vcmp.eq.f32.partialorder %v1628, 8.507059e+37
    %v1630 = vand.u32 %v1618, 2147483648
    %v1631 = vor.u32 1.1754944e-38, %v1630
    %v1632 = vsel %vm1629, %v1631, %v1627
    %v1633 = vmul.f32 1.0, %v1632
    %v1634 = vmul.f32 %v1613, %v1315
    %v1635 = vmul.f32 %v1594, %v1614
    %v1636 = vadd.f32 %v1634, %v1635
    %v1637 = vtanh.pop %v1636
    %v1638 = vmul.f32 %v1633, %v1637
    %s1639 = scalar_lea.vmem [#allocation3], 24
    %1640 = vst [vmem:[%s1639] sm:$0xff] %v1638
    %s1641 = smul.u32 4, 4
    %s1642 = smul.addr %s1641, 8
    %s1643 = scalar_lea.vmem [#allocation2], %s1642
    %v1644 = vld [vmem:[%s1643] sm:$0xff]
    %v1645 = vld [vmem:[%s1643 + $0x8] sm:$0xff]
    %v1646 = vld [vmem:[%s1643 + $0x10] sm:$0xff]
    %v1647 = vld [vmem:[%s1643 + $0x18] sm:$0xff]
    %v1648 = vpack.c.bf16 %v1638, %v1638
    %v1649 = vld [vmem:[#allocation10] sm:$0xff]
    %v1650 = vld [vmem:[#allocation10 + $0x8] sm:$0xff]
    %v1651 = vld [vmem:[#allocation10 + $0x10] sm:$0xff]
    %v1652 = vld [vmem:[#allocation10 + $0x18] sm:$0xff]
    %v1653 = vld [vmem:[#allocation10 + $0x20] sm:$0xff]
    %v1654 = vld [vmem:[#allocation10 + $0x28] sm:$0xff]
    %v1655 = vld [vmem:[#allocation10 + $0x30] sm:$0xff]
    %v1656 = vld [vmem:[#allocation10 + $0x38] sm:$0xff]
    %v1657 = vld [vmem:[#allocation10 + $0x40] sm:$0xff]
    %v1658 = vld [vmem:[#allocation10 + $0x48] sm:$0xff]
    %v1659 = vld [vmem:[#allocation10 + $0x50] sm:$0xff]
    %v1660 = vld [vmem:[#allocation10 + $0x58] sm:$0xff]
    %v1661 = vld [vmem:[#allocation10 + $0x60] sm:$0xff]
    %v1662 = vld [vmem:[#allocation10 + $0x68] sm:$0xff]
    %v1663 = vld [vmem:[#allocation10 + $0x70] sm:$0xff]
    %v1664 = vld [vmem:[#allocation10 + $0x78] sm:$0xff]
    %v1665 = vld [vmem:[#allocation10 + $0x80] sm:$0xff]
    %v1666 = vld [vmem:[#allocation10 + $0x88] sm:$0xff]
    %v1667 = vld [vmem:[#allocation10 + $0x90] sm:$0xff]
    %v1668 = vld [vmem:[#allocation10 + $0x98] sm:$0xff]
    %v1669 = vld [vmem:[#allocation10 + $0xa0] sm:$0xff]
    %v1670 = vld [vmem:[#allocation10 + $0xa8] sm:$0xff]
    %v1671 = vld [vmem:[#allocation10 + $0xb0] sm:$0xff]
    %v1672 = vld [vmem:[#allocation10 + $0xb8] sm:$0xff]
    %v1673 = vld [vmem:[#allocation10 + $0xc0] sm:$0xff]
    %v1674 = vld [vmem:[#allocation10 + $0xc8] sm:$0xff]
    %v1675 = vld [vmem:[#allocation10 + $0xd0] sm:$0xff]
    %v1676 = vld [vmem:[#allocation10 + $0xd8] sm:$0xff]
    %v1677 = vld [vmem:[#allocation10 + $0xe0] sm:$0xff]
    %v1678 = vld [vmem:[#allocation10 + $0xe8] sm:$0xff]
    %v1679 = vld [vmem:[#allocation10 + $0xf0] sm:$0xff]
    %v1680 = vld [vmem:[#allocation10 + $0xf8] sm:$0xff]
    %v1713 = vunpack.c.l.b16 %v1649
    %v1714 = vunpack.c.h.b16 %v1649
    %v1715 = vunpack.c.l.b16 %v1650
    %v1716 = vunpack.c.h.b16 %v1650
    %v1717 = vunpack.c.l.b16 %v1651
    %v1718 = vunpack.c.h.b16 %v1651
    %v1719 = vunpack.c.l.b16 %v1652
    %v1720 = vunpack.c.h.b16 %v1652
    %v1721 = vunpack.c.l.b16 %v1653
    %v1722 = vunpack.c.h.b16 %v1653
    %v1723 = vunpack.c.l.b16 %v1654
    %v1724 = vunpack.c.h.b16 %v1654
    %v1725 = vunpack.c.l.b16 %v1655
    %v1726 = vunpack.c.h.b16 %v1655
    %v1727 = vunpack.c.l.b16 %v1656
    %v1728 = vunpack.c.h.b16 %v1656
    %v1729 = vunpack.c.l.b16 %v1657
    %v1730 = vunpack.c.h.b16 %v1657
    %v1731 = vunpack.c.l.b16 %v1658
    %v1732 = vunpack.c.h.b16 %v1658
    %v1733 = vunpack.c.l.b16 %v1659
    %v1734 = vunpack.c.h.b16 %v1659
    %v1735 = vunpack.c.l.b16 %v1660
    %v1736 = vunpack.c.h.b16 %v1660
    %v1737 = vunpack.c.l.b16 %v1661
    %v1738 = vunpack.c.h.b16 %v1661
    %v1739 = vunpack.c.l.b16 %v1662
    %v1740 = vunpack.c.h.b16 %v1662
    %v1741 = vunpack.c.l.b16 %v1663
    %v1742 = vunpack.c.h.b16 %v1663
    %v1743 = vunpack.c.l.b16 %v1664
    %v1744 = vunpack.c.h.b16 %v1664
    %v1745 = vunpack.c.l.b16 %v1665
    %v1746 = vunpack.c.h.b16 %v1665
    %v1747 = vunpack.c.l.b16 %v1666
    %v1748 = vunpack.c.h.b16 %v1666
    %v1749 = vunpack.c.l.b16 %v1667
    %v1750 = vunpack.c.h.b16 %v1667
    %v1751 = vunpack.c.l.b16 %v1668
    %v1752 = vunpack.c.h.b16 %v1668
    %v1753 = vunpack.c.l.b16 %v1669
    %v1754 = vunpack.c.h.b16 %v1669
    %v1755 = vunpack.c.l.b16 %v1670
    %v1756 = vunpack.c.h.b16 %v1670
    %v1757 = vunpack.c.l.b16 %v1671
    %v1758 = vunpack.c.h.b16 %v1671
    %v1759 = vunpack.c.l.b16 %v1672
    %v1760 = vunpack.c.h.b16 %v1672
    %v1761 = vunpack.c.l.b16 %v1673
    %v1762 = vunpack.c.h.b16 %v1673
    %v1763 = vunpack.c.l.b16 %v1674
    %v1764 = vunpack.c.h.b16 %v1674
    %v1765 = vunpack.c.l.b16 %v1675
    %v1766 = vunpack.c.h.b16 %v1675
    %v1767 = vunpack.c.l.b16 %v1676
    %v1768 = vunpack.c.h.b16 %v1676
    %v1769 = vunpack.c.l.b16 %v1677
    %v1770 = vunpack.c.h.b16 %v1677
    %v1771 = vunpack.c.l.b16 %v1678
    %v1772 = vunpack.c.h.b16 %v1678
    %v1773 = vunpack.c.l.b16 %v1679
    %v1774 = vunpack.c.h.b16 %v1679
    %v1775 = vunpack.c.l.b16 %v1680
    %v1776 = vunpack.c.h.b16 %v1680
    %v1777 = vpack.c.b16 %v1717, %v1713
    %v1778 = vpack.c.b16 %v1718, %v1714
    %v1779 = vpack.c.b16 %v1719, %v1715
    %v1780 = vpack.c.b16 %v1720, %v1716
    %v1781 = vpack.c.b16 %v1725, %v1721
    %v1782 = vpack.c.b16 %v1726, %v1722
    %v1783 = vpack.c.b16 %v1727, %v1723
    %v1784 = vpack.c.b16 %v1728, %v1724
    %v1785 = vpack.c.b16 %v1733, %v1729
    %v1786 = vpack.c.b16 %v1734, %v1730
    %v1787 = vpack.c.b16 %v1735, %v1731
    %v1788 = vpack.c.b16 %v1736, %v1732
    %v1789 = vpack.c.b16 %v1741, %v1737
    %v1790 = vpack.c.b16 %v1742, %v1738
    %v1791 = vpack.c.b16 %v1743, %v1739
    %v1792 = vpack.c.b16 %v1744, %v1740
    %v1793 = vpack.c.b16 %v1749, %v1745
    %v1794 = vpack.c.b16 %v1750, %v1746
    %v1795 = vpack.c.b16 %v1751, %v1747
    %v1796 = vpack.c.b16 %v1752, %v1748
    %v1797 = vpack.c.b16 %v1757, %v1753
    %v1798 = vpack.c.b16 %v1758, %v1754
    %v1799 = vpack.c.b16 %v1759, %v1755
    %v1800 = vpack.c.b16 %v1760, %v1756
    %v1801 = vpack.c.b16 %v1765, %v1761
    %v1802 = vpack.c.b16 %v1766, %v1762
    %v1803 = vpack.c.b16 %v1767, %v1763
    %v1804 = vpack.c.b16 %v1768, %v1764
    %v1805 = vpack.c.b16 %v1773, %v1769
    %v1806 = vpack.c.b16 %v1774, %v1770
    %v1807 = vpack.c.b16 %v1775, %v1771
    %v1808 = vpack.c.b16 %v1776, %v1772
    %1841 = vmatpush.bf16.msra.mxu0 %v1805
    %1842 = vmatpush.bf16.msra.mxu0 %v1801
    %1843 = vmatpush.bf16.msra.mxu0 %v1797
    %1844 = vmatpush.bf16.msra.mxu0 %v1793
    %1845 = vmatpush.bf16.msra.mxu0 %v1789
    %1846 = vmatpush.bf16.msra.mxu0 %v1785
    %1847 = vmatpush.bf16.msra.mxu0 %v1781
    %1848 = vmatpush.bf16.msra.mxu0 %v1777
    %1849 = vmatmul.bf16.gmra.mxu0 %v1648
    %v1850 = vpop.f32.mrf.mxu0
    %v1851 = vadd.f32 0.0, %v1850
    %v1852 = vpop.f32.mrf.mxu0
    %1853 = vdwg.mxu0
    %1854 = vmatpush.bf16.msra.mxu0 %v1806
    %1855 = vmatpush.bf16.msra.mxu0 %v1802
    %1856 = vmatpush.bf16.msra.mxu0 %v1798
    %1857 = vmatpush.bf16.msra.mxu0 %v1794
    %1858 = vmatpush.bf16.msra.mxu0 %v1790
    %1859 = vmatpush.bf16.msra.mxu0 %v1786
    %1860 = vmatpush.bf16.msra.mxu0 %v1782
    %1861 = vmatpush.bf16.msra.mxu0 %v1778
    %1862 = vmatmul.bf16.gmra.mxu0 %v1648
    %v1863 = vpop.f32.mrf.mxu0
    %v1864 = vadd.f32 0.0, %v1863
    %v1865 = vpop.f32.mrf.mxu0
    %1866 = vdwg.mxu0
    %1867 = vmatpush.bf16.msra.mxu0 %v1807
    %1868 = vmatpush.bf16.msra.mxu0 %v1803
    %1869 = vmatpush.bf16.msra.mxu0 %v1799
    %1870 = vmatpush.bf16.msra.mxu0 %v1795
    %1871 = vmatpush.bf16.msra.mxu0 %v1791
    %1872 = vmatpush.bf16.msra.mxu0 %v1787
    %1873 = vmatpush.bf16.msra.mxu0 %v1783
    %1874 = vmatpush.bf16.msra.mxu0 %v1779
    %1875 = vmatmul.bf16.gmra.mxu0 %v1648
    %v1876 = vpop.f32.mrf.mxu0
    %v1877 = vadd.f32 0.0, %v1876
    %v1878 = vpop.f32.mrf.mxu0
    %1879 = vdwg.mxu0
    %1880 = vmatpush.bf16.msra.mxu0 %v1808
    %1881 = vmatpush.bf16.msra.mxu0 %v1804
    %1882 = vmatpush.bf16.msra.mxu0 %v1800
    %1883 = vmatpush.bf16.msra.mxu0 %v1796
    %1884 = vmatpush.bf16.msra.mxu0 %v1792
    %1885 = vmatpush.bf16.msra.mxu0 %v1788
    %1886 = vmatpush.bf16.msra.mxu0 %v1784
    %1887 = vmatpush.bf16.msra.mxu0 %v1780
    %1888 = vmatmul.bf16.gmra.mxu0 %v1648
    %v1889 = vpop.f32.mrf.mxu0
    %v1890 = vadd.f32 0.0, %v1889
    %v1891 = vpop.f32.mrf.mxu0
    %1892 = vdwg.mxu0
    %v1893 = vadd.f32 %v1644, %v1851
    %v1894 = vadd.f32 %v1645, %v1864
    %v1895 = vadd.f32 %v1646, %v1877
    %v1896 = vadd.f32 %v1647, %v1890
    %v1897 = vxor.u32 %v1893, 2147483648
    %v1898 = vmul.f32 %v1897, 1.442695
    %v1899 = vpow.pop %v1898
    %v1900 = vadd.f32 %v1899, 1.0
    %v1901 = vrcp.pop %v1900
    %v1902 = vmul.f32 %v1900, %v1901
    %v1903 = vsub.f32 1.0, %v1902
    %v1904 = vmul.f32 %v1901, %v1903
    %v1905 = vadd.f32 %v1901, %v1904
    %vm1906 = vweird.f32 %v1900
    %vm1907 = vweird.f32 %v1901
    %vm1908 = vmor %vm1906, %vm1907
    %v1909 = vsel %vm1908, %v1901, %v1905
    %v1910 = vand.u32 2147483647, %v1900
    %vm1911 = vcmp.eq.f32.partialorder %v1910, 8.507059e+37
    %v1912 = vand.u32 %v1900, 2147483648
    %v1913 = vor.u32 1.1754944e-38, %v1912
    %v1914 = vsel %vm1911, %v1913, %v1909
    %v1915 = vmul.f32 1.0, %v1914
    %v1916 = vxor.u32 %v1894, 2147483648
    %v1917 = vmul.f32 %v1916, 1.442695
    %v1918 = vpow.pop %v1917
    %v1919 = vadd.f32 %v1918, 1.0
    %v1920 = vrcp.pop %v1919
    %v1921 = vmul.f32 %v1919, %v1920
    %v1922 = vsub.f32 1.0, %v1921
    %v1923 = vmul.f32 %v1920, %v1922
    %v1924 = vadd.f32 %v1920, %v1923
    %vm1925 = vweird.f32 %v1919
    %vm1926 = vweird.f32 %v1920
    %vm1927 = vmor %vm1925, %vm1926
    %v1928 = vsel %vm1927, %v1920, %v1924
    %v1929 = vand.u32 2147483647, %v1919
    %vm1930 = vcmp.eq.f32.partialorder %v1929, 8.507059e+37
    %v1931 = vand.u32 %v1919, 2147483648
    %v1932 = vor.u32 1.1754944e-38, %v1931
    %v1933 = vsel %vm1930, %v1932, %v1928
    %v1934 = vmul.f32 1.0, %v1933
    %v1935 = vtanh.pop %v1895
    %v1936 = vxor.u32 %v1896, 2147483648
    %v1937 = vmul.f32 %v1936, 1.442695
    %v1938 = vpow.pop %v1937
    %v1939 = vadd.f32 %v1938, 1.0
    %v1940 = vrcp.pop %v1939
    %v1941 = vmul.f32 %v1939, %v1940
    %v1942 = vsub.f32 1.0, %v1941
    %v1943 = vmul.f32 %v1940, %v1942
    %v1944 = vadd.f32 %v1940, %v1943
    %vm1945 = vweird.f32 %v1939
    %vm1946 = vweird.f32 %v1940
    %vm1947 = vmor %vm1945, %vm1946
    %v1948 = vsel %vm1947, %v1940, %v1944
    %v1949 = vand.u32 2147483647, %v1939
    %vm1950 = vcmp.eq.f32.partialorder %v1949, 8.507059e+37
    %v1951 = vand.u32 %v1939, 2147483648
    %v1952 = vor.u32 1.1754944e-38, %v1951
    %v1953 = vsel %vm1950, %v1952, %v1948
    %v1954 = vmul.f32 1.0, %v1953
    %v1955 = vmul.f32 %v1934, %v1636
    %v1956 = vmul.f32 %v1915, %v1935
    %v1957 = vadd.f32 %v1955, %v1956
    %v1958 = vtanh.pop %v1957
    %v1959 = vmul.f32 %v1954, %v1958
    %s1960 = scalar_lea.vmem [#allocation3], 32
    %1961 = vst [vmem:[%s1960] sm:$0xff] %v1959
    %s1962 = smul.u32 5, 4
    %s1963 = smul.addr %s1962, 8
    %s1964 = scalar_lea.vmem [#allocation2], %s1963
    %v1965 = vld [vmem:[%s1964] sm:$0xff]
    %v1966 = vld [vmem:[%s1964 + $0x8] sm:$0xff]
    %v1967 = vld [vmem:[%s1964 + $0x10] sm:$0xff]
    %v1968 = vld [vmem:[%s1964 + $0x18] sm:$0xff]
    %v1969 = vpack.c.bf16 %v1959, %v1959
    %v1970 = vld [vmem:[#allocation10] sm:$0xff]
    %v1971 = vld [vmem:[#allocation10 + $0x8] sm:$0xff]
    %v1972 = vld [vmem:[#allocation10 + $0x10] sm:$0xff]
    %v1973 = vld [vmem:[#allocation10 + $0x18] sm:$0xff]
    %v1974 = vld [vmem:[#allocation10 + $0x20] sm:$0xff]
    %v1975 = vld [vmem:[#allocation10 + $0x28] sm:$0xff]
    %v1976 = vld [vmem:[#allocation10 + $0x30] sm:$0xff]
    %v1977 = vld [vmem:[#allocation10 + $0x38] sm:$0xff]
    %v1978 = vld [vmem:[#allocation10 + $0x40] sm:$0xff]
    %v1979 = vld [vmem:[#allocation10 + $0x48] sm:$0xff]
    %v1980 = vld [vmem:[#allocation10 + $0x50] sm:$0xff]
    %v1981 = vld [vmem:[#allocation10 + $0x58] sm:$0xff]
    %v1982 = vld [vmem:[#allocation10 + $0x60] sm:$0xff]
    %v1983 = vld [vmem:[#allocation10 + $0x68] sm:$0xff]
    %v1984 = vld [vmem:[#allocation10 + $0x70] sm:$0xff]
    %v1985 = vld [vmem:[#allocation10 + $0x78] sm:$0xff]
    %v1986 = vld [vmem:[#allocation10 + $0x80] sm:$0xff]
    %v1987 = vld [vmem:[#allocation10 + $0x88] sm:$0xff]
    %v1988 = vld [vmem:[#allocation10 + $0x90] sm:$0xff]
    %v1989 = vld [vmem:[#allocation10 + $0x98] sm:$0xff]
    %v1990 = vld [vmem:[#allocation10 + $0xa0] sm:$0xff]
    %v1991 = vld [vmem:[#allocation10 + $0xa8] sm:$0xff]
    %v1992 = vld [vmem:[#allocation10 + $0xb0] sm:$0xff]
    %v1993 = vld [vmem:[#allocation10 + $0xb8] sm:$0xff]
    %v1994 = vld [vmem:[#allocation10 + $0xc0] sm:$0xff]
    %v1995 = vld [vmem:[#allocation10 + $0xc8] sm:$0xff]
    %v1996 = vld [vmem:[#allocation10 + $0xd0] sm:$0xff]
    %v1997 = vld [vmem:[#allocation10 + $0xd8] sm:$0xff]
    %v1998 = vld [vmem:[#allocation10 + $0xe0] sm:$0xff]
    %v1999 = vld [vmem:[#allocation10 + $0xe8] sm:$0xff]
    %v2000 = vld [vmem:[#allocation10 + $0xf0] sm:$0xff]
    %v2001 = vld [vmem:[#allocation10 + $0xf8] sm:$0xff]
    %v2034 = vunpack.c.l.b16 %v1970
    %v2035 = vunpack.c.h.b16 %v1970
    %v2036 = vunpack.c.l.b16 %v1971
    %v2037 = vunpack.c.h.b16 %v1971
    %v2038 = vunpack.c.l.b16 %v1972
    %v2039 = vunpack.c.h.b16 %v1972
    %v2040 = vunpack.c.l.b16 %v1973
    %v2041 = vunpack.c.h.b16 %v1973
    %v2042 = vunpack.c.l.b16 %v1974
    %v2043 = vunpack.c.h.b16 %v1974
    %v2044 = vunpack.c.l.b16 %v1975
    %v2045 = vunpack.c.h.b16 %v1975
    %v2046 = vunpack.c.l.b16 %v1976
    %v2047 = vunpack.c.h.b16 %v1976
    %v2048 = vunpack.c.l.b16 %v1977
    %v2049 = vunpack.c.h.b16 %v1977
    %v2050 = vunpack.c.l.b16 %v1978
    %v2051 = vunpack.c.h.b16 %v1978
    %v2052 = vunpack.c.l.b16 %v1979
    %v2053 = vunpack.c.h.b16 %v1979
    %v2054 = vunpack.c.l.b16 %v1980
    %v2055 = vunpack.c.h.b16 %v1980
    %v2056 = vunpack.c.l.b16 %v1981
    %v2057 = vunpack.c.h.b16 %v1981
    %v2058 = vunpack.c.l.b16 %v1982
    %v2059 = vunpack.c.h.b16 %v1982
    %v2060 = vunpack.c.l.b16 %v1983
    %v2061 = vunpack.c.h.b16 %v1983
    %v2062 = vunpack.c.l.b16 %v1984
    %v2063 = vunpack.c.h.b16 %v1984
    %v2064 = vunpack.c.l.b16 %v1985
    %v2065 = vunpack.c.h.b16 %v1985
    %v2066 = vunpack.c.l.b16 %v1986
    %v2067 = vunpack.c.h.b16 %v1986
    %v2068 = vunpack.c.l.b16 %v1987
    %v2069 = vunpack.c.h.b16 %v1987
    %v2070 = vunpack.c.l.b16 %v1988
    %v2071 = vunpack.c.h.b16 %v1988
    %v2072 = vunpack.c.l.b16 %v1989
    %v2073 = vunpack.c.h.b16 %v1989
    %v2074 = vunpack.c.l.b16 %v1990
    %v2075 = vunpack.c.h.b16 %v1990
    %v2076 = vunpack.c.l.b16 %v1991
    %v2077 = vunpack.c.h.b16 %v1991
    %v2078 = vunpack.c.l.b16 %v1992
    %v2079 = vunpack.c.h.b16 %v1992
    %v2080 = vunpack.c.l.b16 %v1993
    %v2081 = vunpack.c.h.b16 %v1993
    %v2082 = vunpack.c.l.b16 %v1994
    %v2083 = vunpack.c.h.b16 %v1994
    %v2084 = vunpack.c.l.b16 %v1995
    %v2085 = vunpack.c.h.b16 %v1995
    %v2086 = vunpack.c.l.b16 %v1996
    %v2087 = vunpack.c.h.b16 %v1996
    %v2088 = vunpack.c.l.b16 %v1997
    %v2089 = vunpack.c.h.b16 %v1997
    %v2090 = vunpack.c.l.b16 %v1998
    %v2091 = vunpack.c.h.b16 %v1998
    %v2092 = vunpack.c.l.b16 %v1999
    %v2093 = vunpack.c.h.b16 %v1999
    %v2094 = vunpack.c.l.b16 %v2000
    %v2095 = vunpack.c.h.b16 %v2000
    %v2096 = vunpack.c.l.b16 %v2001
    %v2097 = vunpack.c.h.b16 %v2001
    %v2098 = vpack.c.b16 %v2038, %v2034
    %v2099 = vpack.c.b16 %v2039, %v2035
    %v2100 = vpack.c.b16 %v2040, %v2036
    %v2101 = vpack.c.b16 %v2041, %v2037
    %v2102 = vpack.c.b16 %v2046, %v2042
    %v2103 = vpack.c.b16 %v2047, %v2043
    %v2104 = vpack.c.b16 %v2048, %v2044
    %v2105 = vpack.c.b16 %v2049, %v2045
    %v2106 = vpack.c.b16 %v2054, %v2050
    %v2107 = vpack.c.b16 %v2055, %v2051
    %v2108 = vpack.c.b16 %v2056, %v2052
    %v2109 = vpack.c.b16 %v2057, %v2053
    %v2110 = vpack.c.b16 %v2062, %v2058
    %v2111 = vpack.c.b16 %v2063, %v2059
    %v2112 = vpack.c.b16 %v2064, %v2060
    %v2113 = vpack.c.b16 %v2065, %v2061
    %v2114 = vpack.c.b16 %v2070, %v2066
    %v2115 = vpack.c.b16 %v2071, %v2067
    %v2116 = vpack.c.b16 %v2072, %v2068
    %v2117 = vpack.c.b16 %v2073, %v2069
    %v2118 = vpack.c.b16 %v2078, %v2074
    %v2119 = vpack.c.b16 %v2079, %v2075
    %v2120 = vpack.c.b16 %v2080, %v2076
    %v2121 = vpack.c.b16 %v2081, %v2077
    %v2122 = vpack.c.b16 %v2086, %v2082
    %v2123 = vpack.c.b16 %v2087, %v2083
    %v2124 = vpack.c.b16 %v2088, %v2084
    %v2125 = vpack.c.b16 %v2089, %v2085
    %v2126 = vpack.c.b16 %v2094, %v2090
    %v2127 = vpack.c.b16 %v2095, %v2091
    %v2128 = vpack.c.b16 %v2096, %v2092
    %v2129 = vpack.c.b16 %v2097, %v2093
    %2162 = vmatpush.bf16.msra.mxu0 %v2126
    %2163 = vmatpush.bf16.msra.mxu0 %v2122
    %2164 = vmatpush.bf16.msra.mxu0 %v2118
    %2165 = vmatpush.bf16.msra.mxu0 %v2114
    %2166 = vmatpush.bf16.msra.mxu0 %v2110
    %2167 = vmatpush.bf16.msra.mxu0 %v2106
    %2168 = vmatpush.bf16.msra.mxu0 %v2102
    %2169 = vmatpush.bf16.msra.mxu0 %v2098
    %2170 = vmatmul.bf16.gmra.mxu0 %v1969
    %v2171 = vpop.f32.mrf.mxu0
    %v2172 = vadd.f32 0.0, %v2171
    %v2173 = vpop.f32.mrf.mxu0
    %2174 = vdwg.mxu0
    %2175 = vmatpush.bf16.msra.mxu0 %v2127
    %2176 = vmatpush.bf16.msra.mxu0 %v2123
    %2177 = vmatpush.bf16.msra.mxu0 %v2119
    %2178 = vmatpush.bf16.msra.mxu0 %v2115
    %2179 = vmatpush.bf16.msra.mxu0 %v2111
    %2180 = vmatpush.bf16.msra.mxu0 %v2107
    %2181 = vmatpush.bf16.msra.mxu0 %v2103
    %2182 = vmatpush.bf16.msra.mxu0 %v2099
    %2183 = vmatmul.bf16.gmra.mxu0 %v1969
    %v2184 = vpop.f32.mrf.mxu0
    %v2185 = vadd.f32 0.0, %v2184
    %v2186 = vpop.f32.mrf.mxu0
    %2187 = vdwg.mxu0
    %2188 = vmatpush.bf16.msra.mxu0 %v2128
    %2189 = vmatpush.bf16.msra.mxu0 %v2124
    %2190 = vmatpush.bf16.msra.mxu0 %v2120
    %2191 = vmatpush.bf16.msra.mxu0 %v2116
    %2192 = vmatpush.bf16.msra.mxu0 %v2112
    %2193 = vmatpush.bf16.msra.mxu0 %v2108
    %2194 = vmatpush.bf16.msra.mxu0 %v2104
    %2195 = vmatpush.bf16.msra.mxu0 %v2100
    %2196 = vmatmul.bf16.gmra.mxu0 %v1969
    %v2197 = vpop.f32.mrf.mxu0
    %v2198 = vadd.f32 0.0, %v2197
    %v2199 = vpop.f32.mrf.mxu0
    %2200 = vdwg.mxu0
    %2201 = vmatpush.bf16.msra.mxu0 %v2129
    %2202 = vmatpush.bf16.msra.mxu0 %v2125
    %2203 = vmatpush.bf16.msra.mxu0 %v2121
    %2204 = vmatpush.bf16.msra.mxu0 %v2117
    %2205 = vmatpush.bf16.msra.mxu0 %v2113
    %2206 = vmatpush.bf16.msra.mxu0 %v2109
    %2207 = vmatpush.bf16.msra.mxu0 %v2105
    %2208 = vmatpush.bf16.msra.mxu0 %v2101
    %2209 = vmatmul.bf16.gmra.mxu0 %v1969
    %v2210 = vpop.f32.mrf.mxu0
    %v2211 = vadd.f32 0.0, %v2210
    %v2212 = vpop.f32.mrf.mxu0
    %2213 = vdwg.mxu0
    %v2214 = vadd.f32 %v1965, %v2172
    %v2215 = vadd.f32 %v1966, %v2185
    %v2216 = vadd.f32 %v1967, %v2198
    %v2217 = vadd.f32 %v1968, %v2211
    %v2218 = vxor.u32 %v2214, 2147483648
    %v2219 = vmul.f32 %v2218, 1.442695
    %v2220 = vpow.pop %v2219
    %v2221 = vadd.f32 %v2220, 1.0
    %v2222 = vrcp.pop %v2221
    %v2223 = vmul.f32 %v2221, %v2222
    %v2224 = vsub.f32 1.0, %v2223
    %v2225 = vmul.f32 %v2222, %v2224
    %v2226 = vadd.f32 %v2222, %v2225
    %vm2227 = vweird.f32 %v2221
    %vm2228 = vweird.f32 %v2222
    %vm2229 = vmor %vm2227, %vm2228
    %v2230 = vsel %vm2229, %v2222, %v2226
    %v2231 = vand.u32 2147483647, %v2221
    %vm2232 = vcmp.eq.f32.partialorder %v2231, 8.507059e+37
    %v2233 = vand.u32 %v2221, 2147483648
    %v2234 = vor.u32 1.1754944e-38, %v2233
    %v2235 = vsel %vm2232, %v2234, %v2230
    %v2236 = vmul.f32 1.0, %v2235
    %v2237 = vxor.u32 %v2215, 2147483648
    %v2238 = vmul.f32 %v2237, 1.442695
    %v2239 = vpow.pop %v2238
    %v2240 = vadd.f32 %v2239, 1.0
    %v2241 = vrcp.pop %v2240
    %v2242 = vmul.f32 %v2240, %v2241
    %v2243 = vsub.f32 1.0, %v2242
    %v2244 = vmul.f32 %v2241, %v2243
    %v2245 = vadd.f32 %v2241, %v2244
    %vm2246 = vweird.f32 %v2240
    %vm2247 = vweird.f32 %v2241
    %vm2248 = vmor %vm2246, %vm2247
    %v2249 = vsel %vm2248, %v2241, %v2245
    %v2250 = vand.u32 2147483647, %v2240
    %vm2251 = vcmp.eq.f32.partialorder %v2250, 8.507059e+37
    %v2252 = vand.u32 %v2240, 2147483648
    %v2253 = vor.u32 1.1754944e-38, %v2252
    %v2254 = vsel %vm2251, %v2253, %v2249
    %v2255 = vmul.f32 1.0, %v2254
    %v2256 = vtanh.pop %v2216
    %v2257 = vxor.u32 %v2217, 2147483648
    %v2258 = vmul.f32 %v2257, 1.442695
    %v2259 = vpow.pop %v2258
    %v2260 = vadd.f32 %v2259, 1.0
    %v2261 = vrcp.pop %v2260
    %v2262 = vmul.f32 %v2260, %v2261
    %v2263 = vsub.f32 1.0, %v2262
    %v2264 = vmul.f32 %v2261, %v2263
    %v2265 = vadd.f32 %v2261, %v2264
    %vm2266 = vweird.f32 %v2260
    %vm2267 = vweird.f32 %v2261
    %vm2268 = vmor %vm2266, %vm2267
    %v2269 = vsel %vm2268, %v2261, %v2265
    %v2270 = vand.u32 2147483647, %v2260
    %vm2271 = vcmp.eq.f32.partialorder %v2270, 8.507059e+37
    %v2272 = vand.u32 %v2260, 2147483648
    %v2273 = vor.u32 1.1754944e-38, %v2272
    %v2274 = vsel %vm2271, %v2273, %v2269
    %v2275 = vmul.f32 1.0, %v2274
    %v2276 = vmul.f32 %v2255, %v1957
    %v2277 = vmul.f32 %v2236, %v2256
    %v2278 = vadd.f32 %v2276, %v2277
    %v2279 = vtanh.pop %v2278
    %v2280 = vmul.f32 %v2275, %v2279
    %s2281 = scalar_lea.vmem [#allocation3], 40
    %2282 = vst [vmem:[%s2281] sm:$0xff] %v2280
    %s2283 = smul.u32 6, 4
    %s2284 = smul.addr %s2283, 8
    %s2285 = scalar_lea.vmem [#allocation2], %s2284
    %v2286 = vld [vmem:[%s2285] sm:$0xff]
    %v2287 = vld [vmem:[%s2285 + $0x8] sm:$0xff]
    %v2288 = vld [vmem:[%s2285 + $0x10] sm:$0xff]
    %v2289 = vld [vmem:[%s2285 + $0x18] sm:$0xff]
    %v2290 = vpack.c.bf16 %v2280, %v2280
    %v2291 = vld [vmem:[#allocation10] sm:$0xff]
    %v2292 = vld [vmem:[#allocation10 + $0x8] sm:$0xff]
    %v2293 = vld [vmem:[#allocation10 + $0x10] sm:$0xff]
    %v2294 = vld [vmem:[#allocation10 + $0x18] sm:$0xff]
    %v2295 = vld [vmem:[#allocation10 + $0x20] sm:$0xff]
    %v2296 = vld [vmem:[#allocation10 + $0x28] sm:$0xff]
    %v2297 = vld [vmem:[#allocation10 + $0x30] sm:$0xff]
    %v2298 = vld [vmem:[#allocation10 + $0x38] sm:$0xff]
    %v2299 = vld [vmem:[#allocation10 + $0x40] sm:$0xff]
    %v2300 = vld [vmem:[#allocation10 + $0x48] sm:$0xff]
    %v2301 = vld [vmem:[#allocation10 + $0x50] sm:$0xff]
    %v2302 = vld [vmem:[#allocation10 + $0x58] sm:$0xff]
    %v2303 = vld [vmem:[#allocation10 + $0x60] sm:$0xff]
    %v2304 = vld [vmem:[#allocation10 + $0x68] sm:$0xff]
    %v2305 = vld [vmem:[#allocation10 + $0x70] sm:$0xff]
    %v2306 = vld [vmem:[#allocation10 + $0x78] sm:$0xff]
    %v2307 = vld [vmem:[#allocation10 + $0x80] sm:$0xff]
    %v2308 = vld [vmem:[#allocation10 + $0x88] sm:$0xff]
    %v2309 = vld [vmem:[#allocation10 + $0x90] sm:$0xff]
    %v2310 = vld [vmem:[#allocation10 + $0x98] sm:$0xff]
    %v2311 = vld [vmem:[#allocation10 + $0xa0] sm:$0xff]
    %v2312 = vld [vmem:[#allocation10 + $0xa8] sm:$0xff]
    %v2313 = vld [vmem:[#allocation10 + $0xb0] sm:$0xff]
    %v2314 = vld [vmem:[#allocation10 + $0xb8] sm:$0xff]
    %v2315 = vld [vmem:[#allocation10 + $0xc0] sm:$0xff]
    %v2316 = vld [vmem:[#allocation10 + $0xc8] sm:$0xff]
    %v2317 = vld [vmem:[#allocation10 + $0xd0] sm:$0xff]
    %v2318 = vld [vmem:[#allocation10 + $0xd8] sm:$0xff]
    %v2319 = vld [vmem:[#allocation10 + $0xe0] sm:$0xff]
    %v2320 = vld [vmem:[#allocation10 + $0xe8] sm:$0xff]
    %v2321 = vld [vmem:[#allocation10 + $0xf0] sm:$0xff]
    %v2322 = vld [vmem:[#allocation10 + $0xf8] sm:$0xff]
    %v2355 = vunpack.c.l.b16 %v2291
    %v2356 = vunpack.c.h.b16 %v2291
    %v2357 = vunpack.c.l.b16 %v2292
    %v2358 = vunpack.c.h.b16 %v2292
    %v2359 = vunpack.c.l.b16 %v2293
    %v2360 = vunpack.c.h.b16 %v2293
    %v2361 = vunpack.c.l.b16 %v2294
    %v2362 = vunpack.c.h.b16 %v2294
    %v2363 = vunpack.c.l.b16 %v2295
    %v2364 = vunpack.c.h.b16 %v2295
    %v2365 = vunpack.c.l.b16 %v2296
    %v2366 = vunpack.c.h.b16 %v2296
    %v2367 = vunpack.c.l.b16 %v2297
    %v2368 = vunpack.c.h.b16 %v2297
    %v2369 = vunpack.c.l.b16 %v2298
    %v2370 = vunpack.c.h.b16 %v2298
    %v2371 = vunpack.c.l.b16 %v2299
    %v2372 = vunpack.c.h.b16 %v2299
    %v2373 = vunpack.c.l.b16 %v2300
    %v2374 = vunpack.c.h.b16 %v2300
    %v2375 = vunpack.c.l.b16 %v2301
    %v2376 = vunpack.c.h.b16 %v2301
    %v2377 = vunpack.c.l.b16 %v2302
    %v2378 = vunpack.c.h.b16 %v2302
    %v2379 = vunpack.c.l.b16 %v2303
    %v2380 = vunpack.c.h.b16 %v2303
    %v2381 = vunpack.c.l.b16 %v2304
    %v2382 = vunpack.c.h.b16 %v2304
    %v2383 = vunpack.c.l.b16 %v2305
    %v2384 = vunpack.c.h.b16 %v2305
    %v2385 = vunpack.c.l.b16 %v2306
    %v2386 = vunpack.c.h.b16 %v2306
    %v2387 = vunpack.c.l.b16 %v2307
    %v2388 = vunpack.c.h.b16 %v2307
    %v2389 = vunpack.c.l.b16 %v2308
    %v2390 = vunpack.c.h.b16 %v2308
    %v2391 = vunpack.c.l.b16 %v2309
    %v2392 = vunpack.c.h.b16 %v2309
    %v2393 = vunpack.c.l.b16 %v2310
    %v2394 = vunpack.c.h.b16 %v2310
    %v2395 = vunpack.c.l.b16 %v2311
    %v2396 = vunpack.c.h.b16 %v2311
    %v2397 = vunpack.c.l.b16 %v2312
    %v2398 = vunpack.c.h.b16 %v2312
    %v2399 = vunpack.c.l.b16 %v2313
    %v2400 = vunpack.c.h.b16 %v2313
    %v2401 = vunpack.c.l.b16 %v2314
    %v2402 = vunpack.c.h.b16 %v2314
    %v2403 = vunpack.c.l.b16 %v2315
    %v2404 = vunpack.c.h.b16 %v2315
    %v2405 = vunpack.c.l.b16 %v2316
    %v2406 = vunpack.c.h.b16 %v2316
    %v2407 = vunpack.c.l.b16 %v2317
    %v2408 = vunpack.c.h.b16 %v2317
    %v2409 = vunpack.c.l.b16 %v2318
    %v2410 = vunpack.c.h.b16 %v2318
    %v2411 = vunpack.c.l.b16 %v2319
    %v2412 = vunpack.c.h.b16 %v2319
    %v2413 = vunpack.c.l.b16 %v2320
    %v2414 = vunpack.c.h.b16 %v2320
    %v2415 = vunpack.c.l.b16 %v2321
    %v2416 = vunpack.c.h.b16 %v2321
    %v2417 = vunpack.c.l.b16 %v2322
    %v2418 = vunpack.c.h.b16 %v2322
    %v2419 = vpack.c.b16 %v2359, %v2355
    %v2420 = vpack.c.b16 %v2360, %v2356
    %v2421 = vpack.c.b16 %v2361, %v2357
    %v2422 = vpack.c.b16 %v2362, %v2358
    %v2423 = vpack.c.b16 %v2367, %v2363
    %v2424 = vpack.c.b16 %v2368, %v2364
    %v2425 = vpack.c.b16 %v2369, %v2365
    %v2426 = vpack.c.b16 %v2370, %v2366
    %v2427 = vpack.c.b16 %v2375, %v2371
    %v2428 = vpack.c.b16 %v2376, %v2372
    %v2429 = vpack.c.b16 %v2377, %v2373
    %v2430 = vpack.c.b16 %v2378, %v2374
    %v2431 = vpack.c.b16 %v2383, %v2379
    %v2432 = vpack.c.b16 %v2384, %v2380
    %v2433 = vpack.c.b16 %v2385, %v2381
    %v2434 = vpack.c.b16 %v2386, %v2382
    %v2435 = vpack.c.b16 %v2391, %v2387
    %v2436 = vpack.c.b16 %v2392, %v2388
    %v2437 = vpack.c.b16 %v2393, %v2389
    %v2438 = vpack.c.b16 %v2394, %v2390
    %v2439 = vpack.c.b16 %v2399, %v2395
    %v2440 = vpack.c.b16 %v2400, %v2396
    %v2441 = vpack.c.b16 %v2401, %v2397
    %v2442 = vpack.c.b16 %v2402, %v2398
    %v2443 = vpack.c.b16 %v2407, %v2403
    %v2444 = vpack.c.b16 %v2408, %v2404
    %v2445 = vpack.c.b16 %v2409, %v2405
    %v2446 = vpack.c.b16 %v2410, %v2406
    %v2447 = vpack.c.b16 %v2415, %v2411
    %v2448 = vpack.c.b16 %v2416, %v2412
    %v2449 = vpack.c.b16 %v2417, %v2413
    %v2450 = vpack.c.b16 %v2418, %v2414
    %2483 = vmatpush.bf16.msra.mxu0 %v2447
    %2484 = vmatpush.bf16.msra.mxu0 %v2443
    %2485 = vmatpush.bf16.msra.mxu0 %v2439
    %2486 = vmatpush.bf16.msra.mxu0 %v2435
    %2487 = vmatpush.bf16.msra.mxu0 %v2431
    %2488 = vmatpush.bf16.msra.mxu0 %v2427
    %2489 = vmatpush.bf16.msra.mxu0 %v2423
    %2490 = vmatpush.bf16.msra.mxu0 %v2419
    %2491 = vmatmul.bf16.gmra.mxu0 %v2290
    %v2492 = vpop.f32.mrf.mxu0
    %v2493 = vadd.f32 0.0, %v2492
    %v2494 = vpop.f32.mrf.mxu0
    %2495 = vdwg.mxu0
    %2496 = vmatpush.bf16.msra.mxu0 %v2448
    %2497 = vmatpush.bf16.msra.mxu0 %v2444
    %2498 = vmatpush.bf16.msra.mxu0 %v2440
    %2499 = vmatpush.bf16.msra.mxu0 %v2436
    %2500 = vmatpush.bf16.msra.mxu0 %v2432
    %2501 = vmatpush.bf16.msra.mxu0 %v2428
    %2502 = vmatpush.bf16.msra.mxu0 %v2424
    %2503 = vmatpush.bf16.msra.mxu0 %v2420
    %2504 = vmatmul.bf16.gmra.mxu0 %v2290
    %v2505 = vpop.f32.mrf.mxu0
    %v2506 = vadd.f32 0.0, %v2505
    %v2507 = vpop.f32.mrf.mxu0
    %2508 = vdwg.mxu0
    %2509 = vmatpush.bf16.msra.mxu0 %v2449
    %2510 = vmatpush.bf16.msra.mxu0 %v2445
    %2511 = vmatpush.bf16.msra.mxu0 %v2441
    %2512 = vmatpush.bf16.msra.mxu0 %v2437
    %2513 = vmatpush.bf16.msra.mxu0 %v2433
    %2514 = vmatpush.bf16.msra.mxu0 %v2429
    %2515 = vmatpush.bf16.msra.mxu0 %v2425
    %2516 = vmatpush.bf16.msra.mxu0 %v2421
    %2517 = vmatmul.bf16.gmra.mxu0 %v2290
    %v2518 = vpop.f32.mrf.mxu0
    %v2519 = vadd.f32 0.0, %v2518
    %v2520 = vpop.f32.mrf.mxu0
    %2521 = vdwg.mxu0
    %2522 = vmatpush.bf16.msra.mxu0 %v2450
    %2523 = vmatpush.bf16.msra.mxu0 %v2446
    %2524 = vmatpush.bf16.msra.mxu0 %v2442
    %2525 = vmatpush.bf16.msra.mxu0 %v2438
    %2526 = vmatpush.bf16.msra.mxu0 %v2434
    %2527 = vmatpush.bf16.msra.mxu0 %v2430
    %2528 = vmatpush.bf16.msra.mxu0 %v2426
    %2529 = vmatpush.bf16.msra.mxu0 %v2422
    %2530 = vmatmul.bf16.gmra.mxu0 %v2290
    %v2531 = vpop.f32.mrf.mxu0
    %v2532 = vadd.f32 0.0, %v2531
    %v2533 = vpop.f32.mrf.mxu0
    %2534 = vdwg.mxu0
    %v2535 = vadd.f32 %v2286, %v2493
    %v2536 = vadd.f32 %v2287, %v2506
    %v2537 = vadd.f32 %v2288, %v2519
    %v2538 = vadd.f32 %v2289, %v2532
    %v2539 = vxor.u32 %v2535, 2147483648
    %v2540 = vmul.f32 %v2539, 1.442695
    %v2541 = vpow.pop %v2540
    %v2542 = vadd.f32 %v2541, 1.0
    %v2543 = vrcp.pop %v2542
    %v2544 = vmul.f32 %v2542, %v2543
    %v2545 = vsub.f32 1.0, %v2544
    %v2546 = vmul.f32 %v2543, %v2545
    %v2547 = vadd.f32 %v2543, %v2546
    %vm2548 = vweird.f32 %v2542
    %vm2549 = vweird.f32 %v2543
    %vm2550 = vmor %vm2548, %vm2549
    %v2551 = vsel %vm2550, %v2543, %v2547
    %v2552 = vand.u32 2147483647, %v2542
    %vm2553 = vcmp.eq.f32.partialorder %v2552, 8.507059e+37
    %v2554 = vand.u32 %v2542, 2147483648
    %v2555 = vor.u32 1.1754944e-38, %v2554
    %v2556 = vsel %vm2553, %v2555, %v2551
    %v2557 = vmul.f32 1.0, %v2556
    %v2558 = vxor.u32 %v2536, 2147483648
    %v2559 = vmul.f32 %v2558, 1.442695
    %v2560 = vpow.pop %v2559
    %v2561 = vadd.f32 %v2560, 1.0
    %v2562 = vrcp.pop %v2561
    %v2563 = vmul.f32 %v2561, %v2562
    %v2564 = vsub.f32 1.0, %v2563
    %v2565 = vmul.f32 %v2562, %v2564
    %v2566 = vadd.f32 %v2562, %v2565
    %vm2567 = vweird.f32 %v2561
    %vm2568 = vweird.f32 %v2562
    %vm2569 = vmor %vm2567, %vm2568
    %v2570 = vsel %vm2569, %v2562, %v2566
    %v2571 = vand.u32 2147483647, %v2561
    %vm2572 = vcmp.eq.f32.partialorder %v2571, 8.507059e+37
    %v2573 = vand.u32 %v2561, 2147483648
    %v2574 = vor.u32 1.1754944e-38, %v2573
    %v2575 = vsel %vm2572, %v2574, %v2570
    %v2576 = vmul.f32 1.0, %v2575
    %v2577 = vtanh.pop %v2537
    %v2578 = vxor.u32 %v2538, 2147483648
    %v2579 = vmul.f32 %v2578, 1.442695
    %v2580 = vpow.pop %v2579
    %v2581 = vadd.f32 %v2580, 1.0
    %v2582 = vrcp.pop %v2581
    %v2583 = vmul.f32 %v2581, %v2582
    %v2584 = vsub.f32 1.0, %v2583
    %v2585 = vmul.f32 %v2582, %v2584
    %v2586 = vadd.f32 %v2582, %v2585
    %vm2587 = vweird.f32 %v2581
    %vm2588 = vweird.f32 %v2582
    %vm2589 = vmor %vm2587, %vm2588
    %v2590 = vsel %vm2589, %v2582, %v2586
    %v2591 = vand.u32 2147483647, %v2581
    %vm2592 = vcmp.eq.f32.partialorder %v2591, 8.507059e+37
    %v2593 = vand.u32 %v2581, 2147483648
    %v2594 = vor.u32 1.1754944e-38, %v2593
    %v2595 = vsel %vm2592, %v2594, %v2590
    %v2596 = vmul.f32 1.0, %v2595
    %v2597 = vmul.f32 %v2576, %v2278
    %v2598 = vmul.f32 %v2557, %v2577
    %v2599 = vadd.f32 %v2597, %v2598
    %v2600 = vtanh.pop %v2599
    %v2601 = vmul.f32 %v2596, %v2600
    %s2602 = scalar_lea.vmem [#allocation3], 48
    %2603 = vst [vmem:[%s2602] sm:$0xff] %v2601
    %s2604 = smul.u32 7, 4
    %s2605 = smul.addr %s2604, 8
    %s2606 = scalar_lea.vmem [#allocation2], %s2605
    %v2607 = vld [vmem:[%s2606] sm:$0xff]
    %v2608 = vld [vmem:[%s2606 + $0x8] sm:$0xff]
    %v2609 = vld [vmem:[%s2606 + $0x10] sm:$0xff]
    %v2610 = vld [vmem:[%s2606 + $0x18] sm:$0xff]
    %v2611 = vpack.c.bf16 %v2601, %v2601
    %v2612 = vld [vmem:[#allocation10] sm:$0xff]
    %v2613 = vld [vmem:[#allocation10 + $0x8] sm:$0xff]
    %v2614 = vld [vmem:[#allocation10 + $0x10] sm:$0xff]
    %v2615 = vld [vmem:[#allocation10 + $0x18] sm:$0xff]
    %v2616 = vld [vmem:[#allocation10 + $0x20] sm:$0xff]
    %v2617 = vld [vmem:[#allocation10 + $0x28] sm:$0xff]
    %v2618 = vld [vmem:[#allocation10 + $0x30] sm:$0xff]
    %v2619 = vld [vmem:[#allocation10 + $0x38] sm:$0xff]
    %v2620 = vld [vmem:[#allocation10 + $0x40] sm:$0xff]
    %v2621 = vld [vmem:[#allocation10 + $0x48] sm:$0xff]
    %v2622 = vld [vmem:[#allocation10 + $0x50] sm:$0xff]
    %v2623 = vld [vmem:[#allocation10 + $0x58] sm:$0xff]
    %v2624 = vld [vmem:[#allocation10 + $0x60] sm:$0xff]
    %v2625 = vld [vmem:[#allocation10 + $0x68] sm:$0xff]
    %v2626 = vld [vmem:[#allocation10 + $0x70] sm:$0xff]
    %v2627 = vld [vmem:[#allocation10 + $0x78] sm:$0xff]
    %v2628 = vld [vmem:[#allocation10 + $0x80] sm:$0xff]
    %v2629 = vld [vmem:[#allocation10 + $0x88] sm:$0xff]
    %v2630 = vld [vmem:[#allocation10 + $0x90] sm:$0xff]
    %v2631 = vld [vmem:[#allocation10 + $0x98] sm:$0xff]
    %v2632 = vld [vmem:[#allocation10 + $0xa0] sm:$0xff]
    %v2633 = vld [vmem:[#allocation10 + $0xa8] sm:$0xff]
    %v2634 = vld [vmem:[#allocation10 + $0xb0] sm:$0xff]
    %v2635 = vld [vmem:[#allocation10 + $0xb8] sm:$0xff]
    %v2636 = vld [vmem:[#allocation10 + $0xc0] sm:$0xff]
    %v2637 = vld [vmem:[#allocation10 + $0xc8] sm:$0xff]
    %v2638 = vld [vmem:[#allocation10 + $0xd0] sm:$0xff]
    %v2639 = vld [vmem:[#allocation10 + $0xd8] sm:$0xff]
    %v2640 = vld [vmem:[#allocation10 + $0xe0] sm:$0xff]
    %v2641 = vld [vmem:[#allocation10 + $0xe8] sm:$0xff]
    %v2642 = vld [vmem:[#allocation10 + $0xf0] sm:$0xff]
    %v2643 = vld [vmem:[#allocation10 + $0xf8] sm:$0xff]
    %v2676 = vunpack.c.l.b16 %v2612
    %v2677 = vunpack.c.h.b16 %v2612
    %v2678 = vunpack.c.l.b16 %v2613
    %v2679 = vunpack.c.h.b16 %v2613
    %v2680 = vunpack.c.l.b16 %v2614
    %v2681 = vunpack.c.h.b16 %v2614
    %v2682 = vunpack.c.l.b16 %v2615
    %v2683 = vunpack.c.h.b16 %v2615
    %v2684 = vunpack.c.l.b16 %v2616
    %v2685 = vunpack.c.h.b16 %v2616
    %v2686 = vunpack.c.l.b16 %v2617
    %v2687 = vunpack.c.h.b16 %v2617
    %v2688 = vunpack.c.l.b16 %v2618
    %v2689 = vunpack.c.h.b16 %v2618
    %v2690 = vunpack.c.l.b16 %v2619
    %v2691 = vunpack.c.h.b16 %v2619
    %v2692 = vunpack.c.l.b16 %v2620
    %v2693 = vunpack.c.h.b16 %v2620
    %v2694 = vunpack.c.l.b16 %v2621
    %v2695 = vunpack.c.h.b16 %v2621
    %v2696 = vunpack.c.l.b16 %v2622
    %v2697 = vunpack.c.h.b16 %v2622
    %v2698 = vunpack.c.l.b16 %v2623
    %v2699 = vunpack.c.h.b16 %v2623
    %v2700 = vunpack.c.l.b16 %v2624
    %v2701 = vunpack.c.h.b16 %v2624
    %v2702 = vunpack.c.l.b16 %v2625
    %v2703 = vunpack.c.h.b16 %v2625
    %v2704 = vunpack.c.l.b16 %v2626
    %v2705 = vunpack.c.h.b16 %v2626
    %v2706 = vunpack.c.l.b16 %v2627
    %v2707 = vunpack.c.h.b16 %v2627
    %v2708 = vunpack.c.l.b16 %v2628
    %v2709 = vunpack.c.h.b16 %v2628
    %v2710 = vunpack.c.l.b16 %v2629
    %v2711 = vunpack.c.h.b16 %v2629
    %v2712 = vunpack.c.l.b16 %v2630
    %v2713 = vunpack.c.h.b16 %v2630
    %v2714 = vunpack.c.l.b16 %v2631
    %v2715 = vunpack.c.h.b16 %v2631
    %v2716 = vunpack.c.l.b16 %v2632
    %v2717 = vunpack.c.h.b16 %v2632
    %v2718 = vunpack.c.l.b16 %v2633
    %v2719 = vunpack.c.h.b16 %v2633
    %v2720 = vunpack.c.l.b16 %v2634
    %v2721 = vunpack.c.h.b16 %v2634
    %v2722 = vunpack.c.l.b16 %v2635
    %v2723 = vunpack.c.h.b16 %v2635
    %v2724 = vunpack.c.l.b16 %v2636
    %v2725 = vunpack.c.h.b16 %v2636
    %v2726 = vunpack.c.l.b16 %v2637
    %v2727 = vunpack.c.h.b16 %v2637
    %v2728 = vunpack.c.l.b16 %v2638
    %v2729 = vunpack.c.h.b16 %v2638
    %v2730 = vunpack.c.l.b16 %v2639
    %v2731 = vunpack.c.h.b16 %v2639
    %v2732 = vunpack.c.l.b16 %v2640
    %v2733 = vunpack.c.h.b16 %v2640
    %v2734 = vunpack.c.l.b16 %v2641
    %v2735 = vunpack.c.h.b16 %v2641
    %v2736 = vunpack.c.l.b16 %v2642
    %v2737 = vunpack.c.h.b16 %v2642
    %v2738 = vunpack.c.l.b16 %v2643
    %v2739 = vunpack.c.h.b16 %v2643
    %v2740 = vpack.c.b16 %v2680, %v2676
    %v2741 = vpack.c.b16 %v2681, %v2677
    %v2742 = vpack.c.b16 %v2682, %v2678
    %v2743 = vpack.c.b16 %v2683, %v2679
    %v2744 = vpack.c.b16 %v2688, %v2684
    %v2745 = vpack.c.b16 %v2689, %v2685
    %v2746 = vpack.c.b16 %v2690, %v2686
    %v2747 = vpack.c.b16 %v2691, %v2687
    %v2748 = vpack.c.b16 %v2696, %v2692
    %v2749 = vpack.c.b16 %v2697, %v2693
    %v2750 = vpack.c.b16 %v2698, %v2694
    %v2751 = vpack.c.b16 %v2699, %v2695
    %v2752 = vpack.c.b16 %v2704, %v2700
    %v2753 = vpack.c.b16 %v2705, %v2701
    %v2754 = vpack.c.b16 %v2706, %v2702
    %v2755 = vpack.c.b16 %v2707, %v2703
    %v2756 = vpack.c.b16 %v2712, %v2708
    %v2757 = vpack.c.b16 %v2713, %v2709
    %v2758 = vpack.c.b16 %v2714, %v2710
    %v2759 = vpack.c.b16 %v2715, %v2711
    %v2760 = vpack.c.b16 %v2720, %v2716
    %v2761 = vpack.c.b16 %v2721, %v2717
    %v2762 = vpack.c.b16 %v2722, %v2718
    %v2763 = vpack.c.b16 %v2723, %v2719
    %v2764 = vpack.c.b16 %v2728, %v2724
    %v2765 = vpack.c.b16 %v2729, %v2725
    %v2766 = vpack.c.b16 %v2730, %v2726
    %v2767 = vpack.c.b16 %v2731, %v2727
    %v2768 = vpack.c.b16 %v2736, %v2732
    %v2769 = vpack.c.b16 %v2737, %v2733
    %v2770 = vpack.c.b16 %v2738, %v2734
    %v2771 = vpack.c.b16 %v2739, %v2735
    %2804 = vmatpush.bf16.msra.mxu0 %v2768
    %2805 = vmatpush.bf16.msra.mxu0 %v2764
    %2806 = vmatpush.bf16.msra.mxu0 %v2760
    %2807 = vmatpush.bf16.msra.mxu0 %v2756
    %2808 = vmatpush.bf16.msra.mxu0 %v2752
    %2809 = vmatpush.bf16.msra.mxu0 %v2748
    %2810 = vmatpush.bf16.msra.mxu0 %v2744
    %2811 = vmatpush.bf16.msra.mxu0 %v2740
    %2812 = vmatmul.bf16.gmra.mxu0 %v2611
    %v2813 = vpop.f32.mrf.mxu0
    %v2814 = vadd.f32 0.0, %v2813
    %v2815 = vpop.f32.mrf.mxu0
    %2816 = vdwg.mxu0
    %2817 = vmatpush.bf16.msra.mxu0 %v2769
    %2818 = vmatpush.bf16.msra.mxu0 %v2765
    %2819 = vmatpush.bf16.msra.mxu0 %v2761
    %2820 = vmatpush.bf16.msra.mxu0 %v2757
    %2821 = vmatpush.bf16.msra.mxu0 %v2753
    %2822 = vmatpush.bf16.msra.mxu0 %v2749
    %2823 = vmatpush.bf16.msra.mxu0 %v2745
    %2824 = vmatpush.bf16.msra.mxu0 %v2741
    %2825 = vmatmul.bf16.gmra.mxu0 %v2611
    %v2826 = vpop.f32.mrf.mxu0
    %v2827 = vadd.f32 0.0, %v2826
    %v2828 = vpop.f32.mrf.mxu0
    %2829 = vdwg.mxu0
    %2830 = vmatpush.bf16.msra.mxu0 %v2770
    %2831 = vmatpush.bf16.msra.mxu0 %v2766
    %2832 = vmatpush.bf16.msra.mxu0 %v2762
    %2833 = vmatpush.bf16.msra.mxu0 %v2758
    %2834 = vmatpush.bf16.msra.mxu0 %v2754
    %2835 = vmatpush.bf16.msra.mxu0 %v2750
    %2836 = vmatpush.bf16.msra.mxu0 %v2746
    %2837 = vmatpush.bf16.msra.mxu0 %v2742
    %2838 = vmatmul.bf16.gmra.mxu0 %v2611
    %v2839 = vpop.f32.mrf.mxu0
    %v2840 = vadd.f32 0.0, %v2839
    %v2841 = vpop.f32.mrf.mxu0
    %2842 = vdwg.mxu0
    %2843 = vmatpush.bf16.msra.mxu0 %v2771
    %2844 = vmatpush.bf16.msra.mxu0 %v2767
    %2845 = vmatpush.bf16.msra.mxu0 %v2763
    %2846 = vmatpush.bf16.msra.mxu0 %v2759
    %2847 = vmatpush.bf16.msra.mxu0 %v2755
    %2848 = vmatpush.bf16.msra.mxu0 %v2751
    %2849 = vmatpush.bf16.msra.mxu0 %v2747
    %2850 = vmatpush.bf16.msra.mxu0 %v2743
    %2851 = vmatmul.bf16.gmra.mxu0 %v2611
    %v2852 = vpop.f32.mrf.mxu0
    %v2853 = vadd.f32 0.0, %v2852
    %v2854 = vpop.f32.mrf.mxu0
    %2855 = vdwg.mxu0
    %v2856 = vadd.f32 %v2607, %v2814
    %v2857 = vadd.f32 %v2608, %v2827
    %v2858 = vadd.f32 %v2609, %v2840
    %v2859 = vadd.f32 %v2610, %v2853
    %v2860 = vxor.u32 %v2856, 2147483648
    %v2861 = vmul.f32 %v2860, 1.442695
    %v2862 = vpow.pop %v2861
    %v2863 = vadd.f32 %v2862, 1.0
    %v2864 = vrcp.pop %v2863
    %v2865 = vmul.f32 %v2863, %v2864
    %v2866 = vsub.f32 1.0, %v2865
    %v2867 = vmul.f32 %v2864, %v2866
    %v2868 = vadd.f32 %v2864, %v2867
    %vm2869 = vweird.f32 %v2863
    %vm2870 = vweird.f32 %v2864
    %vm2871 = vmor %vm2869, %vm2870
    %v2872 = vsel %vm2871, %v2864, %v2868
    %v2873 = vand.u32 2147483647, %v2863
    %vm2874 = vcmp.eq.f32.partialorder %v2873, 8.507059e+37
    %v2875 = vand.u32 %v2863, 2147483648
    %v2876 = vor.u32 1.1754944e-38, %v2875
    %v2877 = vsel %vm2874, %v2876, %v2872
    %v2878 = vmul.f32 1.0, %v2877
    %v2879 = vxor.u32 %v2857, 2147483648
    %v2880 = vmul.f32 %v2879, 1.442695
    %v2881 = vpow.pop %v2880
    %v2882 = vadd.f32 %v2881, 1.0
    %v2883 = vrcp.pop %v2882
    %v2884 = vmul.f32 %v2882, %v2883
    %v2885 = vsub.f32 1.0, %v2884
    %v2886 = vmul.f32 %v2883, %v2885
    %v2887 = vadd.f32 %v2883, %v2886
    %vm2888 = vweird.f32 %v2882
    %vm2889 = vweird.f32 %v2883
    %vm2890 = vmor %vm2888, %vm2889
    %v2891 = vsel %vm2890, %v2883, %v2887
    %v2892 = vand.u32 2147483647, %v2882
    %vm2893 = vcmp.eq.f32.partialorder %v2892, 8.507059e+37
    %v2894 = vand.u32 %v2882, 2147483648
    %v2895 = vor.u32 1.1754944e-38, %v2894
    %v2896 = vsel %vm2893, %v2895, %v2891
    %v2897 = vmul.f32 1.0, %v2896
    %v2898 = vtanh.pop %v2858
    %v2899 = vxor.u32 %v2859, 2147483648
    %v2900 = vmul.f32 %v2899, 1.442695
    %v2901 = vpow.pop %v2900
    %v2902 = vadd.f32 %v2901, 1.0
    %v2903 = vrcp.pop %v2902
    %v2904 = vmul.f32 %v2902, %v2903
    %v2905 = vsub.f32 1.0, %v2904
    %v2906 = vmul.f32 %v2903, %v2905
    %v2907 = vadd.f32 %v2903, %v2906
    %vm2908 = vweird.f32 %v2902
    %vm2909 = vweird.f32 %v2903
    %vm2910 = vmor %vm2908, %vm2909
    %v2911 = vsel %vm2910, %v2903, %v2907
    %v2912 = vand.u32 2147483647, %v2902
    %vm2913 = vcmp.eq.f32.partialorder %v2912, 8.507059e+37
    %v2914 = vand.u32 %v2902, 2147483648
    %v2915 = vor.u32 1.1754944e-38, %v2914
    %v2916 = vsel %vm2913, %v2915, %v2911
    %v2917 = vmul.f32 1.0, %v2916
    %v2918 = vmul.f32 %v2897, %v2599
    %v2919 = vmul.f32 %v2878, %v2898
    %v2920 = vadd.f32 %v2918, %v2919
    %v2921 = vtanh.pop %v2920
    %v2922 = vmul.f32 %v2917, %v2921
    %s2923 = scalar_lea.vmem [#allocation3], 56
    %2924 = vst [vmem:[%s2923] sm:$0xff] %v2922
    %2925 = vst [vmem:[#allocation4] sm:$0xff] %v2922
    %2926 = vst [vmem:[#allocation5] sm:$0xff] %v2920
    %v2927 = vld [vmem:[#allocation3] sm:$0xff]
    %v2928 = vld [vmem:[#allocation3 + $0x8] sm:$0xff]
    %v2929 = vld [vmem:[#allocation3 + $0x10] sm:$0xff]
    %v2930 = vld [vmem:[#allocation3 + $0x18] sm:$0xff]
    %v2931 = vld [vmem:[#allocation3 + $0x20] sm:$0xff]
    %v2932 = vld [vmem:[#allocation3 + $0x28] sm:$0xff]
    %v2933 = vld [vmem:[#allocation3 + $0x30] sm:$0xff]
    %v2934 = vld [vmem:[#allocation3 + $0x38] sm:$0xff]
    %v2935 = vpack.c.bf16 %v2928, %v2927
    %v2936 = vpack.c.bf16 %v2930, %v2929
    %v2937 = vpack.c.bf16 %v2932, %v2931
    %v2938 = vpack.c.bf16 %v2934, %v2933
    %v2939 = vld [vmem:[#allocation13] sm:$0xff]
    %v2940 = vld [vmem:[#allocation13 + $0x8] sm:$0xff]
    %v2941 = vld [vmem:[#allocation13 + $0x10] sm:$0xff]
    %v2942 = vld [vmem:[#allocation13 + $0x18] sm:$0xff]
    %v2943 = vld [vmem:[#allocation13 + $0x20] sm:$0xff]
    %v2944 = vld [vmem:[#allocation13 + $0x28] sm:$0xff]
    %v2945 = vld [vmem:[#allocation13 + $0x30] sm:$0xff]
    %v2946 = vld [vmem:[#allocation13 + $0x38] sm:$0xff]
    %v2947 = vld [vmem:[#allocation13 + $0x40] sm:$0xff]
    %v2948 = vld [vmem:[#allocation13 + $0x48] sm:$0xff]
    %v2949 = vld [vmem:[#allocation13 + $0x50] sm:$0xff]
    %v2950 = vld [vmem:[#allocation13 + $0x58] sm:$0xff]
    %v2951 = vld [vmem:[#allocation13 + $0x60] sm:$0xff]
    %v2952 = vld [vmem:[#allocation13 + $0x68] sm:$0xff]
    %v2953 = vld [vmem:[#allocation13 + $0x70] sm:$0xff]
    %v2954 = vld [vmem:[#allocation13 + $0x78] sm:$0xff]
    %v2955 = vld [vmem:[#allocation13 + $0x80] sm:$0xff]
    %v2956 = vld [vmem:[#allocation13 + $0x88] sm:$0xff]
    %v2957 = vld [vmem:[#allocation13 + $0x90] sm:$0xff]
    %v2958 = vld [vmem:[#allocation13 + $0x98] sm:$0xff]
    %v2959 = vld [vmem:[#allocation13 + $0xa0] sm:$0xff]
    %v2960 = vld [vmem:[#allocation13 + $0xa8] sm:$0xff]
    %v2961 = vld [vmem:[#allocation13 + $0xb0] sm:$0xff]
    %v2962 = vld [vmem:[#allocation13 + $0xb8] sm:$0xff]
    %v2963 = vld [vmem:[#allocation13 + $0xc0] sm:$0xff]
    %v2964 = vld [vmem:[#allocation13 + $0xc8] sm:$0xff]
    %v2965 = vld [vmem:[#allocation13 + $0xd0] sm:$0xff]
    %v2966 = vld [vmem:[#allocation13 + $0xd8] sm:$0xff]
    %v2967 = vld [vmem:[#allocation13 + $0xe0] sm:$0xff]
    %v2968 = vld [vmem:[#allocation13 + $0xe8] sm:$0xff]
    %v2969 = vld [vmem:[#allocation13 + $0xf0] sm:$0xff]
    %v2970 = vld [vmem:[#allocation13 + $0xf8] sm:$0xff]
    %v2971 = vld [vmem:[%s6] sm:$0xf]
    %v2973 = vperm.slane %v2971, 0
    %v2974 = vperm.slane %v2971, 1
    %v2975 = vperm.slane %v2971, 2
    %v2976 = vperm.slane %v2971, 3
    %v3013 = vunpack.c.l.b16 %v2939
    %v3014 = vunpack.c.h.b16 %v2939
    %v3015 = vunpack.c.l.b16 %v2940
    %v3016 = vunpack.c.h.b16 %v2940
    %v3017 = vunpack.c.l.b16 %v2941
    %v3018 = vunpack.c.h.b16 %v2941
    %v3019 = vunpack.c.l.b16 %v2942
    %v3020 = vunpack.c.h.b16 %v2942
    %v3021 = vunpack.c.l.b16 %v2943
    %v3022 = vunpack.c.h.b16 %v2943
    %v3023 = vunpack.c.l.b16 %v2944
    %v3024 = vunpack.c.h.b16 %v2944
    %v3025 = vunpack.c.l.b16 %v2945
    %v3026 = vunpack.c.h.b16 %v2945
    %v3027 = vunpack.c.l.b16 %v2946
    %v3028 = vunpack.c.h.b16 %v2946
    %v3029 = vunpack.c.l.b16 %v2947
    %v3030 = vunpack.c.h.b16 %v2947
    %v3031 = vunpack.c.l.b16 %v2948
    %v3032 = vunpack.c.h.b16 %v2948
    %v3033 = vunpack.c.l.b16 %v2949
    %v3034 = vunpack.c.h.b16 %v2949
    %v3035 = vunpack.c.l.b16 %v2950
    %v3036 = vunpack.c.h.b16 %v2950
    %v3037 = vunpack.c.l.b16 %v2951
    %v3038 = vunpack.c.h.b16 %v2951
    %v3039 = vunpack.c.l.b16 %v2952
    %v3040 = vunpack.c.h.b16 %v2952
    %v3041 = vunpack.c.l.b16 %v2953
    %v3042 = vunpack.c.h.b16 %v2953
    %v3043 = vunpack.c.l.b16 %v2954
    %v3044 = vunpack.c.h.b16 %v2954
    %v3045 = vunpack.c.l.b16 %v2955
    %v3046 = vunpack.c.h.b16 %v2955
    %v3047 = vunpack.c.l.b16 %v2956
    %v3048 = vunpack.c.h.b16 %v2956
    %v3049 = vunpack.c.l.b16 %v2957
    %v3050 = vunpack.c.h.b16 %v2957
    %v3051 = vunpack.c.l.b16 %v2958
    %v3052 = vunpack.c.h.b16 %v2958
    %v3053 = vunpack.c.l.b16 %v2959
    %v3054 = vunpack.c.h.b16 %v2959
    %v3055 = vunpack.c.l.b16 %v2960
    %v3056 = vunpack.c.h.b16 %v2960
    %v3057 = vunpack.c.l.b16 %v2961
    %v3058 = vunpack.c.h.b16 %v2961
    %v3059 = vunpack.c.l.b16 %v2962
    %v3060 = vunpack.c.h.b16 %v2962
    %v3061 = vunpack.c.l.b16 %v2963
    %v3062 = vunpack.c.h.b16 %v2963
    %v3063 = vunpack.c.l.b16 %v2964
    %v3064 = vunpack.c.h.b16 %v2964
    %v3065 = vunpack.c.l.b16 %v2965
    %v3066 = vunpack.c.h.b16 %v2965
    %v3067 = vunpack.c.l.b16 %v2966
    %v3068 = vunpack.c.h.b16 %v2966
    %v3069 = vunpack.c.l.b16 %v2967
    %v3070 = vunpack.c.h.b16 %v2967
    %v3071 = vunpack.c.l.b16 %v2968
    %v3072 = vunpack.c.h.b16 %v2968
    %v3073 = vunpack.c.l.b16 %v2969
    %v3074 = vunpack.c.h.b16 %v2969
    %v3075 = vunpack.c.l.b16 %v2970
    %v3076 = vunpack.c.h.b16 %v2970
    %v3077 = vpack.c.b16 %v3017, %v3013
    %v3078 = vpack.c.b16 %v3018, %v3014
    %v3079 = vpack.c.b16 %v3019, %v3015
    %v3080 = vpack.c.b16 %v3020, %v3016
    %v3081 = vpack.c.b16 %v3025, %v3021
    %v3082 = vpack.c.b16 %v3026, %v3022
    %v3083 = vpack.c.b16 %v3027, %v3023
    %v3084 = vpack.c.b16 %v3028, %v3024
    %v3085 = vpack.c.b16 %v3033, %v3029
    %v3086 = vpack.c.b16 %v3034, %v3030
    %v3087 = vpack.c.b16 %v3035, %v3031
    %v3088 = vpack.c.b16 %v3036, %v3032
    %v3089 = vpack.c.b16 %v3041, %v3037
    %v3090 = vpack.c.b16 %v3042, %v3038
    %v3091 = vpack.c.b16 %v3043, %v3039
    %v3092 = vpack.c.b16 %v3044, %v3040
    %v3093 = vpack.c.b16 %v3049, %v3045
    %v3094 = vpack.c.b16 %v3050, %v3046
    %v3095 = vpack.c.b16 %v3051, %v3047
    %v3096 = vpack.c.b16 %v3052, %v3048
    %v3097 = vpack.c.b16 %v3057, %v3053
    %v3098 = vpack.c.b16 %v3058, %v3054
    %v3099 = vpack.c.b16 %v3059, %v3055
    %v3100 = vpack.c.b16 %v3060, %v3056
    %v3101 = vpack.c.b16 %v3065, %v3061
    %v3102 = vpack.c.b16 %v3066, %v3062
    %v3103 = vpack.c.b16 %v3067, %v3063
    %v3104 = vpack.c.b16 %v3068, %v3064
    %v3105 = vpack.c.b16 %v3073, %v3069
    %v3106 = vpack.c.b16 %v3074, %v3070
    %v3107 = vpack.c.b16 %v3075, %v3071
    %v3108 = vpack.c.b16 %v3076, %v3072
    %3141 = vmatpush.bf16.msra.mxu0 %v3105
    %3142 = vmatpush.bf16.msra.mxu0 %v3101
    %3143 = vmatpush.bf16.msra.mxu0 %v3097
    %3144 = vmatpush.bf16.msra.mxu0 %v3093
    %3145 = vmatpush.bf16.msra.mxu0 %v3089
    %3146 = vmatpush.bf16.msra.mxu0 %v3085
    %3147 = vmatpush.bf16.msra.mxu0 %v3081
    %3148 = vmatpush.bf16.msra.mxu0 %v3077
    %3149 = vmatmul.bf16.gmra.mxu0 %v2935
    %v3150 = vpop.f32.mrf.mxu0
    %v3151 = vadd.f32 %v2973, %v3150
    %v3152 = vpop.f32.mrf.mxu0
    %v3153 = vadd.f32 %v2973, %v3152
    %3154 = vmatmul.bf16.gmra.mxu0 %v2936
    %v3155 = vpop.f32.mrf.mxu0
    %v3156 = vadd.f32 %v2973, %v3155
    %v3157 = vpop.f32.mrf.mxu0
    %v3158 = vadd.f32 %v2973, %v3157
    %3159 = vmatmul.bf16.gmra.mxu0 %v2937
    %v3160 = vpop.f32.mrf.mxu0
    %v3161 = vadd.f32 %v2973, %v3160
    %v3162 = vpop.f32.mrf.mxu0
    %v3163 = vadd.f32 %v2973, %v3162
    %3164 = vmatmul.bf16.gmra.mxu0 %v2938
    %v3165 = vpop.f32.mrf.mxu0
    %v3166 = vadd.f32 %v2973, %v3165
    %v3167 = vpop.f32.mrf.mxu0
    %v3168 = vadd.f32 %v2973, %v3167
    %3169 = vdwg.mxu0
    %3170 = vmatpush.bf16.msra.mxu0 %v3106
    %3171 = vmatpush.bf16.msra.mxu0 %v3102
    %3172 = vmatpush.bf16.msra.mxu0 %v3098
    %3173 = vmatpush.bf16.msra.mxu0 %v3094
    %3174 = vmatpush.bf16.msra.mxu0 %v3090
    %3175 = vmatpush.bf16.msra.mxu0 %v3086
    %3176 = vmatpush.bf16.msra.mxu0 %v3082
    %3177 = vmatpush.bf16.msra.mxu0 %v3078
    %3178 = vmatmul.bf16.gmra.mxu0 %v2935
    %v3179 = vpop.f32.mrf.mxu0
    %v3180 = vadd.f32 %v2974, %v3179
    %v3181 = vpop.f32.mrf.mxu0
    %v3182 = vadd.f32 %v2974, %v3181
    %3183 = vmatmul.bf16.gmra.mxu0 %v2936
    %v3184 = vpop.f32.mrf.mxu0
    %v3185 = vadd.f32 %v2974, %v3184
    %v3186 = vpop.f32.mrf.mxu0
    %v3187 = vadd.f32 %v2974, %v3186
    %3188 = vmatmul.bf16.gmra.mxu0 %v2937
    %v3189 = vpop.f32.mrf.mxu0
    %v3190 = vadd.f32 %v2974, %v3189
    %v3191 = vpop.f32.mrf.mxu0
    %v3192 = vadd.f32 %v2974, %v3191
    %3193 = vmatmul.bf16.gmra.mxu0 %v2938
    %v3194 = vpop.f32.mrf.mxu0
    %v3195 = vadd.f32 %v2974, %v3194
    %v3196 = vpop.f32.mrf.mxu0
    %v3197 = vadd.f32 %v2974, %v3196
    %3198 = vdwg.mxu0
    %3199 = vmatpush.bf16.msra.mxu0 %v3107
    %3200 = vmatpush.bf16.msra.mxu0 %v3103
    %3201 = vmatpush.bf16.msra.mxu0 %v3099
    %3202 = vmatpush.bf16.msra.mxu0 %v3095
    %3203 = vmatpush.bf16.msra.mxu0 %v3091
    %3204 = vmatpush.bf16.msra.mxu0 %v3087
    %3205 = vmatpush.bf16.msra.mxu0 %v3083
    %3206 = vmatpush.bf16.msra.mxu0 %v3079
    %3207 = vmatmul.bf16.gmra.mxu0 %v2935
    %v3208 = vpop.f32.mrf.mxu0
    %v3209 = vadd.f32 %v2975, %v3208
    %v3210 = vpop.f32.mrf.mxu0
    %v3211 = vadd.f32 %v2975, %v3210
    %3212 = vmatmul.bf16.gmra.mxu0 %v2936
    %v3213 = vpop.f32.mrf.mxu0
    %v3214 = vadd.f32 %v2975, %v3213
    %v3215 = vpop.f32.mrf.mxu0
    %v3216 = vadd.f32 %v2975, %v3215
    %3217 = vmatmul.bf16.gmra.mxu0 %v2937
    %v3218 = vpop.f32.mrf.mxu0
    %v3219 = vadd.f32 %v2975, %v3218
    %v3220 = vpop.f32.mrf.mxu0
    %v3221 = vadd.f32 %v2975, %v3220
    %3222 = vmatmul.bf16.gmra.mxu0 %v2938
    %v3223 = vpop.f32.mrf.mxu0
    %v3224 = vadd.f32 %v2975, %v3223
    %v3225 = vpop.f32.mrf.mxu0
    %v3226 = vadd.f32 %v2975, %v3225
    %3227 = vdwg.mxu0
    %3228 = vmatpush.bf16.msra.mxu0 %v3108
    %3229 = vmatpush.bf16.msra.mxu0 %v3104
    %3230 = vmatpush.bf16.msra.mxu0 %v3100
    %3231 = vmatpush.bf16.msra.mxu0 %v3096
    %3232 = vmatpush.bf16.msra.mxu0 %v3092
    %3233 = vmatpush.bf16.msra.mxu0 %v3088
    %3234 = vmatpush.bf16.msra.mxu0 %v3084
    %3235 = vmatpush.bf16.msra.mxu0 %v3080
    %3236 = vmatmul.bf16.gmra.mxu0 %v2935
    %v3237 = vpop.f32.mrf.mxu0
    %v3238 = vadd.f32 %v2976, %v3237
    %v3239 = vpop.f32.mrf.mxu0
    %v3240 = vadd.f32 %v2976, %v3239
    %3241 = vmatmul.bf16.gmra.mxu0 %v2936
    %v3242 = vpop.f32.mrf.mxu0
    %v3243 = vadd.f32 %v2976, %v3242
    %v3244 = vpop.f32.mrf.mxu0
    %v3245 = vadd.f32 %v2976, %v3244
    %3246 = vmatmul.bf16.gmra.mxu0 %v2937
    %v3247 = vpop.f32.mrf.mxu0
    %v3248 = vadd.f32 %v2976, %v3247
    %v3249 = vpop.f32.mrf.mxu0
    %v3250 = vadd.f32 %v2976, %v3249
    %3251 = vmatmul.bf16.gmra.mxu0 %v2938
    %v3252 = vpop.f32.mrf.mxu0
    %v3253 = vadd.f32 %v2976, %v3252
    %v3254 = vpop.f32.mrf.mxu0
    %v3255 = vadd.f32 %v2976, %v3254
    %3256 = vdwg.mxu0
    %3257 = vst [vmem:[#allocation2] sm:$0xff] %v3151
    %3258 = vst [vmem:[#allocation2 + $0x8] sm:$0xff] %v3180
    %3259 = vst [vmem:[#allocation2 + $0x10] sm:$0xff] %v3209
    %3260 = vst [vmem:[#allocation2 + $0x18] sm:$0xff] %v3238
    %3261 = vst [vmem:[#allocation2 + $0x20] sm:$0xff] %v3153
    %3262 = vst [vmem:[#allocation2 + $0x28] sm:$0xff] %v3182
    %3263 = vst [vmem:[#allocation2 + $0x30] sm:$0xff] %v3211
    %3264 = vst [vmem:[#allocation2 + $0x38] sm:$0xff] %v3240
    %3265 = vst [vmem:[#allocation2 + $0x40] sm:$0xff] %v3156
    %3266 = vst [vmem:[#allocation2 + $0x48] sm:$0xff] %v3185
    %3267 = vst [vmem:[#allocation2 + $0x50] sm:$0xff] %v3214
    %3268 = vst [vmem:[#allocation2 + $0x58] sm:$0xff] %v3243
    %3269 = vst [vmem:[#allocation2 + $0x60] sm:$0xff] %v3158
    %3270 = vst [vmem:[#allocation2 + $0x68] sm:$0xff] %v3187
    %3271 = vst [vmem:[#allocation2 + $0x70] sm:$0xff] %v3216
    %3272 = vst [vmem:[#allocation2 + $0x78] sm:$0xff] %v3245
    %3273 = vst [vmem:[#allocation2 + $0x80] sm:$0xff] %v3161
    %3274 = vst [vmem:[#allocation2 + $0x88] sm:$0xff] %v3190
    %3275 = vst [vmem:[#allocation2 + $0x90] sm:$0xff] %v3219
    %3276 = vst [vmem:[#allocation2 + $0x98] sm:$0xff] %v3248
    %3277 = vst [vmem:[#allocation2 + $0xa0] sm:$0xff] %v3163
    %3278 = vst [vmem:[#allocation2 + $0xa8] sm:$0xff] %v3192
    %3279 = vst [vmem:[#allocation2 + $0xb0] sm:$0xff] %v3221
    %3280 = vst [vmem:[#allocation2 + $0xb8] sm:$0xff] %v3250
    %3281 = vst [vmem:[#allocation2 + $0xc0] sm:$0xff] %v3166
    %3282 = vst [vmem:[#allocation2 + $0xc8] sm:$0xff] %v3195
    %3283 = vst [vmem:[#allocation2 + $0xd0] sm:$0xff] %v3224
    %3284 = vst [vmem:[#allocation2 + $0xd8] sm:$0xff] %v3253
    %3285 = vst [vmem:[#allocation2 + $0xe0] sm:$0xff] %v3168
    %3286 = vst [vmem:[#allocation2 + $0xe8] sm:$0xff] %v3197
    %3287 = vst [vmem:[#allocation2 + $0xf0] sm:$0xff] %v3226
    %3288 = vst [vmem:[#allocation2 + $0xf8] sm:$0xff] %v3255
    %v3289 = vld [vmem:[#allocation6] sm:$0xff]
    %v3290 = vld [vmem:[#allocation7] sm:$0xff]
    %v3291 = vld [vmem:[%s360] sm:$0xff]
    %v3292 = vld [vmem:[%s360 + $0x8] sm:$0xff]
    %v3293 = vld [vmem:[%s360 + $0x10] sm:$0xff]
    %v3294 = vld [vmem:[%s360 + $0x18] sm:$0xff]
    %v3295 = vpack.c.bf16 %v3289, %v3289
    %v3296 = vld [vmem:[#allocation15] sm:$0xff]
    %v3297 = vld [vmem:[#allocation15 + $0x8] sm:$0xff]
    %v3298 = vld [vmem:[#allocation15 + $0x10] sm:$0xff]
    %v3299 = vld [vmem:[#allocation15 + $0x18] sm:$0xff]
    %v3300 = vld [vmem:[#allocation15 + $0x20] sm:$0xff]
    %v3301 = vld [vmem:[#allocation15 + $0x28] sm:$0xff]
    %v3302 = vld [vmem:[#allocation15 + $0x30] sm:$0xff]
    %v3303 = vld [vmem:[#allocation15 + $0x38] sm:$0xff]
    %v3304 = vld [vmem:[#allocation15 + $0x40] sm:$0xff]
    %v3305 = vld [vmem:[#allocation15 + $0x48] sm:$0xff]
    %v3306 = vld [vmem:[#allocation15 + $0x50] sm:$0xff]
    %v3307 = vld [vmem:[#allocation15 + $0x58] sm:$0xff]
    %v3308 = vld [vmem:[#allocation15 + $0x60] sm:$0xff]
    %v3309 = vld [vmem:[#allocation15 + $0x68] sm:$0xff]
    %v3310 = vld [vmem:[#allocation15 + $0x70] sm:$0xff]
    %v3311 = vld [vmem:[#allocation15 + $0x78] sm:$0xff]
    %v3312 = vld [vmem:[#allocation15 + $0x80] sm:$0xff]
    %v3313 = vld [vmem:[#allocation15 + $0x88] sm:$0xff]
    %v3314 = vld [vmem:[#allocation15 + $0x90] sm:$0xff]
    %v3315 = vld [vmem:[#allocation15 + $0x98] sm:$0xff]
    %v3316 = vld [vmem:[#allocation15 + $0xa0] sm:$0xff]
    %v3317 = vld [vmem:[#allocation15 + $0xa8] sm:$0xff]
    %v3318 = vld [vmem:[#allocation15 + $0xb0] sm:$0xff]
    %v3319 = vld [vmem:[#allocation15 + $0xb8] sm:$0xff]
    %v3320 = vld [vmem:[#allocation15 + $0xc0] sm:$0xff]
    %v3321 = vld [vmem:[#allocation15 + $0xc8] sm:$0xff]
    %v3322 = vld [vmem:[#allocation15 + $0xd0] sm:$0xff]
    %v3323 = vld [vmem:[#allocation15 + $0xd8] sm:$0xff]
    %v3324 = vld [vmem:[#allocation15 + $0xe0] sm:$0xff]
    %v3325 = vld [vmem:[#allocation15 + $0xe8] sm:$0xff]
    %v3326 = vld [vmem:[#allocation15 + $0xf0] sm:$0xff]
    %v3327 = vld [vmem:[#allocation15 + $0xf8] sm:$0xff]
    %v3360 = vunpack.c.l.b16 %v3296
    %v3361 = vunpack.c.h.b16 %v3296
    %v3362 = vunpack.c.l.b16 %v3297
    %v3363 = vunpack.c.h.b16 %v3297
    %v3364 = vunpack.c.l.b16 %v3298
    %v3365 = vunpack.c.h.b16 %v3298
    %v3366 = vunpack.c.l.b16 %v3299
    %v3367 = vunpack.c.h.b16 %v3299
    %v3368 = vunpack.c.l.b16 %v3300
    %v3369 = vunpack.c.h.b16 %v3300
    %v3370 = vunpack.c.l.b16 %v3301
    %v3371 = vunpack.c.h.b16 %v3301
    %v3372 = vunpack.c.l.b16 %v3302
    %v3373 = vunpack.c.h.b16 %v3302
    %v3374 = vunpack.c.l.b16 %v3303
    %v3375 = vunpack.c.h.b16 %v3303
    %v3376 = vunpack.c.l.b16 %v3304
    %v3377 = vunpack.c.h.b16 %v3304
    %v3378 = vunpack.c.l.b16 %v3305
    %v3379 = vunpack.c.h.b16 %v3305
    %v3380 = vunpack.c.l.b16 %v3306
    %v3381 = vunpack.c.h.b16 %v3306
    %v3382 = vunpack.c.l.b16 %v3307
    %v3383 = vunpack.c.h.b16 %v3307
    %v3384 = vunpack.c.l.b16 %v3308
    %v3385 = vunpack.c.h.b16 %v3308
    %v3386 = vunpack.c.l.b16 %v3309
    %v3387 = vunpack.c.h.b16 %v3309
    %v3388 = vunpack.c.l.b16 %v3310
    %v3389 = vunpack.c.h.b16 %v3310
    %v3390 = vunpack.c.l.b16 %v3311
    %v3391 = vunpack.c.h.b16 %v3311
    %v3392 = vunpack.c.l.b16 %v3312
    %v3393 = vunpack.c.h.b16 %v3312
    %v3394 = vunpack.c.l.b16 %v3313
    %v3395 = vunpack.c.h.b16 %v3313
    %v3396 = vunpack.c.l.b16 %v3314
    %v3397 = vunpack.c.h.b16 %v3314
    %v3398 = vunpack.c.l.b16 %v3315
    %v3399 = vunpack.c.h.b16 %v3315
    %v3400 = vunpack.c.l.b16 %v3316
    %v3401 = vunpack.c.h.b16 %v3316
    %v3402 = vunpack.c.l.b16 %v3317
    %v3403 = vunpack.c.h.b16 %v3317
    %v3404 = vunpack.c.l.b16 %v3318
    %v3405 = vunpack.c.h.b16 %v3318
    %v3406 = vunpack.c.l.b16 %v3319
    %v3407 = vunpack.c.h.b16 %v3319
    %v3408 = vunpack.c.l.b16 %v3320
    %v3409 = vunpack.c.h.b16 %v3320
    %v3410 = vunpack.c.l.b16 %v3321
    %v3411 = vunpack.c.h.b16 %v3321
    %v3412 = vunpack.c.l.b16 %v3322
    %v3413 = vunpack.c.h.b16 %v3322
    %v3414 = vunpack.c.l.b16 %v3323
    %v3415 = vunpack.c.h.b16 %v3323
    %v3416 = vunpack.c.l.b16 %v3324
    %v3417 = vunpack.c.h.b16 %v3324
    %v3418 = vunpack.c.l.b16 %v3325
    %v3419 = vunpack.c.h.b16 %v3325
    %v3420 = vunpack.c.l.b16 %v3326
    %v3421 = vunpack.c.h.b16 %v3326
    %v3422 = vunpack.c.l.b16 %v3327
    %v3423 = vunpack.c.h.b16 %v3327
    %v3424 = vpack.c.b16 %v3364, %v3360
    %v3425 = vpack.c.b16 %v3365, %v3361
    %v3426 = vpack.c.b16 %v3366, %v3362
    %v3427 = vpack.c.b16 %v3367, %v3363
    %v3428 = vpack.c.b16 %v3372, %v3368
    %v3429 = vpack.c.b16 %v3373, %v3369
    %v3430 = vpack.c.b16 %v3374, %v3370
    %v3431 = vpack.c.b16 %v3375, %v3371
    %v3432 = vpack.c.b16 %v3380, %v3376
    %v3433 = vpack.c.b16 %v3381, %v3377
    %v3434 = vpack.c.b16 %v3382, %v3378
    %v3435 = vpack.c.b16 %v3383, %v3379
    %v3436 = vpack.c.b16 %v3388, %v3384
    %v3437 = vpack.c.b16 %v3389, %v3385
    %v3438 = vpack.c.b16 %v3390, %v3386
    %v3439 = vpack.c.b16 %v3391, %v3387
    %v3440 = vpack.c.b16 %v3396, %v3392
    %v3441 = vpack.c.b16 %v3397, %v3393
    %v3442 = vpack.c.b16 %v3398, %v3394
    %v3443 = vpack.c.b16 %v3399, %v3395
    %v3444 = vpack.c.b16 %v3404, %v3400
    %v3445 = vpack.c.b16 %v3405, %v3401
    %v3446 = vpack.c.b16 %v3406, %v3402
    %v3447 = vpack.c.b16 %v3407, %v3403
    %v3448 = vpack.c.b16 %v3412, %v3408
    %v3449 = vpack.c.b16 %v3413, %v3409
    %v3450 = vpack.c.b16 %v3414, %v3410
    %v3451 = vpack.c.b16 %v3415, %v3411
    %v3452 = vpack.c.b16 %v3420, %v3416
    %v3453 = vpack.c.b16 %v3421, %v3417
    %v3454 = vpack.c.b16 %v3422, %v3418
    %v3455 = vpack.c.b16 %v3423, %v3419
    %3488 = vmatpush.bf16.msra.mxu0 %v3452
    %3489 = vmatpush.bf16.msra.mxu0 %v3448
    %3490 = vmatpush.bf16.msra.mxu0 %v3444
    %3491 = vmatpush.bf16.msra.mxu0 %v3440
    %3492 = vmatpush.bf16.msra.mxu0 %v3436
    %3493 = vmatpush.bf16.msra.mxu0 %v3432
    %3494 = vmatpush.bf16.msra.mxu0 %v3428
    %3495 = vmatpush.bf16.msra.mxu0 %v3424
    %3496 = vmatmul.bf16.gmra.mxu0 %v3295
    %v3497 = vpop.f32.mrf.mxu0
    %v3498 = vadd.f32 0.0, %v3497
    %v3499 = vpop.f32.mrf.mxu0
    %3500 = vdwg.mxu0
    %3501 = vmatpush.bf16.msra.mxu0 %v3453
    %3502 = vmatpush.bf16.msra.mxu0 %v3449
    %3503 = vmatpush.bf16.msra.mxu0 %v3445
    %3504 = vmatpush.bf16.msra.mxu0 %v3441
    %3505 = vmatpush.bf16.msra.mxu0 %v3437
    %3506 = vmatpush.bf16.msra.mxu0 %v3433
    %3507 = vmatpush.bf16.msra.mxu0 %v3429
    %3508 = vmatpush.bf16.msra.mxu0 %v3425
    %3509 = vmatmul.bf16.gmra.mxu0 %v3295
    %v3510 = vpop.f32.mrf.mxu0
    %v3511 = vadd.f32 0.0, %v3510
    %v3512 = vpop.f32.mrf.mxu0
    %3513 = vdwg.mxu0
    %3514 = vmatpush.bf16.msra.mxu0 %v3454
    %3515 = vmatpush.bf16.msra.mxu0 %v3450
    %3516 = vmatpush.bf16.msra.mxu0 %v3446
    %3517 = vmatpush.bf16.msra.mxu0 %v3442
    %3518 = vmatpush.bf16.msra.mxu0 %v3438
    %3519 = vmatpush.bf16.msra.mxu0 %v3434
    %3520 = vmatpush.bf16.msra.mxu0 %v3430
    %3521 = vmatpush.bf16.msra.mxu0 %v3426
    %3522 = vmatmul.bf16.gmra.mxu0 %v3295
    %v3523 = vpop.f32.mrf.mxu0
    %v3524 = vadd.f32 0.0, %v3523
    %v3525 = vpop.f32.mrf.mxu0
    %3526 = vdwg.mxu0
    %3527 = vmatpush.bf16.msra.mxu0 %v3455
    %3528 = vmatpush.bf16.msra.mxu0 %v3451
    %3529 = vmatpush.bf16.msra.mxu0 %v3447
    %3530 = vmatpush.bf16.msra.mxu0 %v3443
    %3531 = vmatpush.bf16.msra.mxu0 %v3439
    %3532 = vmatpush.bf16.msra.mxu0 %v3435
    %3533 = vmatpush.bf16.msra.mxu0 %v3431
    %3534 = vmatpush.bf16.msra.mxu0 %v3427
    %3535 = vmatmul.bf16.gmra.mxu0 %v3295
    %v3536 = vpop.f32.mrf.mxu0
    %v3537 = vadd.f32 0.0, %v3536
    %v3538 = vpop.f32.mrf.mxu0
    %3539 = vdwg.mxu0
    %v3540 = vadd.f32 %v3291, %v3498
    %v3541 = vadd.f32 %v3292, %v3511
    %v3542 = vadd.f32 %v3293, %v3524
    %v3543 = vadd.f32 %v3294, %v3537
    %v3544 = vxor.u32 %v3540, 2147483648
    %v3545 = vmul.f32 %v3544, 1.442695
    %v3546 = vpow.pop %v3545
    %v3547 = vadd.f32 %v3546, 1.0
    %v3548 = vrcp.pop %v3547
    %v3549 = vmul.f32 %v3547, %v3548
    %v3550 = vsub.f32 1.0, %v3549
    %v3551 = vmul.f32 %v3548, %v3550
    %v3552 = vadd.f32 %v3548, %v3551
    %vm3553 = vweird.f32 %v3547
    %vm3554 = vweird.f32 %v3548
    %vm3555 = vmor %vm3553, %vm3554
    %v3556 = vsel %vm3555, %v3548, %v3552
    %v3557 = vand.u32 2147483647, %v3547
    %vm3558 = vcmp.eq.f32.partialorder %v3557, 8.507059e+37
    %v3559 = vand.u32 %v3547, 2147483648
    %v3560 = vor.u32 1.1754944e-38, %v3559
    %v3561 = vsel %vm3558, %v3560, %v3556
    %v3562 = vmul.f32 1.0, %v3561
    %v3563 = vxor.u32 %v3541, 2147483648
    %v3564 = vmul.f32 %v3563, 1.442695
    %v3565 = vpow.pop %v3564
    %v3566 = vadd.f32 %v3565, 1.0
    %v3567 = vrcp.pop %v3566
    %v3568 = vmul.f32 %v3566, %v3567
    %v3569 = vsub.f32 1.0, %v3568
    %v3570 = vmul.f32 %v3567, %v3569
    %v3571 = vadd.f32 %v3567, %v3570
    %vm3572 = vweird.f32 %v3566
    %vm3573 = vweird.f32 %v3567
    %vm3574 = vmor %vm3572, %vm3573
    %v3575 = vsel %vm3574, %v3567, %v3571
    %v3576 = vand.u32 2147483647, %v3566
    %vm3577 = vcmp.eq.f32.partialorder %v3576, 8.507059e+37
    %v3578 = vand.u32 %v3566, 2147483648
    %v3579 = vor.u32 1.1754944e-38, %v3578
    %v3580 = vsel %vm3577, %v3579, %v3575
    %v3581 = vmul.f32 1.0, %v3580
    %v3582 = vtanh.pop %v3542
    %v3583 = vxor.u32 %v3543, 2147483648
    %v3584 = vmul.f32 %v3583, 1.442695
    %v3585 = vpow.pop %v3584
    %v3586 = vadd.f32 %v3585, 1.0
    %v3587 = vrcp.pop %v3586
    %v3588 = vmul.f32 %v3586, %v3587
    %v3589 = vsub.f32 1.0, %v3588
    %v3590 = vmul.f32 %v3587, %v3589
    %v3591 = vadd.f32 %v3587, %v3590
    %vm3592 = vweird.f32 %v3586
    %vm3593 = vweird.f32 %v3587
    %vm3594 = vmor %vm3592, %vm3593
    %v3595 = vsel %vm3594, %v3587, %v3591
    %v3596 = vand.u32 2147483647, %v3586
    %vm3597 = vcmp.eq.f32.partialorder %v3596, 8.507059e+37
    %v3598 = vand.u32 %v3586, 2147483648
    %v3599 = vor.u32 1.1754944e-38, %v3598
    %v3600 = vsel %vm3597, %v3599, %v3595
    %v3601 = vmul.f32 1.0, %v3600
    %v3602 = vmul.f32 %v3581, %v3290
    %v3603 = vmul.f32 %v3562, %v3582
    %v3604 = vadd.f32 %v3602, %v3603
    %v3605 = vtanh.pop %v3604
    %v3606 = vmul.f32 %v3601, %v3605
    %3607 = vst [vmem:[#allocation3] sm:$0xff] %v3606
    %v3608 = vld [vmem:[%s680] sm:$0xff]
    %v3609 = vld [vmem:[%s680 + $0x8] sm:$0xff]
    %v3610 = vld [vmem:[%s680 + $0x10] sm:$0xff]
    %v3611 = vld [vmem:[%s680 + $0x18] sm:$0xff]
    %v3612 = vpack.c.bf16 %v3606, %v3606
    %v3613 = vld [vmem:[#allocation15] sm:$0xff]
    %v3614 = vld [vmem:[#allocation15 + $0x8] sm:$0xff]
    %v3615 = vld [vmem:[#allocation15 + $0x10] sm:$0xff]
    %v3616 = vld [vmem:[#allocation15 + $0x18] sm:$0xff]
    %v3617 = vld [vmem:[#allocation15 + $0x20] sm:$0xff]
    %v3618 = vld [vmem:[#allocation15 + $0x28] sm:$0xff]
    %v3619 = vld [vmem:[#allocation15 + $0x30] sm:$0xff]
    %v3620 = vld [vmem:[#allocation15 + $0x38] sm:$0xff]
    %v3621 = vld [vmem:[#allocation15 + $0x40] sm:$0xff]
    %v3622 = vld [vmem:[#allocation15 + $0x48] sm:$0xff]
    %v3623 = vld [vmem:[#allocation15 + $0x50] sm:$0xff]
    %v3624 = vld [vmem:[#allocation15 + $0x58] sm:$0xff]
    %v3625 = vld [vmem:[#allocation15 + $0x60] sm:$0xff]
    %v3626 = vld [vmem:[#allocation15 + $0x68] sm:$0xff]
    %v3627 = vld [vmem:[#allocation15 + $0x70] sm:$0xff]
    %v3628 = vld [vmem:[#allocation15 + $0x78] sm:$0xff]
    %v3629 = vld [vmem:[#allocation15 + $0x80] sm:$0xff]
    %v3630 = vld [vmem:[#allocation15 + $0x88] sm:$0xff]
    %v3631 = vld [vmem:[#allocation15 + $0x90] sm:$0xff]
    %v3632 = vld [vmem:[#allocation15 + $0x98] sm:$0xff]
    %v3633 = vld [vmem:[#allocation15 + $0xa0] sm:$0xff]
    %v3634 = vld [vmem:[#allocation15 + $0xa8] sm:$0xff]
    %v3635 = vld [vmem:[#allocation15 + $0xb0] sm:$0xff]
    %v3636 = vld [vmem:[#allocation15 + $0xb8] sm:$0xff]
    %v3637 = vld [vmem:[#allocation15 + $0xc0] sm:$0xff]
    %v3638 = vld [vmem:[#allocation15 + $0xc8] sm:$0xff]
    %v3639 = vld [vmem:[#allocation15 + $0xd0] sm:$0xff]
    %v3640 = vld [vmem:[#allocation15 + $0xd8] sm:$0xff]
    %v3641 = vld [vmem:[#allocation15 + $0xe0] sm:$0xff]
    %v3642 = vld [vmem:[#allocation15 + $0xe8] sm:$0xff]
    %v3643 = vld [vmem:[#allocation15 + $0xf0] sm:$0xff]
    %v3644 = vld [vmem:[#allocation15 + $0xf8] sm:$0xff]
    %v3677 = vunpack.c.l.b16 %v3613
    %v3678 = vunpack.c.h.b16 %v3613
    %v3679 = vunpack.c.l.b16 %v3614
    %v3680 = vunpack.c.h.b16 %v3614
    %v3681 = vunpack.c.l.b16 %v3615
    %v3682 = vunpack.c.h.b16 %v3615
    %v3683 = vunpack.c.l.b16 %v3616
    %v3684 = vunpack.c.h.b16 %v3616
    %v3685 = vunpack.c.l.b16 %v3617
    %v3686 = vunpack.c.h.b16 %v3617
    %v3687 = vunpack.c.l.b16 %v3618
    %v3688 = vunpack.c.h.b16 %v3618
    %v3689 = vunpack.c.l.b16 %v3619
    %v3690 = vunpack.c.h.b16 %v3619
    %v3691 = vunpack.c.l.b16 %v3620
    %v3692 = vunpack.c.h.b16 %v3620
    %v3693 = vunpack.c.l.b16 %v3621
    %v3694 = vunpack.c.h.b16 %v3621
    %v3695 = vunpack.c.l.b16 %v3622
    %v3696 = vunpack.c.h.b16 %v3622
    %v3697 = vunpack.c.l.b16 %v3623
    %v3698 = vunpack.c.h.b16 %v3623
    %v3699 = vunpack.c.l.b16 %v3624
    %v3700 = vunpack.c.h.b16 %v3624
    %v3701 = vunpack.c.l.b16 %v3625
    %v3702 = vunpack.c.h.b16 %v3625
    %v3703 = vunpack.c.l.b16 %v3626
    %v3704 = vunpack.c.h.b16 %v3626
    %v3705 = vunpack.c.l.b16 %v3627
    %v3706 = vunpack.c.h.b16 %v3627
    %v3707 = vunpack.c.l.b16 %v3628
    %v3708 = vunpack.c.h.b16 %v3628
    %v3709 = vunpack.c.l.b16 %v3629
    %v3710 = vunpack.c.h.b16 %v3629
    %v3711 = vunpack.c.l.b16 %v3630
    %v3712 = vunpack.c.h.b16 %v3630
    %v3713 = vunpack.c.l.b16 %v3631
    %v3714 = vunpack.c.h.b16 %v3631
    %v3715 = vunpack.c.l.b16 %v3632
    %v3716 = vunpack.c.h.b16 %v3632
    %v3717 = vunpack.c.l.b16 %v3633
    %v3718 = vunpack.c.h.b16 %v3633
    %v3719 = vunpack.c.l.b16 %v3634
    %v3720 = vunpack.c.h.b16 %v3634
    %v3721 = vunpack.c.l.b16 %v3635
    %v3722 = vunpack.c.h.b16 %v3635
    %v3723 = vunpack.c.l.b16 %v3636
    %v3724 = vunpack.c.h.b16 %v3636
    %v3725 = vunpack.c.l.b16 %v3637
    %v3726 = vunpack.c.h.b16 %v3637
    %v3727 = vunpack.c.l.b16 %v3638
    %v3728 = vunpack.c.h.b16 %v3638
    %v3729 = vunpack.c.l.b16 %v3639
    %v3730 = vunpack.c.h.b16 %v3639
    %v3731 = vunpack.c.l.b16 %v3640
    %v3732 = vunpack.c.h.b16 %v3640
    %v3733 = vunpack.c.l.b16 %v3641
    %v3734 = vunpack.c.h.b16 %v3641
    %v3735 = vunpack.c.l.b16 %v3642
    %v3736 = vunpack.c.h.b16 %v3642
    %v3737 = vunpack.c.l.b16 %v3643
    %v3738 = vunpack.c.h.b16 %v3643
    %v3739 = vunpack.c.l.b16 %v3644
    %v3740 = vunpack.c.h.b16 %v3644
    %v3741 = vpack.c.b16 %v3681, %v3677
    %v3742 = vpack.c.b16 %v3682, %v3678
    %v3743 = vpack.c.b16 %v3683, %v3679
    %v3744 = vpack.c.b16 %v3684, %v3680
    %v3745 = vpack.c.b16 %v3689, %v3685
    %v3746 = vpack.c.b16 %v3690, %v3686
    %v3747 = vpack.c.b16 %v3691, %v3687
    %v3748 = vpack.c.b16 %v3692, %v3688
    %v3749 = vpack.c.b16 %v3697, %v3693
    %v3750 = vpack.c.b16 %v3698, %v3694
    %v3751 = vpack.c.b16 %v3699, %v3695
    %v3752 = vpack.c.b16 %v3700, %v3696
    %v3753 = vpack.c.b16 %v3705, %v3701
    %v3754 = vpack.c.b16 %v3706, %v3702
    %v3755 = vpack.c.b16 %v3707, %v3703
    %v3756 = vpack.c.b16 %v3708, %v3704
    %v3757 = vpack.c.b16 %v3713, %v3709
    %v3758 = vpack.c.b16 %v3714, %v3710
    %v3759 = vpack.c.b16 %v3715, %v3711
    %v3760 = vpack.c.b16 %v3716, %v3712
    %v3761 = vpack.c.b16 %v3721, %v3717
    %v3762 = vpack.c.b16 %v3722, %v3718
    %v3763 = vpack.c.b16 %v3723, %v3719
    %v3764 = vpack.c.b16 %v3724, %v3720
    %v3765 = vpack.c.b16 %v3729, %v3725
    %v3766 = vpack.c.b16 %v3730, %v3726
    %v3767 = vpack.c.b16 %v3731, %v3727
    %v3768 = vpack.c.b16 %v3732, %v3728
    %v3769 = vpack.c.b16 %v3737, %v3733
    %v3770 = vpack.c.b16 %v3738, %v3734
    %v3771 = vpack.c.b16 %v3739, %v3735
    %v3772 = vpack.c.b16 %v3740, %v3736
    %3805 = vmatpush.bf16.msra.mxu0 %v3769
    %3806 = vmatpush.bf16.msra.mxu0 %v3765
    %3807 = vmatpush.bf16.msra.mxu0 %v3761
    %3808 = vmatpush.bf16.msra.mxu0 %v3757
    %3809 = vmatpush.bf16.msra.mxu0 %v3753
    %3810 = vmatpush.bf16.msra.mxu0 %v3749
    %3811 = vmatpush.bf16.msra.mxu0 %v3745
    %3812 = vmatpush.bf16.msra.mxu0 %v3741
    %3813 = vmatmul.bf16.gmra.mxu0 %v3612
    %v3814 = vpop.f32.mrf.mxu0
    %v3815 = vadd.f32 0.0, %v3814
    %v3816 = vpop.f32.mrf.mxu0
    %3817 = vdwg.mxu0
    %3818 = vmatpush.bf16.msra.mxu0 %v3770
    %3819 = vmatpush.bf16.msra.mxu0 %v3766
    %3820 = vmatpush.bf16.msra.mxu0 %v3762
    %3821 = vmatpush.bf16.msra.mxu0 %v3758
    %3822 = vmatpush.bf16.msra.mxu0 %v3754
    %3823 = vmatpush.bf16.msra.mxu0 %v3750
    %3824 = vmatpush.bf16.msra.mxu0 %v3746
    %3825 = vmatpush.bf16.msra.mxu0 %v3742
    %3826 = vmatmul.bf16.gmra.mxu0 %v3612
    %v3827 = vpop.f32.mrf.mxu0
    %v3828 = vadd.f32 0.0, %v3827
    %v3829 = vpop.f32.mrf.mxu0
    %3830 = vdwg.mxu0
    %3831 = vmatpush.bf16.msra.mxu0 %v3771
    %3832 = vmatpush.bf16.msra.mxu0 %v3767
    %3833 = vmatpush.bf16.msra.mxu0 %v3763
    %3834 = vmatpush.bf16.msra.mxu0 %v3759
    %3835 = vmatpush.bf16.msra.mxu0 %v3755
    %3836 = vmatpush.bf16.msra.mxu0 %v3751
    %3837 = vmatpush.bf16.msra.mxu0 %v3747
    %3838 = vmatpush.bf16.msra.mxu0 %v3743
    %3839 = vmatmul.bf16.gmra.mxu0 %v3612
    %v3840 = vpop.f32.mrf.mxu0
    %v3841 = vadd.f32 0.0, %v3840
    %v3842 = vpop.f32.mrf.mxu0
    %3843 = vdwg.mxu0
    %3844 = vmatpush.bf16.msra.mxu0 %v3772
    %3845 = vmatpush.bf16.msra.mxu0 %v3768
    %3846 = vmatpush.bf16.msra.mxu0 %v3764
    %3847 = vmatpush.bf16.msra.mxu0 %v3760
    %3848 = vmatpush.bf16.msra.mxu0 %v3756
    %3849 = vmatpush.bf16.msra.mxu0 %v3752
    %3850 = vmatpush.bf16.msra.mxu0 %v3748
    %3851 = vmatpush.bf16.msra.mxu0 %v3744
    %3852 = vmatmul.bf16.gmra.mxu0 %v3612
    %v3853 = vpop.f32.mrf.mxu0
    %v3854 = vadd.f32 0.0, %v3853
    %v3855 = vpop.f32.mrf.mxu0
    %3856 = vdwg.mxu0
    %v3857 = vadd.f32 %v3608, %v3815
    %v3858 = vadd.f32 %v3609, %v3828
    %v3859 = vadd.f32 %v3610, %v3841
    %v3860 = vadd.f32 %v3611, %v3854
    %v3861 = vxor.u32 %v3857, 2147483648
    %v3862 = vmul.f32 %v3861, 1.442695
    %v3863 = vpow.pop %v3862
    %v3864 = vadd.f32 %v3863, 1.0
    %v3865 = vrcp.pop %v3864
    %v3866 = vmul.f32 %v3864, %v3865
    %v3867 = vsub.f32 1.0, %v3866
    %v3868 = vmul.f32 %v3865, %v3867
    %v3869 = vadd.f32 %v3865, %v3868
    %vm3870 = vweird.f32 %v3864
    %vm3871 = vweird.f32 %v3865
    %vm3872 = vmor %vm3870, %vm3871
    %v3873 = vsel %vm3872, %v3865, %v3869
    %v3874 = vand.u32 2147483647, %v3864
    %vm3875 = vcmp.eq.f32.partialorder %v3874, 8.507059e+37
    %v3876 = vand.u32 %v3864, 2147483648
    %v3877 = vor.u32 1.1754944e-38, %v3876
    %v3878 = vsel %vm3875, %v3877, %v3873
    %v3879 = vmul.f32 1.0, %v3878
    %v3880 = vxor.u32 %v3858, 2147483648
    %v3881 = vmul.f32 %v3880, 1.442695
    %v3882 = vpow.pop %v3881
    %v3883 = vadd.f32 %v3882, 1.0
    %v3884 = vrcp.pop %v3883
    %v3885 = vmul.f32 %v3883, %v3884
    %v3886 = vsub.f32 1.0, %v3885
    %v3887 = vmul.f32 %v3884, %v3886
    %v3888 = vadd.f32 %v3884, %v3887
    %vm3889 = vweird.f32 %v3883
    %vm3890 = vweird.f32 %v3884
    %vm3891 = vmor %vm3889, %vm3890
    %v3892 = vsel %vm3891, %v3884, %v3888
    %v3893 = vand.u32 2147483647, %v3883
    %vm3894 = vcmp.eq.f32.partialorder %v3893, 8.507059e+37
    %v3895 = vand.u32 %v3883, 2147483648
    %v3896 = vor.u32 1.1754944e-38, %v3895
    %v3897 = vsel %vm3894, %v3896, %v3892
    %v3898 = vmul.f32 1.0, %v3897
    %v3899 = vtanh.pop %v3859
    %v3900 = vxor.u32 %v3860, 2147483648
    %v3901 = vmul.f32 %v3900, 1.442695
    %v3902 = vpow.pop %v3901
    %v3903 = vadd.f32 %v3902, 1.0
    %v3904 = vrcp.pop %v3903
    %v3905 = vmul.f32 %v3903, %v3904
    %v3906 = vsub.f32 1.0, %v3905
    %v3907 = vmul.f32 %v3904, %v3906
    %v3908 = vadd.f32 %v3904, %v3907
    %vm3909 = vweird.f32 %v3903
    %vm3910 = vweird.f32 %v3904
    %vm3911 = vmor %vm3909, %vm3910
    %v3912 = vsel %vm3911, %v3904, %v3908
    %v3913 = vand.u32 2147483647, %v3903
    %vm3914 = vcmp.eq.f32.partialorder %v3913, 8.507059e+37
    %v3915 = vand.u32 %v3903, 2147483648
    %v3916 = vor.u32 1.1754944e-38, %v3915
    %v3917 = vsel %vm3914, %v3916, %v3912
    %v3918 = vmul.f32 1.0, %v3917
    %v3919 = vmul.f32 %v3898, %v3604
    %v3920 = vmul.f32 %v3879, %v3899
    %v3921 = vadd.f32 %v3919, %v3920
    %v3922 = vtanh.pop %v3921
    %v3923 = vmul.f32 %v3918, %v3922
    %3924 = vst [vmem:[%s997] sm:$0xff] %v3923
    %v3925 = vld [vmem:[%s1001] sm:$0xff]
    %v3926 = vld [vmem:[%s1001 + $0x8] sm:$0xff]
    %v3927 = vld [vmem:[%s1001 + $0x10] sm:$0xff]
    %v3928 = vld [vmem:[%s1001 + $0x18] sm:$0xff]
    %v3929 = vpack.c.bf16 %v3923, %v3923
    %v3930 = vld [vmem:[#allocation15] sm:$0xff]
    %v3931 = vld [vmem:[#allocation15 + $0x8] sm:$0xff]
    %v3932 = vld [vmem:[#allocation15 + $0x10] sm:$0xff]
    %v3933 = vld [vmem:[#allocation15 + $0x18] sm:$0xff]
    %v3934 = vld [vmem:[#allocation15 + $0x20] sm:$0xff]
    %v3935 = vld [vmem:[#allocation15 + $0x28] sm:$0xff]
    %v3936 = vld [vmem:[#allocation15 + $0x30] sm:$0xff]
    %v3937 = vld [vmem:[#allocation15 + $0x38] sm:$0xff]
    %v3938 = vld [vmem:[#allocation15 + $0x40] sm:$0xff]
    %v3939 = vld [vmem:[#allocation15 + $0x48] sm:$0xff]
    %v3940 = vld [vmem:[#allocation15 + $0x50] sm:$0xff]
    %v3941 = vld [vmem:[#allocation15 + $0x58] sm:$0xff]
    %v3942 = vld [vmem:[#allocation15 + $0x60] sm:$0xff]
    %v3943 = vld [vmem:[#allocation15 + $0x68] sm:$0xff]
    %v3944 = vld [vmem:[#allocation15 + $0x70] sm:$0xff]
    %v3945 = vld [vmem:[#allocation15 + $0x78] sm:$0xff]
    %v3946 = vld [vmem:[#allocation15 + $0x80] sm:$0xff]
    %v3947 = vld [vmem:[#allocation15 + $0x88] sm:$0xff]
    %v3948 = vld [vmem:[#allocation15 + $0x90] sm:$0xff]
    %v3949 = vld [vmem:[#allocation15 + $0x98] sm:$0xff]
    %v3950 = vld [vmem:[#allocation15 + $0xa0] sm:$0xff]
    %v3951 = vld [vmem:[#allocation15 + $0xa8] sm:$0xff]
    %v3952 = vld [vmem:[#allocation15 + $0xb0] sm:$0xff]
    %v3953 = vld [vmem:[#allocation15 + $0xb8] sm:$0xff]
    %v3954 = vld [vmem:[#allocation15 + $0xc0] sm:$0xff]
    %v3955 = vld [vmem:[#allocation15 + $0xc8] sm:$0xff]
    %v3956 = vld [vmem:[#allocation15 + $0xd0] sm:$0xff]
    %v3957 = vld [vmem:[#allocation15 + $0xd8] sm:$0xff]
    %v3958 = vld [vmem:[#allocation15 + $0xe0] sm:$0xff]
    %v3959 = vld [vmem:[#allocation15 + $0xe8] sm:$0xff]
    %v3960 = vld [vmem:[#allocation15 + $0xf0] sm:$0xff]
    %v3961 = vld [vmem:[#allocation15 + $0xf8] sm:$0xff]
    %v3994 = vunpack.c.l.b16 %v3930
    %v3995 = vunpack.c.h.b16 %v3930
    %v3996 = vunpack.c.l.b16 %v3931
    %v3997 = vunpack.c.h.b16 %v3931
    %v3998 = vunpack.c.l.b16 %v3932
    %v3999 = vunpack.c.h.b16 %v3932
    %v4000 = vunpack.c.l.b16 %v3933
    %v4001 = vunpack.c.h.b16 %v3933
    %v4002 = vunpack.c.l.b16 %v3934
    %v4003 = vunpack.c.h.b16 %v3934
    %v4004 = vunpack.c.l.b16 %v3935
    %v4005 = vunpack.c.h.b16 %v3935
    %v4006 = vunpack.c.l.b16 %v3936
    %v4007 = vunpack.c.h.b16 %v3936
    %v4008 = vunpack.c.l.b16 %v3937
    %v4009 = vunpack.c.h.b16 %v3937
    %v4010 = vunpack.c.l.b16 %v3938
    %v4011 = vunpack.c.h.b16 %v3938
    %v4012 = vunpack.c.l.b16 %v3939
    %v4013 = vunpack.c.h.b16 %v3939
    %v4014 = vunpack.c.l.b16 %v3940
    %v4015 = vunpack.c.h.b16 %v3940
    %v4016 = vunpack.c.l.b16 %v3941
    %v4017 = vunpack.c.h.b16 %v3941
    %v4018 = vunpack.c.l.b16 %v3942
    %v4019 = vunpack.c.h.b16 %v3942
    %v4020 = vunpack.c.l.b16 %v3943
    %v4021 = vunpack.c.h.b16 %v3943
    %v4022 = vunpack.c.l.b16 %v3944
    %v4023 = vunpack.c.h.b16 %v3944
    %v4024 = vunpack.c.l.b16 %v3945
    %v4025 = vunpack.c.h.b16 %v3945
    %v4026 = vunpack.c.l.b16 %v3946
    %v4027 = vunpack.c.h.b16 %v3946
    %v4028 = vunpack.c.l.b16 %v3947
    %v4029 = vunpack.c.h.b16 %v3947
    %v4030 = vunpack.c.l.b16 %v3948
    %v4031 = vunpack.c.h.b16 %v3948
    %v4032 = vunpack.c.l.b16 %v3949
    %v4033 = vunpack.c.h.b16 %v3949
    %v4034 = vunpack.c.l.b16 %v3950
    %v4035 = vunpack.c.h.b16 %v3950
    %v4036 = vunpack.c.l.b16 %v3951
    %v4037 = vunpack.c.h.b16 %v3951
    %v4038 = vunpack.c.l.b16 %v3952
    %v4039 = vunpack.c.h.b16 %v3952
    %v4040 = vunpack.c.l.b16 %v3953
    %v4041 = vunpack.c.h.b16 %v3953
    %v4042 = vunpack.c.l.b16 %v3954
    %v4043 = vunpack.c.h.b16 %v3954
    %v4044 = vunpack.c.l.b16 %v3955
    %v4045 = vunpack.c.h.b16 %v3955
    %v4046 = vunpack.c.l.b16 %v3956
    %v4047 = vunpack.c.h.b16 %v3956
    %v4048 = vunpack.c.l.b16 %v3957
    %v4049 = vunpack.c.h.b16 %v3957
    %v4050 = vunpack.c.l.b16 %v3958
    %v4051 = vunpack.c.h.b16 %v3958
    %v4052 = vunpack.c.l.b16 %v3959
    %v4053 = vunpack.c.h.b16 %v3959
    %v4054 = vunpack.c.l.b16 %v3960
    %v4055 = vunpack.c.h.b16 %v3960
    %v4056 = vunpack.c.l.b16 %v3961
    %v4057 = vunpack.c.h.b16 %v3961
    %v4058 = vpack.c.b16 %v3998, %v3994
    %v4059 = vpack.c.b16 %v3999, %v3995
    %v4060 = vpack.c.b16 %v4000, %v3996
    %v4061 = vpack.c.b16 %v4001, %v3997
    %v4062 = vpack.c.b16 %v4006, %v4002
    %v4063 = vpack.c.b16 %v4007, %v4003
    %v4064 = vpack.c.b16 %v4008, %v4004
    %v4065 = vpack.c.b16 %v4009, %v4005
    %v4066 = vpack.c.b16 %v4014, %v4010
    %v4067 = vpack.c.b16 %v4015, %v4011
    %v4068 = vpack.c.b16 %v4016, %v4012
    %v4069 = vpack.c.b16 %v4017, %v4013
    %v4070 = vpack.c.b16 %v4022, %v4018
    %v4071 = vpack.c.b16 %v4023, %v4019
    %v4072 = vpack.c.b16 %v4024, %v4020
    %v4073 = vpack.c.b16 %v4025, %v4021
    %v4074 = vpack.c.b16 %v4030, %v4026
    %v4075 = vpack.c.b16 %v4031, %v4027
    %v4076 = vpack.c.b16 %v4032, %v4028
    %v4077 = vpack.c.b16 %v4033, %v4029
    %v4078 = vpack.c.b16 %v4038, %v4034
    %v4079 = vpack.c.b16 %v4039, %v4035
    %v4080 = vpack.c.b16 %v4040, %v4036
    %v4081 = vpack.c.b16 %v4041, %v4037
    %v4082 = vpack.c.b16 %v4046, %v4042
    %v4083 = vpack.c.b16 %v4047, %v4043
    %v4084 = vpack.c.b16 %v4048, %v4044
    %v4085 = vpack.c.b16 %v4049, %v4045
    %v4086 = vpack.c.b16 %v4054, %v4050
    %v4087 = vpack.c.b16 %v4055, %v4051
    %v4088 = vpack.c.b16 %v4056, %v4052
    %v4089 = vpack.c.b16 %v4057, %v4053
    %4122 = vmatpush.bf16.msra.mxu0 %v4086
    %4123 = vmatpush.bf16.msra.mxu0 %v4082
    %4124 = vmatpush.bf16.msra.mxu0 %v4078
    %4125 = vmatpush.bf16.msra.mxu0 %v4074
    %4126 = vmatpush.bf16.msra.mxu0 %v4070
    %4127 = vmatpush.bf16.msra.mxu0 %v4066
    %4128 = vmatpush.bf16.msra.mxu0 %v4062
    %4129 = vmatpush.bf16.msra.mxu0 %v4058
    %4130 = vmatmul.bf16.gmra.mxu0 %v3929
    %v4131 = vpop.f32.mrf.mxu0
    %v4132 = vadd.f32 0.0, %v4131
    %v4133 = vpop.f32.mrf.mxu0
    %4134 = vdwg.mxu0
    %4135 = vmatpush.bf16.msra.mxu0 %v4087
    %4136 = vmatpush.bf16.msra.mxu0 %v4083
    %4137 = vmatpush.bf16.msra.mxu0 %v4079
    %4138 = vmatpush.bf16.msra.mxu0 %v4075
    %4139 = vmatpush.bf16.msra.mxu0 %v4071
    %4140 = vmatpush.bf16.msra.mxu0 %v4067
    %4141 = vmatpush.bf16.msra.mxu0 %v4063
    %4142 = vmatpush.bf16.msra.mxu0 %v4059
    %4143 = vmatmul.bf16.gmra.mxu0 %v3929
    %v4144 = vpop.f32.mrf.mxu0
    %v4145 = vadd.f32 0.0, %v4144
    %v4146 = vpop.f32.mrf.mxu0
    %4147 = vdwg.mxu0
    %4148 = vmatpush.bf16.msra.mxu0 %v4088
    %4149 = vmatpush.bf16.msra.mxu0 %v4084
    %4150 = vmatpush.bf16.msra.mxu0 %v4080
    %4151 = vmatpush.bf16.msra.mxu0 %v4076
    %4152 = vmatpush.bf16.msra.mxu0 %v4072
    %4153 = vmatpush.bf16.msra.mxu0 %v4068
    %4154 = vmatpush.bf16.msra.mxu0 %v4064
    %4155 = vmatpush.bf16.msra.mxu0 %v4060
    %4156 = vmatmul.bf16.gmra.mxu0 %v3929
    %v4157 = vpop.f32.mrf.mxu0
    %v4158 = vadd.f32 0.0, %v4157
    %v4159 = vpop.f32.mrf.mxu0
    %4160 = vdwg.mxu0
    %4161 = vmatpush.bf16.msra.mxu0 %v4089
    %4162 = vmatpush.bf16.msra.mxu0 %v4085
    %4163 = vmatpush.bf16.msra.mxu0 %v4081
    %4164 = vmatpush.bf16.msra.mxu0 %v4077
    %4165 = vmatpush.bf16.msra.mxu0 %v4073
    %4166 = vmatpush.bf16.msra.mxu0 %v4069
    %4167 = vmatpush.bf16.msra.mxu0 %v4065
    %4168 = vmatpush.bf16.msra.mxu0 %v4061
    %4169 = vmatmul.bf16.gmra.mxu0 %v3929
    %v4170 = vpop.f32.mrf.mxu0
    %v4171 = vadd.f32 0.0, %v4170
    %v4172 = vpop.f32.mrf.mxu0
    %4173 = vdwg.mxu0
    %v4174 = vadd.f32 %v3925, %v4132
    %v4175 = vadd.f32 %v3926, %v4145
    %v4176 = vadd.f32 %v3927, %v4158
    %v4177 = vadd.f32 %v3928, %v4171
    %v4178 = vxor.u32 %v4174, 2147483648
    %v4179 = vmul.f32 %v4178, 1.442695
    %v4180 = vpow.pop %v4179
    %v4181 = vadd.f32 %v4180, 1.0
    %v4182 = vrcp.pop %v4181
    %v4183 = vmul.f32 %v4181, %v4182
    %v4184 = vsub.f32 1.0, %v4183
    %v4185 = vmul.f32 %v4182, %v4184
    %v4186 = vadd.f32 %v4182, %v4185
    %vm4187 = vweird.f32 %v4181
    %vm4188 = vweird.f32 %v4182
    %vm4189 = vmor %vm4187, %vm4188
    %v4190 = vsel %vm4189, %v4182, %v4186
    %v4191 = vand.u32 2147483647, %v4181
    %vm4192 = vcmp.eq.f32.partialorder %v4191, 8.507059e+37
    %v4193 = vand.u32 %v4181, 2147483648
    %v4194 = vor.u32 1.1754944e-38, %v4193
    %v4195 = vsel %vm4192, %v4194, %v4190
    %v4196 = vmul.f32 1.0, %v4195
    %v4197 = vxor.u32 %v4175, 2147483648
    %v4198 = vmul.f32 %v4197, 1.442695
    %v4199 = vpow.pop %v4198
    %v4200 = vadd.f32 %v4199, 1.0
    %v4201 = vrcp.pop %v4200
    %v4202 = vmul.f32 %v4200, %v4201
    %v4203 = vsub.f32 1.0, %v4202
    %v4204 = vmul.f32 %v4201, %v4203
    %v4205 = vadd.f32 %v4201, %v4204
    %vm4206 = vweird.f32 %v4200
    %vm4207 = vweird.f32 %v4201
    %vm4208 = vmor %vm4206, %vm4207
    %v4209 = vsel %vm4208, %v4201, %v4205
    %v4210 = vand.u32 2147483647, %v4200
    %vm4211 = vcmp.eq.f32.partialorder %v4210, 8.507059e+37
    %v4212 = vand.u32 %v4200, 2147483648
    %v4213 = vor.u32 1.1754944e-38, %v4212
    %v4214 = vsel %vm4211, %v4213, %v4209
    %v4215 = vmul.f32 1.0, %v4214
    %v4216 = vtanh.pop %v4176
    %v4217 = vxor.u32 %v4177, 2147483648
    %v4218 = vmul.f32 %v4217, 1.442695
    %v4219 = vpow.pop %v4218
    %v4220 = vadd.f32 %v4219, 1.0
    %v4221 = vrcp.pop %v4220
    %v4222 = vmul.f32 %v4220, %v4221
    %v4223 = vsub.f32 1.0, %v4222
    %v4224 = vmul.f32 %v4221, %v4223
    %v4225 = vadd.f32 %v4221, %v4224
    %vm4226 = vweird.f32 %v4220
    %vm4227 = vweird.f32 %v4221
    %vm4228 = vmor %vm4226, %vm4227
    %v4229 = vsel %vm4228, %v4221, %v4225
    %v4230 = vand.u32 2147483647, %v4220
    %vm4231 = vcmp.eq.f32.partialorder %v4230, 8.507059e+37
    %v4232 = vand.u32 %v4220, 2147483648
    %v4233 = vor.u32 1.1754944e-38, %v4232
    %v4234 = vsel %vm4231, %v4233, %v4229
    %v4235 = vmul.f32 1.0, %v4234
    %v4236 = vmul.f32 %v4215, %v3921
    %v4237 = vmul.f32 %v4196, %v4216
    %v4238 = vadd.f32 %v4236, %v4237
    %v4239 = vtanh.pop %v4238
    %v4240 = vmul.f32 %v4235, %v4239
    %4241 = vst [vmem:[%s1318] sm:$0xff] %v4240
    %v4242 = vld [vmem:[%s1322] sm:$0xff]
    %v4243 = vld [vmem:[%s1322 + $0x8] sm:$0xff]
    %v4244 = vld [vmem:[%s1322 + $0x10] sm:$0xff]
    %v4245 = vld [vmem:[%s1322 + $0x18] sm:$0xff]
    %v4246 = vpack.c.bf16 %v4240, %v4240
    %v4247 = vld [vmem:[#allocation15] sm:$0xff]
    %v4248 = vld [vmem:[#allocation15 + $0x8] sm:$0xff]
    %v4249 = vld [vmem:[#allocation15 + $0x10] sm:$0xff]
    %v4250 = vld [vmem:[#allocation15 + $0x18] sm:$0xff]
    %v4251 = vld [vmem:[#allocation15 + $0x20] sm:$0xff]
    %v4252 = vld [vmem:[#allocation15 + $0x28] sm:$0xff]
    %v4253 = vld [vmem:[#allocation15 + $0x30] sm:$0xff]
    %v4254 = vld [vmem:[#allocation15 + $0x38] sm:$0xff]
    %v4255 = vld [vmem:[#allocation15 + $0x40] sm:$0xff]
    %v4256 = vld [vmem:[#allocation15 + $0x48] sm:$0xff]
    %v4257 = vld [vmem:[#allocation15 + $0x50] sm:$0xff]
    %v4258 = vld [vmem:[#allocation15 + $0x58] sm:$0xff]
    %v4259 = vld [vmem:[#allocation15 + $0x60] sm:$0xff]
    %v4260 = vld [vmem:[#allocation15 + $0x68] sm:$0xff]
    %v4261 = vld [vmem:[#allocation15 + $0x70] sm:$0xff]
    %v4262 = vld [vmem:[#allocation15 + $0x78] sm:$0xff]
    %v4263 = vld [vmem:[#allocation15 + $0x80] sm:$0xff]
    %v4264 = vld [vmem:[#allocation15 + $0x88] sm:$0xff]
    %v4265 = vld [vmem:[#allocation15 + $0x90] sm:$0xff]
    %v4266 = vld [vmem:[#allocation15 + $0x98] sm:$0xff]
    %v4267 = vld [vmem:[#allocation15 + $0xa0] sm:$0xff]
    %v4268 = vld [vmem:[#allocation15 + $0xa8] sm:$0xff]
    %v4269 = vld [vmem:[#allocation15 + $0xb0] sm:$0xff]
    %v4270 = vld [vmem:[#allocation15 + $0xb8] sm:$0xff]
    %v4271 = vld [vmem:[#allocation15 + $0xc0] sm:$0xff]
    %v4272 = vld [vmem:[#allocation15 + $0xc8] sm:$0xff]
    %v4273 = vld [vmem:[#allocation15 + $0xd0] sm:$0xff]
    %v4274 = vld [vmem:[#allocation15 + $0xd8] sm:$0xff]
    %v4275 = vld [vmem:[#allocation15 + $0xe0] sm:$0xff]
    %v4276 = vld [vmem:[#allocation15 + $0xe8] sm:$0xff]
    %v4277 = vld [vmem:[#allocation15 + $0xf0] sm:$0xff]
    %v4278 = vld [vmem:[#allocation15 + $0xf8] sm:$0xff]
    %v4311 = vunpack.c.l.b16 %v4247
    %v4312 = vunpack.c.h.b16 %v4247
    %v4313 = vunpack.c.l.b16 %v4248
    %v4314 = vunpack.c.h.b16 %v4248
    %v4315 = vunpack.c.l.b16 %v4249
    %v4316 = vunpack.c.h.b16 %v4249
    %v4317 = vunpack.c.l.b16 %v4250
    %v4318 = vunpack.c.h.b16 %v4250
    %v4319 = vunpack.c.l.b16 %v4251
    %v4320 = vunpack.c.h.b16 %v4251
    %v4321 = vunpack.c.l.b16 %v4252
    %v4322 = vunpack.c.h.b16 %v4252
    %v4323 = vunpack.c.l.b16 %v4253
    %v4324 = vunpack.c.h.b16 %v4253
    %v4325 = vunpack.c.l.b16 %v4254
    %v4326 = vunpack.c.h.b16 %v4254
    %v4327 = vunpack.c.l.b16 %v4255
    %v4328 = vunpack.c.h.b16 %v4255
    %v4329 = vunpack.c.l.b16 %v4256
    %v4330 = vunpack.c.h.b16 %v4256
    %v4331 = vunpack.c.l.b16 %v4257
    %v4332 = vunpack.c.h.b16 %v4257
    %v4333 = vunpack.c.l.b16 %v4258
    %v4334 = vunpack.c.h.b16 %v4258
    %v4335 = vunpack.c.l.b16 %v4259
    %v4336 = vunpack.c.h.b16 %v4259
    %v4337 = vunpack.c.l.b16 %v4260
    %v4338 = vunpack.c.h.b16 %v4260
    %v4339 = vunpack.c.l.b16 %v4261
    %v4340 = vunpack.c.h.b16 %v4261
    %v4341 = vunpack.c.l.b16 %v4262
    %v4342 = vunpack.c.h.b16 %v4262
    %v4343 = vunpack.c.l.b16 %v4263
    %v4344 = vunpack.c.h.b16 %v4263
    %v4345 = vunpack.c.l.b16 %v4264
    %v4346 = vunpack.c.h.b16 %v4264
    %v4347 = vunpack.c.l.b16 %v4265
    %v4348 = vunpack.c.h.b16 %v4265
    %v4349 = vunpack.c.l.b16 %v4266
    %v4350 = vunpack.c.h.b16 %v4266
    %v4351 = vunpack.c.l.b16 %v4267
    %v4352 = vunpack.c.h.b16 %v4267
    %v4353 = vunpack.c.l.b16 %v4268
    %v4354 = vunpack.c.h.b16 %v4268
    %v4355 = vunpack.c.l.b16 %v4269
    %v4356 = vunpack.c.h.b16 %v4269
    %v4357 = vunpack.c.l.b16 %v4270
    %v4358 = vunpack.c.h.b16 %v4270
    %v4359 = vunpack.c.l.b16 %v4271
    %v4360 = vunpack.c.h.b16 %v4271
    %v4361 = vunpack.c.l.b16 %v4272
    %v4362 = vunpack.c.h.b16 %v4272
    %v4363 = vunpack.c.l.b16 %v4273
    %v4364 = vunpack.c.h.b16 %v4273
    %v4365 = vunpack.c.l.b16 %v4274
    %v4366 = vunpack.c.h.b16 %v4274
    %v4367 = vunpack.c.l.b16 %v4275
    %v4368 = vunpack.c.h.b16 %v4275
    %v4369 = vunpack.c.l.b16 %v4276
    %v4370 = vunpack.c.h.b16 %v4276
    %v4371 = vunpack.c.l.b16 %v4277
    %v4372 = vunpack.c.h.b16 %v4277
    %v4373 = vunpack.c.l.b16 %v4278
    %v4374 = vunpack.c.h.b16 %v4278
    %v4375 = vpack.c.b16 %v4315, %v4311
    %v4376 = vpack.c.b16 %v4316, %v4312
    %v4377 = vpack.c.b16 %v4317, %v4313
    %v4378 = vpack.c.b16 %v4318, %v4314
    %v4379 = vpack.c.b16 %v4323, %v4319
    %v4380 = vpack.c.b16 %v4324, %v4320
    %v4381 = vpack.c.b16 %v4325, %v4321
    %v4382 = vpack.c.b16 %v4326, %v4322
    %v4383 = vpack.c.b16 %v4331, %v4327
    %v4384 = vpack.c.b16 %v4332, %v4328
    %v4385 = vpack.c.b16 %v4333, %v4329
    %v4386 = vpack.c.b16 %v4334, %v4330
    %v4387 = vpack.c.b16 %v4339, %v4335
    %v4388 = vpack.c.b16 %v4340, %v4336
    %v4389 = vpack.c.b16 %v4341, %v4337
    %v4390 = vpack.c.b16 %v4342, %v4338
    %v4391 = vpack.c.b16 %v4347, %v4343
    %v4392 = vpack.c.b16 %v4348, %v4344
    %v4393 = vpack.c.b16 %v4349, %v4345
    %v4394 = vpack.c.b16 %v4350, %v4346
    %v4395 = vpack.c.b16 %v4355, %v4351
    %v4396 = vpack.c.b16 %v4356, %v4352
    %v4397 = vpack.c.b16 %v4357, %v4353
    %v4398 = vpack.c.b16 %v4358, %v4354
    %v4399 = vpack.c.b16 %v4363, %v4359
    %v4400 = vpack.c.b16 %v4364, %v4360
    %v4401 = vpack.c.b16 %v4365, %v4361
    %v4402 = vpack.c.b16 %v4366, %v4362
    %v4403 = vpack.c.b16 %v4371, %v4367
    %v4404 = vpack.c.b16 %v4372, %v4368
    %v4405 = vpack.c.b16 %v4373, %v4369
    %v4406 = vpack.c.b16 %v4374, %v4370
    %4439 = vmatpush.bf16.msra.mxu0 %v4403
    %4440 = vmatpush.bf16.msra.mxu0 %v4399
    %4441 = vmatpush.bf16.msra.mxu0 %v4395
    %4442 = vmatpush.bf16.msra.mxu0 %v4391
    %4443 = vmatpush.bf16.msra.mxu0 %v4387
    %4444 = vmatpush.bf16.msra.mxu0 %v4383
    %4445 = vmatpush.bf16.msra.mxu0 %v4379
    %4446 = vmatpush.bf16.msra.mxu0 %v4375
    %4447 = vmatmul.bf16.gmra.mxu0 %v4246
    %v4448 = vpop.f32.mrf.mxu0
    %v4449 = vadd.f32 0.0, %v4448
    %v4450 = vpop.f32.mrf.mxu0
    %4451 = vdwg.mxu0
    %4452 = vmatpush.bf16.msra.mxu0 %v4404
    %4453 = vmatpush.bf16.msra.mxu0 %v4400
    %4454 = vmatpush.bf16.msra.mxu0 %v4396
    %4455 = vmatpush.bf16.msra.mxu0 %v4392
    %4456 = vmatpush.bf16.msra.mxu0 %v4388
    %4457 = vmatpush.bf16.msra.mxu0 %v4384
    %4458 = vmatpush.bf16.msra.mxu0 %v4380
    %4459 = vmatpush.bf16.msra.mxu0 %v4376
    %4460 = vmatmul.bf16.gmra.mxu0 %v4246
    %v4461 = vpop.f32.mrf.mxu0
    %v4462 = vadd.f32 0.0, %v4461
    %v4463 = vpop.f32.mrf.mxu0
    %4464 = vdwg.mxu0
    %4465 = vmatpush.bf16.msra.mxu0 %v4405
    %4466 = vmatpush.bf16.msra.mxu0 %v4401
    %4467 = vmatpush.bf16.msra.mxu0 %v4397
    %4468 = vmatpush.bf16.msra.mxu0 %v4393
    %4469 = vmatpush.bf16.msra.mxu0 %v4389
    %4470 = vmatpush.bf16.msra.mxu0 %v4385
    %4471 = vmatpush.bf16.msra.mxu0 %v4381
    %4472 = vmatpush.bf16.msra.mxu0 %v4377
    %4473 = vmatmul.bf16.gmra.mxu0 %v4246
    %v4474 = vpop.f32.mrf.mxu0
    %v4475 = vadd.f32 0.0, %v4474
    %v4476 = vpop.f32.mrf.mxu0
    %4477 = vdwg.mxu0
    %4478 = vmatpush.bf16.msra.mxu0 %v4406
    %4479 = vmatpush.bf16.msra.mxu0 %v4402
    %4480 = vmatpush.bf16.msra.mxu0 %v4398
    %4481 = vmatpush.bf16.msra.mxu0 %v4394
    %4482 = vmatpush.bf16.msra.mxu0 %v4390
    %4483 = vmatpush.bf16.msra.mxu0 %v4386
    %4484 = vmatpush.bf16.msra.mxu0 %v4382
    %4485 = vmatpush.bf16.msra.mxu0 %v4378
    %4486 = vmatmul.bf16.gmra.mxu0 %v4246
    %v4487 = vpop.f32.mrf.mxu0
    %v4488 = vadd.f32 0.0, %v4487
    %v4489 = vpop.f32.mrf.mxu0
    %4490 = vdwg.mxu0
    %v4491 = vadd.f32 %v4242, %v4449
    %v4492 = vadd.f32 %v4243, %v4462
    %v4493 = vadd.f32 %v4244, %v4475
    %v4494 = vadd.f32 %v4245, %v4488
    %v4495 = vxor.u32 %v4491, 2147483648
    %v4496 = vmul.f32 %v4495, 1.442695
    %v4497 = vpow.pop %v4496
    %v4498 = vadd.f32 %v4497, 1.0
    %v4499 = vrcp.pop %v4498
    %v4500 = vmul.f32 %v4498, %v4499
    %v4501 = vsub.f32 1.0, %v4500
    %v4502 = vmul.f32 %v4499, %v4501
    %v4503 = vadd.f32 %v4499, %v4502
    %vm4504 = vweird.f32 %v4498
    %vm4505 = vweird.f32 %v4499
    %vm4506 = vmor %vm4504, %vm4505
    %v4507 = vsel %vm4506, %v4499, %v4503
    %v4508 = vand.u32 2147483647, %v4498
    %vm4509 = vcmp.eq.f32.partialorder %v4508, 8.507059e+37
    %v4510 = vand.u32 %v4498, 2147483648
    %v4511 = vor.u32 1.1754944e-38, %v4510
    %v4512 = vsel %vm4509, %v4511, %v4507
    %v4513 = vmul.f32 1.0, %v4512
    %v4514 = vxor.u32 %v4492, 2147483648
    %v4515 = vmul.f32 %v4514, 1.442695
    %v4516 = vpow.pop %v4515
    %v4517 = vadd.f32 %v4516, 1.0
    %v4518 = vrcp.pop %v4517
    %v4519 = vmul.f32 %v4517, %v4518
    %v4520 = vsub.f32 1.0, %v4519
    %v4521 = vmul.f32 %v4518, %v4520
    %v4522 = vadd.f32 %v4518, %v4521
    %vm4523 = vweird.f32 %v4517
    %vm4524 = vweird.f32 %v4518
    %vm4525 = vmor %vm4523, %vm4524
    %v4526 = vsel %vm4525, %v4518, %v4522
    %v4527 = vand.u32 2147483647, %v4517
    %vm4528 = vcmp.eq.f32.partialorder %v4527, 8.507059e+37
    %v4529 = vand.u32 %v4517, 2147483648
    %v4530 = vor.u32 1.1754944e-38, %v4529
    %v4531 = vsel %vm4528, %v4530, %v4526
    %v4532 = vmul.f32 1.0, %v4531
    %v4533 = vtanh.pop %v4493
    %v4534 = vxor.u32 %v4494, 2147483648
    %v4535 = vmul.f32 %v4534, 1.442695
    %v4536 = vpow.pop %v4535
    %v4537 = vadd.f32 %v4536, 1.0
    %v4538 = vrcp.pop %v4537
    %v4539 = vmul.f32 %v4537, %v4538
    %v4540 = vsub.f32 1.0, %v4539
    %v4541 = vmul.f32 %v4538, %v4540
    %v4542 = vadd.f32 %v4538, %v4541
    %vm4543 = vweird.f32 %v4537
    %vm4544 = vweird.f32 %v4538
    %vm4545 = vmor %vm4543, %vm4544
    %v4546 = vsel %vm4545, %v4538, %v4542
    %v4547 = vand.u32 2147483647, %v4537
    %vm4548 = vcmp.eq.f32.partialorder %v4547, 8.507059e+37
    %v4549 = vand.u32 %v4537, 2147483648
    %v4550 = vor.u32 1.1754944e-38, %v4549
    %v4551 = vsel %vm4548, %v4550, %v4546
    %v4552 = vmul.f32 1.0, %v4551
    %v4553 = vmul.f32 %v4532, %v4238
    %v4554 = vmul.f32 %v4513, %v4533
    %v4555 = vadd.f32 %v4553, %v4554
    %v4556 = vtanh.pop %v4555
    %v4557 = vmul.f32 %v4552, %v4556
    %4558 = vst [vmem:[%s1639] sm:$0xff] %v4557
    %v4559 = vld [vmem:[%s1643] sm:$0xff]
    %v4560 = vld [vmem:[%s1643 + $0x8] sm:$0xff]
    %v4561 = vld [vmem:[%s1643 + $0x10] sm:$0xff]
    %v4562 = vld [vmem:[%s1643 + $0x18] sm:$0xff]
    %v4563 = vpack.c.bf16 %v4557, %v4557
    %v4564 = vld [vmem:[#allocation15] sm:$0xff]
    %v4565 = vld [vmem:[#allocation15 + $0x8] sm:$0xff]
    %v4566 = vld [vmem:[#allocation15 + $0x10] sm:$0xff]
    %v4567 = vld [vmem:[#allocation15 + $0x18] sm:$0xff]
    %v4568 = vld [vmem:[#allocation15 + $0x20] sm:$0xff]
    %v4569 = vld [vmem:[#allocation15 + $0x28] sm:$0xff]
    %v4570 = vld [vmem:[#allocation15 + $0x30] sm:$0xff]
    %v4571 = vld [vmem:[#allocation15 + $0x38] sm:$0xff]
    %v4572 = vld [vmem:[#allocation15 + $0x40] sm:$0xff]
    %v4573 = vld [vmem:[#allocation15 + $0x48] sm:$0xff]
    %v4574 = vld [vmem:[#allocation15 + $0x50] sm:$0xff]
    %v4575 = vld [vmem:[#allocation15 + $0x58] sm:$0xff]
    %v4576 = vld [vmem:[#allocation15 + $0x60] sm:$0xff]
    %v4577 = vld [vmem:[#allocation15 + $0x68] sm:$0xff]
    %v4578 = vld [vmem:[#allocation15 + $0x70] sm:$0xff]
    %v4579 = vld [vmem:[#allocation15 + $0x78] sm:$0xff]
    %v4580 = vld [vmem:[#allocation15 + $0x80] sm:$0xff]
    %v4581 = vld [vmem:[#allocation15 + $0x88] sm:$0xff]
    %v4582 = vld [vmem:[#allocation15 + $0x90] sm:$0xff]
    %v4583 = vld [vmem:[#allocation15 + $0x98] sm:$0xff]
    %v4584 = vld [vmem:[#allocation15 + $0xa0] sm:$0xff]
    %v4585 = vld [vmem:[#allocation15 + $0xa8] sm:$0xff]
    %v4586 = vld [vmem:[#allocation15 + $0xb0] sm:$0xff]
    %v4587 = vld [vmem:[#allocation15 + $0xb8] sm:$0xff]
    %v4588 = vld [vmem:[#allocation15 + $0xc0] sm:$0xff]
    %v4589 = vld [vmem:[#allocation15 + $0xc8] sm:$0xff]
    %v4590 = vld [vmem:[#allocation15 + $0xd0] sm:$0xff]
    %v4591 = vld [vmem:[#allocation15 + $0xd8] sm:$0xff]
    %v4592 = vld [vmem:[#allocation15 + $0xe0] sm:$0xff]
    %v4593 = vld [vmem:[#allocation15 + $0xe8] sm:$0xff]
    %v4594 = vld [vmem:[#allocation15 + $0xf0] sm:$0xff]
    %v4595 = vld [vmem:[#allocation15 + $0xf8] sm:$0xff]
    %v4628 = vunpack.c.l.b16 %v4564
    %v4629 = vunpack.c.h.b16 %v4564
    %v4630 = vunpack.c.l.b16 %v4565
    %v4631 = vunpack.c.h.b16 %v4565
    %v4632 = vunpack.c.l.b16 %v4566
    %v4633 = vunpack.c.h.b16 %v4566
    %v4634 = vunpack.c.l.b16 %v4567
    %v4635 = vunpack.c.h.b16 %v4567
    %v4636 = vunpack.c.l.b16 %v4568
    %v4637 = vunpack.c.h.b16 %v4568
    %v4638 = vunpack.c.l.b16 %v4569
    %v4639 = vunpack.c.h.b16 %v4569
    %v4640 = vunpack.c.l.b16 %v4570
    %v4641 = vunpack.c.h.b16 %v4570
    %v4642 = vunpack.c.l.b16 %v4571
    %v4643 = vunpack.c.h.b16 %v4571
    %v4644 = vunpack.c.l.b16 %v4572
    %v4645 = vunpack.c.h.b16 %v4572
    %v4646 = vunpack.c.l.b16 %v4573
    %v4647 = vunpack.c.h.b16 %v4573
    %v4648 = vunpack.c.l.b16 %v4574
    %v4649 = vunpack.c.h.b16 %v4574
    %v4650 = vunpack.c.l.b16 %v4575
    %v4651 = vunpack.c.h.b16 %v4575
    %v4652 = vunpack.c.l.b16 %v4576
    %v4653 = vunpack.c.h.b16 %v4576
    %v4654 = vunpack.c.l.b16 %v4577
    %v4655 = vunpack.c.h.b16 %v4577
    %v4656 = vunpack.c.l.b16 %v4578
    %v4657 = vunpack.c.h.b16 %v4578
    %v4658 = vunpack.c.l.b16 %v4579
    %v4659 = vunpack.c.h.b16 %v4579
    %v4660 = vunpack.c.l.b16 %v4580
    %v4661 = vunpack.c.h.b16 %v4580
    %v4662 = vunpack.c.l.b16 %v4581
    %v4663 = vunpack.c.h.b16 %v4581
    %v4664 = vunpack.c.l.b16 %v4582
    %v4665 = vunpack.c.h.b16 %v4582
    %v4666 = vunpack.c.l.b16 %v4583
    %v4667 = vunpack.c.h.b16 %v4583
    %v4668 = vunpack.c.l.b16 %v4584
    %v4669 = vunpack.c.h.b16 %v4584
    %v4670 = vunpack.c.l.b16 %v4585
    %v4671 = vunpack.c.h.b16 %v4585
    %v4672 = vunpack.c.l.b16 %v4586
    %v4673 = vunpack.c.h.b16 %v4586
    %v4674 = vunpack.c.l.b16 %v4587
    %v4675 = vunpack.c.h.b16 %v4587
    %v4676 = vunpack.c.l.b16 %v4588
    %v4677 = vunpack.c.h.b16 %v4588
    %v4678 = vunpack.c.l.b16 %v4589
    %v4679 = vunpack.c.h.b16 %v4589
    %v4680 = vunpack.c.l.b16 %v4590
    %v4681 = vunpack.c.h.b16 %v4590
    %v4682 = vunpack.c.l.b16 %v4591
    %v4683 = vunpack.c.h.b16 %v4591
    %v4684 = vunpack.c.l.b16 %v4592
    %v4685 = vunpack.c.h.b16 %v4592
    %v4686 = vunpack.c.l.b16 %v4593
    %v4687 = vunpack.c.h.b16 %v4593
    %v4688 = vunpack.c.l.b16 %v4594
    %v4689 = vunpack.c.h.b16 %v4594
    %v4690 = vunpack.c.l.b16 %v4595
    %v4691 = vunpack.c.h.b16 %v4595
    %v4692 = vpack.c.b16 %v4632, %v4628
    %v4693 = vpack.c.b16 %v4633, %v4629
    %v4694 = vpack.c.b16 %v4634, %v4630
    %v4695 = vpack.c.b16 %v4635, %v4631
    %v4696 = vpack.c.b16 %v4640, %v4636
    %v4697 = vpack.c.b16 %v4641, %v4637
    %v4698 = vpack.c.b16 %v4642, %v4638
    %v4699 = vpack.c.b16 %v4643, %v4639
    %v4700 = vpack.c.b16 %v4648, %v4644
    %v4701 = vpack.c.b16 %v4649, %v4645
    %v4702 = vpack.c.b16 %v4650, %v4646
    %v4703 = vpack.c.b16 %v4651, %v4647
    %v4704 = vpack.c.b16 %v4656, %v4652
    %v4705 = vpack.c.b16 %v4657, %v4653
    %v4706 = vpack.c.b16 %v4658, %v4654
    %v4707 = vpack.c.b16 %v4659, %v4655
    %v4708 = vpack.c.b16 %v4664, %v4660
    %v4709 = vpack.c.b16 %v4665, %v4661
    %v4710 = vpack.c.b16 %v4666, %v4662
    %v4711 = vpack.c.b16 %v4667, %v4663
    %v4712 = vpack.c.b16 %v4672, %v4668
    %v4713 = vpack.c.b16 %v4673, %v4669
    %v4714 = vpack.c.b16 %v4674, %v4670
    %v4715 = vpack.c.b16 %v4675, %v4671
    %v4716 = vpack.c.b16 %v4680, %v4676
    %v4717 = vpack.c.b16 %v4681, %v4677
    %v4718 = vpack.c.b16 %v4682, %v4678
    %v4719 = vpack.c.b16 %v4683, %v4679
    %v4720 = vpack.c.b16 %v4688, %v4684
    %v4721 = vpack.c.b16 %v4689, %v4685
    %v4722 = vpack.c.b16 %v4690, %v4686
    %v4723 = vpack.c.b16 %v4691, %v4687
    %4756 = vmatpush.bf16.msra.mxu0 %v4720
    %4757 = vmatpush.bf16.msra.mxu0 %v4716
    %4758 = vmatpush.bf16.msra.mxu0 %v4712
    %4759 = vmatpush.bf16.msra.mxu0 %v4708
    %4760 = vmatpush.bf16.msra.mxu0 %v4704
    %4761 = vmatpush.bf16.msra.mxu0 %v4700
    %4762 = vmatpush.bf16.msra.mxu0 %v4696
    %4763 = vmatpush.bf16.msra.mxu0 %v4692
    %4764 = vmatmul.bf16.gmra.mxu0 %v4563
    %v4765 = vpop.f32.mrf.mxu0
    %v4766 = vadd.f32 0.0, %v4765
    %v4767 = vpop.f32.mrf.mxu0
    %4768 = vdwg.mxu0
    %4769 = vmatpush.bf16.msra.mxu0 %v4721
    %4770 = vmatpush.bf16.msra.mxu0 %v4717
    %4771 = vmatpush.bf16.msra.mxu0 %v4713
    %4772 = vmatpush.bf16.msra.mxu0 %v4709
    %4773 = vmatpush.bf16.msra.mxu0 %v4705
    %4774 = vmatpush.bf16.msra.mxu0 %v4701
    %4775 = vmatpush.bf16.msra.mxu0 %v4697
    %4776 = vmatpush.bf16.msra.mxu0 %v4693
    %4777 = vmatmul.bf16.gmra.mxu0 %v4563
    %v4778 = vpop.f32.mrf.mxu0
    %v4779 = vadd.f32 0.0, %v4778
    %v4780 = vpop.f32.mrf.mxu0
    %4781 = vdwg.mxu0
    %4782 = vmatpush.bf16.msra.mxu0 %v4722
    %4783 = vmatpush.bf16.msra.mxu0 %v4718
    %4784 = vmatpush.bf16.msra.mxu0 %v4714
    %4785 = vmatpush.bf16.msra.mxu0 %v4710
    %4786 = vmatpush.bf16.msra.mxu0 %v4706
    %4787 = vmatpush.bf16.msra.mxu0 %v4702
    %4788 = vmatpush.bf16.msra.mxu0 %v4698
    %4789 = vmatpush.bf16.msra.mxu0 %v4694
    %4790 = vmatmul.bf16.gmra.mxu0 %v4563
    %v4791 = vpop.f32.mrf.mxu0
    %v4792 = vadd.f32 0.0, %v4791
    %v4793 = vpop.f32.mrf.mxu0
    %4794 = vdwg.mxu0
    %4795 = vmatpush.bf16.msra.mxu0 %v4723
    %4796 = vmatpush.bf16.msra.mxu0 %v4719
    %4797 = vmatpush.bf16.msra.mxu0 %v4715
    %4798 = vmatpush.bf16.msra.mxu0 %v4711
    %4799 = vmatpush.bf16.msra.mxu0 %v4707
    %4800 = vmatpush.bf16.msra.mxu0 %v4703
    %4801 = vmatpush.bf16.msra.mxu0 %v4699
    %4802 = vmatpush.bf16.msra.mxu0 %v4695
    %4803 = vmatmul.bf16.gmra.mxu0 %v4563
    %v4804 = vpop.f32.mrf.mxu0
    %v4805 = vadd.f32 0.0, %v4804
    %v4806 = vpop.f32.mrf.mxu0
    %4807 = vdwg.mxu0
    %v4808 = vadd.f32 %v4559, %v4766
    %v4809 = vadd.f32 %v4560, %v4779
    %v4810 = vadd.f32 %v4561, %v4792
    %v4811 = vadd.f32 %v4562, %v4805
    %v4812 = vxor.u32 %v4808, 2147483648
    %v4813 = vmul.f32 %v4812, 1.442695
    %v4814 = vpow.pop %v4813
    %v4815 = vadd.f32 %v4814, 1.0
    %v4816 = vrcp.pop %v4815
    %v4817 = vmul.f32 %v4815, %v4816
    %v4818 = vsub.f32 1.0, %v4817
    %v4819 = vmul.f32 %v4816, %v4818
    %v4820 = vadd.f32 %v4816, %v4819
    %vm4821 = vweird.f32 %v4815
    %vm4822 = vweird.f32 %v4816
    %vm4823 = vmor %vm4821, %vm4822
    %v4824 = vsel %vm4823, %v4816, %v4820
    %v4825 = vand.u32 2147483647, %v4815
    %vm4826 = vcmp.eq.f32.partialorder %v4825, 8.507059e+37
    %v4827 = vand.u32 %v4815, 2147483648
    %v4828 = vor.u32 1.1754944e-38, %v4827
    %v4829 = vsel %vm4826, %v4828, %v4824
    %v4830 = vmul.f32 1.0, %v4829
    %v4831 = vxor.u32 %v4809, 2147483648
    %v4832 = vmul.f32 %v4831, 1.442695
    %v4833 = vpow.pop %v4832
    %v4834 = vadd.f32 %v4833, 1.0
    %v4835 = vrcp.pop %v4834
    %v4836 = vmul.f32 %v4834, %v4835
    %v4837 = vsub.f32 1.0, %v4836
    %v4838 = vmul.f32 %v4835, %v4837
    %v4839 = vadd.f32 %v4835, %v4838
    %vm4840 = vweird.f32 %v4834
    %vm4841 = vweird.f32 %v4835
    %vm4842 = vmor %vm4840, %vm4841
    %v4843 = vsel %vm4842, %v4835, %v4839
    %v4844 = vand.u32 2147483647, %v4834
    %vm4845 = vcmp.eq.f32.partialorder %v4844, 8.507059e+37
    %v4846 = vand.u32 %v4834, 2147483648
    %v4847 = vor.u32 1.1754944e-38, %v4846
    %v4848 = vsel %vm4845, %v4847, %v4843
    %v4849 = vmul.f32 1.0, %v4848
    %v4850 = vtanh.pop %v4810
    %v4851 = vxor.u32 %v4811, 2147483648
    %v4852 = vmul.f32 %v4851, 1.442695
    %v4853 = vpow.pop %v4852
    %v4854 = vadd.f32 %v4853, 1.0
    %v4855 = vrcp.pop %v4854
    %v4856 = vmul.f32 %v4854, %v4855
    %v4857 = vsub.f32 1.0, %v4856
    %v4858 = vmul.f32 %v4855, %v4857
    %v4859 = vadd.f32 %v4855, %v4858
    %vm4860 = vweird.f32 %v4854
    %vm4861 = vweird.f32 %v4855
    %vm4862 = vmor %vm4860, %vm4861
    %v4863 = vsel %vm4862, %v4855, %v4859
    %v4864 = vand.u32 2147483647, %v4854
    %vm4865 = vcmp.eq.f32.partialorder %v4864, 8.507059e+37
    %v4866 = vand.u32 %v4854, 2147483648
    %v4867 = vor.u32 1.1754944e-38, %v4866
    %v4868 = vsel %vm4865, %v4867, %v4863
    %v4869 = vmul.f32 1.0, %v4868
    %v4870 = vmul.f32 %v4849, %v4555
    %v4871 = vmul.f32 %v4830, %v4850
    %v4872 = vadd.f32 %v4870, %v4871
    %v4873 = vtanh.pop %v4872
    %v4874 = vmul.f32 %v4869, %v4873
    %4875 = vst [vmem:[%s1960] sm:$0xff] %v4874
    %v4876 = vld [vmem:[%s1964] sm:$0xff]
    %v4877 = vld [vmem:[%s1964 + $0x8] sm:$0xff]
    %v4878 = vld [vmem:[%s1964 + $0x10] sm:$0xff]
    %v4879 = vld [vmem:[%s1964 + $0x18] sm:$0xff]
    %v4880 = vpack.c.bf16 %v4874, %v4874
    %v4881 = vld [vmem:[#allocation15] sm:$0xff]
    %v4882 = vld [vmem:[#allocation15 + $0x8] sm:$0xff]
    %v4883 = vld [vmem:[#allocation15 + $0x10] sm:$0xff]
    %v4884 = vld [vmem:[#allocation15 + $0x18] sm:$0xff]
    %v4885 = vld [vmem:[#allocation15 + $0x20] sm:$0xff]
    %v4886 = vld [vmem:[#allocation15 + $0x28] sm:$0xff]
    %v4887 = vld [vmem:[#allocation15 + $0x30] sm:$0xff]
    %v4888 = vld [vmem:[#allocation15 + $0x38] sm:$0xff]
    %v4889 = vld [vmem:[#allocation15 + $0x40] sm:$0xff]
    %v4890 = vld [vmem:[#allocation15 + $0x48] sm:$0xff]
    %v4891 = vld [vmem:[#allocation15 + $0x50] sm:$0xff]
    %v4892 = vld [vmem:[#allocation15 + $0x58] sm:$0xff]
    %v4893 = vld [vmem:[#allocation15 + $0x60] sm:$0xff]
    %v4894 = vld [vmem:[#allocation15 + $0x68] sm:$0xff]
    %v4895 = vld [vmem:[#allocation15 + $0x70] sm:$0xff]
    %v4896 = vld [vmem:[#allocation15 + $0x78] sm:$0xff]
    %v4897 = vld [vmem:[#allocation15 + $0x80] sm:$0xff]
    %v4898 = vld [vmem:[#allocation15 + $0x88] sm:$0xff]
    %v4899 = vld [vmem:[#allocation15 + $0x90] sm:$0xff]
    %v4900 = vld [vmem:[#allocation15 + $0x98] sm:$0xff]
    %v4901 = vld [vmem:[#allocation15 + $0xa0] sm:$0xff]
    %v4902 = vld [vmem:[#allocation15 + $0xa8] sm:$0xff]
    %v4903 = vld [vmem:[#allocation15 + $0xb0] sm:$0xff]
    %v4904 = vld [vmem:[#allocation15 + $0xb8] sm:$0xff]
    %v4905 = vld [vmem:[#allocation15 + $0xc0] sm:$0xff]
    %v4906 = vld [vmem:[#allocation15 + $0xc8] sm:$0xff]
    %v4907 = vld [vmem:[#allocation15 + $0xd0] sm:$0xff]
    %v4908 = vld [vmem:[#allocation15 + $0xd8] sm:$0xff]
    %v4909 = vld [vmem:[#allocation15 + $0xe0] sm:$0xff]
    %v4910 = vld [vmem:[#allocation15 + $0xe8] sm:$0xff]
    %v4911 = vld [vmem:[#allocation15 + $0xf0] sm:$0xff]
    %v4912 = vld [vmem:[#allocation15 + $0xf8] sm:$0xff]
    %v4945 = vunpack.c.l.b16 %v4881
    %v4946 = vunpack.c.h.b16 %v4881
    %v4947 = vunpack.c.l.b16 %v4882
    %v4948 = vunpack.c.h.b16 %v4882
    %v4949 = vunpack.c.l.b16 %v4883
    %v4950 = vunpack.c.h.b16 %v4883
    %v4951 = vunpack.c.l.b16 %v4884
    %v4952 = vunpack.c.h.b16 %v4884
    %v4953 = vunpack.c.l.b16 %v4885
    %v4954 = vunpack.c.h.b16 %v4885
    %v4955 = vunpack.c.l.b16 %v4886
    %v4956 = vunpack.c.h.b16 %v4886
    %v4957 = vunpack.c.l.b16 %v4887
    %v4958 = vunpack.c.h.b16 %v4887
    %v4959 = vunpack.c.l.b16 %v4888
    %v4960 = vunpack.c.h.b16 %v4888
    %v4961 = vunpack.c.l.b16 %v4889
    %v4962 = vunpack.c.h.b16 %v4889
    %v4963 = vunpack.c.l.b16 %v4890
    %v4964 = vunpack.c.h.b16 %v4890
    %v4965 = vunpack.c.l.b16 %v4891
    %v4966 = vunpack.c.h.b16 %v4891
    %v4967 = vunpack.c.l.b16 %v4892
    %v4968 = vunpack.c.h.b16 %v4892
    %v4969 = vunpack.c.l.b16 %v4893
    %v4970 = vunpack.c.h.b16 %v4893
    %v4971 = vunpack.c.l.b16 %v4894
    %v4972 = vunpack.c.h.b16 %v4894
    %v4973 = vunpack.c.l.b16 %v4895
    %v4974 = vunpack.c.h.b16 %v4895
    %v4975 = vunpack.c.l.b16 %v4896
    %v4976 = vunpack.c.h.b16 %v4896
    %v4977 = vunpack.c.l.b16 %v4897
    %v4978 = vunpack.c.h.b16 %v4897
    %v4979 = vunpack.c.l.b16 %v4898
    %v4980 = vunpack.c.h.b16 %v4898
    %v4981 = vunpack.c.l.b16 %v4899
    %v4982 = vunpack.c.h.b16 %v4899
    %v4983 = vunpack.c.l.b16 %v4900
    %v4984 = vunpack.c.h.b16 %v4900
    %v4985 = vunpack.c.l.b16 %v4901
    %v4986 = vunpack.c.h.b16 %v4901
    %v4987 = vunpack.c.l.b16 %v4902
    %v4988 = vunpack.c.h.b16 %v4902
    %v4989 = vunpack.c.l.b16 %v4903
    %v4990 = vunpack.c.h.b16 %v4903
    %v4991 = vunpack.c.l.b16 %v4904
    %v4992 = vunpack.c.h.b16 %v4904
    %v4993 = vunpack.c.l.b16 %v4905
    %v4994 = vunpack.c.h.b16 %v4905
    %v4995 = vunpack.c.l.b16 %v4906
    %v4996 = vunpack.c.h.b16 %v4906
    %v4997 = vunpack.c.l.b16 %v4907
    %v4998 = vunpack.c.h.b16 %v4907
    %v4999 = vunpack.c.l.b16 %v4908
    %v5000 = vunpack.c.h.b16 %v4908
    %v5001 = vunpack.c.l.b16 %v4909
    %v5002 = vunpack.c.h.b16 %v4909
    %v5003 = vunpack.c.l.b16 %v4910
    %v5004 = vunpack.c.h.b16 %v4910
    %v5005 = vunpack.c.l.b16 %v4911
    %v5006 = vunpack.c.h.b16 %v4911
    %v5007 = vunpack.c.l.b16 %v4912
    %v5008 = vunpack.c.h.b16 %v4912
    %v5009 = vpack.c.b16 %v4949, %v4945
    %v5010 = vpack.c.b16 %v4950, %v4946
    %v5011 = vpack.c.b16 %v4951, %v4947
    %v5012 = vpack.c.b16 %v4952, %v4948
    %v5013 = vpack.c.b16 %v4957, %v4953
    %v5014 = vpack.c.b16 %v4958, %v4954
    %v5015 = vpack.c.b16 %v4959, %v4955
    %v5016 = vpack.c.b16 %v4960, %v4956
    %v5017 = vpack.c.b16 %v4965, %v4961
    %v5018 = vpack.c.b16 %v4966, %v4962
    %v5019 = vpack.c.b16 %v4967, %v4963
    %v5020 = vpack.c.b16 %v4968, %v4964
    %v5021 = vpack.c.b16 %v4973, %v4969
    %v5022 = vpack.c.b16 %v4974, %v4970
    %v5023 = vpack.c.b16 %v4975, %v4971
    %v5024 = vpack.c.b16 %v4976, %v4972
    %v5025 = vpack.c.b16 %v4981, %v4977
    %v5026 = vpack.c.b16 %v4982, %v4978
    %v5027 = vpack.c.b16 %v4983, %v4979
    %v5028 = vpack.c.b16 %v4984, %v4980
    %v5029 = vpack.c.b16 %v4989, %v4985
    %v5030 = vpack.c.b16 %v4990, %v4986
    %v5031 = vpack.c.b16 %v4991, %v4987
    %v5032 = vpack.c.b16 %v4992, %v4988
    %v5033 = vpack.c.b16 %v4997, %v4993
    %v5034 = vpack.c.b16 %v4998, %v4994
    %v5035 = vpack.c.b16 %v4999, %v4995
    %v5036 = vpack.c.b16 %v5000, %v4996
    %v5037 = vpack.c.b16 %v5005, %v5001
    %v5038 = vpack.c.b16 %v5006, %v5002
    %v5039 = vpack.c.b16 %v5007, %v5003
    %v5040 = vpack.c.b16 %v5008, %v5004
    %5073 = vmatpush.bf16.msra.mxu0 %v5037
    %5074 = vmatpush.bf16.msra.mxu0 %v5033
    %5075 = vmatpush.bf16.msra.mxu0 %v5029
    %5076 = vmatpush.bf16.msra.mxu0 %v5025
    %5077 = vmatpush.bf16.msra.mxu0 %v5021
    %5078 = vmatpush.bf16.msra.mxu0 %v5017
    %5079 = vmatpush.bf16.msra.mxu0 %v5013
    %5080 = vmatpush.bf16.msra.mxu0 %v5009
    %5081 = vmatmul.bf16.gmra.mxu0 %v4880
    %v5082 = vpop.f32.mrf.mxu0
    %v5083 = vadd.f32 0.0, %v5082
    %v5084 = vpop.f32.mrf.mxu0
    %5085 = vdwg.mxu0
    %5086 = vmatpush.bf16.msra.mxu0 %v5038
    %5087 = vmatpush.bf16.msra.mxu0 %v5034
    %5088 = vmatpush.bf16.msra.mxu0 %v5030
    %5089 = vmatpush.bf16.msra.mxu0 %v5026
    %5090 = vmatpush.bf16.msra.mxu0 %v5022
    %5091 = vmatpush.bf16.msra.mxu0 %v5018
    %5092 = vmatpush.bf16.msra.mxu0 %v5014
    %5093 = vmatpush.bf16.msra.mxu0 %v5010
    %5094 = vmatmul.bf16.gmra.mxu0 %v4880
    %v5095 = vpop.f32.mrf.mxu0
    %v5096 = vadd.f32 0.0, %v5095
    %v5097 = vpop.f32.mrf.mxu0
    %5098 = vdwg.mxu0
    %5099 = vmatpush.bf16.msra.mxu0 %v5039
    %5100 = vmatpush.bf16.msra.mxu0 %v5035
    %5101 = vmatpush.bf16.msra.mxu0 %v5031
    %5102 = vmatpush.bf16.msra.mxu0 %v5027
    %5103 = vmatpush.bf16.msra.mxu0 %v5023
    %5104 = vmatpush.bf16.msra.mxu0 %v5019
    %5105 = vmatpush.bf16.msra.mxu0 %v5015
    %5106 = vmatpush.bf16.msra.mxu0 %v5011
    %5107 = vmatmul.bf16.gmra.mxu0 %v4880
    %v5108 = vpop.f32.mrf.mxu0
    %v5109 = vadd.f32 0.0, %v5108
    %v5110 = vpop.f32.mrf.mxu0
    %5111 = vdwg.mxu0
    %5112 = vmatpush.bf16.msra.mxu0 %v5040
    %5113 = vmatpush.bf16.msra.mxu0 %v5036
    %5114 = vmatpush.bf16.msra.mxu0 %v5032
    %5115 = vmatpush.bf16.msra.mxu0 %v5028
    %5116 = vmatpush.bf16.msra.mxu0 %v5024
    %5117 = vmatpush.bf16.msra.mxu0 %v5020
    %5118 = vmatpush.bf16.msra.mxu0 %v5016
    %5119 = vmatpush.bf16.msra.mxu0 %v5012
    %5120 = vmatmul.bf16.gmra.mxu0 %v4880
    %v5121 = vpop.f32.mrf.mxu0
    %v5122 = vadd.f32 0.0, %v5121
    %v5123 = vpop.f32.mrf.mxu0
    %5124 = vdwg.mxu0
    %v5125 = vadd.f32 %v4876, %v5083
    %v5126 = vadd.f32 %v4877, %v5096
    %v5127 = vadd.f32 %v4878, %v5109
    %v5128 = vadd.f32 %v4879, %v5122
    %v5129 = vxor.u32 %v5125, 2147483648
    %v5130 = vmul.f32 %v5129, 1.442695
    %v5131 = vpow.pop %v5130
    %v5132 = vadd.f32 %v5131, 1.0
    %v5133 = vrcp.pop %v5132
    %v5134 = vmul.f32 %v5132, %v5133
    %v5135 = vsub.f32 1.0, %v5134
    %v5136 = vmul.f32 %v5133, %v5135
    %v5137 = vadd.f32 %v5133, %v5136
    %vm5138 = vweird.f32 %v5132
    %vm5139 = vweird.f32 %v5133
    %vm5140 = vmor %vm5138, %vm5139
    %v5141 = vsel %vm5140, %v5133, %v5137
    %v5142 = vand.u32 2147483647, %v5132
    %vm5143 = vcmp.eq.f32.partialorder %v5142, 8.507059e+37
    %v5144 = vand.u32 %v5132, 2147483648
    %v5145 = vor.u32 1.1754944e-38, %v5144
    %v5146 = vsel %vm5143, %v5145, %v5141
    %v5147 = vmul.f32 1.0, %v5146
    %v5148 = vxor.u32 %v5126, 2147483648
    %v5149 = vmul.f32 %v5148, 1.442695
    %v5150 = vpow.pop %v5149
    %v5151 = vadd.f32 %v5150, 1.0
    %v5152 = vrcp.pop %v5151
    %v5153 = vmul.f32 %v5151, %v5152
    %v5154 = vsub.f32 1.0, %v5153
    %v5155 = vmul.f32 %v5152, %v5154
    %v5156 = vadd.f32 %v5152, %v5155
    %vm5157 = vweird.f32 %v5151
    %vm5158 = vweird.f32 %v5152
    %vm5159 = vmor %vm5157, %vm5158
    %v5160 = vsel %vm5159, %v5152, %v5156
    %v5161 = vand.u32 2147483647, %v5151
    %vm5162 = vcmp.eq.f32.partialorder %v5161, 8.507059e+37
    %v5163 = vand.u32 %v5151, 2147483648
    %v5164 = vor.u32 1.1754944e-38, %v5163
    %v5165 = vsel %vm5162, %v5164, %v5160
    %v5166 = vmul.f32 1.0, %v5165
    %v5167 = vtanh.pop %v5127
    %v5168 = vxor.u32 %v5128, 2147483648
    %v5169 = vmul.f32 %v5168, 1.442695
    %v5170 = vpow.pop %v5169
    %v5171 = vadd.f32 %v5170, 1.0
    %v5172 = vrcp.pop %v5171
    %v5173 = vmul.f32 %v5171, %v5172
    %v5174 = vsub.f32 1.0, %v5173
    %v5175 = vmul.f32 %v5172, %v5174
    %v5176 = vadd.f32 %v5172, %v5175
    %vm5177 = vweird.f32 %v5171
    %vm5178 = vweird.f32 %v5172
    %vm5179 = vmor %vm5177, %vm5178
    %v5180 = vsel %vm5179, %v5172, %v5176
    %v5181 = vand.u32 2147483647, %v5171
    %vm5182 = vcmp.eq.f32.partialorder %v5181, 8.507059e+37
    %v5183 = vand.u32 %v5171, 2147483648
    %v5184 = vor.u32 1.1754944e-38, %v5183
    %v5185 = vsel %vm5182, %v5184, %v5180
    %v5186 = vmul.f32 1.0, %v5185
    %v5187 = vmul.f32 %v5166, %v4872
    %v5188 = vmul.f32 %v5147, %v5167
    %v5189 = vadd.f32 %v5187, %v5188
    %v5190 = vtanh.pop %v5189
    %v5191 = vmul.f32 %v5186, %v5190
    %5192 = vst [vmem:[%s2281] sm:$0xff] %v5191
    %v5193 = vld [vmem:[%s2285] sm:$0xff]
    %v5194 = vld [vmem:[%s2285 + $0x8] sm:$0xff]
    %v5195 = vld [vmem:[%s2285 + $0x10] sm:$0xff]
    %v5196 = vld [vmem:[%s2285 + $0x18] sm:$0xff]
    %v5197 = vpack.c.bf16 %v5191, %v5191
    %v5198 = vld [vmem:[#allocation15] sm:$0xff]
    %v5199 = vld [vmem:[#allocation15 + $0x8] sm:$0xff]
    %v5200 = vld [vmem:[#allocation15 + $0x10] sm:$0xff]
    %v5201 = vld [vmem:[#allocation15 + $0x18] sm:$0xff]
    %v5202 = vld [vmem:[#allocation15 + $0x20] sm:$0xff]
    %v5203 = vld [vmem:[#allocation15 + $0x28] sm:$0xff]
    %v5204 = vld [vmem:[#allocation15 + $0x30] sm:$0xff]
    %v5205 = vld [vmem:[#allocation15 + $0x38] sm:$0xff]
    %v5206 = vld [vmem:[#allocation15 + $0x40] sm:$0xff]
    %v5207 = vld [vmem:[#allocation15 + $0x48] sm:$0xff]
    %v5208 = vld [vmem:[#allocation15 + $0x50] sm:$0xff]
    %v5209 = vld [vmem:[#allocation15 + $0x58] sm:$0xff]
    %v5210 = vld [vmem:[#allocation15 + $0x60] sm:$0xff]
    %v5211 = vld [vmem:[#allocation15 + $0x68] sm:$0xff]
    %v5212 = vld [vmem:[#allocation15 + $0x70] sm:$0xff]
    %v5213 = vld [vmem:[#allocation15 + $0x78] sm:$0xff]
    %v5214 = vld [vmem:[#allocation15 + $0x80] sm:$0xff]
    %v5215 = vld [vmem:[#allocation15 + $0x88] sm:$0xff]
    %v5216 = vld [vmem:[#allocation15 + $0x90] sm:$0xff]
    %v5217 = vld [vmem:[#allocation15 + $0x98] sm:$0xff]
    %v5218 = vld [vmem:[#allocation15 + $0xa0] sm:$0xff]
    %v5219 = vld [vmem:[#allocation15 + $0xa8] sm:$0xff]
    %v5220 = vld [vmem:[#allocation15 + $0xb0] sm:$0xff]
    %v5221 = vld [vmem:[#allocation15 + $0xb8] sm:$0xff]
    %v5222 = vld [vmem:[#allocation15 + $0xc0] sm:$0xff]
    %v5223 = vld [vmem:[#allocation15 + $0xc8] sm:$0xff]
    %v5224 = vld [vmem:[#allocation15 + $0xd0] sm:$0xff]
    %v5225 = vld [vmem:[#allocation15 + $0xd8] sm:$0xff]
    %v5226 = vld [vmem:[#allocation15 + $0xe0] sm:$0xff]
    %v5227 = vld [vmem:[#allocation15 + $0xe8] sm:$0xff]
    %v5228 = vld [vmem:[#allocation15 + $0xf0] sm:$0xff]
    %v5229 = vld [vmem:[#allocation15 + $0xf8] sm:$0xff]
    %v5262 = vunpack.c.l.b16 %v5198
    %v5263 = vunpack.c.h.b16 %v5198
    %v5264 = vunpack.c.l.b16 %v5199
    %v5265 = vunpack.c.h.b16 %v5199
    %v5266 = vunpack.c.l.b16 %v5200
    %v5267 = vunpack.c.h.b16 %v5200
    %v5268 = vunpack.c.l.b16 %v5201
    %v5269 = vunpack.c.h.b16 %v5201
    %v5270 = vunpack.c.l.b16 %v5202
    %v5271 = vunpack.c.h.b16 %v5202
    %v5272 = vunpack.c.l.b16 %v5203
    %v5273 = vunpack.c.h.b16 %v5203
    %v5274 = vunpack.c.l.b16 %v5204
    %v5275 = vunpack.c.h.b16 %v5204
    %v5276 = vunpack.c.l.b16 %v5205
    %v5277 = vunpack.c.h.b16 %v5205
    %v5278 = vunpack.c.l.b16 %v5206
    %v5279 = vunpack.c.h.b16 %v5206
    %v5280 = vunpack.c.l.b16 %v5207
    %v5281 = vunpack.c.h.b16 %v5207
    %v5282 = vunpack.c.l.b16 %v5208
    %v5283 = vunpack.c.h.b16 %v5208
    %v5284 = vunpack.c.l.b16 %v5209
    %v5285 = vunpack.c.h.b16 %v5209
    %v5286 = vunpack.c.l.b16 %v5210
    %v5287 = vunpack.c.h.b16 %v5210
    %v5288 = vunpack.c.l.b16 %v5211
    %v5289 = vunpack.c.h.b16 %v5211
    %v5290 = vunpack.c.l.b16 %v5212
    %v5291 = vunpack.c.h.b16 %v5212
    %v5292 = vunpack.c.l.b16 %v5213
    %v5293 = vunpack.c.h.b16 %v5213
    %v5294 = vunpack.c.l.b16 %v5214
    %v5295 = vunpack.c.h.b16 %v5214
    %v5296 = vunpack.c.l.b16 %v5215
    %v5297 = vunpack.c.h.b16 %v5215
    %v5298 = vunpack.c.l.b16 %v5216
    %v5299 = vunpack.c.h.b16 %v5216
    %v5300 = vunpack.c.l.b16 %v5217
    %v5301 = vunpack.c.h.b16 %v5217
    %v5302 = vunpack.c.l.b16 %v5218
    %v5303 = vunpack.c.h.b16 %v5218
    %v5304 = vunpack.c.l.b16 %v5219
    %v5305 = vunpack.c.h.b16 %v5219
    %v5306 = vunpack.c.l.b16 %v5220
    %v5307 = vunpack.c.h.b16 %v5220
    %v5308 = vunpack.c.l.b16 %v5221
    %v5309 = vunpack.c.h.b16 %v5221
    %v5310 = vunpack.c.l.b16 %v5222
    %v5311 = vunpack.c.h.b16 %v5222
    %v5312 = vunpack.c.l.b16 %v5223
    %v5313 = vunpack.c.h.b16 %v5223
    %v5314 = vunpack.c.l.b16 %v5224
    %v5315 = vunpack.c.h.b16 %v5224
    %v5316 = vunpack.c.l.b16 %v5225
    %v5317 = vunpack.c.h.b16 %v5225
    %v5318 = vunpack.c.l.b16 %v5226
    %v5319 = vunpack.c.h.b16 %v5226
    %v5320 = vunpack.c.l.b16 %v5227
    %v5321 = vunpack.c.h.b16 %v5227
    %v5322 = vunpack.c.l.b16 %v5228
    %v5323 = vunpack.c.h.b16 %v5228
    %v5324 = vunpack.c.l.b16 %v5229
    %v5325 = vunpack.c.h.b16 %v5229
    %v5326 = vpack.c.b16 %v5266, %v5262
    %v5327 = vpack.c.b16 %v5267, %v5263
    %v5328 = vpack.c.b16 %v5268, %v5264
    %v5329 = vpack.c.b16 %v5269, %v5265
    %v5330 = vpack.c.b16 %v5274, %v5270
    %v5331 = vpack.c.b16 %v5275, %v5271
    %v5332 = vpack.c.b16 %v5276, %v5272
    %v5333 = vpack.c.b16 %v5277, %v5273
    %v5334 = vpack.c.b16 %v5282, %v5278
    %v5335 = vpack.c.b16 %v5283, %v5279
    %v5336 = vpack.c.b16 %v5284, %v5280
    %v5337 = vpack.c.b16 %v5285, %v5281
    %v5338 = vpack.c.b16 %v5290, %v5286
    %v5339 = vpack.c.b16 %v5291, %v5287
    %v5340 = vpack.c.b16 %v5292, %v5288
    %v5341 = vpack.c.b16 %v5293, %v5289
    %v5342 = vpack.c.b16 %v5298, %v5294
    %v5343 = vpack.c.b16 %v5299, %v5295
    %v5344 = vpack.c.b16 %v5300, %v5296
    %v5345 = vpack.c.b16 %v5301, %v5297
    %v5346 = vpack.c.b16 %v5306, %v5302
    %v5347 = vpack.c.b16 %v5307, %v5303
    %v5348 = vpack.c.b16 %v5308, %v5304
    %v5349 = vpack.c.b16 %v5309, %v5305
    %v5350 = vpack.c.b16 %v5314, %v5310
    %v5351 = vpack.c.b16 %v5315, %v5311
    %v5352 = vpack.c.b16 %v5316, %v5312
    %v5353 = vpack.c.b16 %v5317, %v5313
    %v5354 = vpack.c.b16 %v5322, %v5318
    %v5355 = vpack.c.b16 %v5323, %v5319
    %v5356 = vpack.c.b16 %v5324, %v5320
    %v5357 = vpack.c.b16 %v5325, %v5321
    %5390 = vmatpush.bf16.msra.mxu0 %v5354
    %5391 = vmatpush.bf16.msra.mxu0 %v5350
    %5392 = vmatpush.bf16.msra.mxu0 %v5346
    %5393 = vmatpush.bf16.msra.mxu0 %v5342
    %5394 = vmatpush.bf16.msra.mxu0 %v5338
    %5395 = vmatpush.bf16.msra.mxu0 %v5334
    %5396 = vmatpush.bf16.msra.mxu0 %v5330
    %5397 = vmatpush.bf16.msra.mxu0 %v5326
    %5398 = vmatmul.bf16.gmra.mxu0 %v5197
    %v5399 = vpop.f32.mrf.mxu0
    %v5400 = vadd.f32 0.0, %v5399
    %v5401 = vpop.f32.mrf.mxu0
    %5402 = vdwg.mxu0
    %5403 = vmatpush.bf16.msra.mxu0 %v5355
    %5404 = vmatpush.bf16.msra.mxu0 %v5351
    %5405 = vmatpush.bf16.msra.mxu0 %v5347
    %5406 = vmatpush.bf16.msra.mxu0 %v5343
    %5407 = vmatpush.bf16.msra.mxu0 %v5339
    %5408 = vmatpush.bf16.msra.mxu0 %v5335
    %5409 = vmatpush.bf16.msra.mxu0 %v5331
    %5410 = vmatpush.bf16.msra.mxu0 %v5327
    %5411 = vmatmul.bf16.gmra.mxu0 %v5197
    %v5412 = vpop.f32.mrf.mxu0
    %v5413 = vadd.f32 0.0, %v5412
    %v5414 = vpop.f32.mrf.mxu0
    %5415 = vdwg.mxu0
    %5416 = vmatpush.bf16.msra.mxu0 %v5356
    %5417 = vmatpush.bf16.msra.mxu0 %v5352
    %5418 = vmatpush.bf16.msra.mxu0 %v5348
    %5419 = vmatpush.bf16.msra.mxu0 %v5344
    %5420 = vmatpush.bf16.msra.mxu0 %v5340
    %5421 = vmatpush.bf16.msra.mxu0 %v5336
    %5422 = vmatpush.bf16.msra.mxu0 %v5332
    %5423 = vmatpush.bf16.msra.mxu0 %v5328
    %5424 = vmatmul.bf16.gmra.mxu0 %v5197
    %v5425 = vpop.f32.mrf.mxu0
    %v5426 = vadd.f32 0.0, %v5425
    %v5427 = vpop.f32.mrf.mxu0
    %5428 = vdwg.mxu0
    %5429 = vmatpush.bf16.msra.mxu0 %v5357
    %5430 = vmatpush.bf16.msra.mxu0 %v5353
    %5431 = vmatpush.bf16.msra.mxu0 %v5349
    %5432 = vmatpush.bf16.msra.mxu0 %v5345
    %5433 = vmatpush.bf16.msra.mxu0 %v5341
    %5434 = vmatpush.bf16.msra.mxu0 %v5337
    %5435 = vmatpush.bf16.msra.mxu0 %v5333
    %5436 = vmatpush.bf16.msra.mxu0 %v5329
    %5437 = vmatmul.bf16.gmra.mxu0 %v5197
    %v5438 = vpop.f32.mrf.mxu0
    %v5439 = vadd.f32 0.0, %v5438
    %v5440 = vpop.f32.mrf.mxu0
    %5441 = vdwg.mxu0
    %v5442 = vadd.f32 %v5193, %v5400
    %v5443 = vadd.f32 %v5194, %v5413
    %v5444 = vadd.f32 %v5195, %v5426
    %v5445 = vadd.f32 %v5196, %v5439
    %v5446 = vxor.u32 %v5442, 2147483648
    %v5447 = vmul.f32 %v5446, 1.442695
    %v5448 = vpow.pop %v5447
    %v5449 = vadd.f32 %v5448, 1.0
    %v5450 = vrcp.pop %v5449
    %v5451 = vmul.f32 %v5449, %v5450
    %v5452 = vsub.f32 1.0, %v5451
    %v5453 = vmul.f32 %v5450, %v5452
    %v5454 = vadd.f32 %v5450, %v5453
    %vm5455 = vweird.f32 %v5449
    %vm5456 = vweird.f32 %v5450
    %vm5457 = vmor %vm5455, %vm5456
    %v5458 = vsel %vm5457, %v5450, %v5454
    %v5459 = vand.u32 2147483647, %v5449
    %vm5460 = vcmp.eq.f32.partialorder %v5459, 8.507059e+37
    %v5461 = vand.u32 %v5449, 2147483648
    %v5462 = vor.u32 1.1754944e-38, %v5461
    %v5463 = vsel %vm5460, %v5462, %v5458
    %v5464 = vmul.f32 1.0, %v5463
    %v5465 = vxor.u32 %v5443, 2147483648
    %v5466 = vmul.f32 %v5465, 1.442695
    %v5467 = vpow.pop %v5466
    %v5468 = vadd.f32 %v5467, 1.0
    %v5469 = vrcp.pop %v5468
    %v5470 = vmul.f32 %v5468, %v5469
    %v5471 = vsub.f32 1.0, %v5470
    %v5472 = vmul.f32 %v5469, %v5471
    %v5473 = vadd.f32 %v5469, %v5472
    %vm5474 = vweird.f32 %v5468
    %vm5475 = vweird.f32 %v5469
    %vm5476 = vmor %vm5474, %vm5475
    %v5477 = vsel %vm5476, %v5469, %v5473
    %v5478 = vand.u32 2147483647, %v5468
    %vm5479 = vcmp.eq.f32.partialorder %v5478, 8.507059e+37
    %v5480 = vand.u32 %v5468, 2147483648
    %v5481 = vor.u32 1.1754944e-38, %v5480
    %v5482 = vsel %vm5479, %v5481, %v5477
    %v5483 = vmul.f32 1.0, %v5482
    %v5484 = vtanh.pop %v5444
    %v5485 = vxor.u32 %v5445, 2147483648
    %v5486 = vmul.f32 %v5485, 1.442695
    %v5487 = vpow.pop %v5486
    %v5488 = vadd.f32 %v5487, 1.0
    %v5489 = vrcp.pop %v5488
    %v5490 = vmul.f32 %v5488, %v5489
    %v5491 = vsub.f32 1.0, %v5490
    %v5492 = vmul.f32 %v5489, %v5491
    %v5493 = vadd.f32 %v5489, %v5492
    %vm5494 = vweird.f32 %v5488
    %vm5495 = vweird.f32 %v5489
    %vm5496 = vmor %vm5494, %vm5495
    %v5497 = vsel %vm5496, %v5489, %v5493
    %v5498 = vand.u32 2147483647, %v5488
    %vm5499 = vcmp.eq.f32.partialorder %v5498, 8.507059e+37
    %v5500 = vand.u32 %v5488, 2147483648
    %v5501 = vor.u32 1.1754944e-38, %v5500
    %v5502 = vsel %vm5499, %v5501, %v5497
    %v5503 = vmul.f32 1.0, %v5502
    %v5504 = vmul.f32 %v5483, %v5189
    %v5505 = vmul.f32 %v5464, %v5484
    %v5506 = vadd.f32 %v5504, %v5505
    %v5507 = vtanh.pop %v5506
    %v5508 = vmul.f32 %v5503, %v5507
    %5509 = vst [vmem:[%s2602] sm:$0xff] %v5508
    %v5510 = vld [vmem:[%s2606] sm:$0xff]
    %v5511 = vld [vmem:[%s2606 + $0x8] sm:$0xff]
    %v5512 = vld [vmem:[%s2606 + $0x10] sm:$0xff]
    %v5513 = vld [vmem:[%s2606 + $0x18] sm:$0xff]
    %v5514 = vpack.c.bf16 %v5508, %v5508
    %v5515 = vld [vmem:[#allocation15] sm:$0xff]
    %v5516 = vld [vmem:[#allocation15 + $0x8] sm:$0xff]
    %v5517 = vld [vmem:[#allocation15 + $0x10] sm:$0xff]
    %v5518 = vld [vmem:[#allocation15 + $0x18] sm:$0xff]
    %v5519 = vld [vmem:[#allocation15 + $0x20] sm:$0xff]
    %v5520 = vld [vmem:[#allocation15 + $0x28] sm:$0xff]
    %v5521 = vld [vmem:[#allocation15 + $0x30] sm:$0xff]
    %v5522 = vld [vmem:[#allocation15 + $0x38] sm:$0xff]
    %v5523 = vld [vmem:[#allocation15 + $0x40] sm:$0xff]
    %v5524 = vld [vmem:[#allocation15 + $0x48] sm:$0xff]
    %v5525 = vld [vmem:[#allocation15 + $0x50] sm:$0xff]
    %v5526 = vld [vmem:[#allocation15 + $0x58] sm:$0xff]
    %v5527 = vld [vmem:[#allocation15 + $0x60] sm:$0xff]
    %v5528 = vld [vmem:[#allocation15 + $0x68] sm:$0xff]
    %v5529 = vld [vmem:[#allocation15 + $0x70] sm:$0xff]
    %v5530 = vld [vmem:[#allocation15 + $0x78] sm:$0xff]
    %v5531 = vld [vmem:[#allocation15 + $0x80] sm:$0xff]
    %v5532 = vld [vmem:[#allocation15 + $0x88] sm:$0xff]
    %v5533 = vld [vmem:[#allocation15 + $0x90] sm:$0xff]
    %v5534 = vld [vmem:[#allocation15 + $0x98] sm:$0xff]
    %v5535 = vld [vmem:[#allocation15 + $0xa0] sm:$0xff]
    %v5536 = vld [vmem:[#allocation15 + $0xa8] sm:$0xff]
    %v5537 = vld [vmem:[#allocation15 + $0xb0] sm:$0xff]
    %v5538 = vld [vmem:[#allocation15 + $0xb8] sm:$0xff]
    %v5539 = vld [vmem:[#allocation15 + $0xc0] sm:$0xff]
    %v5540 = vld [vmem:[#allocation15 + $0xc8] sm:$0xff]
    %v5541 = vld [vmem:[#allocation15 + $0xd0] sm:$0xff]
    %v5542 = vld [vmem:[#allocation15 + $0xd8] sm:$0xff]
    %v5543 = vld [vmem:[#allocation15 + $0xe0] sm:$0xff]
    %v5544 = vld [vmem:[#allocation15 + $0xe8] sm:$0xff]
    %v5545 = vld [vmem:[#allocation15 + $0xf0] sm:$0xff]
    %v5546 = vld [vmem:[#allocation15 + $0xf8] sm:$0xff]
    %v5579 = vunpack.c.l.b16 %v5515
    %v5580 = vunpack.c.h.b16 %v5515
    %v5581 = vunpack.c.l.b16 %v5516
    %v5582 = vunpack.c.h.b16 %v5516
    %v5583 = vunpack.c.l.b16 %v5517
    %v5584 = vunpack.c.h.b16 %v5517
    %v5585 = vunpack.c.l.b16 %v5518
    %v5586 = vunpack.c.h.b16 %v5518
    %v5587 = vunpack.c.l.b16 %v5519
    %v5588 = vunpack.c.h.b16 %v5519
    %v5589 = vunpack.c.l.b16 %v5520
    %v5590 = vunpack.c.h.b16 %v5520
    %v5591 = vunpack.c.l.b16 %v5521
    %v5592 = vunpack.c.h.b16 %v5521
    %v5593 = vunpack.c.l.b16 %v5522
    %v5594 = vunpack.c.h.b16 %v5522
    %v5595 = vunpack.c.l.b16 %v5523
    %v5596 = vunpack.c.h.b16 %v5523
    %v5597 = vunpack.c.l.b16 %v5524
    %v5598 = vunpack.c.h.b16 %v5524
    %v5599 = vunpack.c.l.b16 %v5525
    %v5600 = vunpack.c.h.b16 %v5525
    %v5601 = vunpack.c.l.b16 %v5526
    %v5602 = vunpack.c.h.b16 %v5526
    %v5603 = vunpack.c.l.b16 %v5527
    %v5604 = vunpack.c.h.b16 %v5527
    %v5605 = vunpack.c.l.b16 %v5528
    %v5606 = vunpack.c.h.b16 %v5528
    %v5607 = vunpack.c.l.b16 %v5529
    %v5608 = vunpack.c.h.b16 %v5529
    %v5609 = vunpack.c.l.b16 %v5530
    %v5610 = vunpack.c.h.b16 %v5530
    %v5611 = vunpack.c.l.b16 %v5531
    %v5612 = vunpack.c.h.b16 %v5531
    %v5613 = vunpack.c.l.b16 %v5532
    %v5614 = vunpack.c.h.b16 %v5532
    %v5615 = vunpack.c.l.b16 %v5533
    %v5616 = vunpack.c.h.b16 %v5533
    %v5617 = vunpack.c.l.b16 %v5534
    %v5618 = vunpack.c.h.b16 %v5534
    %v5619 = vunpack.c.l.b16 %v5535
    %v5620 = vunpack.c.h.b16 %v5535
    %v5621 = vunpack.c.l.b16 %v5536
    %v5622 = vunpack.c.h.b16 %v5536
    %v5623 = vunpack.c.l.b16 %v5537
    %v5624 = vunpack.c.h.b16 %v5537
    %v5625 = vunpack.c.l.b16 %v5538
    %v5626 = vunpack.c.h.b16 %v5538
    %v5627 = vunpack.c.l.b16 %v5539
    %v5628 = vunpack.c.h.b16 %v5539
    %v5629 = vunpack.c.l.b16 %v5540
    %v5630 = vunpack.c.h.b16 %v5540
    %v5631 = vunpack.c.l.b16 %v5541
    %v5632 = vunpack.c.h.b16 %v5541
    %v5633 = vunpack.c.l.b16 %v5542
    %v5634 = vunpack.c.h.b16 %v5542
    %v5635 = vunpack.c.l.b16 %v5543
    %v5636 = vunpack.c.h.b16 %v5543
    %v5637 = vunpack.c.l.b16 %v5544
    %v5638 = vunpack.c.h.b16 %v5544
    %v5639 = vunpack.c.l.b16 %v5545
    %v5640 = vunpack.c.h.b16 %v5545
    %v5641 = vunpack.c.l.b16 %v5546
    %v5642 = vunpack.c.h.b16 %v5546
    %v5643 = vpack.c.b16 %v5583, %v5579
    %v5644 = vpack.c.b16 %v5584, %v5580
    %v5645 = vpack.c.b16 %v5585, %v5581
    %v5646 = vpack.c.b16 %v5586, %v5582
    %v5647 = vpack.c.b16 %v5591, %v5587
    %v5648 = vpack.c.b16 %v5592, %v5588
    %v5649 = vpack.c.b16 %v5593, %v5589
    %v5650 = vpack.c.b16 %v5594, %v5590
    %v5651 = vpack.c.b16 %v5599, %v5595
    %v5652 = vpack.c.b16 %v5600, %v5596
    %v5653 = vpack.c.b16 %v5601, %v5597
    %v5654 = vpack.c.b16 %v5602, %v5598
    %v5655 = vpack.c.b16 %v5607, %v5603
    %v5656 = vpack.c.b16 %v5608, %v5604
    %v5657 = vpack.c.b16 %v5609, %v5605
    %v5658 = vpack.c.b16 %v5610, %v5606
    %v5659 = vpack.c.b16 %v5615, %v5611
    %v5660 = vpack.c.b16 %v5616, %v5612
    %v5661 = vpack.c.b16 %v5617, %v5613
    %v5662 = vpack.c.b16 %v5618, %v5614
    %v5663 = vpack.c.b16 %v5623, %v5619
    %v5664 = vpack.c.b16 %v5624, %v5620
    %v5665 = vpack.c.b16 %v5625, %v5621
    %v5666 = vpack.c.b16 %v5626, %v5622
    %v5667 = vpack.c.b16 %v5631, %v5627
    %v5668 = vpack.c.b16 %v5632, %v5628
    %v5669 = vpack.c.b16 %v5633, %v5629
    %v5670 = vpack.c.b16 %v5634, %v5630
    %v5671 = vpack.c.b16 %v5639, %v5635
    %v5672 = vpack.c.b16 %v5640, %v5636
    %v5673 = vpack.c.b16 %v5641, %v5637
    %v5674 = vpack.c.b16 %v5642, %v5638
    %5707 = vmatpush.bf16.msra.mxu0 %v5671
    %5708 = vmatpush.bf16.msra.mxu0 %v5667
    %5709 = vmatpush.bf16.msra.mxu0 %v5663
    %5710 = vmatpush.bf16.msra.mxu0 %v5659
    %5711 = vmatpush.bf16.msra.mxu0 %v5655
    %5712 = vmatpush.bf16.msra.mxu0 %v5651
    %5713 = vmatpush.bf16.msra.mxu0 %v5647
    %5714 = vmatpush.bf16.msra.mxu0 %v5643
    %5715 = vmatmul.bf16.gmra.mxu0 %v5514
    %v5716 = vpop.f32.mrf.mxu0
    %v5717 = vadd.f32 0.0, %v5716
    %v5718 = vpop.f32.mrf.mxu0
    %5719 = vdwg.mxu0
    %5720 = vmatpush.bf16.msra.mxu0 %v5672
    %5721 = vmatpush.bf16.msra.mxu0 %v5668
    %5722 = vmatpush.bf16.msra.mxu0 %v5664
    %5723 = vmatpush.bf16.msra.mxu0 %v5660
    %5724 = vmatpush.bf16.msra.mxu0 %v5656
    %5725 = vmatpush.bf16.msra.mxu0 %v5652
    %5726 = vmatpush.bf16.msra.mxu0 %v5648
    %5727 = vmatpush.bf16.msra.mxu0 %v5644
    %5728 = vmatmul.bf16.gmra.mxu0 %v5514
    %v5729 = vpop.f32.mrf.mxu0
    %v5730 = vadd.f32 0.0, %v5729
    %v5731 = vpop.f32.mrf.mxu0
    %5732 = vdwg.mxu0
    %5733 = vmatpush.bf16.msra.mxu0 %v5673
    %5734 = vmatpush.bf16.msra.mxu0 %v5669
    %5735 = vmatpush.bf16.msra.mxu0 %v5665
    %5736 = vmatpush.bf16.msra.mxu0 %v5661
    %5737 = vmatpush.bf16.msra.mxu0 %v5657
    %5738 = vmatpush.bf16.msra.mxu0 %v5653
    %5739 = vmatpush.bf16.msra.mxu0 %v5649
    %5740 = vmatpush.bf16.msra.mxu0 %v5645
    %5741 = vmatmul.bf16.gmra.mxu0 %v5514
    %v5742 = vpop.f32.mrf.mxu0
    %v5743 = vadd.f32 0.0, %v5742
    %v5744 = vpop.f32.mrf.mxu0
    %5745 = vdwg.mxu0
    %5746 = vmatpush.bf16.msra.mxu0 %v5674
    %5747 = vmatpush.bf16.msra.mxu0 %v5670
    %5748 = vmatpush.bf16.msra.mxu0 %v5666
    %5749 = vmatpush.bf16.msra.mxu0 %v5662
    %5750 = vmatpush.bf16.msra.mxu0 %v5658
    %5751 = vmatpush.bf16.msra.mxu0 %v5654
    %5752 = vmatpush.bf16.msra.mxu0 %v5650
    %5753 = vmatpush.bf16.msra.mxu0 %v5646
    %5754 = vmatmul.bf16.gmra.mxu0 %v5514
    %v5755 = vpop.f32.mrf.mxu0
    %v5756 = vadd.f32 0.0, %v5755
    %v5757 = vpop.f32.mrf.mxu0
    %5758 = vdwg.mxu0
    %v5759 = vadd.f32 %v5510, %v5717
    %v5760 = vadd.f32 %v5511, %v5730
    %v5761 = vadd.f32 %v5512, %v5743
    %v5762 = vadd.f32 %v5513, %v5756
    %v5763 = vxor.u32 %v5759, 2147483648
    %v5764 = vmul.f32 %v5763, 1.442695
    %v5765 = vpow.pop %v5764
    %v5766 = vadd.f32 %v5765, 1.0
    %v5767 = vrcp.pop %v5766
    %v5768 = vmul.f32 %v5766, %v5767
    %v5769 = vsub.f32 1.0, %v5768
    %v5770 = vmul.f32 %v5767, %v5769
    %v5771 = vadd.f32 %v5767, %v5770
    %vm5772 = vweird.f32 %v5766
    %vm5773 = vweird.f32 %v5767
    %vm5774 = vmor %vm5772, %vm5773
    %v5775 = vsel %vm5774, %v5767, %v5771
    %v5776 = vand.u32 2147483647, %v5766
    %vm5777 = vcmp.eq.f32.partialorder %v5776, 8.507059e+37
    %v5778 = vand.u32 %v5766, 2147483648
    %v5779 = vor.u32 1.1754944e-38, %v5778
    %v5780 = vsel %vm5777, %v5779, %v5775
    %v5781 = vmul.f32 1.0, %v5780
    %v5782 = vxor.u32 %v5760, 2147483648
    %v5783 = vmul.f32 %v5782, 1.442695
    %v5784 = vpow.pop %v5783
    %v5785 = vadd.f32 %v5784, 1.0
    %v5786 = vrcp.pop %v5785
    %v5787 = vmul.f32 %v5785, %v5786
    %v5788 = vsub.f32 1.0, %v5787
    %v5789 = vmul.f32 %v5786, %v5788
    %v5790 = vadd.f32 %v5786, %v5789
    %vm5791 = vweird.f32 %v5785
    %vm5792 = vweird.f32 %v5786
    %vm5793 = vmor %vm5791, %vm5792
    %v5794 = vsel %vm5793, %v5786, %v5790
    %v5795 = vand.u32 2147483647, %v5785
    %vm5796 = vcmp.eq.f32.partialorder %v5795, 8.507059e+37
    %v5797 = vand.u32 %v5785, 2147483648
    %v5798 = vor.u32 1.1754944e-38, %v5797
    %v5799 = vsel %vm5796, %v5798, %v5794
    %v5800 = vmul.f32 1.0, %v5799
    %v5801 = vtanh.pop %v5761
    %v5802 = vxor.u32 %v5762, 2147483648
    %v5803 = vmul.f32 %v5802, 1.442695
    %v5804 = vpow.pop %v5803
    %v5805 = vadd.f32 %v5804, 1.0
    %v5806 = vrcp.pop %v5805
    %v5807 = vmul.f32 %v5805, %v5806
    %v5808 = vsub.f32 1.0, %v5807
    %v5809 = vmul.f32 %v5806, %v5808
    %v5810 = vadd.f32 %v5806, %v5809
    %vm5811 = vweird.f32 %v5805
    %vm5812 = vweird.f32 %v5806
    %vm5813 = vmor %vm5811, %vm5812
    %v5814 = vsel %vm5813, %v5806, %v5810
    %v5815 = vand.u32 2147483647, %v5805
    %vm5816 = vcmp.eq.f32.partialorder %v5815, 8.507059e+37
    %v5817 = vand.u32 %v5805, 2147483648
    %v5818 = vor.u32 1.1754944e-38, %v5817
    %v5819 = vsel %vm5816, %v5818, %v5814
    %v5820 = vmul.f32 1.0, %v5819
    %v5821 = vmul.f32 %v5800, %v5506
    %v5822 = vmul.f32 %v5781, %v5801
    %v5823 = vadd.f32 %v5821, %v5822
    %v5824 = vtanh.pop %v5823
    %v5825 = vmul.f32 %v5820, %v5824
    %5826 = vst [vmem:[%s2923] sm:$0xff] %v5825
    %5827 = vst [vmem:[#allocation6] sm:$0xff] %v5825
    %5828 = vst [vmem:[#allocation7] sm:$0xff] %v5823
    %v5829 = vld [vmem:[#allocation3] sm:$0xff]
    %v5830 = vld [vmem:[#allocation3 + $0x8] sm:$0xff]
    %v5831 = vld [vmem:[#allocation3 + $0x10] sm:$0xff]
    %v5832 = vld [vmem:[#allocation3 + $0x18] sm:$0xff]
    %v5833 = vld [vmem:[#allocation3 + $0x20] sm:$0xff]
    %v5834 = vld [vmem:[#allocation3 + $0x28] sm:$0xff]
    %v5835 = vld [vmem:[#allocation3 + $0x30] sm:$0xff]
    %v5836 = vld [vmem:[#allocation3 + $0x38] sm:$0xff]
    %v5837 = vpack.c.bf16 %v5830, %v5829
    %v5838 = vpack.c.bf16 %v5832, %v5831
    %v5839 = vpack.c.bf16 %v5834, %v5833
    %v5840 = vpack.c.bf16 %v5836, %v5835
    %v5841 = vld [vmem:[#allocation16] sm:$0xff]
    %v5842 = vld [vmem:[#allocation16 + $0x8] sm:$0xff]
    %v5843 = vld [vmem:[#allocation16 + $0x10] sm:$0xff]
    %v5844 = vld [vmem:[#allocation16 + $0x18] sm:$0xff]
    %v5845 = vld [vmem:[#allocation16 + $0x20] sm:$0xff]
    %v5846 = vld [vmem:[#allocation16 + $0x28] sm:$0xff]
    %v5847 = vld [vmem:[#allocation16 + $0x30] sm:$0xff]
    %v5848 = vld [vmem:[#allocation16 + $0x38] sm:$0xff]
    %v5849 = vld [vmem:[#allocation16 + $0x40] sm:$0xff]
    %v5850 = vld [vmem:[#allocation16 + $0x48] sm:$0xff]
    %v5851 = vld [vmem:[#allocation16 + $0x50] sm:$0xff]
    %v5852 = vld [vmem:[#allocation16 + $0x58] sm:$0xff]
    %v5853 = vld [vmem:[#allocation16 + $0x60] sm:$0xff]
    %v5854 = vld [vmem:[#allocation16 + $0x68] sm:$0xff]
    %v5855 = vld [vmem:[#allocation16 + $0x70] sm:$0xff]
    %v5856 = vld [vmem:[#allocation16 + $0x78] sm:$0xff]
    %v5857 = vld [vmem:[#allocation16 + $0x80] sm:$0xff]
    %v5858 = vld [vmem:[#allocation16 + $0x88] sm:$0xff]
    %v5859 = vld [vmem:[#allocation16 + $0x90] sm:$0xff]
    %v5860 = vld [vmem:[#allocation16 + $0x98] sm:$0xff]
    %v5861 = vld [vmem:[#allocation16 + $0xa0] sm:$0xff]
    %v5862 = vld [vmem:[#allocation16 + $0xa8] sm:$0xff]
    %v5863 = vld [vmem:[#allocation16 + $0xb0] sm:$0xff]
    %v5864 = vld [vmem:[#allocation16 + $0xb8] sm:$0xff]
    %v5865 = vld [vmem:[#allocation16 + $0xc0] sm:$0xff]
    %v5866 = vld [vmem:[#allocation16 + $0xc8] sm:$0xff]
    %v5867 = vld [vmem:[#allocation16 + $0xd0] sm:$0xff]
    %v5868 = vld [vmem:[#allocation16 + $0xd8] sm:$0xff]
    %v5869 = vld [vmem:[#allocation16 + $0xe0] sm:$0xff]
    %v5870 = vld [vmem:[#allocation16 + $0xe8] sm:$0xff]
    %v5871 = vld [vmem:[#allocation16 + $0xf0] sm:$0xff]
    %v5872 = vld [vmem:[#allocation16 + $0xf8] sm:$0xff]
    %v5873 = vld [vmem:[%s9] sm:$0xf]
    %v5875 = vperm.slane %v5873, 0
    %v5876 = vperm.slane %v5873, 1
    %v5877 = vperm.slane %v5873, 2
    %v5878 = vperm.slane %v5873, 3
    %v5915 = vunpack.c.l.b16 %v5841
    %v5916 = vunpack.c.h.b16 %v5841
    %v5917 = vunpack.c.l.b16 %v5842
    %v5918 = vunpack.c.h.b16 %v5842
    %v5919 = vunpack.c.l.b16 %v5843
    %v5920 = vunpack.c.h.b16 %v5843
    %v5921 = vunpack.c.l.b16 %v5844
    %v5922 = vunpack.c.h.b16 %v5844
    %v5923 = vunpack.c.l.b16 %v5845
    %v5924 = vunpack.c.h.b16 %v5845
    %v5925 = vunpack.c.l.b16 %v5846
    %v5926 = vunpack.c.h.b16 %v5846
    %v5927 = vunpack.c.l.b16 %v5847
    %v5928 = vunpack.c.h.b16 %v5847
    %v5929 = vunpack.c.l.b16 %v5848
    %v5930 = vunpack.c.h.b16 %v5848
    %v5931 = vunpack.c.l.b16 %v5849
    %v5932 = vunpack.c.h.b16 %v5849
    %v5933 = vunpack.c.l.b16 %v5850
    %v5934 = vunpack.c.h.b16 %v5850
    %v5935 = vunpack.c.l.b16 %v5851
    %v5936 = vunpack.c.h.b16 %v5851
    %v5937 = vunpack.c.l.b16 %v5852
    %v5938 = vunpack.c.h.b16 %v5852
    %v5939 = vunpack.c.l.b16 %v5853
    %v5940 = vunpack.c.h.b16 %v5853
    %v5941 = vunpack.c.l.b16 %v5854
    %v5942 = vunpack.c.h.b16 %v5854
    %v5943 = vunpack.c.l.b16 %v5855
    %v5944 = vunpack.c.h.b16 %v5855
    %v5945 = vunpack.c.l.b16 %v5856
    %v5946 = vunpack.c.h.b16 %v5856
    %v5947 = vunpack.c.l.b16 %v5857
    %v5948 = vunpack.c.h.b16 %v5857
    %v5949 = vunpack.c.l.b16 %v5858
    %v5950 = vunpack.c.h.b16 %v5858
    %v5951 = vunpack.c.l.b16 %v5859
    %v5952 = vunpack.c.h.b16 %v5859
    %v5953 = vunpack.c.l.b16 %v5860
    %v5954 = vunpack.c.h.b16 %v5860
    %v5955 = vunpack.c.l.b16 %v5861
    %v5956 = vunpack.c.h.b16 %v5861
    %v5957 = vunpack.c.l.b16 %v5862
    %v5958 = vunpack.c.h.b16 %v5862
    %v5959 = vunpack.c.l.b16 %v5863
    %v5960 = vunpack.c.h.b16 %v5863
    %v5961 = vunpack.c.l.b16 %v5864
    %v5962 = vunpack.c.h.b16 %v5864
    %v5963 = vunpack.c.l.b16 %v5865
    %v5964 = vunpack.c.h.b16 %v5865
    %v5965 = vunpack.c.l.b16 %v5866
    %v5966 = vunpack.c.h.b16 %v5866
    %v5967 = vunpack.c.l.b16 %v5867
    %v5968 = vunpack.c.h.b16 %v5867
    %v5969 = vunpack.c.l.b16 %v5868
    %v5970 = vunpack.c.h.b16 %v5868
    %v5971 = vunpack.c.l.b16 %v5869
    %v5972 = vunpack.c.h.b16 %v5869
    %v5973 = vunpack.c.l.b16 %v5870
    %v5974 = vunpack.c.h.b16 %v5870
    %v5975 = vunpack.c.l.b16 %v5871
    %v5976 = vunpack.c.h.b16 %v5871
    %v5977 = vunpack.c.l.b16 %v5872
    %v5978 = vunpack.c.h.b16 %v5872
    %v5979 = vpack.c.b16 %v5919, %v5915
    %v5980 = vpack.c.b16 %v5920, %v5916
    %v5981 = vpack.c.b16 %v5921, %v5917
    %v5982 = vpack.c.b16 %v5922, %v5918
    %v5983 = vpack.c.b16 %v5927, %v5923
    %v5984 = vpack.c.b16 %v5928, %v5924
    %v5985 = vpack.c.b16 %v5929, %v5925
    %v5986 = vpack.c.b16 %v5930, %v5926
    %v5987 = vpack.c.b16 %v5935, %v5931
    %v5988 = vpack.c.b16 %v5936, %v5932
    %v5989 = vpack.c.b16 %v5937, %v5933
    %v5990 = vpack.c.b16 %v5938, %v5934
    %v5991 = vpack.c.b16 %v5943, %v5939
    %v5992 = vpack.c.b16 %v5944, %v5940
    %v5993 = vpack.c.b16 %v5945, %v5941
    %v5994 = vpack.c.b16 %v5946, %v5942
    %v5995 = vpack.c.b16 %v5951, %v5947
    %v5996 = vpack.c.b16 %v5952, %v5948
    %v5997 = vpack.c.b16 %v5953, %v5949
    %v5998 = vpack.c.b16 %v5954, %v5950
    %v5999 = vpack.c.b16 %v5959, %v5955
    %v6000 = vpack.c.b16 %v5960, %v5956
    %v6001 = vpack.c.b16 %v5961, %v5957
    %v6002 = vpack.c.b16 %v5962, %v5958
    %v6003 = vpack.c.b16 %v5967, %v5963
    %v6004 = vpack.c.b16 %v5968, %v5964
    %v6005 = vpack.c.b16 %v5969, %v5965
    %v6006 = vpack.c.b16 %v5970, %v5966
    %v6007 = vpack.c.b16 %v5975, %v5971
    %v6008 = vpack.c.b16 %v5976, %v5972
    %v6009 = vpack.c.b16 %v5977, %v5973
    %v6010 = vpack.c.b16 %v5978, %v5974
    %6043 = vmatpush.bf16.msra.mxu0 %v6007
    %6044 = vmatpush.bf16.msra.mxu0 %v6003
    %6045 = vmatpush.bf16.msra.mxu0 %v5999
    %6046 = vmatpush.bf16.msra.mxu0 %v5995
    %6047 = vmatpush.bf16.msra.mxu0 %v5991
    %6048 = vmatpush.bf16.msra.mxu0 %v5987
    %6049 = vmatpush.bf16.msra.mxu0 %v5983
    %6050 = vmatpush.bf16.msra.mxu0 %v5979
    %6051 = vmatmul.bf16.gmra.mxu0 %v5837
    %v6052 = vpop.f32.mrf.mxu0
    %v6053 = vadd.f32 %v5875, %v6052
    %v6054 = vpop.f32.mrf.mxu0
    %v6055 = vadd.f32 %v5875, %v6054
    %6056 = vmatmul.bf16.gmra.mxu0 %v5838
    %v6057 = vpop.f32.mrf.mxu0
    %v6058 = vadd.f32 %v5875, %v6057
    %v6059 = vpop.f32.mrf.mxu0
    %v6060 = vadd.f32 %v5875, %v6059
    %6061 = vmatmul.bf16.gmra.mxu0 %v5839
    %v6062 = vpop.f32.mrf.mxu0
    %v6063 = vadd.f32 %v5875, %v6062
    %v6064 = vpop.f32.mrf.mxu0
    %v6065 = vadd.f32 %v5875, %v6064
    %6066 = vmatmul.bf16.gmra.mxu0 %v5840
    %v6067 = vpop.f32.mrf.mxu0
    %v6068 = vadd.f32 %v5875, %v6067
    %v6069 = vpop.f32.mrf.mxu0
    %v6070 = vadd.f32 %v5875, %v6069
    %6071 = vdwg.mxu0
    %6072 = vmatpush.bf16.msra.mxu0 %v6008
    %6073 = vmatpush.bf16.msra.mxu0 %v6004
    %6074 = vmatpush.bf16.msra.mxu0 %v6000
    %6075 = vmatpush.bf16.msra.mxu0 %v5996
    %6076 = vmatpush.bf16.msra.mxu0 %v5992
    %6077 = vmatpush.bf16.msra.mxu0 %v5988
    %6078 = vmatpush.bf16.msra.mxu0 %v5984
    %6079 = vmatpush.bf16.msra.mxu0 %v5980
    %6080 = vmatmul.bf16.gmra.mxu0 %v5837
    %v6081 = vpop.f32.mrf.mxu0
    %v6082 = vadd.f32 %v5876, %v6081
    %v6083 = vpop.f32.mrf.mxu0
    %v6084 = vadd.f32 %v5876, %v6083
    %6085 = vmatmul.bf16.gmra.mxu0 %v5838
    %v6086 = vpop.f32.mrf.mxu0
    %v6087 = vadd.f32 %v5876, %v6086
    %v6088 = vpop.f32.mrf.mxu0
    %v6089 = vadd.f32 %v5876, %v6088
    %6090 = vmatmul.bf16.gmra.mxu0 %v5839
    %v6091 = vpop.f32.mrf.mxu0
    %v6092 = vadd.f32 %v5876, %v6091
    %v6093 = vpop.f32.mrf.mxu0
    %v6094 = vadd.f32 %v5876, %v6093
    %6095 = vmatmul.bf16.gmra.mxu0 %v5840
    %v6096 = vpop.f32.mrf.mxu0
    %v6097 = vadd.f32 %v5876, %v6096
    %v6098 = vpop.f32.mrf.mxu0
    %v6099 = vadd.f32 %v5876, %v6098
    %6100 = vdwg.mxu0
    %6101 = vmatpush.bf16.msra.mxu0 %v6009
    %6102 = vmatpush.bf16.msra.mxu0 %v6005
    %6103 = vmatpush.bf16.msra.mxu0 %v6001
    %6104 = vmatpush.bf16.msra.mxu0 %v5997
    %6105 = vmatpush.bf16.msra.mxu0 %v5993
    %6106 = vmatpush.bf16.msra.mxu0 %v5989
    %6107 = vmatpush.bf16.msra.mxu0 %v5985
    %6108 = vmatpush.bf16.msra.mxu0 %v5981
    %6109 = vmatmul.bf16.gmra.mxu0 %v5837
    %v6110 = vpop.f32.mrf.mxu0
    %v6111 = vadd.f32 %v5877, %v6110
    %v6112 = vpop.f32.mrf.mxu0
    %v6113 = vadd.f32 %v5877, %v6112
    %6114 = vmatmul.bf16.gmra.mxu0 %v5838
    %v6115 = vpop.f32.mrf.mxu0
    %v6116 = vadd.f32 %v5877, %v6115
    %v6117 = vpop.f32.mrf.mxu0
    %v6118 = vadd.f32 %v5877, %v6117
    %6119 = vmatmul.bf16.gmra.mxu0 %v5839
    %v6120 = vpop.f32.mrf.mxu0
    %v6121 = vadd.f32 %v5877, %v6120
    %v6122 = vpop.f32.mrf.mxu0
    %v6123 = vadd.f32 %v5877, %v6122
    %6124 = vmatmul.bf16.gmra.mxu0 %v5840
    %v6125 = vpop.f32.mrf.mxu0
    %v6126 = vadd.f32 %v5877, %v6125
    %v6127 = vpop.f32.mrf.mxu0
    %v6128 = vadd.f32 %v5877, %v6127
    %6129 = vdwg.mxu0
    %6130 = vmatpush.bf16.msra.mxu0 %v6010
    %6131 = vmatpush.bf16.msra.mxu0 %v6006
    %6132 = vmatpush.bf16.msra.mxu0 %v6002
    %6133 = vmatpush.bf16.msra.mxu0 %v5998
    %6134 = vmatpush.bf16.msra.mxu0 %v5994
    %6135 = vmatpush.bf16.msra.mxu0 %v5990
    %6136 = vmatpush.bf16.msra.mxu0 %v5986
    %6137 = vmatpush.bf16.msra.mxu0 %v5982
    %6138 = vmatmul.bf16.gmra.mxu0 %v5837
    %v6139 = vpop.f32.mrf.mxu0
    %v6140 = vadd.f32 %v5878, %v6139
    %v6141 = vpop.f32.mrf.mxu0
    %v6142 = vadd.f32 %v5878, %v6141
    %6143 = vmatmul.bf16.gmra.mxu0 %v5838
    %v6144 = vpop.f32.mrf.mxu0
    %v6145 = vadd.f32 %v5878, %v6144
    %v6146 = vpop.f32.mrf.mxu0
    %v6147 = vadd.f32 %v5878, %v6146
    %6148 = vmatmul.bf16.gmra.mxu0 %v5839
    %v6149 = vpop.f32.mrf.mxu0
    %v6150 = vadd.f32 %v5878, %v6149
    %v6151 = vpop.f32.mrf.mxu0
    %v6152 = vadd.f32 %v5878, %v6151
    %6153 = vmatmul.bf16.gmra.mxu0 %v5840
    %v6154 = vpop.f32.mrf.mxu0
    %v6155 = vadd.f32 %v5878, %v6154
    %v6156 = vpop.f32.mrf.mxu0
    %v6157 = vadd.f32 %v5878, %v6156
    %6158 = vdwg.mxu0
    %6159 = vst [vmem:[#allocation2] sm:$0xff] %v6053
    %6160 = vst [vmem:[#allocation2 + $0x8] sm:$0xff] %v6082
    %6161 = vst [vmem:[#allocation2 + $0x10] sm:$0xff] %v6111
    %6162 = vst [vmem:[#allocation2 + $0x18] sm:$0xff] %v6140
    %6163 = vst [vmem:[#allocation2 + $0x20] sm:$0xff] %v6055
    %6164 = vst [vmem:[#allocation2 + $0x28] sm:$0xff] %v6084
    %6165 = vst [vmem:[#allocation2 + $0x30] sm:$0xff] %v6113
    %6166 = vst [vmem:[#allocation2 + $0x38] sm:$0xff] %v6142
    %6167 = vst [vmem:[#allocation2 + $0x40] sm:$0xff] %v6058
    %6168 = vst [vmem:[#allocation2 + $0x48] sm:$0xff] %v6087
    %6169 = vst [vmem:[#allocation2 + $0x50] sm:$0xff] %v6116
    %6170 = vst [vmem:[#allocation2 + $0x58] sm:$0xff] %v6145
    %6171 = vst [vmem:[#allocation2 + $0x60] sm:$0xff] %v6060
    %6172 = vst [vmem:[#allocation2 + $0x68] sm:$0xff] %v6089
    %6173 = vst [vmem:[#allocation2 + $0x70] sm:$0xff] %v6118
    %6174 = vst [vmem:[#allocation2 + $0x78] sm:$0xff] %v6147
    %6175 = vst [vmem:[#allocation2 + $0x80] sm:$0xff] %v6063
    %6176 = vst [vmem:[#allocation2 + $0x88] sm:$0xff] %v6092
    %6177 = vst [vmem:[#allocation2 + $0x90] sm:$0xff] %v6121
    %6178 = vst [vmem:[#allocation2 + $0x98] sm:$0xff] %v6150
    %6179 = vst [vmem:[#allocation2 + $0xa0] sm:$0xff] %v6065
    %6180 = vst [vmem:[#allocation2 + $0xa8] sm:$0xff] %v6094
    %6181 = vst [vmem:[#allocation2 + $0xb0] sm:$0xff] %v6123
    %6182 = vst [vmem:[#allocation2 + $0xb8] sm:$0xff] %v6152
    %6183 = vst [vmem:[#allocation2 + $0xc0] sm:$0xff] %v6068
    %6184 = vst [vmem:[#allocation2 + $0xc8] sm:$0xff] %v6097
    %6185 = vst [vmem:[#allocation2 + $0xd0] sm:$0xff] %v6126
    %6186 = vst [vmem:[#allocation2 + $0xd8] sm:$0xff] %v6155
    %6187 = vst [vmem:[#allocation2 + $0xe0] sm:$0xff] %v6070
    %6188 = vst [vmem:[#allocation2 + $0xe8] sm:$0xff] %v6099
    %6189 = vst [vmem:[#allocation2 + $0xf0] sm:$0xff] %v6128
    %6190 = vst [vmem:[#allocation2 + $0xf8] sm:$0xff] %v6157
    %v6191 = vld [vmem:[#allocation8] sm:$0xff]
    %v6192 = vld [vmem:[#allocation9] sm:$0xff]
    %v6193 = vld [vmem:[%s360] sm:$0xff]
    %v6194 = vld [vmem:[%s360 + $0x8] sm:$0xff]
    %v6195 = vld [vmem:[%s360 + $0x10] sm:$0xff]
    %v6196 = vld [vmem:[%s360 + $0x18] sm:$0xff]
    %v6197 = vpack.c.bf16 %v6191, %v6191
    %v6198 = vld [vmem:[#allocation18] sm:$0xff]
    %v6199 = vld [vmem:[#allocation18 + $0x8] sm:$0xff]
    %v6200 = vld [vmem:[#allocation18 + $0x10] sm:$0xff]
    %v6201 = vld [vmem:[#allocation18 + $0x18] sm:$0xff]
    %v6202 = vld [vmem:[#allocation18 + $0x20] sm:$0xff]
    %v6203 = vld [vmem:[#allocation18 + $0x28] sm:$0xff]
    %v6204 = vld [vmem:[#allocation18 + $0x30] sm:$0xff]
    %v6205 = vld [vmem:[#allocation18 + $0x38] sm:$0xff]
    %v6206 = vld [vmem:[#allocation18 + $0x40] sm:$0xff]
    %v6207 = vld [vmem:[#allocation18 + $0x48] sm:$0xff]
    %v6208 = vld [vmem:[#allocation18 + $0x50] sm:$0xff]
    %v6209 = vld [vmem:[#allocation18 + $0x58] sm:$0xff]
    %v6210 = vld [vmem:[#allocation18 + $0x60] sm:$0xff]
    %v6211 = vld [vmem:[#allocation18 + $0x68] sm:$0xff]
    %v6212 = vld [vmem:[#allocation18 + $0x70] sm:$0xff]
    %v6213 = vld [vmem:[#allocation18 + $0x78] sm:$0xff]
    %v6214 = vld [vmem:[#allocation18 + $0x80] sm:$0xff]
    %v6215 = vld [vmem:[#allocation18 + $0x88] sm:$0xff]
    %v6216 = vld [vmem:[#allocation18 + $0x90] sm:$0xff]
    %v6217 = vld [vmem:[#allocation18 + $0x98] sm:$0xff]
    %v6218 = vld [vmem:[#allocation18 + $0xa0] sm:$0xff]
    %v6219 = vld [vmem:[#allocation18 + $0xa8] sm:$0xff]
    %v6220 = vld [vmem:[#allocation18 + $0xb0] sm:$0xff]
    %v6221 = vld [vmem:[#allocation18 + $0xb8] sm:$0xff]
    %v6222 = vld [vmem:[#allocation18 + $0xc0] sm:$0xff]
    %v6223 = vld [vmem:[#allocation18 + $0xc8] sm:$0xff]
    %v6224 = vld [vmem:[#allocation18 + $0xd0] sm:$0xff]
    %v6225 = vld [vmem:[#allocation18 + $0xd8] sm:$0xff]
    %v6226 = vld [vmem:[#allocation18 + $0xe0] sm:$0xff]
    %v6227 = vld [vmem:[#allocation18 + $0xe8] sm:$0xff]
    %v6228 = vld [vmem:[#allocation18 + $0xf0] sm:$0xff]
    %v6229 = vld [vmem:[#allocation18 + $0xf8] sm:$0xff]
    %v6262 = vunpack.c.l.b16 %v6198
    %v6263 = vunpack.c.h.b16 %v6198
    %v6264 = vunpack.c.l.b16 %v6199
    %v6265 = vunpack.c.h.b16 %v6199
    %v6266 = vunpack.c.l.b16 %v6200
    %v6267 = vunpack.c.h.b16 %v6200
    %v6268 = vunpack.c.l.b16 %v6201
    %v6269 = vunpack.c.h.b16 %v6201
    %v6270 = vunpack.c.l.b16 %v6202
    %v6271 = vunpack.c.h.b16 %v6202
    %v6272 = vunpack.c.l.b16 %v6203
    %v6273 = vunpack.c.h.b16 %v6203
    %v6274 = vunpack.c.l.b16 %v6204
    %v6275 = vunpack.c.h.b16 %v6204
    %v6276 = vunpack.c.l.b16 %v6205
    %v6277 = vunpack.c.h.b16 %v6205
    %v6278 = vunpack.c.l.b16 %v6206
    %v6279 = vunpack.c.h.b16 %v6206
    %v6280 = vunpack.c.l.b16 %v6207
    %v6281 = vunpack.c.h.b16 %v6207
    %v6282 = vunpack.c.l.b16 %v6208
    %v6283 = vunpack.c.h.b16 %v6208
    %v6284 = vunpack.c.l.b16 %v6209
    %v6285 = vunpack.c.h.b16 %v6209
    %v6286 = vunpack.c.l.b16 %v6210
    %v6287 = vunpack.c.h.b16 %v6210
    %v6288 = vunpack.c.l.b16 %v6211
    %v6289 = vunpack.c.h.b16 %v6211
    %v6290 = vunpack.c.l.b16 %v6212
    %v6291 = vunpack.c.h.b16 %v6212
    %v6292 = vunpack.c.l.b16 %v6213
    %v6293 = vunpack.c.h.b16 %v6213
    %v6294 = vunpack.c.l.b16 %v6214
    %v6295 = vunpack.c.h.b16 %v6214
    %v6296 = vunpack.c.l.b16 %v6215
    %v6297 = vunpack.c.h.b16 %v6215
    %v6298 = vunpack.c.l.b16 %v6216
    %v6299 = vunpack.c.h.b16 %v6216
    %v6300 = vunpack.c.l.b16 %v6217
    %v6301 = vunpack.c.h.b16 %v6217
    %v6302 = vunpack.c.l.b16 %v6218
    %v6303 = vunpack.c.h.b16 %v6218
    %v6304 = vunpack.c.l.b16 %v6219
    %v6305 = vunpack.c.h.b16 %v6219
    %v6306 = vunpack.c.l.b16 %v6220
    %v6307 = vunpack.c.h.b16 %v6220
    %v6308 = vunpack.c.l.b16 %v6221
    %v6309 = vunpack.c.h.b16 %v6221
    %v6310 = vunpack.c.l.b16 %v6222
    %v6311 = vunpack.c.h.b16 %v6222
    %v6312 = vunpack.c.l.b16 %v6223
    %v6313 = vunpack.c.h.b16 %v6223
    %v6314 = vunpack.c.l.b16 %v6224
    %v6315 = vunpack.c.h.b16 %v6224
    %v6316 = vunpack.c.l.b16 %v6225
    %v6317 = vunpack.c.h.b16 %v6225
    %v6318 = vunpack.c.l.b16 %v6226
    %v6319 = vunpack.c.h.b16 %v6226
    %v6320 = vunpack.c.l.b16 %v6227
    %v6321 = vunpack.c.h.b16 %v6227
    %v6322 = vunpack.c.l.b16 %v6228
    %v6323 = vunpack.c.h.b16 %v6228
    %v6324 = vunpack.c.l.b16 %v6229
    %v6325 = vunpack.c.h.b16 %v6229
    %v6326 = vpack.c.b16 %v6266, %v6262
    %v6327 = vpack.c.b16 %v6267, %v6263
    %v6328 = vpack.c.b16 %v6268, %v6264
    %v6329 = vpack.c.b16 %v6269, %v6265
    %v6330 = vpack.c.b16 %v6274, %v6270
    %v6331 = vpack.c.b16 %v6275, %v6271
    %v6332 = vpack.c.b16 %v6276, %v6272
    %v6333 = vpack.c.b16 %v6277, %v6273
    %v6334 = vpack.c.b16 %v6282, %v6278
    %v6335 = vpack.c.b16 %v6283, %v6279
    %v6336 = vpack.c.b16 %v6284, %v6280
    %v6337 = vpack.c.b16 %v6285, %v6281
    %v6338 = vpack.c.b16 %v6290, %v6286
    %v6339 = vpack.c.b16 %v6291, %v6287
    %v6340 = vpack.c.b16 %v6292, %v6288
    %v6341 = vpack.c.b16 %v6293, %v6289
    %v6342 = vpack.c.b16 %v6298, %v6294
    %v6343 = vpack.c.b16 %v6299, %v6295
    %v6344 = vpack.c.b16 %v6300, %v6296
    %v6345 = vpack.c.b16 %v6301, %v6297
    %v6346 = vpack.c.b16 %v6306, %v6302
    %v6347 = vpack.c.b16 %v6307, %v6303
    %v6348 = vpack.c.b16 %v6308, %v6304
    %v6349 = vpack.c.b16 %v6309, %v6305
    %v6350 = vpack.c.b16 %v6314, %v6310
    %v6351 = vpack.c.b16 %v6315, %v6311
    %v6352 = vpack.c.b16 %v6316, %v6312
    %v6353 = vpack.c.b16 %v6317, %v6313
    %v6354 = vpack.c.b16 %v6322, %v6318
    %v6355 = vpack.c.b16 %v6323, %v6319
    %v6356 = vpack.c.b16 %v6324, %v6320
    %v6357 = vpack.c.b16 %v6325, %v6321
    %6390 = vmatpush.bf16.msra.mxu0 %v6354
    %6391 = vmatpush.bf16.msra.mxu0 %v6350
    %6392 = vmatpush.bf16.msra.mxu0 %v6346
    %6393 = vmatpush.bf16.msra.mxu0 %v6342
    %6394 = vmatpush.bf16.msra.mxu0 %v6338
    %6395 = vmatpush.bf16.msra.mxu0 %v6334
    %6396 = vmatpush.bf16.msra.mxu0 %v6330
    %6397 = vmatpush.bf16.msra.mxu0 %v6326
    %6398 = vmatmul.bf16.gmra.mxu0 %v6197
    %v6399 = vpop.f32.mrf.mxu0
    %v6400 = vadd.f32 0.0, %v6399
    %v6401 = vpop.f32.mrf.mxu0
    %6402 = vdwg.mxu0
    %6403 = vmatpush.bf16.msra.mxu0 %v6355
    %6404 = vmatpush.bf16.msra.mxu0 %v6351
    %6405 = vmatpush.bf16.msra.mxu0 %v6347
    %6406 = vmatpush.bf16.msra.mxu0 %v6343
    %6407 = vmatpush.bf16.msra.mxu0 %v6339
    %6408 = vmatpush.bf16.msra.mxu0 %v6335
    %6409 = vmatpush.bf16.msra.mxu0 %v6331
    %6410 = vmatpush.bf16.msra.mxu0 %v6327
    %6411 = vmatmul.bf16.gmra.mxu0 %v6197
    %v6412 = vpop.f32.mrf.mxu0
    %v6413 = vadd.f32 0.0, %v6412
    %v6414 = vpop.f32.mrf.mxu0
    %6415 = vdwg.mxu0
    %6416 = vmatpush.bf16.msra.mxu0 %v6356
    %6417 = vmatpush.bf16.msra.mxu0 %v6352
    %6418 = vmatpush.bf16.msra.mxu0 %v6348
    %6419 = vmatpush.bf16.msra.mxu0 %v6344
    %6420 = vmatpush.bf16.msra.mxu0 %v6340
    %6421 = vmatpush.bf16.msra.mxu0 %v6336
    %6422 = vmatpush.bf16.msra.mxu0 %v6332
    %6423 = vmatpush.bf16.msra.mxu0 %v6328
    %6424 = vmatmul.bf16.gmra.mxu0 %v6197
    %v6425 = vpop.f32.mrf.mxu0
    %v6426 = vadd.f32 0.0, %v6425
    %v6427 = vpop.f32.mrf.mxu0
    %6428 = vdwg.mxu0
    %6429 = vmatpush.bf16.msra.mxu0 %v6357
    %6430 = vmatpush.bf16.msra.mxu0 %v6353
    %6431 = vmatpush.bf16.msra.mxu0 %v6349
    %6432 = vmatpush.bf16.msra.mxu0 %v6345
    %6433 = vmatpush.bf16.msra.mxu0 %v6341
    %6434 = vmatpush.bf16.msra.mxu0 %v6337
    %6435 = vmatpush.bf16.msra.mxu0 %v6333
    %6436 = vmatpush.bf16.msra.mxu0 %v6329
    %6437 = vmatmul.bf16.gmra.mxu0 %v6197
    %v6438 = vpop.f32.mrf.mxu0
    %v6439 = vadd.f32 0.0, %v6438
    %v6440 = vpop.f32.mrf.mxu0
    %6441 = vdwg.mxu0
    %v6442 = vadd.f32 %v6193, %v6400
    %v6443 = vadd.f32 %v6194, %v6413
    %v6444 = vadd.f32 %v6195, %v6426
    %v6445 = vadd.f32 %v6196, %v6439
    %v6446 = vxor.u32 %v6442, 2147483648
    %v6447 = vmul.f32 %v6446, 1.442695
    %v6448 = vpow.pop %v6447
    %v6449 = vadd.f32 %v6448, 1.0
    %v6450 = vrcp.pop %v6449
    %v6451 = vmul.f32 %v6449, %v6450
    %v6452 = vsub.f32 1.0, %v6451
    %v6453 = vmul.f32 %v6450, %v6452
    %v6454 = vadd.f32 %v6450, %v6453
    %vm6455 = vweird.f32 %v6449
    %vm6456 = vweird.f32 %v6450
    %vm6457 = vmor %vm6455, %vm6456
    %v6458 = vsel %vm6457, %v6450, %v6454
    %v6459 = vand.u32 2147483647, %v6449
    %vm6460 = vcmp.eq.f32.partialorder %v6459, 8.507059e+37
    %v6461 = vand.u32 %v6449, 2147483648
    %v6462 = vor.u32 1.1754944e-38, %v6461
    %v6463 = vsel %vm6460, %v6462, %v6458
    %v6464 = vmul.f32 1.0, %v6463
    %v6465 = vxor.u32 %v6443, 2147483648
    %v6466 = vmul.f32 %v6465, 1.442695
    %v6467 = vpow.pop %v6466
    %v6468 = vadd.f32 %v6467, 1.0
    %v6469 = vrcp.pop %v6468
    %v6470 = vmul.f32 %v6468, %v6469
    %v6471 = vsub.f32 1.0, %v6470
    %v6472 = vmul.f32 %v6469, %v6471
    %v6473 = vadd.f32 %v6469, %v6472
    %vm6474 = vweird.f32 %v6468
    %vm6475 = vweird.f32 %v6469
    %vm6476 = vmor %vm6474, %vm6475
    %v6477 = vsel %vm6476, %v6469, %v6473
    %v6478 = vand.u32 2147483647, %v6468
    %vm6479 = vcmp.eq.f32.partialorder %v6478, 8.507059e+37
    %v6480 = vand.u32 %v6468, 2147483648
    %v6481 = vor.u32 1.1754944e-38, %v6480
    %v6482 = vsel %vm6479, %v6481, %v6477
    %v6483 = vmul.f32 1.0, %v6482
    %v6484 = vtanh.pop %v6444
    %v6485 = vxor.u32 %v6445, 2147483648
    %v6486 = vmul.f32 %v6485, 1.442695
    %v6487 = vpow.pop %v6486
    %v6488 = vadd.f32 %v6487, 1.0
    %v6489 = vrcp.pop %v6488
    %v6490 = vmul.f32 %v6488, %v6489
    %v6491 = vsub.f32 1.0, %v6490
    %v6492 = vmul.f32 %v6489, %v6491
    %v6493 = vadd.f32 %v6489, %v6492
    %vm6494 = vweird.f32 %v6488
    %vm6495 = vweird.f32 %v6489
    %vm6496 = vmor %vm6494, %vm6495
    %v6497 = vsel %vm6496, %v6489, %v6493
    %v6498 = vand.u32 2147483647, %v6488
    %vm6499 = vcmp.eq.f32.partialorder %v6498, 8.507059e+37
    %v6500 = vand.u32 %v6488, 2147483648
    %v6501 = vor.u32 1.1754944e-38, %v6500
    %v6502 = vsel %vm6499, %v6501, %v6497
    %v6503 = vmul.f32 1.0, %v6502
    %v6504 = vmul.f32 %v6483, %v6192
    %v6505 = vmul.f32 %v6464, %v6484
    %v6506 = vadd.f32 %v6504, %v6505
    %v6507 = vtanh.pop %v6506
    %v6508 = vmul.f32 %v6503, %v6507
    %v6509 = vld [vmem:[%s680] sm:$0xff]
    %v6510 = vld [vmem:[%s680 + $0x8] sm:$0xff]
    %v6511 = vld [vmem:[%s680 + $0x10] sm:$0xff]
    %v6512 = vld [vmem:[%s680 + $0x18] sm:$0xff]
    %v6513 = vpack.c.bf16 %v6508, %v6508
    %6514 = vmatpush.bf16.msra.mxu0 %v6354
    %6515 = vmatpush.bf16.msra.mxu0 %v6350
    %6516 = vmatpush.bf16.msra.mxu0 %v6346
    %6517 = vmatpush.bf16.msra.mxu0 %v6342
    %6518 = vmatpush.bf16.msra.mxu0 %v6338
    %6519 = vmatpush.bf16.msra.mxu0 %v6334
    %6520 = vmatpush.bf16.msra.mxu0 %v6330
    %6521 = vmatpush.bf16.msra.mxu0 %v6326
    %6522 = vmatmul.bf16.gmra.mxu0 %v6513
    %v6523 = vpop.f32.mrf.mxu0
    %v6524 = vadd.f32 0.0, %v6523
    %v6525 = vpop.f32.mrf.mxu0
    %6526 = vdwg.mxu0
    %6527 = vmatpush.bf16.msra.mxu0 %v6355
    %6528 = vmatpush.bf16.msra.mxu0 %v6351
    %6529 = vmatpush.bf16.msra.mxu0 %v6347
    %6530 = vmatpush.bf16.msra.mxu0 %v6343
    %6531 = vmatpush.bf16.msra.mxu0 %v6339
    %6532 = vmatpush.bf16.msra.mxu0 %v6335
    %6533 = vmatpush.bf16.msra.mxu0 %v6331
    %6534 = vmatpush.bf16.msra.mxu0 %v6327
    %6535 = vmatmul.bf16.gmra.mxu0 %v6513
    %v6536 = vpop.f32.mrf.mxu0
    %v6537 = vadd.f32 0.0, %v6536
    %v6538 = vpop.f32.mrf.mxu0
    %6539 = vdwg.mxu0
    %6540 = vmatpush.bf16.msra.mxu0 %v6356
    %6541 = vmatpush.bf16.msra.mxu0 %v6352
    %6542 = vmatpush.bf16.msra.mxu0 %v6348
    %6543 = vmatpush.bf16.msra.mxu0 %v6344
    %6544 = vmatpush.bf16.msra.mxu0 %v6340
    %6545 = vmatpush.bf16.msra.mxu0 %v6336
    %6546 = vmatpush.bf16.msra.mxu0 %v6332
    %6547 = vmatpush.bf16.msra.mxu0 %v6328
    %6548 = vmatmul.bf16.gmra.mxu0 %v6513
    %v6549 = vpop.f32.mrf.mxu0
    %v6550 = vadd.f32 0.0, %v6549
    %v6551 = vpop.f32.mrf.mxu0
    %6552 = vdwg.mxu0
    %6553 = vmatpush.bf16.msra.mxu0 %v6357
    %6554 = vmatpush.bf16.msra.mxu0 %v6353
    %6555 = vmatpush.bf16.msra.mxu0 %v6349
    %6556 = vmatpush.bf16.msra.mxu0 %v6345
    %6557 = vmatpush.bf16.msra.mxu0 %v6341
    %6558 = vmatpush.bf16.msra.mxu0 %v6337
    %6559 = vmatpush.bf16.msra.mxu0 %v6333
    %6560 = vmatpush.bf16.msra.mxu0 %v6329
    %6561 = vmatmul.bf16.gmra.mxu0 %v6513
    %v6562 = vpop.f32.mrf.mxu0
    %v6563 = vadd.f32 0.0, %v6562
    %v6564 = vpop.f32.mrf.mxu0
    %6565 = vdwg.mxu0
    %v6566 = vadd.f32 %v6509, %v6524
    %v6567 = vadd.f32 %v6510, %v6537
    %v6568 = vadd.f32 %v6511, %v6550
    %v6569 = vadd.f32 %v6512, %v6563
    %v6570 = vxor.u32 %v6566, 2147483648
    %v6571 = vmul.f32 %v6570, 1.442695
    %v6572 = vpow.pop %v6571
    %v6573 = vadd.f32 %v6572, 1.0
    %v6574 = vrcp.pop %v6573
    %v6575 = vmul.f32 %v6573, %v6574
    %v6576 = vsub.f32 1.0, %v6575
    %v6577 = vmul.f32 %v6574, %v6576
    %v6578 = vadd.f32 %v6574, %v6577
    %vm6579 = vweird.f32 %v6573
    %vm6580 = vweird.f32 %v6574
    %vm6581 = vmor %vm6579, %vm6580
    %v6582 = vsel %vm6581, %v6574, %v6578
    %v6583 = vand.u32 2147483647, %v6573
    %vm6584 = vcmp.eq.f32.partialorder %v6583, 8.507059e+37
    %v6585 = vand.u32 %v6573, 2147483648
    %v6586 = vor.u32 1.1754944e-38, %v6585
    %v6587 = vsel %vm6584, %v6586, %v6582
    %v6588 = vmul.f32 1.0, %v6587
    %v6589 = vxor.u32 %v6567, 2147483648
    %v6590 = vmul.f32 %v6589, 1.442695
    %v6591 = vpow.pop %v6590
    %v6592 = vadd.f32 %v6591, 1.0
    %v6593 = vrcp.pop %v6592
    %v6594 = vmul.f32 %v6592, %v6593
    %v6595 = vsub.f32 1.0, %v6594
    %v6596 = vmul.f32 %v6593, %v6595
    %v6597 = vadd.f32 %v6593, %v6596
    %vm6598 = vweird.f32 %v6592
    %vm6599 = vweird.f32 %v6593
    %vm6600 = vmor %vm6598, %vm6599
    %v6601 = vsel %vm6600, %v6593, %v6597
    %v6602 = vand.u32 2147483647, %v6592
    %vm6603 = vcmp.eq.f32.partialorder %v6602, 8.507059e+37
    %v6604 = vand.u32 %v6592, 2147483648
    %v6605 = vor.u32 1.1754944e-38, %v6604
    %v6606 = vsel %vm6603, %v6605, %v6601
    %v6607 = vmul.f32 1.0, %v6606
    %v6608 = vtanh.pop %v6568
    %v6609 = vxor.u32 %v6569, 2147483648
    %v6610 = vmul.f32 %v6609, 1.442695
    %v6611 = vpow.pop %v6610
    %v6612 = vadd.f32 %v6611, 1.0
    %v6613 = vrcp.pop %v6612
    %v6614 = vmul.f32 %v6612, %v6613
    %v6615 = vsub.f32 1.0, %v6614
    %v6616 = vmul.f32 %v6613, %v6615
    %v6617 = vadd.f32 %v6613, %v6616
    %vm6618 = vweird.f32 %v6612
    %vm6619 = vweird.f32 %v6613
    %vm6620 = vmor %vm6618, %vm6619
    %v6621 = vsel %vm6620, %v6613, %v6617
    %v6622 = vand.u32 2147483647, %v6612
    %vm6623 = vcmp.eq.f32.partialorder %v6622, 8.507059e+37
    %v6624 = vand.u32 %v6612, 2147483648
    %v6625 = vor.u32 1.1754944e-38, %v6624
    %v6626 = vsel %vm6623, %v6625, %v6621
    %v6627 = vmul.f32 1.0, %v6626
    %v6628 = vmul.f32 %v6607, %v6506
    %v6629 = vmul.f32 %v6588, %v6608
    %v6630 = vadd.f32 %v6628, %v6629
    %v6631 = vtanh.pop %v6630
    %v6632 = vmul.f32 %v6627, %v6631
    %v6633 = vld [vmem:[%s1001] sm:$0xff]
    %v6634 = vld [vmem:[%s1001 + $0x8] sm:$0xff]
    %v6635 = vld [vmem:[%s1001 + $0x10] sm:$0xff]
    %v6636 = vld [vmem:[%s1001 + $0x18] sm:$0xff]
    %v6637 = vpack.c.bf16 %v6632, %v6632
    %6638 = vmatpush.bf16.msra.mxu0 %v6354
    %6639 = vmatpush.bf16.msra.mxu0 %v6350
    %6640 = vmatpush.bf16.msra.mxu0 %v6346
    %6641 = vmatpush.bf16.msra.mxu0 %v6342
    %6642 = vmatpush.bf16.msra.mxu0 %v6338
    %6643 = vmatpush.bf16.msra.mxu0 %v6334
    %6644 = vmatpush.bf16.msra.mxu0 %v6330
    %6645 = vmatpush.bf16.msra.mxu0 %v6326
    %6646 = vmatmul.bf16.gmra.mxu0 %v6637
    %v6647 = vpop.f32.mrf.mxu0
    %v6648 = vadd.f32 0.0, %v6647
    %v6649 = vpop.f32.mrf.mxu0
    %6650 = vdwg.mxu0
    %6651 = vmatpush.bf16.msra.mxu0 %v6355
    %6652 = vmatpush.bf16.msra.mxu0 %v6351
    %6653 = vmatpush.bf16.msra.mxu0 %v6347
    %6654 = vmatpush.bf16.msra.mxu0 %v6343
    %6655 = vmatpush.bf16.msra.mxu0 %v6339
    %6656 = vmatpush.bf16.msra.mxu0 %v6335
    %6657 = vmatpush.bf16.msra.mxu0 %v6331
    %6658 = vmatpush.bf16.msra.mxu0 %v6327
    %6659 = vmatmul.bf16.gmra.mxu0 %v6637
    %v6660 = vpop.f32.mrf.mxu0
    %v6661 = vadd.f32 0.0, %v6660
    %v6662 = vpop.f32.mrf.mxu0
    %6663 = vdwg.mxu0
    %6664 = vmatpush.bf16.msra.mxu0 %v6356
    %6665 = vmatpush.bf16.msra.mxu0 %v6352
    %6666 = vmatpush.bf16.msra.mxu0 %v6348
    %6667 = vmatpush.bf16.msra.mxu0 %v6344
    %6668 = vmatpush.bf16.msra.mxu0 %v6340
    %6669 = vmatpush.bf16.msra.mxu0 %v6336
    %6670 = vmatpush.bf16.msra.mxu0 %v6332
    %6671 = vmatpush.bf16.msra.mxu0 %v6328
    %6672 = vmatmul.bf16.gmra.mxu0 %v6637
    %v6673 = vpop.f32.mrf.mxu0
    %v6674 = vadd.f32 0.0, %v6673
    %v6675 = vpop.f32.mrf.mxu0
    %6676 = vdwg.mxu0
    %6677 = vmatpush.bf16.msra.mxu0 %v6357
    %6678 = vmatpush.bf16.msra.mxu0 %v6353
    %6679 = vmatpush.bf16.msra.mxu0 %v6349
    %6680 = vmatpush.bf16.msra.mxu0 %v6345
    %6681 = vmatpush.bf16.msra.mxu0 %v6341
    %6682 = vmatpush.bf16.msra.mxu0 %v6337
    %6683 = vmatpush.bf16.msra.mxu0 %v6333
    %6684 = vmatpush.bf16.msra.mxu0 %v6329
    %6685 = vmatmul.bf16.gmra.mxu0 %v6637
    %v6686 = vpop.f32.mrf.mxu0
    %v6687 = vadd.f32 0.0, %v6686
    %v6688 = vpop.f32.mrf.mxu0
    %6689 = vdwg.mxu0
    %v6690 = vadd.f32 %v6633, %v6648
    %v6691 = vadd.f32 %v6634, %v6661
    %v6692 = vadd.f32 %v6635, %v6674
    %v6693 = vadd.f32 %v6636, %v6687
    %v6694 = vxor.u32 %v6690, 2147483648
    %v6695 = vmul.f32 %v6694, 1.442695
    %v6696 = vpow.pop %v6695
    %v6697 = vadd.f32 %v6696, 1.0
    %v6698 = vrcp.pop %v6697
    %v6699 = vmul.f32 %v6697, %v6698
    %v6700 = vsub.f32 1.0, %v6699
    %v6701 = vmul.f32 %v6698, %v6700
    %v6702 = vadd.f32 %v6698, %v6701
    %vm6703 = vweird.f32 %v6697
    %vm6704 = vweird.f32 %v6698
    %vm6705 = vmor %vm6703, %vm6704
    %v6706 = vsel %vm6705, %v6698, %v6702
    %v6707 = vand.u32 2147483647, %v6697
    %vm6708 = vcmp.eq.f32.partialorder %v6707, 8.507059e+37
    %v6709 = vand.u32 %v6697, 2147483648
    %v6710 = vor.u32 1.1754944e-38, %v6709
    %v6711 = vsel %vm6708, %v6710, %v6706
    %v6712 = vmul.f32 1.0, %v6711
    %v6713 = vxor.u32 %v6691, 2147483648
    %v6714 = vmul.f32 %v6713, 1.442695
    %v6715 = vpow.pop %v6714
    %v6716 = vadd.f32 %v6715, 1.0
    %v6717 = vrcp.pop %v6716
    %v6718 = vmul.f32 %v6716, %v6717
    %v6719 = vsub.f32 1.0, %v6718
    %v6720 = vmul.f32 %v6717, %v6719
    %v6721 = vadd.f32 %v6717, %v6720
    %vm6722 = vweird.f32 %v6716
    %vm6723 = vweird.f32 %v6717
    %vm6724 = vmor %vm6722, %vm6723
    %v6725 = vsel %vm6724, %v6717, %v6721
    %v6726 = vand.u32 2147483647, %v6716
    %vm6727 = vcmp.eq.f32.partialorder %v6726, 8.507059e+37
    %v6728 = vand.u32 %v6716, 2147483648
    %v6729 = vor.u32 1.1754944e-38, %v6728
    %v6730 = vsel %vm6727, %v6729, %v6725
    %v6731 = vmul.f32 1.0, %v6730
    %v6732 = vtanh.pop %v6692
    %v6733 = vxor.u32 %v6693, 2147483648
    %v6734 = vmul.f32 %v6733, 1.442695
    %v6735 = vpow.pop %v6734
    %v6736 = vadd.f32 %v6735, 1.0
    %v6737 = vrcp.pop %v6736
    %v6738 = vmul.f32 %v6736, %v6737
    %v6739 = vsub.f32 1.0, %v6738
    %v6740 = vmul.f32 %v6737, %v6739
    %v6741 = vadd.f32 %v6737, %v6740
    %vm6742 = vweird.f32 %v6736
    %vm6743 = vweird.f32 %v6737
    %vm6744 = vmor %vm6742, %vm6743
    %v6745 = vsel %vm6744, %v6737, %v6741
    %v6746 = vand.u32 2147483647, %v6736
    %vm6747 = vcmp.eq.f32.partialorder %v6746, 8.507059e+37
    %v6748 = vand.u32 %v6736, 2147483648
    %v6749 = vor.u32 1.1754944e-38, %v6748
    %v6750 = vsel %vm6747, %v6749, %v6745
    %v6751 = vmul.f32 1.0, %v6750
    %v6752 = vmul.f32 %v6731, %v6630
    %v6753 = vmul.f32 %v6712, %v6732
    %v6754 = vadd.f32 %v6752, %v6753
    %v6755 = vtanh.pop %v6754
    %v6756 = vmul.f32 %v6751, %v6755
    %v6757 = vld [vmem:[%s1322] sm:$0xff]
    %v6758 = vld [vmem:[%s1322 + $0x8] sm:$0xff]
    %v6759 = vld [vmem:[%s1322 + $0x10] sm:$0xff]
    %v6760 = vld [vmem:[%s1322 + $0x18] sm:$0xff]
    %v6761 = vpack.c.bf16 %v6756, %v6756
    %6762 = vmatpush.bf16.msra.mxu0 %v6354
    %6763 = vmatpush.bf16.msra.mxu0 %v6350
    %6764 = vmatpush.bf16.msra.mxu0 %v6346
    %6765 = vmatpush.bf16.msra.mxu0 %v6342
    %6766 = vmatpush.bf16.msra.mxu0 %v6338
    %6767 = vmatpush.bf16.msra.mxu0 %v6334
    %6768 = vmatpush.bf16.msra.mxu0 %v6330
    %6769 = vmatpush.bf16.msra.mxu0 %v6326
    %6770 = vmatmul.bf16.gmra.mxu0 %v6761
    %v6771 = vpop.f32.mrf.mxu0
    %v6772 = vadd.f32 0.0, %v6771
    %v6773 = vpop.f32.mrf.mxu0
    %6774 = vdwg.mxu0
    %6775 = vmatpush.bf16.msra.mxu0 %v6355
    %6776 = vmatpush.bf16.msra.mxu0 %v6351
    %6777 = vmatpush.bf16.msra.mxu0 %v6347
    %6778 = vmatpush.bf16.msra.mxu0 %v6343
    %6779 = vmatpush.bf16.msra.mxu0 %v6339
    %6780 = vmatpush.bf16.msra.mxu0 %v6335
    %6781 = vmatpush.bf16.msra.mxu0 %v6331
    %6782 = vmatpush.bf16.msra.mxu0 %v6327
    %6783 = vmatmul.bf16.gmra.mxu0 %v6761
    %v6784 = vpop.f32.mrf.mxu0
    %v6785 = vadd.f32 0.0, %v6784
    %v6786 = vpop.f32.mrf.mxu0
    %6787 = vdwg.mxu0
    %6788 = vmatpush.bf16.msra.mxu0 %v6356
    %6789 = vmatpush.bf16.msra.mxu0 %v6352
    %6790 = vmatpush.bf16.msra.mxu0 %v6348
    %6791 = vmatpush.bf16.msra.mxu0 %v6344
    %6792 = vmatpush.bf16.msra.mxu0 %v6340
    %6793 = vmatpush.bf16.msra.mxu0 %v6336
    %6794 = vmatpush.bf16.msra.mxu0 %v6332
    %6795 = vmatpush.bf16.msra.mxu0 %v6328
    %6796 = vmatmul.bf16.gmra.mxu0 %v6761
    %v6797 = vpop.f32.mrf.mxu0
    %v6798 = vadd.f32 0.0, %v6797
    %v6799 = vpop.f32.mrf.mxu0
    %6800 = vdwg.mxu0
    %6801 = vmatpush.bf16.msra.mxu0 %v6357
    %6802 = vmatpush.bf16.msra.mxu0 %v6353
    %6803 = vmatpush.bf16.msra.mxu0 %v6349
    %6804 = vmatpush.bf16.msra.mxu0 %v6345
    %6805 = vmatpush.bf16.msra.mxu0 %v6341
    %6806 = vmatpush.bf16.msra.mxu0 %v6337
    %6807 = vmatpush.bf16.msra.mxu0 %v6333
    %6808 = vmatpush.bf16.msra.mxu0 %v6329
    %6809 = vmatmul.bf16.gmra.mxu0 %v6761
    %v6810 = vpop.f32.mrf.mxu0
    %v6811 = vadd.f32 0.0, %v6810
    %v6812 = vpop.f32.mrf.mxu0
    %6813 = vdwg.mxu0
    %v6814 = vadd.f32 %v6757, %v6772
    %v6815 = vadd.f32 %v6758, %v6785
    %v6816 = vadd.f32 %v6759, %v6798
    %v6817 = vadd.f32 %v6760, %v6811
    %v6818 = vxor.u32 %v6814, 2147483648
    %v6819 = vmul.f32 %v6818, 1.442695
    %v6820 = vpow.pop %v6819
    %v6821 = vadd.f32 %v6820, 1.0
    %v6822 = vrcp.pop %v6821
    %v6823 = vmul.f32 %v6821, %v6822
    %v6824 = vsub.f32 1.0, %v6823
    %v6825 = vmul.f32 %v6822, %v6824
    %v6826 = vadd.f32 %v6822, %v6825
    %vm6827 = vweird.f32 %v6821
    %vm6828 = vweird.f32 %v6822
    %vm6829 = vmor %vm6827, %vm6828
    %v6830 = vsel %vm6829, %v6822, %v6826
    %v6831 = vand.u32 2147483647, %v6821
    %vm6832 = vcmp.eq.f32.partialorder %v6831, 8.507059e+37
    %v6833 = vand.u32 %v6821, 2147483648
    %v6834 = vor.u32 1.1754944e-38, %v6833
    %v6835 = vsel %vm6832, %v6834, %v6830
    %v6836 = vmul.f32 1.0, %v6835
    %v6837 = vxor.u32 %v6815, 2147483648
    %v6838 = vmul.f32 %v6837, 1.442695
    %v6839 = vpow.pop %v6838
    %v6840 = vadd.f32 %v6839, 1.0
    %v6841 = vrcp.pop %v6840
    %v6842 = vmul.f32 %v6840, %v6841
    %v6843 = vsub.f32 1.0, %v6842
    %v6844 = vmul.f32 %v6841, %v6843
    %v6845 = vadd.f32 %v6841, %v6844
    %vm6846 = vweird.f32 %v6840
    %vm6847 = vweird.f32 %v6841
    %vm6848 = vmor %vm6846, %vm6847
    %v6849 = vsel %vm6848, %v6841, %v6845
    %v6850 = vand.u32 2147483647, %v6840
    %vm6851 = vcmp.eq.f32.partialorder %v6850, 8.507059e+37
    %v6852 = vand.u32 %v6840, 2147483648
    %v6853 = vor.u32 1.1754944e-38, %v6852
    %v6854 = vsel %vm6851, %v6853, %v6849
    %v6855 = vmul.f32 1.0, %v6854
    %v6856 = vtanh.pop %v6816
    %v6857 = vxor.u32 %v6817, 2147483648
    %v6858 = vmul.f32 %v6857, 1.442695
    %v6859 = vpow.pop %v6858
    %v6860 = vadd.f32 %v6859, 1.0
    %v6861 = vrcp.pop %v6860
    %v6862 = vmul.f32 %v6860, %v6861
    %v6863 = vsub.f32 1.0, %v6862
    %v6864 = vmul.f32 %v6861, %v6863
    %v6865 = vadd.f32 %v6861, %v6864
    %vm6866 = vweird.f32 %v6860
    %vm6867 = vweird.f32 %v6861
    %vm6868 = vmor %vm6866, %vm6867
    %v6869 = vsel %vm6868, %v6861, %v6865
    %v6870 = vand.u32 2147483647, %v6860
    %vm6871 = vcmp.eq.f32.partialorder %v6870, 8.507059e+37
    %v6872 = vand.u32 %v6860, 2147483648
    %v6873 = vor.u32 1.1754944e-38, %v6872
    %v6874 = vsel %vm6871, %v6873, %v6869
    %v6875 = vmul.f32 1.0, %v6874
    %v6876 = vmul.f32 %v6855, %v6754
    %v6877 = vmul.f32 %v6836, %v6856
    %v6878 = vadd.f32 %v6876, %v6877
    %v6879 = vtanh.pop %v6878
    %v6880 = vmul.f32 %v6875, %v6879
    %v6881 = vld [vmem:[%s1643] sm:$0xff]
    %v6882 = vld [vmem:[%s1643 + $0x8] sm:$0xff]
    %v6883 = vld [vmem:[%s1643 + $0x10] sm:$0xff]
    %v6884 = vld [vmem:[%s1643 + $0x18] sm:$0xff]
    %v6885 = vpack.c.bf16 %v6880, %v6880
    %6886 = vmatpush.bf16.msra.mxu0 %v6354
    %6887 = vmatpush.bf16.msra.mxu0 %v6350
    %6888 = vmatpush.bf16.msra.mxu0 %v6346
    %6889 = vmatpush.bf16.msra.mxu0 %v6342
    %6890 = vmatpush.bf16.msra.mxu0 %v6338
    %6891 = vmatpush.bf16.msra.mxu0 %v6334
    %6892 = vmatpush.bf16.msra.mxu0 %v6330
    %6893 = vmatpush.bf16.msra.mxu0 %v6326
    %6894 = vmatmul.bf16.gmra.mxu0 %v6885
    %v6895 = vpop.f32.mrf.mxu0
    %v6896 = vadd.f32 0.0, %v6895
    %v6897 = vpop.f32.mrf.mxu0
    %6898 = vdwg.mxu0
    %6899 = vmatpush.bf16.msra.mxu0 %v6355
    %6900 = vmatpush.bf16.msra.mxu0 %v6351
    %6901 = vmatpush.bf16.msra.mxu0 %v6347
    %6902 = vmatpush.bf16.msra.mxu0 %v6343
    %6903 = vmatpush.bf16.msra.mxu0 %v6339
    %6904 = vmatpush.bf16.msra.mxu0 %v6335
    %6905 = vmatpush.bf16.msra.mxu0 %v6331
    %6906 = vmatpush.bf16.msra.mxu0 %v6327
    %6907 = vmatmul.bf16.gmra.mxu0 %v6885
    %v6908 = vpop.f32.mrf.mxu0
    %v6909 = vadd.f32 0.0, %v6908
    %v6910 = vpop.f32.mrf.mxu0
    %6911 = vdwg.mxu0
    %6912 = vmatpush.bf16.msra.mxu0 %v6356
    %6913 = vmatpush.bf16.msra.mxu0 %v6352
    %6914 = vmatpush.bf16.msra.mxu0 %v6348
    %6915 = vmatpush.bf16.msra.mxu0 %v6344
    %6916 = vmatpush.bf16.msra.mxu0 %v6340
    %6917 = vmatpush.bf16.msra.mxu0 %v6336
    %6918 = vmatpush.bf16.msra.mxu0 %v6332
    %6919 = vmatpush.bf16.msra.mxu0 %v6328
    %6920 = vmatmul.bf16.gmra.mxu0 %v6885
    %v6921 = vpop.f32.mrf.mxu0
    %v6922 = vadd.f32 0.0, %v6921
    %v6923 = vpop.f32.mrf.mxu0
    %6924 = vdwg.mxu0
    %6925 = vmatpush.bf16.msra.mxu0 %v6357
    %6926 = vmatpush.bf16.msra.mxu0 %v6353
    %6927 = vmatpush.bf16.msra.mxu0 %v6349
    %6928 = vmatpush.bf16.msra.mxu0 %v6345
    %6929 = vmatpush.bf16.msra.mxu0 %v6341
    %6930 = vmatpush.bf16.msra.mxu0 %v6337
    %6931 = vmatpush.bf16.msra.mxu0 %v6333
    %6932 = vmatpush.bf16.msra.mxu0 %v6329
    %6933 = vmatmul.bf16.gmra.mxu0 %v6885
    %v6934 = vpop.f32.mrf.mxu0
    %v6935 = vadd.f32 0.0, %v6934
    %v6936 = vpop.f32.mrf.mxu0
    %6937 = vdwg.mxu0
    %v6938 = vadd.f32 %v6881, %v6896
    %v6939 = vadd.f32 %v6882, %v6909
    %v6940 = vadd.f32 %v6883, %v6922
    %v6941 = vadd.f32 %v6884, %v6935
    %v6942 = vxor.u32 %v6938, 2147483648
    %v6943 = vmul.f32 %v6942, 1.442695
    %v6944 = vpow.pop %v6943
    %v6945 = vadd.f32 %v6944, 1.0
    %v6946 = vrcp.pop %v6945
    %v6947 = vmul.f32 %v6945, %v6946
    %v6948 = vsub.f32 1.0, %v6947
    %v6949 = vmul.f32 %v6946, %v6948
    %v6950 = vadd.f32 %v6946, %v6949
    %vm6951 = vweird.f32 %v6945
    %vm6952 = vweird.f32 %v6946
    %vm6953 = vmor %vm6951, %vm6952
    %v6954 = vsel %vm6953, %v6946, %v6950
    %v6955 = vand.u32 2147483647, %v6945
    %vm6956 = vcmp.eq.f32.partialorder %v6955, 8.507059e+37
    %v6957 = vand.u32 %v6945, 2147483648
    %v6958 = vor.u32 1.1754944e-38, %v6957
    %v6959 = vsel %vm6956, %v6958, %v6954
    %v6960 = vmul.f32 1.0, %v6959
    %v6961 = vxor.u32 %v6939, 2147483648
    %v6962 = vmul.f32 %v6961, 1.442695
    %v6963 = vpow.pop %v6962
    %v6964 = vadd.f32 %v6963, 1.0
    %v6965 = vrcp.pop %v6964
    %v6966 = vmul.f32 %v6964, %v6965
    %v6967 = vsub.f32 1.0, %v6966
    %v6968 = vmul.f32 %v6965, %v6967
    %v6969 = vadd.f32 %v6965, %v6968
    %vm6970 = vweird.f32 %v6964
    %vm6971 = vweird.f32 %v6965
    %vm6972 = vmor %vm6970, %vm6971
    %v6973 = vsel %vm6972, %v6965, %v6969
    %v6974 = vand.u32 2147483647, %v6964
    %vm6975 = vcmp.eq.f32.partialorder %v6974, 8.507059e+37
    %v6976 = vand.u32 %v6964, 2147483648
    %v6977 = vor.u32 1.1754944e-38, %v6976
    %v6978 = vsel %vm6975, %v6977, %v6973
    %v6979 = vmul.f32 1.0, %v6978
    %v6980 = vtanh.pop %v6940
    %v6981 = vxor.u32 %v6941, 2147483648
    %v6982 = vmul.f32 %v6981, 1.442695
    %v6983 = vpow.pop %v6982
    %v6984 = vadd.f32 %v6983, 1.0
    %v6985 = vrcp.pop %v6984
    %v6986 = vmul.f32 %v6984, %v6985
    %v6987 = vsub.f32 1.0, %v6986
    %v6988 = vmul.f32 %v6985, %v6987
    %v6989 = vadd.f32 %v6985, %v6988
    %vm6990 = vweird.f32 %v6984
    %vm6991 = vweird.f32 %v6985
    %vm6992 = vmor %vm6990, %vm6991
    %v6993 = vsel %vm6992, %v6985, %v6989
    %v6994 = vand.u32 2147483647, %v6984
    %vm6995 = vcmp.eq.f32.partialorder %v6994, 8.507059e+37
    %v6996 = vand.u32 %v6984, 2147483648
    %v6997 = vor.u32 1.1754944e-38, %v6996
    %v6998 = vsel %vm6995, %v6997, %v6993
    %v6999 = vmul.f32 1.0, %v6998
    %v7000 = vmul.f32 %v6979, %v6878
    %v7001 = vmul.f32 %v6960, %v6980
    %v7002 = vadd.f32 %v7000, %v7001
    %v7003 = vtanh.pop %v7002
    %v7004 = vmul.f32 %v6999, %v7003
    %v7005 = vld [vmem:[%s1964] sm:$0xff]
    %v7006 = vld [vmem:[%s1964 + $0x8] sm:$0xff]
    %v7007 = vld [vmem:[%s1964 + $0x10] sm:$0xff]
    %v7008 = vld [vmem:[%s1964 + $0x18] sm:$0xff]
    %v7009 = vpack.c.bf16 %v7004, %v7004
    %7010 = vmatpush.bf16.msra.mxu0 %v6354
    %7011 = vmatpush.bf16.msra.mxu0 %v6350
    %7012 = vmatpush.bf16.msra.mxu0 %v6346
    %7013 = vmatpush.bf16.msra.mxu0 %v6342
    %7014 = vmatpush.bf16.msra.mxu0 %v6338
    %7015 = vmatpush.bf16.msra.mxu0 %v6334
    %7016 = vmatpush.bf16.msra.mxu0 %v6330
    %7017 = vmatpush.bf16.msra.mxu0 %v6326
    %7018 = vmatmul.bf16.gmra.mxu0 %v7009
    %v7019 = vpop.f32.mrf.mxu0
    %v7020 = vadd.f32 0.0, %v7019
    %v7021 = vpop.f32.mrf.mxu0
    %7022 = vdwg.mxu0
    %7023 = vmatpush.bf16.msra.mxu0 %v6355
    %7024 = vmatpush.bf16.msra.mxu0 %v6351
    %7025 = vmatpush.bf16.msra.mxu0 %v6347
    %7026 = vmatpush.bf16.msra.mxu0 %v6343
    %7027 = vmatpush.bf16.msra.mxu0 %v6339
    %7028 = vmatpush.bf16.msra.mxu0 %v6335
    %7029 = vmatpush.bf16.msra.mxu0 %v6331
    %7030 = vmatpush.bf16.msra.mxu0 %v6327
    %7031 = vmatmul.bf16.gmra.mxu0 %v7009
    %v7032 = vpop.f32.mrf.mxu0
    %v7033 = vadd.f32 0.0, %v7032
    %v7034 = vpop.f32.mrf.mxu0
    %7035 = vdwg.mxu0
    %7036 = vmatpush.bf16.msra.mxu0 %v6356
    %7037 = vmatpush.bf16.msra.mxu0 %v6352
    %7038 = vmatpush.bf16.msra.mxu0 %v6348
    %7039 = vmatpush.bf16.msra.mxu0 %v6344
    %7040 = vmatpush.bf16.msra.mxu0 %v6340
    %7041 = vmatpush.bf16.msra.mxu0 %v6336
    %7042 = vmatpush.bf16.msra.mxu0 %v6332
    %7043 = vmatpush.bf16.msra.mxu0 %v6328
    %7044 = vmatmul.bf16.gmra.mxu0 %v7009
    %v7045 = vpop.f32.mrf.mxu0
    %v7046 = vadd.f32 0.0, %v7045
    %v7047 = vpop.f32.mrf.mxu0
    %7048 = vdwg.mxu0
    %7049 = vmatpush.bf16.msra.mxu0 %v6357
    %7050 = vmatpush.bf16.msra.mxu0 %v6353
    %7051 = vmatpush.bf16.msra.mxu0 %v6349
    %7052 = vmatpush.bf16.msra.mxu0 %v6345
    %7053 = vmatpush.bf16.msra.mxu0 %v6341
    %7054 = vmatpush.bf16.msra.mxu0 %v6337
    %7055 = vmatpush.bf16.msra.mxu0 %v6333
    %7056 = vmatpush.bf16.msra.mxu0 %v6329
    %7057 = vmatmul.bf16.gmra.mxu0 %v7009
    %v7058 = vpop.f32.mrf.mxu0
    %v7059 = vadd.f32 0.0, %v7058
    %v7060 = vpop.f32.mrf.mxu0
    %7061 = vdwg.mxu0
    %v7062 = vadd.f32 %v7005, %v7020
    %v7063 = vadd.f32 %v7006, %v7033
    %v7064 = vadd.f32 %v7007, %v7046
    %v7065 = vadd.f32 %v7008, %v7059
    %v7066 = vxor.u32 %v7062, 2147483648
    %v7067 = vmul.f32 %v7066, 1.442695
    %v7068 = vpow.pop %v7067
    %v7069 = vadd.f32 %v7068, 1.0
    %v7070 = vrcp.pop %v7069
    %v7071 = vmul.f32 %v7069, %v7070
    %v7072 = vsub.f32 1.0, %v7071
    %v7073 = vmul.f32 %v7070, %v7072
    %v7074 = vadd.f32 %v7070, %v7073
    %vm7075 = vweird.f32 %v7069
    %vm7076 = vweird.f32 %v7070
    %vm7077 = vmor %vm7075, %vm7076
    %v7078 = vsel %vm7077, %v7070, %v7074
    %v7079 = vand.u32 2147483647, %v7069
    %vm7080 = vcmp.eq.f32.partialorder %v7079, 8.507059e+37
    %v7081 = vand.u32 %v7069, 2147483648
    %v7082 = vor.u32 1.1754944e-38, %v7081
    %v7083 = vsel %vm7080, %v7082, %v7078
    %v7084 = vmul.f32 1.0, %v7083
    %v7085 = vxor.u32 %v7063, 2147483648
    %v7086 = vmul.f32 %v7085, 1.442695
    %v7087 = vpow.pop %v7086
    %v7088 = vadd.f32 %v7087, 1.0
    %v7089 = vrcp.pop %v7088
    %v7090 = vmul.f32 %v7088, %v7089
    %v7091 = vsub.f32 1.0, %v7090
    %v7092 = vmul.f32 %v7089, %v7091
    %v7093 = vadd.f32 %v7089, %v7092
    %vm7094 = vweird.f32 %v7088
    %vm7095 = vweird.f32 %v7089
    %vm7096 = vmor %vm7094, %vm7095
    %v7097 = vsel %vm7096, %v7089, %v7093
    %v7098 = vand.u32 2147483647, %v7088
    %vm7099 = vcmp.eq.f32.partialorder %v7098, 8.507059e+37
    %v7100 = vand.u32 %v7088, 2147483648
    %v7101 = vor.u32 1.1754944e-38, %v7100
    %v7102 = vsel %vm7099, %v7101, %v7097
    %v7103 = vmul.f32 1.0, %v7102
    %v7104 = vtanh.pop %v7064
    %v7105 = vxor.u32 %v7065, 2147483648
    %v7106 = vmul.f32 %v7105, 1.442695
    %v7107 = vpow.pop %v7106
    %v7108 = vadd.f32 %v7107, 1.0
    %v7109 = vrcp.pop %v7108
    %v7110 = vmul.f32 %v7108, %v7109
    %v7111 = vsub.f32 1.0, %v7110
    %v7112 = vmul.f32 %v7109, %v7111
    %v7113 = vadd.f32 %v7109, %v7112
    %vm7114 = vweird.f32 %v7108
    %vm7115 = vweird.f32 %v7109
    %vm7116 = vmor %vm7114, %vm7115
    %v7117 = vsel %vm7116, %v7109, %v7113
    %v7118 = vand.u32 2147483647, %v7108
    %vm7119 = vcmp.eq.f32.partialorder %v7118, 8.507059e+37
    %v7120 = vand.u32 %v7108, 2147483648
    %v7121 = vor.u32 1.1754944e-38, %v7120
    %v7122 = vsel %vm7119, %v7121, %v7117
    %v7123 = vmul.f32 1.0, %v7122
    %v7124 = vmul.f32 %v7103, %v7002
    %v7125 = vmul.f32 %v7084, %v7104
    %v7126 = vadd.f32 %v7124, %v7125
    %v7127 = vtanh.pop %v7126
    %v7128 = vmul.f32 %v7123, %v7127
    %v7129 = vld [vmem:[%s2285] sm:$0xff]
    %v7130 = vld [vmem:[%s2285 + $0x8] sm:$0xff]
    %v7131 = vld [vmem:[%s2285 + $0x10] sm:$0xff]
    %v7132 = vld [vmem:[%s2285 + $0x18] sm:$0xff]
    %v7133 = vpack.c.bf16 %v7128, %v7128
    %7134 = vmatpush.bf16.msra.mxu0 %v6354
    %7135 = vmatpush.bf16.msra.mxu0 %v6350
    %7136 = vmatpush.bf16.msra.mxu0 %v6346
    %7137 = vmatpush.bf16.msra.mxu0 %v6342
    %7138 = vmatpush.bf16.msra.mxu0 %v6338
    %7139 = vmatpush.bf16.msra.mxu0 %v6334
    %7140 = vmatpush.bf16.msra.mxu0 %v6330
    %7141 = vmatpush.bf16.msra.mxu0 %v6326
    %7142 = vmatmul.bf16.gmra.mxu0 %v7133
    %v7143 = vpop.f32.mrf.mxu0
    %v7144 = vadd.f32 0.0, %v7143
    %v7145 = vpop.f32.mrf.mxu0
    %7146 = vdwg.mxu0
    %7147 = vmatpush.bf16.msra.mxu0 %v6355
    %7148 = vmatpush.bf16.msra.mxu0 %v6351
    %7149 = vmatpush.bf16.msra.mxu0 %v6347
    %7150 = vmatpush.bf16.msra.mxu0 %v6343
    %7151 = vmatpush.bf16.msra.mxu0 %v6339
    %7152 = vmatpush.bf16.msra.mxu0 %v6335
    %7153 = vmatpush.bf16.msra.mxu0 %v6331
    %7154 = vmatpush.bf16.msra.mxu0 %v6327
    %7155 = vmatmul.bf16.gmra.mxu0 %v7133
    %v7156 = vpop.f32.mrf.mxu0
    %v7157 = vadd.f32 0.0, %v7156
    %v7158 = vpop.f32.mrf.mxu0
    %7159 = vdwg.mxu0
    %7160 = vmatpush.bf16.msra.mxu0 %v6356
    %7161 = vmatpush.bf16.msra.mxu0 %v6352
    %7162 = vmatpush.bf16.msra.mxu0 %v6348
    %7163 = vmatpush.bf16.msra.mxu0 %v6344
    %7164 = vmatpush.bf16.msra.mxu0 %v6340
    %7165 = vmatpush.bf16.msra.mxu0 %v6336
    %7166 = vmatpush.bf16.msra.mxu0 %v6332
    %7167 = vmatpush.bf16.msra.mxu0 %v6328
    %7168 = vmatmul.bf16.gmra.mxu0 %v7133
    %v7169 = vpop.f32.mrf.mxu0
    %v7170 = vadd.f32 0.0, %v7169
    %v7171 = vpop.f32.mrf.mxu0
    %7172 = vdwg.mxu0
    %7173 = vmatpush.bf16.msra.mxu0 %v6357
    %7174 = vmatpush.bf16.msra.mxu0 %v6353
    %7175 = vmatpush.bf16.msra.mxu0 %v6349
    %7176 = vmatpush.bf16.msra.mxu0 %v6345
    %7177 = vmatpush.bf16.msra.mxu0 %v6341
    %7178 = vmatpush.bf16.msra.mxu0 %v6337
    %7179 = vmatpush.bf16.msra.mxu0 %v6333
    %7180 = vmatpush.bf16.msra.mxu0 %v6329
    %7181 = vmatmul.bf16.gmra.mxu0 %v7133
    %v7182 = vpop.f32.mrf.mxu0
    %v7183 = vadd.f32 0.0, %v7182
    %v7184 = vpop.f32.mrf.mxu0
    %7185 = vdwg.mxu0
    %v7186 = vadd.f32 %v7129, %v7144
    %v7187 = vadd.f32 %v7130, %v7157
    %v7188 = vadd.f32 %v7131, %v7170
    %v7189 = vadd.f32 %v7132, %v7183
    %v7190 = vxor.u32 %v7186, 2147483648
    %v7191 = vmul.f32 %v7190, 1.442695
    %v7192 = vpow.pop %v7191
    %v7193 = vadd.f32 %v7192, 1.0
    %v7194 = vrcp.pop %v7193
    %v7195 = vmul.f32 %v7193, %v7194
    %v7196 = vsub.f32 1.0, %v7195
    %v7197 = vmul.f32 %v7194, %v7196
    %v7198 = vadd.f32 %v7194, %v7197
    %vm7199 = vweird.f32 %v7193
    %vm7200 = vweird.f32 %v7194
    %vm7201 = vmor %vm7199, %vm7200
    %v7202 = vsel %vm7201, %v7194, %v7198
    %v7203 = vand.u32 2147483647, %v7193
    %vm7204 = vcmp.eq.f32.partialorder %v7203, 8.507059e+37
    %v7205 = vand.u32 %v7193, 2147483648
    %v7206 = vor.u32 1.1754944e-38, %v7205
    %v7207 = vsel %vm7204, %v7206, %v7202
    %v7208 = vmul.f32 1.0, %v7207
    %v7209 = vxor.u32 %v7187, 2147483648
    %v7210 = vmul.f32 %v7209, 1.442695
    %v7211 = vpow.pop %v7210
    %v7212 = vadd.f32 %v7211, 1.0
    %v7213 = vrcp.pop %v7212
    %v7214 = vmul.f32 %v7212, %v7213
    %v7215 = vsub.f32 1.0, %v7214
    %v7216 = vmul.f32 %v7213, %v7215
    %v7217 = vadd.f32 %v7213, %v7216
    %vm7218 = vweird.f32 %v7212
    %vm7219 = vweird.f32 %v7213
    %vm7220 = vmor %vm7218, %vm7219
    %v7221 = vsel %vm7220, %v7213, %v7217
    %v7222 = vand.u32 2147483647, %v7212
    %vm7223 = vcmp.eq.f32.partialorder %v7222, 8.507059e+37
    %v7224 = vand.u32 %v7212, 2147483648
    %v7225 = vor.u32 1.1754944e-38, %v7224
    %v7226 = vsel %vm7223, %v7225, %v7221
    %v7227 = vmul.f32 1.0, %v7226
    %v7228 = vtanh.pop %v7188
    %v7229 = vxor.u32 %v7189, 2147483648
    %v7230 = vmul.f32 %v7229, 1.442695
    %v7231 = vpow.pop %v7230
    %v7232 = vadd.f32 %v7231, 1.0
    %v7233 = vrcp.pop %v7232
    %v7234 = vmul.f32 %v7232, %v7233
    %v7235 = vsub.f32 1.0, %v7234
    %v7236 = vmul.f32 %v7233, %v7235
    %v7237 = vadd.f32 %v7233, %v7236
    %vm7238 = vweird.f32 %v7232
    %vm7239 = vweird.f32 %v7233
    %vm7240 = vmor %vm7238, %vm7239
    %v7241 = vsel %vm7240, %v7233, %v7237
    %v7242 = vand.u32 2147483647, %v7232
    %vm7243 = vcmp.eq.f32.partialorder %v7242, 8.507059e+37
    %v7244 = vand.u32 %v7232, 2147483648
    %v7245 = vor.u32 1.1754944e-38, %v7244
    %v7246 = vsel %vm7243, %v7245, %v7241
    %v7247 = vmul.f32 1.0, %v7246
    %v7248 = vmul.f32 %v7227, %v7126
    %v7249 = vmul.f32 %v7208, %v7228
    %v7250 = vadd.f32 %v7248, %v7249
    %v7251 = vtanh.pop %v7250
    %v7252 = vmul.f32 %v7247, %v7251
    %v7253 = vld [vmem:[%s2606] sm:$0xff]
    %v7254 = vld [vmem:[%s2606 + $0x8] sm:$0xff]
    %v7255 = vld [vmem:[%s2606 + $0x10] sm:$0xff]
    %v7256 = vld [vmem:[%s2606 + $0x18] sm:$0xff]
    %v7257 = vpack.c.bf16 %v7252, %v7252
    %7258 = vmatpush.bf16.msra.mxu0 %v6354
    %7259 = vmatpush.bf16.msra.mxu0 %v6350
    %7260 = vmatpush.bf16.msra.mxu0 %v6346
    %7261 = vmatpush.bf16.msra.mxu0 %v6342
    %7262 = vmatpush.bf16.msra.mxu0 %v6338
    %7263 = vmatpush.bf16.msra.mxu0 %v6334
    %7264 = vmatpush.bf16.msra.mxu0 %v6330
    %7265 = vmatpush.bf16.msra.mxu0 %v6326
    %7266 = vmatmul.bf16.gmra.mxu0 %v7257
    %v7267 = vpop.f32.mrf.mxu0
    %v7268 = vadd.f32 0.0, %v7267
    %v7269 = vpop.f32.mrf.mxu0
    %7270 = vdwg.mxu0
    %7271 = vmatpush.bf16.msra.mxu0 %v6355
    %7272 = vmatpush.bf16.msra.mxu0 %v6351
    %7273 = vmatpush.bf16.msra.mxu0 %v6347
    %7274 = vmatpush.bf16.msra.mxu0 %v6343
    %7275 = vmatpush.bf16.msra.mxu0 %v6339
    %7276 = vmatpush.bf16.msra.mxu0 %v6335
    %7277 = vmatpush.bf16.msra.mxu0 %v6331
    %7278 = vmatpush.bf16.msra.mxu0 %v6327
    %7279 = vmatmul.bf16.gmra.mxu0 %v7257
    %v7280 = vpop.f32.mrf.mxu0
    %v7281 = vadd.f32 0.0, %v7280
    %v7282 = vpop.f32.mrf.mxu0
    %7283 = vdwg.mxu0
    %7284 = vmatpush.bf16.msra.mxu0 %v6356
    %7285 = vmatpush.bf16.msra.mxu0 %v6352
    %7286 = vmatpush.bf16.msra.mxu0 %v6348
    %7287 = vmatpush.bf16.msra.mxu0 %v6344
    %7288 = vmatpush.bf16.msra.mxu0 %v6340
    %7289 = vmatpush.bf16.msra.mxu0 %v6336
    %7290 = vmatpush.bf16.msra.mxu0 %v6332
    %7291 = vmatpush.bf16.msra.mxu0 %v6328
    %7292 = vmatmul.bf16.gmra.mxu0 %v7257
    %v7293 = vpop.f32.mrf.mxu0
    %v7294 = vadd.f32 0.0, %v7293
    %v7295 = vpop.f32.mrf.mxu0
    %7296 = vdwg.mxu0
    %7297 = vmatpush.bf16.msra.mxu0 %v6357
    %7298 = vmatpush.bf16.msra.mxu0 %v6353
    %7299 = vmatpush.bf16.msra.mxu0 %v6349
    %7300 = vmatpush.bf16.msra.mxu0 %v6345
    %7301 = vmatpush.bf16.msra.mxu0 %v6341
    %7302 = vmatpush.bf16.msra.mxu0 %v6337
    %7303 = vmatpush.bf16.msra.mxu0 %v6333
    %7304 = vmatpush.bf16.msra.mxu0 %v6329
    %7305 = vmatmul.bf16.gmra.mxu0 %v7257
    %v7306 = vpop.f32.mrf.mxu0
    %v7307 = vadd.f32 0.0, %v7306
    %v7308 = vpop.f32.mrf.mxu0
    %7309 = vdwg.mxu0
    %v7310 = vadd.f32 %v7253, %v7268
    %v7311 = vadd.f32 %v7254, %v7281
    %v7312 = vadd.f32 %v7255, %v7294
    %v7313 = vadd.f32 %v7256, %v7307
    %v7314 = vxor.u32 %v7310, 2147483648
    %v7315 = vmul.f32 %v7314, 1.442695
    %v7316 = vpow.pop %v7315
    %v7317 = vadd.f32 %v7316, 1.0
    %v7318 = vrcp.pop %v7317
    %v7319 = vmul.f32 %v7317, %v7318
    %v7320 = vsub.f32 1.0, %v7319
    %v7321 = vmul.f32 %v7318, %v7320
    %v7322 = vadd.f32 %v7318, %v7321
    %vm7323 = vweird.f32 %v7317
    %vm7324 = vweird.f32 %v7318
    %vm7325 = vmor %vm7323, %vm7324
    %v7326 = vsel %vm7325, %v7318, %v7322
    %v7327 = vand.u32 2147483647, %v7317
    %vm7328 = vcmp.eq.f32.partialorder %v7327, 8.507059e+37
    %v7329 = vand.u32 %v7317, 2147483648
    %v7330 = vor.u32 1.1754944e-38, %v7329
    %v7331 = vsel %vm7328, %v7330, %v7326
    %v7332 = vmul.f32 1.0, %v7331
    %v7333 = vxor.u32 %v7311, 2147483648
    %v7334 = vmul.f32 %v7333, 1.442695
    %v7335 = vpow.pop %v7334
    %v7336 = vadd.f32 %v7335, 1.0
    %v7337 = vrcp.pop %v7336
    %v7338 = vmul.f32 %v7336, %v7337
    %v7339 = vsub.f32 1.0, %v7338
    %v7340 = vmul.f32 %v7337, %v7339
    %v7341 = vadd.f32 %v7337, %v7340
    %vm7342 = vweird.f32 %v7336
    %vm7343 = vweird.f32 %v7337
    %vm7344 = vmor %vm7342, %vm7343
    %v7345 = vsel %vm7344, %v7337, %v7341
    %v7346 = vand.u32 2147483647, %v7336
    %vm7347 = vcmp.eq.f32.partialorder %v7346, 8.507059e+37
    %v7348 = vand.u32 %v7336, 2147483648
    %v7349 = vor.u32 1.1754944e-38, %v7348
    %v7350 = vsel %vm7347, %v7349, %v7345
    %v7351 = vmul.f32 1.0, %v7350
    %v7352 = vtanh.pop %v7312
    %v7353 = vxor.u32 %v7313, 2147483648
    %v7354 = vmul.f32 %v7353, 1.442695
    %v7355 = vpow.pop %v7354
    %v7356 = vadd.f32 %v7355, 1.0
    %v7357 = vrcp.pop %v7356
    %v7358 = vmul.f32 %v7356, %v7357
    %v7359 = vsub.f32 1.0, %v7358
    %v7360 = vmul.f32 %v7357, %v7359
    %v7361 = vadd.f32 %v7357, %v7360
    %vm7362 = vweird.f32 %v7356
    %vm7363 = vweird.f32 %v7357
    %vm7364 = vmor %vm7362, %vm7363
    %v7365 = vsel %vm7364, %v7357, %v7361
    %v7366 = vand.u32 2147483647, %v7356
    %vm7367 = vcmp.eq.f32.partialorder %v7366, 8.507059e+37
    %v7368 = vand.u32 %v7356, 2147483648
    %v7369 = vor.u32 1.1754944e-38, %v7368
    %v7370 = vsel %vm7367, %v7369, %v7365
    %v7371 = vmul.f32 1.0, %v7370
    %v7372 = vmul.f32 %v7351, %v7250
    %v7373 = vmul.f32 %v7332, %v7352
    %v7374 = vadd.f32 %v7372, %v7373
    %v7375 = vtanh.pop %v7374
    %v7376 = vmul.f32 %v7371, %v7375
    %7377 = vst [vmem:[#allocation8] sm:$0xff] %v7376
    %7378 = vst [vmem:[#allocation9] sm:$0xff] %v7374
    // Predicated region
    $region78: #{lstm_rnn_forward.1} parent=1 // pred_check
      %p7379 = pneg %p139
    $region79: #{lstm_rnn_forward.1} parent=1 // pred_check_branch
      %7381 = sbr.rel (%p7379) target = $region81
    $region80: #{lstm_rnn_forward.1} parent=1 // pred_region
      %v7382 = vld [vmem:[#allocation19] sm:$0xff]
      %v7383 = vld [vmem:[#allocation19 + $0x8] sm:$0xff]
      %v7384 = vld [vmem:[#allocation19 + $0x10] sm:$0xff]
      %v7385 = vld [vmem:[#allocation19 + $0x18] sm:$0xff]
      %v7386 = vld [vmem:[#allocation19 + $0x20] sm:$0xff]
      %v7387 = vld [vmem:[#allocation19 + $0x28] sm:$0xff]
      %v7388 = vld [vmem:[#allocation19 + $0x30] sm:$0xff]
      %v7389 = vld [vmem:[#allocation19 + $0x38] sm:$0xff]
      %v7390 = vld [vmem:[#allocation19 + $0x40] sm:$0xff]
      %v7391 = vld [vmem:[#allocation19 + $0x48] sm:$0xff]
      %v7392 = vld [vmem:[#allocation19 + $0x50] sm:$0xff]
      %v7393 = vld [vmem:[#allocation19 + $0x58] sm:$0xff]
      %v7394 = vld [vmem:[#allocation19 + $0x60] sm:$0xff]
      %v7395 = vld [vmem:[#allocation19 + $0x68] sm:$0xff]
      %v7396 = vld [vmem:[#allocation19 + $0x70] sm:$0xff]
      %v7397 = vld [vmem:[#allocation19 + $0x78] sm:$0xff]
      %v7398 = vld [vmem:[%s11] sm:$0x1]
      %v7400 = vperm.slane %v7398, 0
      %7402 = vmatpush.msra.mxu0 %v7397
      %7403 = vmatpush.msra.mxu0 %v7396
      %7404 = vmatpush.msra.mxu0 %v7395
      %7405 = vmatpush.msra.mxu0 %v7394
      %7406 = vmatpush.msra.mxu0 %v7393
      %7407 = vmatpush.msra.mxu0 %v7392
      %7408 = vmatpush.msra.mxu0 %v7391
      %7409 = vmatpush.msra.mxu0 %v7390
      %7410 = vmatpush.msra.mxu0 %v7389
      %7411 = vmatpush.msra.mxu0 %v7388
      %7412 = vmatpush.msra.mxu0 %v7387
      %7413 = vmatpush.msra.mxu0 %v7386
      %7414 = vmatpush.msra.mxu0 %v7385
      %7415 = vmatpush.msra.mxu0 %v7384
      %7416 = vmatpush.msra.mxu0 %v7383
      %7417 = vmatpush.msra.mxu0 %v7382
      %7418 = vmatmul.f32.gmra.mxu0 %v7376
      %v7419 = vpop.f32.mrf.mxu0
      %v7420 = vadd.f32 %v7400, %v7419
      %7421 = vdwg.mxu0
      %7422 = vst [vmem:[#allocation21] sm:$0xff] %v7420
      %v7423 = vxor.u32 %v7420, 2147483648
      %v7424 = vmul.f32 %v7423, 1.442695
      %v7425 = vpow.pop %v7424
      %v7426 = vadd.f32 %v7425, 1.0
      %v7427 = vrcp.pop %v7426
      %v7428 = vmul.f32 %v7426, %v7427
      %v7429 = vsub.f32 1.0, %v7428
      %v7430 = vmul.f32 %v7427, %v7429
      %v7431 = vadd.f32 %v7427, %v7430
      %vm7432 = vweird.f32 %v7426
      %vm7433 = vweird.f32 %v7427
      %vm7434 = vmor %vm7432, %vm7433
      %v7435 = vsel %vm7434, %v7427, %v7431
      %v7436 = vand.u32 2147483647, %v7426
      %vm7437 = vcmp.eq.f32.partialorder %v7436, 8.507059e+37
      %v7438 = vand.u32 %v7426, 2147483648
      %v7439 = vor.u32 1.1754944e-38, %v7438
      %v7440 = vsel %vm7437, %v7439, %v7435
      %v7441 = vmul.f32 1.0, %v7440
      %7442 = vst [vmem:[%s12] sm:$0xff] %v7441
    $region81: #{lstm_rnn_forward.1} parent=1 // pred_fallthru
      _
    // Predicated region
    $region82: #{lstm_rnn_forward.1} parent=1 // pred_check
      _
    $region83: #{lstm_rnn_forward.1} parent=1 // pred_check_branch
      %7444 = sbr.rel (0) target = $region85
    $region84: #{lstm_rnn_forward.1} parent=1 // pred_region
      _
    $region85: #{lstm_rnn_forward.1} parent=1 // pred_fallthru
      _
    // Predicated region
    $region86: #{lstm_rnn_forward.1} parent=1 // pred_check
      _
    $region87: #{lstm_rnn_forward.1} parent=1 // pred_check_branch
      %7446 = sbr.rel (0) target = $region89
    $region88: #{lstm_rnn_forward.1} parent=1 // pred_region
      %7448 = vsyncadd [#allocation12], 0
      %s7450 = sshll.u32 [#allocation21], 4
      %s7451 = int_to_ptr.vmem [resolvable:$true] %s7450
      %s7452 = sshll.u32 %s13, 4
      %s7453 = int_to_ptr.hbm [resolvable:$true] %s7452
      %7455 = dma.vmem_to_hbm [thread:$0]  %s7451, 128, %s7453, [#allocation12]
    $region89: #{lstm_rnn_forward.1} parent=1 // pred_fallthru
      _
    // Predicated region
    $region90: #{lstm_rnn_forward.1} parent=1 // pred_check
      _
    $region91: #{lstm_rnn_forward.1} parent=1 // pred_check_branch
      %7457 = sbr.rel (0) target = $region93
    $region92: #{lstm_rnn_forward.1} parent=1 // pred_region
      _
    $region93: #{lstm_rnn_forward.1} parent=1 // pred_fallthru
      _
    // Predicated region
    $region94: #{lstm_rnn_forward.1} parent=1 // pred_check
      _
    $region95: #{lstm_rnn_forward.1} parent=1 // pred_check_branch
      %7459 = sbr.rel (0) target = $region97
    $region96: #{lstm_rnn_forward.1} parent=1 // pred_region
      %7461 = dma.done [#allocation12], 128
    $region97: #{lstm_rnn_forward.1} parent=1 // pred_fallthru
      _
    %7462 = vsyncpa [#allocation11], 1
    %7463 = vsyncpa [#allocation14], 1
    %7464 = vsyncpa [#allocation17], 1
    %7465 = vsyncpa [#allocation20], 1
    %7466 = vsyncpa [#allocation12], 1

</llo_original>
